<compile_context>
chip_gen: v7x
topology: tpu7x:2x2x1
jax: 0.10.0
libtpu: 0.0.40
codegen_flags: <defaults>
</compile_context>

<pallas_src>
import functools

import jax
import jax.numpy as jnp
from jax.experimental import pallas as pl
from jax.experimental.pallas import tpu as pltpu


# ---------------------------------------------------------------------------
# Fused kernel
# ---------------------------------------------------------------------------

def _fused_head_kernel(win_ref, w1_ref, b1_ref, w2_ref, b2_ref,
                       wc_ref, bc_ref, o_ref, *, tile_h, H, W):
    """conv3x3+BN+ReLU -> conv3x3+BN+ReLU -> conv1x1+bias, all in VMEM.

    win_ref : (tile_h+4, W+2, Cin) bf16  halo'd raw input window (2-row /
                                         1-col zero padding already applied)
    w1_ref  : (9*Cin, C) bf16  layer-1 weight, BN scale folded in
    b1_ref  : (1, C)     f32   layer-1 BN shift
    w2_ref  : (3,3,C,C)  bf16  layer-2 weight, BN scale folded in
    b2_ref  : (1, C)     f32   layer-2 BN shift
    wc_ref  : (ncls, C)  bf16  1x1 classifier weight
    bc_ref  : (ncls, 1)  f32   classifier bias
    o_ref   : (ncls, tile_h*W) f32  lane-dense NCHW output slab
    """
    r = pl.program_id(1)
    TH = tile_h
    TH2 = TH + 2                       # layer-1 output rows (1-row halo)
    C = w1_ref.shape[-1]
    K1 = w1_ref.shape[0]               # 9 * Cin

    # -------- layer 1: in-kernel im2col (transient 36-wide) + one K=9*Cin ---
    # matmul.  Window-local row j holds padded2 row r*TH + j; output local
    # row i (global y = r*TH - 1 + i) needs window rows i..i+2, cols x..x+2.
    slabs = [win_ref[pl.ds(dy, TH2), pl.ds(dx, W), :]
             for dy in range(3) for dx in range(3)]          # 9 x (TH2, W, Cin)
    patches = jnp.concatenate(slabs, axis=-1)                # (TH2, W, 9*Cin)
    acc1 = jnp.dot(patches.reshape(TH2 * W, K1), w1_ref[...],
                   preferred_element_type=jnp.float32)       # (TH2*W, C)
    f1 = jnp.maximum(acc1 + b1_ref[...], 0.0).reshape(TH2, W, C)

    # Halo rows outside the image are layer-2's zero padding: force exact
    # zeros (the BN shift + ReLU would otherwise leak through).
    rows = jax.lax.broadcasted_iota(jnp.int32, (TH2, W, 1), 0) + (r * TH - 1)
    f1 = jnp.where((rows >= 0) & (rows < H), f1, 0.0)

    # -------- layer 2: 3 width-shifted copies (XLU roll + boundary mask), ---
    # reused across the 3 dy row offsets; 9 K=C MXU matmuls, f32 accumulate.
    col = jax.lax.broadcasted_iota(jnp.int32, (TH2, W, 1), 1)
    left = jnp.where(col == 0, 0.0, pltpu.roll(f1, 1, axis=1))       # dx = 0
    right = jnp.where(col == W - 1, 0.0, pltpu.roll(f1, W - 1, axis=1))  # dx = 2
    variants = [v.astype(jnp.bfloat16) for v in (left, f1, right)]

    acc2 = jnp.zeros((TH * W, C), jnp.float32)
    for dy in range(3):
        for dx in range(3):
            patch = variants[dx][dy:dy + TH].reshape(TH * W, C)
            acc2 = acc2 + jnp.dot(patch, w2_ref[dy, dx],
                                  preferred_element_type=jnp.float32)
    f2 = jnp.maximum(acc2 + b2_ref[...], 0.0)                # (TH*W, C) f32

    # -------- classifier: lane-dense (ncls, TH*W) NCHW output slab ----------
    # A.B^T form keeps the big operand un-transposed in HBM-facing layout and
    # the output 128-lane dense; ncls underfills the MXU but is ~3% of FLOPs.
    logits = jax.lax.dot_general(
        wc_ref[...], f2.astype(jnp.bfloat16),
        dimension_numbers=(((1,), (1,)), ((), ())),
        preferred_element_type=jnp.float32)                  # (ncls, TH*W)
    o_ref[...] = (logits + bc_ref[...]).astype(o_ref.dtype)


# ---------------------------------------------------------------------------
# Generation-aware sizing
# ---------------------------------------------------------------------------

def _round_up(v, m):
    return -(-v // m) * m


def _vmem_limit_bytes():
    """Scoped-VMEM request: ~3/4 of physical VMEM (v5e/v6e 128 MiB, v7x 64 MiB),
    capped with headroom for Mosaic internals."""
    cap = 128 * 1024 * 1024
    try:
        cap = int(pltpu.get_tpu_info().vmem_capacity_bytes)
    except Exception:
        cap = 64 * 1024 * 1024          # conservative (v7x-sized) fallback
    return int(min(max(cap * 3 // 4, 32 * 1024 * 1024), 100 * 1024 * 1024))


def _tile_working_set_bytes(th, W, C, Cin, ncls):
    """Rough per-grid-step VMEM working set (padded to (8,128) tiles)."""
    th2, th4 = th + 2, th + 4
    lane = lambda n: _round_up(n, 128)
    sub = lambda n: _round_up(n, 8)
    window = 2 * th4 * sub(W + 2) * lane(Cin) * 2            # 2 pipeline bufs, bf16
    patches = th2 * sub(W) * lane(9 * Cin) * 2               # transient im2col, bf16
    f1 = 3 * th2 * sub(W) * lane(C) * (4 + 2)                # f32 + bf16 dx variants
    acc = 2 * sub(th * W) * lane(C) * 4                      # acc2 + f2 (f32)
    outb = 2 * sub(ncls) * lane(th * W) * 4                  # output block, 2 bufs
    weights = 2 * (sub(9 * Cin) + 9 * C + 2 + 2 * sub(ncls)) * lane(C) * 4
    return window + patches + f1 + acc + outb + weights


def _choose_tile_h(N, H, W, C, Cin, ncls, vmem_budget):
    """Largest row tile (multiple of 8, 128-lane-dense output) that fits VMEM,
    preferring >=2 total grid steps so both v7x TensorCores get work."""
    cands = [H]
    t = (H // 8) * 8
    while t >= 8:
        if t != H and H % t == 0 and (t * W) % 128 == 0:
            cands.append(t)
        t -= 8
    fitting = [t for t in cands
               if _tile_working_set_bytes(t, W, C, Cin, ncls) <= 0.6 * vmem_budget]
    if not fitting:
        return cands[-1]                # best effort (correct, maybe slower)
    multi = [t for t in fitting if N * (H // t) >= 2]
    return multi[0] if multi else fitting[0]


# ---------------------------------------------------------------------------
# Wrapper
# ---------------------------------------------------------------------------

def upsampling_forward(x_nchw, params):
    """Full Upsampling.forward. Input/Output are NCHW like PyTorch."""
    N, Cin, H, W = x_nchw.shape
    C = params["w2"].shape[-1]                  # 256 internal channels
    ncls = params["wc"].shape[-1]

    vmem_limit = _vmem_limit_bytes()
    tile_h = _choose_tile_h(N, H, W, C, Cin, ncls, vmem_limit)
    num_row_tiles = H // tile_h

    # ---- glue in plain XLA: layout, padding, per-tile halo windows ---------
    x = jnp.transpose(x_nchw, (0, 2, 3, 1))                      # NCHW -> NHWC
    xp = jnp.pad(x, ((0, 0), (2, 2), (1, 1), (0, 0))).astype(jnp.bfloat16)
    # Non-overlapping per-(batch, row-tile) halo windows of the RAW input:
    # only tile_h+4 rows x (W+2) x Cin are DMA'd per grid step.
    wins = jnp.stack([xp[:, r * tile_h: r * tile_h + tile_h + 4]
                      for r in range(num_row_tiles)], axis=1)    # (N,R,TH+4,W+2,Cin)

    # Fold eval-mode BN scales into conv weights in f32, then cast to bf16.
    w1f = (params["w1"] * params["scale1"]).reshape(9 * Cin, C).astype(jnp.bfloat16)
    w2f = (params["w2"] * params["scale2"]).astype(jnp.bfloat16)
    b1 = params["shift1"].reshape(1, C).astype(jnp.float32)
    b2 = params["shift2"].reshape(1, C).astype(jnp.float32)
    wct = params["wc"].T.astype(jnp.bfloat16)                    # (ncls, C)
    bc2 = params["bc"].reshape(ncls, 1).astype(jnp.float32)

    kernel = functools.partial(_fused_head_kernel, tile_h=tile_h, H=H, W=W)

    out_flat = pl.pallas_call(
        kernel,
        out_shape=jax.ShapeDtypeStruct((N, ncls, H * W), jnp.float32),
        grid=(N, num_row_tiles),
        in_specs=[
            pl.BlockSpec((None, None, tile_h + 4, W + 2, Cin),
                         lambda n, r: (n, r, 0, 0, 0)),
            pl.BlockSpec((9 * Cin, C), lambda n, r: (0, 0)),
            pl.BlockSpec((1, C), lambda n, r: (0, 0)),
            pl.BlockSpec((3, 3, C, C), lambda n, r: (0, 0, 0, 0)),
            pl.BlockSpec((1, C), lambda n, r: (0, 0)),
            pl.BlockSpec((ncls, C), lambda n, r: (0, 0)),
            pl.BlockSpec((ncls, 1), lambda n, r: (0, 0)),
        ],
        out_specs=pl.BlockSpec((None, ncls, tile_h * W), lambda n, r: (n, 0, r)),
        compiler_params=pltpu.CompilerParams(
            dimension_semantics=("parallel", "parallel"),
            vmem_limit_bytes=vmem_limit),
    )(wins, w1f, b1, w2f, b2, wct, bc2)

    # (N, ncls, H*W) is already NCHW-ordered; just split the spatial axis.
    return out_flat.reshape(N, ncls, H, W)


# ---------------------------------------------------------------------------
# Pure-JAX reference (f32) and deterministic parameter construction
# ---------------------------------------------------------------------------

def upsampling_reference(x_nchw, params):
    x = jnp.transpose(x_nchw, (0, 2, 3, 1))

    def conv3(inp, w):
        return jax.lax.conv_general_dilated(
            inp, w, window_strides=(1, 1), padding="SAME",
            dimension_numbers=("NHWC", "HWIO", "NHWC"))

    f = jnp.maximum(conv3(x, params["w1"]) * params["scale1"]
                    + params["shift1"], 0.0)
    f = jnp.maximum(conv3(f, params["w2"]) * params["scale2"]
                    + params["shift2"], 0.0)
    logits = jnp.einsum("nhwc,ck->nhwk", f, params["wc"]) + params["bc"]
    return jnp.transpose(logits, (0, 3, 1, 2))


def make_params(key, conv_in, num_classes, mid=256, eps=1e-5):
    ks = jax.random.split(key, 12)

    def bn_fold(kg, kb, km, kv, c):
        gamma = 1.0 + 0.1 * jax.random.normal(kg, (c,), jnp.float32)
        beta = 0.1 * jax.random.normal(kb, (c,), jnp.float32)
        rmean = 0.1 * jax.random.normal(km, (c,), jnp.float32)
        rvar = 1.0 + 0.1 * jnp.abs(jax.random.normal(kv, (c,), jnp.float32))
        scale = gamma / jnp.sqrt(rvar + eps)
        shift = beta - rmean * scale
        return scale, shift

    w1 = 0.1 * jax.random.normal(ks[0], (3, 3, conv_in, mid), jnp.float32)
    scale1, shift1 = bn_fold(ks[1], ks[2], ks[3], ks[4], mid)
    w2 = 0.05 * jax.random.normal(ks[5], (3, 3, mid, mid), jnp.float32)
    scale2, shift2 = bn_fold(ks[6], ks[7], ks[8], ks[9], mid)
    wc = 0.1 * jax.random.normal(ks[10], (mid, num_classes), jnp.float32)
    bc = 0.1 * jax.random.normal(ks[11], (num_classes,), jnp.float32)

    return dict(w1=w1, scale1=scale1, shift1=shift1,
                w2=w2, scale2=scale2, shift2=shift2,
                wc=wc, bc=bc)


# ---------------------------------------------------------------------------

if __name__ == "__main__":
    key = jax.random.PRNGKey(0)
    k_x, k_p = jax.random.split(key)

    # Small shapes consistent with the module: conv_in = 4 input channels,
    # 256 internal channels (fixed by the module), num_classes = 8.
    N, conv_in, H, W = 2, 4, 16, 16
    num_classes = 8

    x_nchw = jax.random.normal(k_x, (N, conv_in, H, W), jnp.float32)
    params = make_params(k_p, conv_in, num_classes)

    out = jax.jit(upsampling_forward)(x_nchw, params)     # (N, ncls, H, W)
    jax.block_until_ready(out)
    assert out.shape == (N, num_classes, H, W)

    # Correctness check vs. f32 reference (tolerance covers bf16 MXU operands).
    ref = upsampling_reference(x_nchw, params)
    err = float(jnp.max(jnp.abs(out - ref)))
    tol = 0.15 + 0.05 * float(jnp.max(jnp.abs(ref)))
    assert err <= tol, f"mismatch vs reference: max|diff|={err:.4f} > tol={tol:.4f}"

    print("KERNEL_OK")
</pallas_src>

<mosaic_0001>
module attributes {stable_mosaic.version = 11 : i64} {
  func.func @_fused_head_kernel(%arg0: i32, %arg1: i32, %arg2: memref<1x1x20x18x4xbf16, #tpu.memory_space<vmem>>, %arg3: memref<36x256xbf16, #tpu.memory_space<vmem>>, %arg4: memref<1x256xf32, #tpu.memory_space<vmem>>, %arg5: memref<3x3x256x256xbf16, #tpu.memory_space<vmem>>, %arg6: memref<1x256xf32, #tpu.memory_space<vmem>>, %arg7: memref<8x256xbf16, #tpu.memory_space<vmem>>, %arg8: memref<8x1xf32, #tpu.memory_space<vmem>>, %arg9: memref<1x8x256xf32, #tpu.memory_space<vmem>>) attributes {dimension_semantics = [#tpu.dimension_semantics<parallel>, #tpu.dimension_semantics<parallel>], iteration_bounds = array<i64: 2, 1>, scalar_prefetch = 0 : i64, scratch_operands = 0 : i64, tpu.core_type = #tpu.core_type<tc>, window_params = [{transform_indices = @transform_0, window_bounds = array<i64: 1, 1, 20, 18, 4>}, {pipeline_mode = #tpu.pipeline_mode<synchronous>, transform_indices = @transform_1, window_bounds = array<i64: 36, 256>}, {pipeline_mode = #tpu.pipeline_mode<synchronous>, transform_indices = @transform_2, window_bounds = array<i64: 1, 256>}, {pipeline_mode = #tpu.pipeline_mode<synchronous>, transform_indices = @transform_3, window_bounds = array<i64: 3, 3, 256, 256>}, {pipeline_mode = #tpu.pipeline_mode<synchronous>, transform_indices = @transform_4, window_bounds = array<i64: 1, 256>}, {pipeline_mode = #tpu.pipeline_mode<synchronous>, transform_indices = @transform_5, window_bounds = array<i64: 8, 256>}, {pipeline_mode = #tpu.pipeline_mode<synchronous>, transform_indices = @transform_6, window_bounds = array<i64: 8, 1>}, {transform_indices = @transform_7, window_bounds = array<i64: 1, 8, 256>}]} {
    %c0 = arith.constant 0 : index
    %c0_0 = arith.constant 0 : index
    %c0_1 = arith.constant 0 : index
    %c0_2 = arith.constant 0 : index
    %c0_3 = arith.constant 0 : index
    %0 = vector.load %arg2[%c0, %c0_0, %c0_1, %c0_2, %c0_3] : memref<1x1x20x18x4xbf16, #tpu.memory_space<vmem>>, vector<1x1x18x16x4xbf16>
    %1 = vector.shape_cast %0 : vector<1x1x18x16x4xbf16> to vector<18x16x4xbf16>
    %c0_4 = arith.constant 0 : index
    %c0_5 = arith.constant 0 : index
    %c0_6 = arith.constant 0 : index
    %c1 = arith.constant 1 : index
    %c0_7 = arith.constant 0 : index
    %2 = vector.load %arg2[%c0_4, %c0_5, %c0_6, %c1, %c0_7] : memref<1x1x20x18x4xbf16, #tpu.memory_space<vmem>>, vector<1x1x18x16x4xbf16>
    %3 = vector.shape_cast %2 : vector<1x1x18x16x4xbf16> to vector<18x16x4xbf16>
    %c0_8 = arith.constant 0 : index
    %c0_9 = arith.constant 0 : index
    %c0_10 = arith.constant 0 : index
    %c2 = arith.constant 2 : index
    %c0_11 = arith.constant 0 : index
    %4 = vector.load %arg2[%c0_8, %c0_9, %c0_10, %c2, %c0_11] : memref<1x1x20x18x4xbf16, #tpu.memory_space<vmem>>, vector<1x1x18x16x4xbf16>
    %5 = vector.shape_cast %4 : vector<1x1x18x16x4xbf16> to vector<18x16x4xbf16>
    %c0_12 = arith.constant 0 : index
    %c0_13 = arith.constant 0 : index
    %c1_14 = arith.constant 1 : index
    %c0_15 = arith.constant 0 : index
    %c0_16 = arith.constant 0 : index
    %6 = vector.load %arg2[%c0_12, %c0_13, %c1_14, %c0_15, %c0_16] : memref<1x1x20x18x4xbf16, #tpu.memory_space<vmem>>, vector<1x1x18x16x4xbf16>
    %7 = vector.shape_cast %6 : vector<1x1x18x16x4xbf16> to vector<18x16x4xbf16>
    %c0_17 = arith.constant 0 : index
    %c0_18 = arith.constant 0 : index
    %c1_19 = arith.constant 1 : index
    %c1_20 = arith.constant 1 : index
    %c0_21 = arith.constant 0 : index
    %8 = vector.load %arg2[%c0_17, %c0_18, %c1_19, %c1_20, %c0_21] : memref<1x1x20x18x4xbf16, #tpu.memory_space<vmem>>, vector<1x1x18x16x4xbf16>
    %9 = vector.shape_cast %8 : vector<1x1x18x16x4xbf16> to vector<18x16x4xbf16>
    %c0_22 = arith.constant 0 : index
    %c0_23 = arith.constant 0 : index
    %c1_24 = arith.constant 1 : index
    %c2_25 = arith.constant 2 : index
    %c0_26 = arith.constant 0 : index
    %10 = vector.load %arg2[%c0_22, %c0_23, %c1_24, %c2_25, %c0_26] : memref<1x1x20x18x4xbf16, #tpu.memory_space<vmem>>, vector<1x1x18x16x4xbf16>
    %11 = vector.shape_cast %10 : vector<1x1x18x16x4xbf16> to vector<18x16x4xbf16>
    %c0_27 = arith.constant 0 : index
    %c0_28 = arith.constant 0 : index
    %c2_29 = arith.constant 2 : index
    %c0_30 = arith.constant 0 : index
    %c0_31 = arith.constant 0 : index
    %12 = vector.load %arg2[%c0_27, %c0_28, %c2_29, %c0_30, %c0_31] : memref<1x1x20x18x4xbf16, #tpu.memory_space<vmem>>, vector<1x1x18x16x4xbf16>
    %13 = vector.shape_cast %12 : vector<1x1x18x16x4xbf16> to vector<18x16x4xbf16>
    %c0_32 = arith.constant 0 : index
    %c0_33 = arith.constant 0 : index
    %c2_34 = arith.constant 2 : index
    %c1_35 = arith.constant 1 : index
    %c0_36 = arith.constant 0 : index
    %14 = vector.load %arg2[%c0_32, %c0_33, %c2_34, %c1_35, %c0_36] : memref<1x1x20x18x4xbf16, #tpu.memory_space<vmem>>, vector<1x1x18x16x4xbf16>
    %15 = vector.shape_cast %14 : vector<1x1x18x16x4xbf16> to vector<18x16x4xbf16>
    %c0_37 = arith.constant 0 : index
    %c0_38 = arith.constant 0 : index
    %c2_39 = arith.constant 2 : index
    %c2_40 = arith.constant 2 : index
    %c0_41 = arith.constant 0 : index
    %16 = vector.load %arg2[%c0_37, %c0_38, %c2_39, %c2_40, %c0_41] : memref<1x1x20x18x4xbf16, #tpu.memory_space<vmem>>, vector<1x1x18x16x4xbf16>
    %17 = vector.shape_cast %16 : vector<1x1x18x16x4xbf16> to vector<18x16x4xbf16>
    %18 = tpu.concatenate %1, %3, %5, %7, %9, %11, %13, %15, %17 in 2 : vector<18x16x4xbf16>, vector<18x16x4xbf16>, vector<18x16x4xbf16>, vector<18x16x4xbf16>, vector<18x16x4xbf16>, vector<18x16x4xbf16>, vector<18x16x4xbf16>, vector<18x16x4xbf16>, vector<18x16x4xbf16> -> vector<18x16x36xbf16>
    %19 = vector.shape_cast %18 : vector<18x16x36xbf16> to vector<288x36xbf16>
    %c0_42 = arith.constant 0 : index
    %c0_43 = arith.constant 0 : index
    %20 = vector.load %arg3[%c0_42, %c0_43] : memref<36x256xbf16, #tpu.memory_space<vmem>>, vector<36x256xbf16>
    %cst = arith.constant dense<0.000000e+00> : vector<288x256xf32>
    %21 = tpu.matmul %19, %20, %cst {dimension_numbers = #tpu.dot_dimension_numbers<[1], [0], [0], [1], [0, 0, 1, 1], [], []>} : vector<288x36xbf16>, vector<36x256xbf16>, vector<288x256xf32> -> vector<288x256xf32>
    %c0_44 = arith.constant 0 : index
    %c0_45 = arith.constant 0 : index
    %22 = vector.load %arg4[%c0_44, %c0_45] : memref<1x256xf32, #tpu.memory_space<vmem>>, vector<1x256xf32>
    %23 = vector.broadcast %22 : vector<1x256xf32> to vector<288x256xf32>
    %24 = arith.addf %21, %23 : vector<288x256xf32>
    %cst_46 = arith.constant 0.000000e+00 : f32
    %25 = vector.broadcast %cst_46 : f32 to vector<288x256xf32>
    %26 = arith.maximumf %24, %25 : vector<288x256xf32>
    %27 = vector.shape_cast %26 : vector<288x256xf32> to vector<18x16x256xf32>
    %28 = tpu.iota {dimensions = array<i32: 0>} : vector<18x16x1xi32>
    %c16_i32 = arith.constant 16 : i32
    %29 = arith.muli %arg1, %c16_i32 : i32
    %c1_i32 = arith.constant 1 : i32
    %30 = arith.subi %29, %c1_i32 : i32
    %31 = vector.broadcast %30 : i32 to vector<18x16x1xi32>
    %32 = arith.addi %28, %31 : vector<18x16x1xi32>
    %c0_i32 = arith.constant 0 : i32
    %33 = vector.broadcast %c0_i32 : i32 to vector<18x16x1xi32>
    %34 = arith.cmpi sge, %32, %33 : vector<18x16x1xi32>
    %c16_i32_47 = arith.constant 16 : i32
    %35 = vector.broadcast %c16_i32_47 : i32 to vector<18x16x1xi32>
    %36 = arith.cmpi slt, %32, %35 : vector<18x16x1xi32>
    %37 = arith.andi %34, %36 : vector<18x16x1xi1>
    %cst_48 = arith.constant 0.000000e+00 : f32
    %38 = vector.shape_cast %37 : vector<18x16x1xi1> to vector<18x16x1xi1>
    %39 = vector.broadcast %38 : vector<18x16x1xi1> to vector<18x16x256xi1>
    %40 = vector.broadcast %cst_48 : f32 to vector<18x16x256xf32>
    %41 = arith.select %39, %27, %40 : vector<18x16x256xi1>, vector<18x16x256xf32>
    %42 = tpu.iota {dimensions = array<i32: 1>} : vector<18x16x1xi32>
    %c0_i32_49 = arith.constant 0 : i32
    %43 = vector.broadcast %c0_i32_49 : i32 to vector<18x16x1xi32>
    %44 = arith.cmpi eq, %42, %43 : vector<18x16x1xi32>
    %c1_i32_50 = arith.constant 1 : i32
    %45 = tpu.dynamic_rotate %41 by %c1_i32_50 dim 1 : vector<18x16x256xf32>, i32 -> vector<18x16x256xf32>
    %cst_51 = arith.constant 0.000000e+00 : f32
    %46 = vector.shape_cast %44 : vector<18x16x1xi1> to vector<18x16x1xi1>
    %47 = vector.broadcast %46 : vector<18x16x1xi1> to vector<18x16x256xi1>
    %48 = vector.broadcast %cst_51 : f32 to vector<18x16x256xf32>
    %49 = arith.select %47, %48, %45 : vector<18x16x256xi1>, vector<18x16x256xf32>
    %c15_i32 = arith.constant 15 : i32
    %50 = vector.broadcast %c15_i32 : i32 to vector<18x16x1xi32>
    %51 = arith.cmpi eq, %42, %50 : vector<18x16x1xi32>
    %c15_i32_52 = arith.constant 15 : i32
    %52 = tpu.dynamic_rotate %41 by %c15_i32_52 dim 1 : vector<18x16x256xf32>, i32 -> vector<18x16x256xf32>
    %cst_53 = arith.constant 0.000000e+00 : f32
    %53 = vector.shape_cast %51 : vector<18x16x1xi1> to vector<18x16x1xi1>
    %54 = vector.broadcast %53 : vector<18x16x1xi1> to vector<18x16x256xi1>
    %55 = vector.broadcast %cst_53 : f32 to vector<18x16x256xf32>
    %56 = arith.select %54, %55, %52 : vector<18x16x256xi1>, vector<18x16x256xf32>
    %57 = arith.truncf %49 : vector<18x16x256xf32> to vector<18x16x256xbf16>
    %58 = arith.truncf %41 : vector<18x16x256xf32> to vector<18x16x256xbf16>
    %59 = arith.truncf %56 : vector<18x16x256xf32> to vector<18x16x256xbf16>
    %cst_54 = arith.constant 0.000000e+00 : f32
    %60 = vector.broadcast %cst_54 : f32 to vector<256x256xf32>
    %61 = vector.extract_strided_slice %57 {offsets = [0, 0, 0], sizes = [16, 16, 256], strides = [1, 1, 1]} : vector<18x16x256xbf16> to vector<16x16x256xbf16>
    %62 = vector.shape_cast %61 : vector<16x16x256xbf16> to vector<256x256xbf16>
    %c0_55 = arith.constant 0 : index
    %c0_56 = arith.constant 0 : index
    %c0_57 = arith.constant 0 : index
    %c0_58 = arith.constant 0 : index
    %63 = vector.load %arg5[%c0_55, %c0_56, %c0_57, %c0_58] : memref<3x3x256x256xbf16, #tpu.memory_space<vmem>>, vector<1x1x256x256xbf16>
    %64 = vector.shape_cast %63 : vector<1x1x256x256xbf16> to vector<256x256xbf16>
    %cst_59 = arith.constant dense<0.000000e+00> : vector<256x256xf32>
    %65 = tpu.matmul %62, %64, %cst_59 {dimension_numbers = #tpu.dot_dimension_numbers<[1], [0], [0], [1], [0, 0, 1, 1], [], []>} : vector<256x256xbf16>, vector<256x256xbf16>, vector<256x256xf32> -> vector<256x256xf32>
    %66 = arith.addf %60, %65 : vector<256x256xf32>
    %67 = vector.extract_strided_slice %58 {offsets = [0, 0, 0], sizes = [16, 16, 256], strides = [1, 1, 1]} : vector<18x16x256xbf16> to vector<16x16x256xbf16>
    %68 = vector.shape_cast %67 : vector<16x16x256xbf16> to vector<256x256xbf16>
    %c0_60 = arith.constant 0 : index
    %c1_61 = arith.constant 1 : index
    %c0_62 = arith.constant 0 : index
    %c0_63 = arith.constant 0 : index
    %69 = vector.load %arg5[%c0_60, %c1_61, %c0_62, %c0_63] : memref<3x3x256x256xbf16, #tpu.memory_space<vmem>>, vector<1x1x256x256xbf16>
    %70 = vector.shape_cast %69 : vector<1x1x256x256xbf16> to vector<256x256xbf16>
    %cst_64 = arith.constant dense<0.000000e+00> : vector<256x256xf32>
    %71 = tpu.matmul %68, %70, %cst_64 {dimension_numbers = #tpu.dot_dimension_numbers<[1], [0], [0], [1], [0, 0, 1, 1], [], []>} : vector<256x256xbf16>, vector<256x256xbf16>, vector<256x256xf32> -> vector<256x256xf32>
    %72 = arith.addf %66, %71 : vector<256x256xf32>
    %73 = vector.extract_strided_slice %59 {offsets = [0, 0, 0], sizes = [16, 16, 256], strides = [1, 1, 1]} : vector<18x16x256xbf16> to vector<16x16x256xbf16>
    %74 = vector.shape_cast %73 : vector<16x16x256xbf16> to vector<256x256xbf16>
    %c0_65 = arith.constant 0 : index
    %c2_66 = arith.constant 2 : index
    %c0_67 = arith.constant 0 : index
    %c0_68 = arith.constant 0 : index
    %75 = vector.load %arg5[%c0_65, %c2_66, %c0_67, %c0_68] : memref<3x3x256x256xbf16, #tpu.memory_space<vmem>>, vector<1x1x256x256xbf16>
    %76 = vector.shape_cast %75 : vector<1x1x256x256xbf16> to vector<256x256xbf16>
    %cst_69 = arith.constant dense<0.000000e+00> : vector<256x256xf32>
    %77 = tpu.matmul %74, %76, %cst_69 {dimension_numbers = #tpu.dot_dimension_numbers<[1], [0], [0], [1], [0, 0, 1, 1], [], []>} : vector<256x256xbf16>, vector<256x256xbf16>, vector<256x256xf32> -> vector<256x256xf32>
    %78 = arith.addf %72, %77 : vector<256x256xf32>
    %79 = vector.extract_strided_slice %57 {offsets = [1, 0, 0], sizes = [16, 16, 256], strides = [1, 1, 1]} : vector<18x16x256xbf16> to vector<16x16x256xbf16>
    %80 = vector.shape_cast %79 : vector<16x16x256xbf16> to vector<256x256xbf16>
    %c1_70 = arith.constant 1 : index
    %c0_71 = arith.constant 0 : index
    %c0_72 = arith.constant 0 : index
    %c0_73 = arith.constant 0 : index
    %81 = vector.load %arg5[%c1_70, %c0_71, %c0_72, %c0_73] : memref<3x3x256x256xbf16, #tpu.memory_space<vmem>>, vector<1x1x256x256xbf16>
    %82 = vector.shape_cast %81 : vector<1x1x256x256xbf16> to vector<256x256xbf16>
    %cst_74 = arith.constant dense<0.000000e+00> : vector<256x256xf32>
    %83 = tpu.matmul %80, %82, %cst_74 {dimension_numbers = #tpu.dot_dimension_numbers<[1], [0], [0], [1], [0, 0, 1, 1], [], []>} : vector<256x256xbf16>, vector<256x256xbf16>, vector<256x256xf32> -> vector<256x256xf32>
    %84 = arith.addf %78, %83 : vector<256x256xf32>
    %85 = vector.extract_strided_slice %58 {offsets = [1, 0, 0], sizes = [16, 16, 256], strides = [1, 1, 1]} : vector<18x16x256xbf16> to vector<16x16x256xbf16>
    %86 = vector.shape_cast %85 : vector<16x16x256xbf16> to vector<256x256xbf16>
    %c1_75 = arith.constant 1 : index
    %c1_76 = arith.constant 1 : index
    %c0_77 = arith.constant 0 : index
    %c0_78 = arith.constant 0 : index
    %87 = vector.load %arg5[%c1_75, %c1_76, %c0_77, %c0_78] : memref<3x3x256x256xbf16, #tpu.memory_space<vmem>>, vector<1x1x256x256xbf16>
    %88 = vector.shape_cast %87 : vector<1x1x256x256xbf16> to vector<256x256xbf16>
    %cst_79 = arith.constant dense<0.000000e+00> : vector<256x256xf32>
    %89 = tpu.matmul %86, %88, %cst_79 {dimension_numbers = #tpu.dot_dimension_numbers<[1], [0], [0], [1], [0, 0, 1, 1], [], []>} : vector<256x256xbf16>, vector<256x256xbf16>, vector<256x256xf32> -> vector<256x256xf32>
    %90 = arith.addf %84, %89 : vector<256x256xf32>
    %91 = vector.extract_strided_slice %59 {offsets = [1, 0, 0], sizes = [16, 16, 256], strides = [1, 1, 1]} : vector<18x16x256xbf16> to vector<16x16x256xbf16>
    %92 = vector.shape_cast %91 : vector<16x16x256xbf16> to vector<256x256xbf16>
    %c1_80 = arith.constant 1 : index
    %c2_81 = arith.constant 2 : index
    %c0_82 = arith.constant 0 : index
    %c0_83 = arith.constant 0 : index
    %93 = vector.load %arg5[%c1_80, %c2_81, %c0_82, %c0_83] : memref<3x3x256x256xbf16, #tpu.memory_space<vmem>>, vector<1x1x256x256xbf16>
    %94 = vector.shape_cast %93 : vector<1x1x256x256xbf16> to vector<256x256xbf16>
    %cst_84 = arith.constant dense<0.000000e+00> : vector<256x256xf32>
    %95 = tpu.matmul %92, %94, %cst_84 {dimension_numbers = #tpu.dot_dimension_numbers<[1], [0], [0], [1], [0, 0, 1, 1], [], []>} : vector<256x256xbf16>, vector<256x256xbf16>, vector<256x256xf32> -> vector<256x256xf32>
    %96 = arith.addf %90, %95 : vector<256x256xf32>
    %97 = vector.extract_strided_slice %57 {offsets = [2, 0, 0], sizes = [16, 16, 256], strides = [1, 1, 1]} : vector<18x16x256xbf16> to vector<16x16x256xbf16>
    %98 = vector.shape_cast %97 : vector<16x16x256xbf16> to vector<256x256xbf16>
    %c2_85 = arith.constant 2 : index
    %c0_86 = arith.constant 0 : index
    %c0_87 = arith.constant 0 : index
    %c0_88 = arith.constant 0 : index
    %99 = vector.load %arg5[%c2_85, %c0_86, %c0_87, %c0_88] : memref<3x3x256x256xbf16, #tpu.memory_space<vmem>>, vector<1x1x256x256xbf16>
    %100 = vector.shape_cast %99 : vector<1x1x256x256xbf16> to vector<256x256xbf16>
    %cst_89 = arith.constant dense<0.000000e+00> : vector<256x256xf32>
    %101 = tpu.matmul %98, %100, %cst_89 {dimension_numbers = #tpu.dot_dimension_numbers<[1], [0], [0], [1], [0, 0, 1, 1], [], []>} : vector<256x256xbf16>, vector<256x256xbf16>, vector<256x256xf32> -> vector<256x256xf32>
    %102 = arith.addf %96, %101 : vector<256x256xf32>
    %103 = vector.extract_strided_slice %58 {offsets = [2, 0, 0], sizes = [16, 16, 256], strides = [1, 1, 1]} : vector<18x16x256xbf16> to vector<16x16x256xbf16>
    %104 = vector.shape_cast %103 : vector<16x16x256xbf16> to vector<256x256xbf16>
    %c2_90 = arith.constant 2 : index
    %c1_91 = arith.constant 1 : index
    %c0_92 = arith.constant 0 : index
    %c0_93 = arith.constant 0 : index
    %105 = vector.load %arg5[%c2_90, %c1_91, %c0_92, %c0_93] : memref<3x3x256x256xbf16, #tpu.memory_space<vmem>>, vector<1x1x256x256xbf16>
    %106 = vector.shape_cast %105 : vector<1x1x256x256xbf16> to vector<256x256xbf16>
    %cst_94 = arith.constant dense<0.000000e+00> : vector<256x256xf32>
    %107 = tpu.matmul %104, %106, %cst_94 {dimension_numbers = #tpu.dot_dimension_numbers<[1], [0], [0], [1], [0, 0, 1, 1], [], []>} : vector<256x256xbf16>, vector<256x256xbf16>, vector<256x256xf32> -> vector<256x256xf32>
    %108 = arith.addf %102, %107 : vector<256x256xf32>
    %109 = vector.extract_strided_slice %59 {offsets = [2, 0, 0], sizes = [16, 16, 256], strides = [1, 1, 1]} : vector<18x16x256xbf16> to vector<16x16x256xbf16>
    %110 = vector.shape_cast %109 : vector<16x16x256xbf16> to vector<256x256xbf16>
    %c2_95 = arith.constant 2 : index
    %c2_96 = arith.constant 2 : index
    %c0_97 = arith.constant 0 : index
    %c0_98 = arith.constant 0 : index
    %111 = vector.load %arg5[%c2_95, %c2_96, %c0_97, %c0_98] : memref<3x3x256x256xbf16, #tpu.memory_space<vmem>>, vector<1x1x256x256xbf16>
    %112 = vector.shape_cast %111 : vector<1x1x256x256xbf16> to vector<256x256xbf16>
    %cst_99 = arith.constant dense<0.000000e+00> : vector<256x256xf32>
    %113 = tpu.matmul %110, %112, %cst_99 {dimension_numbers = #tpu.dot_dimension_numbers<[1], [0], [0], [1], [0, 0, 1, 1], [], []>} : vector<256x256xbf16>, vector<256x256xbf16>, vector<256x256xf32> -> vector<256x256xf32>
    %114 = arith.addf %108, %113 : vector<256x256xf32>
    %c0_100 = arith.constant 0 : index
    %c0_101 = arith.constant 0 : index
    %115 = vector.load %arg6[%c0_100, %c0_101] : memref<1x256xf32, #tpu.memory_space<vmem>>, vector<1x256xf32>
    %116 = vector.broadcast %115 : vector<1x256xf32> to vector<256x256xf32>
    %117 = arith.addf %114, %116 : vector<256x256xf32>
    %cst_102 = arith.constant 0.000000e+00 : f32
    %118 = vector.broadcast %cst_102 : f32 to vector<256x256xf32>
    %119 = arith.maximumf %117, %118 : vector<256x256xf32>
    %c0_103 = arith.constant 0 : index
    %c0_104 = arith.constant 0 : index
    %120 = vector.load %arg7[%c0_103, %c0_104] : memref<8x256xbf16, #tpu.memory_space<vmem>>, vector<8x256xbf16>
    %121 = arith.truncf %119 : vector<256x256xf32> to vector<256x256xbf16>
    %cst_105 = arith.constant dense<0.000000e+00> : vector<8x256xf32>
    %122 = tpu.matmul %120, %121, %cst_105 {dimension_numbers = #tpu.dot_dimension_numbers<[1], [1], [0], [0], [0, 0, 1, 0], [], []>} : vector<8x256xbf16>, vector<256x256xbf16>, vector<8x256xf32> -> vector<8x256xf32>
    %c0_106 = arith.constant 0 : index
    %c0_107 = arith.constant 0 : index
    %123 = vector.load %arg8[%c0_106, %c0_107] : memref<8x1xf32, #tpu.memory_space<vmem>>, vector<8x1xf32>
    %124 = vector.broadcast %123 : vector<8x1xf32> to vector<8x256xf32>
    %125 = arith.addf %122, %124 : vector<8x256xf32>
    %c0_108 = arith.constant 0 : index
    %c0_109 = arith.constant 0 : index
    %c0_110 = arith.constant 0 : index
    %126 = vector.load %arg9[%c0_108, %c0_109, %c0_110] : memref<1x8x256xf32, #tpu.memory_space<vmem>>, vector<1x8x256xf32>
    %127 = vector.shape_cast %126 : vector<1x8x256xf32> to vector<8x256xf32>
    %128 = vector.shape_cast %125 : vector<8x256xf32> to vector<1x8x256xf32>
    tpu.vector_store %arg9[%c0_108, %c0_109, %c0_110], %128 {strides = array<i32>} : memref<1x8x256xf32, #tpu.memory_space<vmem>>, vector<1x8x256xf32>,
    return
  }
  func.func @transform_0(%arg0: i32, %arg1: i32) -> (i32, i32, i32, i32, i32) {
    %c0_i32 = arith.constant 0 : i32
    %c0_i32_0 = arith.constant 0 : i32
    %c0_i32_1 = arith.constant 0 : i32
    %c0_i32_2 = arith.constant 0 : i32
    return %arg0, %arg1, %c0_i32, %c0_i32_0, %c0_i32_1 : i32, i32, i32, i32, i32
  }
  func.func @transform_1(%arg0: i32, %arg1: i32) -> (i32, i32) {
    %c0_i32 = arith.constant 0 : i32
    %c0_i32_0 = arith.constant 0 : i32
    %c0_i32_1 = arith.constant 0 : i32
    return %c0_i32, %c0_i32_0 : i32, i32
  }
  func.func @transform_2(%arg0: i32, %arg1: i32) -> (i32, i32) {
    %c0_i32 = arith.constant 0 : i32
    %c0_i32_0 = arith.constant 0 : i32
    %c0_i32_1 = arith.constant 0 : i32
    return %c0_i32, %c0_i32_0 : i32, i32
  }
  func.func @transform_3(%arg0: i32, %arg1: i32) -> (i32, i32, i32, i32) {
    %c0_i32 = arith.constant 0 : i32
    %c0_i32_0 = arith.constant 0 : i32
    %c0_i32_1 = arith.constant 0 : i32
    %c0_i32_2 = arith.constant 0 : i32
    %c0_i32_3 = arith.constant 0 : i32
    return %c0_i32, %c0_i32_0, %c0_i32_1, %c0_i32_2 : i32, i32, i32, i32
  }
  func.func @transform_4(%arg0: i32, %arg1: i32) -> (i32, i32) {
    %c0_i32 = arith.constant 0 : i32
    %c0_i32_0 = arith.constant 0 : i32
    %c0_i32_1 = arith.constant 0 : i32
    return %c0_i32, %c0_i32_0 : i32, i32
  }
  func.func @transform_5(%arg0: i32, %arg1: i32) -> (i32, i32) {
    %c0_i32 = arith.constant 0 : i32
    %c0_i32_0 = arith.constant 0 : i32
    %c0_i32_1 = arith.constant 0 : i32
    return %c0_i32, %c0_i32_0 : i32, i32
  }
  func.func @transform_6(%arg0: i32, %arg1: i32) -> (i32, i32) {
    %c0_i32 = arith.constant 0 : i32
    %c0_i32_0 = arith.constant 0 : i32
    %c0_i32_1 = arith.constant 0 : i32
    return %c0_i32, %c0_i32_0 : i32, i32
  }
  func.func @transform_7(%arg0: i32, %arg1: i32) -> (i32, i32, i32) {
    %c0_i32 = arith.constant 0 : i32
    %c0_i32_0 = arith.constant 0 : i32
    return %arg0, %c0_i32, %arg1 : i32, i32, i32
  }
}

</mosaic_0001>

<llo_original>
// kernel: upsampling_forward.1
$region0: #{upsampling_forward.1}
  #allocation0 [shape = 'u32[]', space=smem, size = 0x4, offset = 0x4, fixed_abs, tag = 'smem constant byte address 0x4 - core index']
  #allocation1 [shape = 'u32[144,128]{1,0:T(1,128)}', space=vmem, size = 0x12000, scoped, tag = 'internal scratch']
  %s0 = inlined_call_operand.vmem [shape: bf16[2,1,20,18,4], index: 0, kind: input, shape index: {}]
  %s1 = inlined_call_operand.vmem [shape: bf16[36,256], index: 1, kind: input, shape index: {}]
  %s2 = inlined_call_operand.vmem [shape: f32[1,256], index: 2, kind: input, shape index: {}]
  %s3 = inlined_call_operand.vmem [shape: bf16[3,3,256,256], index: 3, kind: input, shape index: {}]
  %s4 = inlined_call_operand.vmem [shape: f32[1,256], index: 4, kind: input, shape index: {}]
  %s5 = inlined_call_operand.vmem [shape: bf16[8,256], index: 5, kind: input, shape index: {}]
  %s6 = inlined_call_operand.vmem [shape: f32[8,1], index: 6, kind: input, shape index: {}]
  %s7 = inlined_call_operand.vmem [shape: f32[2,8,256], index: 7, kind: output, shape index: {}]
  %s8 = sld [smem:[#allocation0]]
  $region61: #{upsampling_forward.1} parent=0
    _
  %s10 = ssub.s32 1, %s8
  %s11 = scalar_select 0, %s10, %s8
  loop: start=0, step=1, limit=4
  $region2: #{upsampling_forward.1} parent=0 // loop_pre_header
    _
  $region3: #{upsampling_forward.1} parent=0 // loop_header
    %s13 = sphi 0, %s17
    %p14 = scmp.ge.s32.totalorder %s13, 4
    %s20 = sphi 0, %s32
    %s21 = sphi 0, %s28
    %s22 = sphi 0, %s20
    %s23 = sphi 0, %s21
    %s24 = sphi 0, %s22
    %s25 = sphi 0, %s23
    %s37 = sphi 0, %s39
    %s40 = sphi 0, %s37
    %s41 = sphi 0, %s40
    %s57 = sphi 0, %s41
    %s61 = sphi 0, %s61
    %s63 = sphi 0, %s61
    %s64 = sphi 0, %s63
    %s78 = sphi 0, %s64
    %s82 = sphi 0, %s82
    %s84 = sphi 0, %s82
    %s85 = sphi 0, %s84
    %s99 = sphi 0, %s85
    %s103 = sphi 0, %s103
    %s105 = sphi 0, %s103
    %s106 = sphi 0, %s105
    %s120 = sphi 0, %s106
    %s124 = sphi 0, %s124
    %s126 = sphi 0, %s124
    %s127 = sphi 0, %s126
    %s141 = sphi 0, %s127
    %s145 = sphi 0, %s145
    %s147 = sphi 0, %s145
    %s148 = sphi 0, %s147
    %s162 = sphi 0, %s148
    %s166 = sphi 0, %s166
    %s168 = sphi 0, %s166
    %s169 = sphi 0, %s168
    %s183 = sphi 0, %s169
    %s191 = sphi 0, %s193
    %s194 = sphi 0, %s191
    %s195 = sphi 0, %s194
    %s211 = sphi 0, %s195
  $region4: #{upsampling_forward.1} parent=0 // loop_header_branch
    %16 = sbr.rel (%p14) target = $region8
  $region5: #{upsampling_forward.1} parent=0 // loop_body
    %s18 = ssub.s32 %s13, 1
    %s19 = ssub.s32 %s13, 2
    %s26 = sadd.s32 1, %s21
    %p27 = scmp.ge.s32.totalorder %s26, 1
    %s28 = scalar_select %p27, 0, %s26
    %s29 = sadd.s32 1, %s20
    %s30 = scalar_select %p27, %s29, %s20
    %p31 = scmp.ge.s32.totalorder %s30, 2
    %s32 = scalar_select %p31, 0, %s30
    %s33 = ssub.s32 %s20, %s32
    %s34 = ssub.s32 %s21, %s28
    %s35 = sor.u32 %s33, %s34
    %p36 = scmp.eq.s32.totalorder %s35, 0
    %s38 = sadd.s32 %s37, 1
    %s39 = scalar_select %p36, %s37, %s38
    %p42 = pneg %p36
    %p43 = scmp.eq.s32.totalorder %s13, 1
    %p44 = por %p42, %p43
    %p45 = scmp.ne.s32.totalorder %s37, %s40
    %p46 = scmp.eq.s32.totalorder %s13, 0
    %p47 = por %p45, %p46
    %p48 = scmp.ne.s32.totalorder %s37, %s40
    %p49 = scmp.eq.s32.totalorder %s18, 1
    %p50 = por %p48, %p49
    %p51 = scmp.ne.s32.totalorder %s40, %s41
    %p52 = scmp.eq.s32.totalorder %s18, 0
    %p53 = por %p51, %p52
    %p54 = scmp.ne.s32.totalorder %s40, %s41
    %p55 = scmp.eq.s32.totalorder %s19, 1
    %p56 = por %p54, %p55
    %p58 = scmp.ne.s32.totalorder %s41, %s57
    %p59 = scmp.eq.s32.totalorder %s19, 0
    %p60 = por %p58, %p59
    %s62 = sadd.s32 %s61, 1
    %p65 = scmp.eq.s32.totalorder %s13, 1
    %p66 = scmp.ne.s32.totalorder %s61, %s63
    %p67 = scmp.eq.s32.totalorder %s13, 0
    %p68 = por %p66, %p67
    %p69 = scmp.ne.s32.totalorder %s61, %s63
    %p70 = scmp.eq.s32.totalorder %s18, 1
    %p71 = por %p69, %p70
    %p72 = scmp.ne.s32.totalorder %s63, %s64
    %p73 = scmp.eq.s32.totalorder %s18, 0
    %p74 = por %p72, %p73
    %p75 = scmp.ne.s32.totalorder %s63, %s64
    %p76 = scmp.eq.s32.totalorder %s19, 1
    %p77 = por %p75, %p76
    %p79 = scmp.ne.s32.totalorder %s64, %s78
    %p80 = scmp.eq.s32.totalorder %s19, 0
    %p81 = por %p79, %p80
    %s83 = sadd.s32 %s82, 1
    %p86 = scmp.eq.s32.totalorder %s13, 1
    %p87 = scmp.ne.s32.totalorder %s82, %s84
    %p88 = scmp.eq.s32.totalorder %s13, 0
    %p89 = por %p87, %p88
    %p90 = scmp.ne.s32.totalorder %s82, %s84
    %p91 = scmp.eq.s32.totalorder %s18, 1
    %p92 = por %p90, %p91
    %p93 = scmp.ne.s32.totalorder %s84, %s85
    %p94 = scmp.eq.s32.totalorder %s18, 0
    %p95 = por %p93, %p94
    %p96 = scmp.ne.s32.totalorder %s84, %s85
    %p97 = scmp.eq.s32.totalorder %s19, 1
    %p98 = por %p96, %p97
    %p100 = scmp.ne.s32.totalorder %s85, %s99
    %p101 = scmp.eq.s32.totalorder %s19, 0
    %p102 = por %p100, %p101
    %s104 = sadd.s32 %s103, 1
    %p107 = scmp.eq.s32.totalorder %s13, 1
    %p108 = scmp.ne.s32.totalorder %s103, %s105
    %p109 = scmp.eq.s32.totalorder %s13, 0
    %p110 = por %p108, %p109
    %p111 = scmp.ne.s32.totalorder %s103, %s105
    %p112 = scmp.eq.s32.totalorder %s18, 1
    %p113 = por %p111, %p112
    %p114 = scmp.ne.s32.totalorder %s105, %s106
    %p115 = scmp.eq.s32.totalorder %s18, 0
    %p116 = por %p114, %p115
    %p117 = scmp.ne.s32.totalorder %s105, %s106
    %p118 = scmp.eq.s32.totalorder %s19, 1
    %p119 = por %p117, %p118
    %p121 = scmp.ne.s32.totalorder %s106, %s120
    %p122 = scmp.eq.s32.totalorder %s19, 0
    %p123 = por %p121, %p122
    %s125 = sadd.s32 %s124, 1
    %p128 = scmp.eq.s32.totalorder %s13, 1
    %p129 = scmp.ne.s32.totalorder %s124, %s126
    %p130 = scmp.eq.s32.totalorder %s13, 0
    %p131 = por %p129, %p130
    %p132 = scmp.ne.s32.totalorder %s124, %s126
    %p133 = scmp.eq.s32.totalorder %s18, 1
    %p134 = por %p132, %p133
    %p135 = scmp.ne.s32.totalorder %s126, %s127
    %p136 = scmp.eq.s32.totalorder %s18, 0
    %p137 = por %p135, %p136
    %p138 = scmp.ne.s32.totalorder %s126, %s127
    %p139 = scmp.eq.s32.totalorder %s19, 1
    %p140 = por %p138, %p139
    %p142 = scmp.ne.s32.totalorder %s127, %s141
    %p143 = scmp.eq.s32.totalorder %s19, 0
    %p144 = por %p142, %p143
    %s146 = sadd.s32 %s145, 1
    %p149 = scmp.eq.s32.totalorder %s13, 1
    %p150 = scmp.ne.s32.totalorder %s145, %s147
    %p151 = scmp.eq.s32.totalorder %s13, 0
    %p152 = por %p150, %p151
    %p153 = scmp.ne.s32.totalorder %s145, %s147
    %p154 = scmp.eq.s32.totalorder %s18, 1
    %p155 = por %p153, %p154
    %p156 = scmp.ne.s32.totalorder %s147, %s148
    %p157 = scmp.eq.s32.totalorder %s18, 0
    %p158 = por %p156, %p157
    %p159 = scmp.ne.s32.totalorder %s147, %s148
    %p160 = scmp.eq.s32.totalorder %s19, 1
    %p161 = por %p159, %p160
    %p163 = scmp.ne.s32.totalorder %s148, %s162
    %p164 = scmp.eq.s32.totalorder %s19, 0
    %p165 = por %p163, %p164
    %s167 = sadd.s32 %s166, 1
    %p170 = scmp.eq.s32.totalorder %s13, 1
    %p171 = scmp.ne.s32.totalorder %s166, %s168
    %p172 = scmp.eq.s32.totalorder %s13, 0
    %p173 = por %p171, %p172
    %p174 = scmp.ne.s32.totalorder %s166, %s168
    %p175 = scmp.eq.s32.totalorder %s18, 1
    %p176 = por %p174, %p175
    %p177 = scmp.ne.s32.totalorder %s168, %s169
    %p178 = scmp.eq.s32.totalorder %s18, 0
    %p179 = por %p177, %p178
    %p180 = scmp.ne.s32.totalorder %s168, %s169
    %p181 = scmp.eq.s32.totalorder %s19, 1
    %p182 = por %p180, %p181
    %p184 = scmp.ne.s32.totalorder %s169, %s183
    %p185 = scmp.eq.s32.totalorder %s19, 0
    %p186 = por %p184, %p185
    %s187 = ssub.s32 %s20, %s32
    %s188 = ssub.s32 %s21, %s28
    %s189 = sor.u32 %s187, %s188
    %p190 = scmp.eq.s32.totalorder %s189, 0
    %s192 = sadd.s32 %s191, 1
    %s193 = scalar_select %p190, %s191, %s192
    %p196 = pneg %p190
    %p197 = scmp.eq.s32.totalorder %s13, 1
    %p198 = por %p196, %p197
    %p199 = scmp.ne.s32.totalorder %s191, %s194
    %p200 = scmp.eq.s32.totalorder %s13, 0
    %p201 = por %p199, %p200
    %p202 = scmp.ne.s32.totalorder %s191, %s194
    %p203 = scmp.eq.s32.totalorder %s18, 1
    %p204 = por %p202, %p203
    %p205 = scmp.ne.s32.totalorder %s194, %s195
    %p206 = scmp.eq.s32.totalorder %s18, 0
    %p207 = por %p205, %p206
    %p208 = scmp.ne.s32.totalorder %s194, %s195
    %p209 = scmp.eq.s32.totalorder %s19, 1
    %p210 = por %p208, %p209
    %p212 = scmp.ne.s32.totalorder %s195, %s211
    %p213 = scmp.eq.s32.totalorder %s19, 0
    %p214 = por %p212, %p213
    %p215 = scmp.le.s32.totalorder 1, %s13
    %p216 = scmp.lt.s32.totalorder %s13, 3
    %p217 = pnand %p215, %p216
    %p218 = pneg %p217
    // Predicated region
    $region9: #{upsampling_forward.1} parent=5 // pred_check
      _
    $region10: #{upsampling_forward.1} parent=5 // pred_check_branch
      %220 = sbr.rel (%p217) target = $region12
    $region11: #{upsampling_forward.1} parent=5 // pred_region
      %s221 = ssub.s32 %s13, 1
      // Predicated region
      $region13: #{upsampling_forward.1} parent=11 // pred_check
        %p222 = pneg %p74
      $region14: #{upsampling_forward.1} parent=11 // pred_check_branch
        %224 = sbr.rel (%p222) target = $region16
      $region15: #{upsampling_forward.1} parent=11 // pred_region
        _
      $region16: #{upsampling_forward.1} parent=11 // pred_fallthru
        _
      // Predicated region
      $region17: #{upsampling_forward.1} parent=11 // pred_check
        %p225 = pneg %p95
      $region18: #{upsampling_forward.1} parent=11 // pred_check_branch
        %227 = sbr.rel (%p225) target = $region20
      $region19: #{upsampling_forward.1} parent=11 // pred_region
        _
      $region20: #{upsampling_forward.1} parent=11 // pred_fallthru
        _
      // Predicated region
      $region21: #{upsampling_forward.1} parent=11 // pred_check
        %p228 = pneg %p116
      $region22: #{upsampling_forward.1} parent=11 // pred_check_branch
        %230 = sbr.rel (%p228) target = $region24
      $region23: #{upsampling_forward.1} parent=11 // pred_region
        _
      $region24: #{upsampling_forward.1} parent=11 // pred_fallthru
        _
      // Predicated region
      $region25: #{upsampling_forward.1} parent=11 // pred_check
        %p231 = pneg %p137
      $region26: #{upsampling_forward.1} parent=11 // pred_check_branch
        %233 = sbr.rel (%p231) target = $region28
      $region27: #{upsampling_forward.1} parent=11 // pred_region
        _
      $region28: #{upsampling_forward.1} parent=11 // pred_fallthru
        _
      // Predicated region
      $region29: #{upsampling_forward.1} parent=11 // pred_check
        %p234 = pneg %p158
      $region30: #{upsampling_forward.1} parent=11 // pred_check_branch
        %236 = sbr.rel (%p234) target = $region32
      $region31: #{upsampling_forward.1} parent=11 // pred_region
        _
      $region32: #{upsampling_forward.1} parent=11 // pred_fallthru
        _
      // Predicated region
      $region33: #{upsampling_forward.1} parent=11 // pred_check
        %p237 = pneg %p179
      $region34: #{upsampling_forward.1} parent=11 // pred_check_branch
        %239 = sbr.rel (%p237) target = $region36
      $region35: #{upsampling_forward.1} parent=11 // pred_region
        _
      $region36: #{upsampling_forward.1} parent=11 // pred_fallthru
        _
    $region12: #{upsampling_forward.1} parent=5 // pred_fallthru
      _
    %p240 = scmp.lt.s32.totalorder %s13, 2
    // Predicated region
    $region37: #{upsampling_forward.1} parent=5 // pred_check
      %p241 = pneg %p240
    $region38: #{upsampling_forward.1} parent=5 // pred_check_branch
      %243 = sbr.rel (%p241) target = $region40
    $region39: #{upsampling_forward.1} parent=5 // pred_region
      // Predicated region
      $region41: #{upsampling_forward.1} parent=39 // pred_check
        %p244 = pneg %p47
      $region42: #{upsampling_forward.1} parent=39 // pred_check_branch
        %246 = sbr.rel (%p244) target = $region44
      $region43: #{upsampling_forward.1} parent=39 // pred_region
        %p247 = scmp.lt.s32.totalorder %s20, 1
        %s248 = scalar_select %p247, %s20, 1
        %p249 = scmp.lt.s32.totalorder %s21, 0
        %s250 = scalar_select %p249, %s21, 0
        %s251 = smul.addr %s250, 60
        %s252 = smul.addr %s248, 60
        %s253 = sadd.s32 %s251, %s252
        %s254 = smul.addr %s253, 4
        %s255 = scalar_lea.vmem %s0, %s254
      $region44: #{upsampling_forward.1} parent=39 // pred_fallthru
        _
    $region40: #{upsampling_forward.1} parent=5 // pred_fallthru
      _
    %p256 = scmp.le.s32.totalorder 1, %s13
    %p257 = scmp.lt.s32.totalorder %s13, 3
    %p258 = pnand %p256, %p257
    %p259 = pneg %p258
    // Predicated region
    $region45: #{upsampling_forward.1} parent=5 // pred_check
      _
    $region46: #{upsampling_forward.1} parent=5 // pred_check_branch
      %261 = sbr.rel (%p258) target = $region48
    $region47: #{upsampling_forward.1} parent=5 // pred_region
      %s262 = ssub.s32 %s13, 1
      %p263 = scmp.lt.s32.totalorder %s22, 1
      %s264 = scalar_select %p263, %s22, 1
      %p265 = scmp.lt.s32.totalorder %s23, 0
      %s266 = scalar_select %p265, %s23, 0
      %s267 = smul.addr %s266, 60
      %s268 = smul.addr %s264, 60
      %s269 = sadd.s32 %s267, %s268
      %s270 = smul.addr %s269, 4
      %s271 = scalar_lea.vmem %s0, %s270
      %p272 = pneg %p53
      %p273 = pneg %p50
      %p274 = pneg %p74
      %p275 = pneg %p71
      %p276 = pneg %p95
      %p277 = pneg %p92
      %p278 = pneg %p116
      %p279 = pneg %p113
      %p280 = pneg %p137
      %p281 = pneg %p134
      %p282 = pneg %p158
      %p283 = pneg %p155
      %p284 = pneg %p179
      %p285 = pneg %p176
      %p286 = pneg %p207
      %p287 = pneg %p204
      %s288 = smul.u32 2, %s23
      %p289 = scmp.lt.s32.totalorder %s22, 1
      %s290 = scalar_select %p289, %s22, 1
      %p291 = scmp.lt.s32.totalorder %s288, 1
      %s292 = scalar_select %p291, %s288, 1
      %s293 = smul.addr %s290, 2
      %s294 = sadd.s32 %s292, %s293
      %s295 = smul.addr %s294, 8
      %s296 = scalar_lea.vmem %s7, %s295
      %p297 = scmp.lt.s32.totalorder %s22, 1
      %s298 = scalar_select %p297, %s22, 1
      %p299 = scmp.lt.s32.totalorder %s23, 0
      %s300 = scalar_select %p299, %s23, 0
      %s301 = smul.addr %s300, 60
      %s302 = smul.addr %s298, 60
      %s303 = sadd.s32 %s301, %s302
      %s304 = smul.addr %s303, 4
      %s305 = scalar_lea.vmem %s0, %s304
      %s306 = smul.u32 2, %s23
      %p307 = scmp.lt.s32.totalorder %s22, 1
      %s308 = scalar_select %p307, %s22, 1
      %p309 = scmp.lt.s32.totalorder %s306, 1
      %s310 = scalar_select %p309, %s306, 1
      %s311 = smul.addr %s308, 2
      %s312 = sadd.s32 %s310, %s311
      %s313 = smul.addr %s312, 8
      %s314 = scalar_lea.vmem %s7, %s313
      %s315 = smul.u32 2, %s23
      %v317 = vld [vmem:[%s305] sm:$0xf]
      %v318 = vld [vmem:[%s305 + $0x4] sm:$0xf]
      %v319 = vld [vmem:[%s305 + $0xc] sm:$0xf]
      %v320 = vld [vmem:[%s305 + $0x10] sm:$0xf]
      %v321 = vld [vmem:[%s305 + $0x18] sm:$0xf]
      %v322 = vld [vmem:[%s305 + $0x1c] sm:$0xf]
      %v323 = vld [vmem:[%s305 + $0x24] sm:$0xf]
      %v324 = vld [vmem:[%s305 + $0x28] sm:$0xf]
      %v325 = vld [vmem:[%s305 + $0x30] sm:$0xf]
      %v326 = vld [vmem:[%s305 + $0x34] sm:$0xf]
      %v327 = vld [vmem:[%s305 + $0x3c] sm:$0xf]
      %v328 = vld [vmem:[%s305 + $0x40] sm:$0xf]
      %v329 = vld [vmem:[%s305 + $0x48] sm:$0xf]
      %v330 = vld [vmem:[%s305 + $0x4c] sm:$0xf]
      %v331 = vld [vmem:[%s305 + $0x54] sm:$0xf]
      %v332 = vld [vmem:[%s305 + $0x58] sm:$0xf]
      %v333 = vld [vmem:[%s305 + $0x60] sm:$0xf]
      %v334 = vld [vmem:[%s305 + $0x64] sm:$0xf]
      %v335 = vld [vmem:[%s305 + $0x6c] sm:$0xf]
      %v336 = vld [vmem:[%s305 + $0x70] sm:$0xf]
      %v337 = vld [vmem:[%s305 + $0x78] sm:$0xf]
      %v338 = vld [vmem:[%s305 + $0x7c] sm:$0xf]
      %v339 = vld [vmem:[%s305 + $0x84] sm:$0xf]
      %v340 = vld [vmem:[%s305 + $0x88] sm:$0xf]
      %v341 = vld [vmem:[%s305 + $0x90] sm:$0xf]
      %v342 = vld [vmem:[%s305 + $0x94] sm:$0xf]
      %v343 = vld [vmem:[%s305 + $0x9c] sm:$0xf]
      %v344 = vld [vmem:[%s305 + $0xa0] sm:$0xf]
      %v345 = vld [vmem:[%s305 + $0xa8] sm:$0xf]
      %v346 = vld [vmem:[%s305 + $0xac] sm:$0xf]
      %v347 = vld [vmem:[%s305 + $0xb4] sm:$0xf]
      %v348 = vld [vmem:[%s305 + $0xb8] sm:$0xf]
      %v349 = vld [vmem:[%s305 + $0xc0] sm:$0xf]
      %v350 = vld [vmem:[%s305 + $0xc4] sm:$0xf]
      %v351 = vld [vmem:[%s305 + $0xcc] sm:$0xf]
      %v352 = vld [vmem:[%s305 + $0xd0] sm:$0xf]
      %v353 = vld [vmem:[%s305 + $0x8] sm:$0x1]
      %v354 = vld [vmem:[%s305 + $0x14] sm:$0x1]
      %v355 = vld [vmem:[%s305 + $0x20] sm:$0x1]
      %v356 = vld [vmem:[%s305 + $0x2c] sm:$0x1]
      %v357 = vld [vmem:[%s305 + $0x38] sm:$0x1]
      %v358 = vld [vmem:[%s305 + $0x44] sm:$0x1]
      %v359 = vld [vmem:[%s305 + $0x50] sm:$0x1]
      %v360 = vld [vmem:[%s305 + $0x5c] sm:$0x1]
      %v361 = vld [vmem:[%s305 + $0x68] sm:$0x1]
      %v362 = vld [vmem:[%s305 + $0x74] sm:$0x1]
      %v363 = vld [vmem:[%s305 + $0x80] sm:$0x1]
      %v364 = vld [vmem:[%s305 + $0x8c] sm:$0x1]
      %v365 = vld [vmem:[%s305 + $0x98] sm:$0x1]
      %v366 = vld [vmem:[%s305 + $0xa4] sm:$0x1]
      %v367 = vld [vmem:[%s305 + $0xb0] sm:$0x1]
      %v368 = vld [vmem:[%s305 + $0xbc] sm:$0x1]
      %v369 = vld [vmem:[%s305 + $0xc8] sm:$0x1]
      %v370 = vld [vmem:[%s305 + $0xd4] sm:$0x1]
      %v371 = vld [vmem:[%s305] sm:$0xe]
      %v372 = vld [vmem:[%s305 + $0xc] sm:$0xe]
      %v373 = vld [vmem:[%s305 + $0x18] sm:$0xe]
      %v374 = vld [vmem:[%s305 + $0x24] sm:$0xe]
      %v375 = vld [vmem:[%s305 + $0x30] sm:$0xe]
      %v376 = vld [vmem:[%s305 + $0x3c] sm:$0xe]
      %v377 = vld [vmem:[%s305 + $0x48] sm:$0xe]
      %v378 = vld [vmem:[%s305 + $0x54] sm:$0xe]
      %v379 = vld [vmem:[%s305 + $0x60] sm:$0xe]
      %v380 = vld [vmem:[%s305 + $0x6c] sm:$0xe]
      %v381 = vld [vmem:[%s305 + $0x78] sm:$0xe]
      %v382 = vld [vmem:[%s305 + $0x84] sm:$0xe]
      %v383 = vld [vmem:[%s305 + $0x90] sm:$0xe]
      %v384 = vld [vmem:[%s305 + $0x9c] sm:$0xe]
      %v385 = vld [vmem:[%s305 + $0xa8] sm:$0xe]
      %v386 = vld [vmem:[%s305 + $0xb4] sm:$0xe]
      %v387 = vld [vmem:[%s305 + $0xc0] sm:$0xe]
      %v388 = vld [vmem:[%s305 + $0xcc] sm:$0xe]
      %s389 = scalar_lea.vmem %s305, 12
      %v390 = vld [vmem:[%s389] sm:$0xf]
      %v391 = vld [vmem:[%s389 + $0x4] sm:$0xf]
      %v392 = vld [vmem:[%s389 + $0xc] sm:$0xf]
      %v393 = vld [vmem:[%s389 + $0x10] sm:$0xf]
      %v394 = vld [vmem:[%s389 + $0x18] sm:$0xf]
      %v395 = vld [vmem:[%s389 + $0x1c] sm:$0xf]
      %v396 = vld [vmem:[%s389 + $0x24] sm:$0xf]
      %v397 = vld [vmem:[%s389 + $0x28] sm:$0xf]
      %v398 = vld [vmem:[%s389 + $0x30] sm:$0xf]
      %v399 = vld [vmem:[%s389 + $0x34] sm:$0xf]
      %v400 = vld [vmem:[%s389 + $0x3c] sm:$0xf]
      %v401 = vld [vmem:[%s389 + $0x40] sm:$0xf]
      %v402 = vld [vmem:[%s389 + $0x48] sm:$0xf]
      %v403 = vld [vmem:[%s389 + $0x4c] sm:$0xf]
      %v404 = vld [vmem:[%s389 + $0x54] sm:$0xf]
      %v405 = vld [vmem:[%s389 + $0x58] sm:$0xf]
      %v406 = vld [vmem:[%s389 + $0x60] sm:$0xf]
      %v407 = vld [vmem:[%s389 + $0x64] sm:$0xf]
      %v408 = vld [vmem:[%s389 + $0x6c] sm:$0xf]
      %v409 = vld [vmem:[%s389 + $0x70] sm:$0xf]
      %v410 = vld [vmem:[%s389 + $0x78] sm:$0xf]
      %v411 = vld [vmem:[%s389 + $0x7c] sm:$0xf]
      %v412 = vld [vmem:[%s389 + $0x84] sm:$0xf]
      %v413 = vld [vmem:[%s389 + $0x88] sm:$0xf]
      %v414 = vld [vmem:[%s389 + $0x90] sm:$0xf]
      %v415 = vld [vmem:[%s389 + $0x94] sm:$0xf]
      %v416 = vld [vmem:[%s389 + $0x9c] sm:$0xf]
      %v417 = vld [vmem:[%s389 + $0xa0] sm:$0xf]
      %v418 = vld [vmem:[%s389 + $0xa8] sm:$0xf]
      %v419 = vld [vmem:[%s389 + $0xac] sm:$0xf]
      %v420 = vld [vmem:[%s389 + $0xb4] sm:$0xf]
      %v421 = vld [vmem:[%s389 + $0xb8] sm:$0xf]
      %v422 = vld [vmem:[%s389 + $0xc0] sm:$0xf]
      %v423 = vld [vmem:[%s389 + $0xc4] sm:$0xf]
      %v424 = vld [vmem:[%s389 + $0xcc] sm:$0xf]
      %v425 = vld [vmem:[%s389 + $0xd0] sm:$0xf]
      %v426 = vld [vmem:[%s389 + $0x8] sm:$0x1]
      %v427 = vld [vmem:[%s389 + $0x14] sm:$0x1]
      %v428 = vld [vmem:[%s389 + $0x20] sm:$0x1]
      %v429 = vld [vmem:[%s389 + $0x2c] sm:$0x1]
      %v430 = vld [vmem:[%s389 + $0x38] sm:$0x1]
      %v431 = vld [vmem:[%s389 + $0x44] sm:$0x1]
      %v432 = vld [vmem:[%s389 + $0x50] sm:$0x1]
      %v433 = vld [vmem:[%s389 + $0x5c] sm:$0x1]
      %v434 = vld [vmem:[%s389 + $0x68] sm:$0x1]
      %v435 = vld [vmem:[%s389 + $0x74] sm:$0x1]
      %v436 = vld [vmem:[%s389 + $0x80] sm:$0x1]
      %v437 = vld [vmem:[%s389 + $0x8c] sm:$0x1]
      %v438 = vld [vmem:[%s389 + $0x98] sm:$0x1]
      %v439 = vld [vmem:[%s389 + $0xa4] sm:$0x1]
      %v440 = vld [vmem:[%s389 + $0xb0] sm:$0x1]
      %v441 = vld [vmem:[%s389 + $0xbc] sm:$0x1]
      %v442 = vld [vmem:[%s389 + $0xc8] sm:$0x1]
      %v443 = vld [vmem:[%s389 + $0xd4] sm:$0x1]
      %v444 = vld [vmem:[%s389] sm:$0xe]
      %v445 = vld [vmem:[%s389 + $0xc] sm:$0xe]
      %v446 = vld [vmem:[%s389 + $0x18] sm:$0xe]
      %v447 = vld [vmem:[%s389 + $0x24] sm:$0xe]
      %v448 = vld [vmem:[%s389 + $0x30] sm:$0xe]
      %v449 = vld [vmem:[%s389 + $0x3c] sm:$0xe]
      %v450 = vld [vmem:[%s389 + $0x48] sm:$0xe]
      %v451 = vld [vmem:[%s389 + $0x54] sm:$0xe]
      %v452 = vld [vmem:[%s389 + $0x60] sm:$0xe]
      %v453 = vld [vmem:[%s389 + $0x6c] sm:$0xe]
      %v454 = vld [vmem:[%s389 + $0x78] sm:$0xe]
      %v455 = vld [vmem:[%s389 + $0x84] sm:$0xe]
      %v456 = vld [vmem:[%s389 + $0x90] sm:$0xe]
      %v457 = vld [vmem:[%s389 + $0x9c] sm:$0xe]
      %v458 = vld [vmem:[%s389 + $0xa8] sm:$0xe]
      %v459 = vld [vmem:[%s389 + $0xb4] sm:$0xe]
      %v460 = vld [vmem:[%s389 + $0xc0] sm:$0xe]
      %v461 = vld [vmem:[%s389 + $0xcc] sm:$0xe]
      %s462 = scalar_lea.vmem %s305, 24
      %v463 = vld [vmem:[%s462] sm:$0xf]
      %v464 = vld [vmem:[%s462 + $0x4] sm:$0xf]
      %v465 = vld [vmem:[%s462 + $0xc] sm:$0xf]
      %v466 = vld [vmem:[%s462 + $0x10] sm:$0xf]
      %v467 = vld [vmem:[%s462 + $0x18] sm:$0xf]
      %v468 = vld [vmem:[%s462 + $0x1c] sm:$0xf]
      %v469 = vld [vmem:[%s462 + $0x24] sm:$0xf]
      %v470 = vld [vmem:[%s462 + $0x28] sm:$0xf]
      %v471 = vld [vmem:[%s462 + $0x30] sm:$0xf]
      %v472 = vld [vmem:[%s462 + $0x34] sm:$0xf]
      %v473 = vld [vmem:[%s462 + $0x3c] sm:$0xf]
      %v474 = vld [vmem:[%s462 + $0x40] sm:$0xf]
      %v475 = vld [vmem:[%s462 + $0x48] sm:$0xf]
      %v476 = vld [vmem:[%s462 + $0x4c] sm:$0xf]
      %v477 = vld [vmem:[%s462 + $0x54] sm:$0xf]
      %v478 = vld [vmem:[%s462 + $0x58] sm:$0xf]
      %v479 = vld [vmem:[%s462 + $0x60] sm:$0xf]
      %v480 = vld [vmem:[%s462 + $0x64] sm:$0xf]
      %v481 = vld [vmem:[%s462 + $0x6c] sm:$0xf]
      %v482 = vld [vmem:[%s462 + $0x70] sm:$0xf]
      %v483 = vld [vmem:[%s462 + $0x78] sm:$0xf]
      %v484 = vld [vmem:[%s462 + $0x7c] sm:$0xf]
      %v485 = vld [vmem:[%s462 + $0x84] sm:$0xf]
      %v486 = vld [vmem:[%s462 + $0x88] sm:$0xf]
      %v487 = vld [vmem:[%s462 + $0x90] sm:$0xf]
      %v488 = vld [vmem:[%s462 + $0x94] sm:$0xf]
      %v489 = vld [vmem:[%s462 + $0x9c] sm:$0xf]
      %v490 = vld [vmem:[%s462 + $0xa0] sm:$0xf]
      %v491 = vld [vmem:[%s462 + $0xa8] sm:$0xf]
      %v492 = vld [vmem:[%s462 + $0xac] sm:$0xf]
      %v493 = vld [vmem:[%s462 + $0xb4] sm:$0xf]
      %v494 = vld [vmem:[%s462 + $0xb8] sm:$0xf]
      %v495 = vld [vmem:[%s462 + $0xc0] sm:$0xf]
      %v496 = vld [vmem:[%s462 + $0xc4] sm:$0xf]
      %v497 = vld [vmem:[%s462 + $0xcc] sm:$0xf]
      %v498 = vld [vmem:[%s462 + $0xd0] sm:$0xf]
      %v499 = vld [vmem:[%s462 + $0x8] sm:$0x1]
      %v500 = vld [vmem:[%s462 + $0x14] sm:$0x1]
      %v501 = vld [vmem:[%s462 + $0x20] sm:$0x1]
      %v502 = vld [vmem:[%s462 + $0x2c] sm:$0x1]
      %v503 = vld [vmem:[%s462 + $0x38] sm:$0x1]
      %v504 = vld [vmem:[%s462 + $0x44] sm:$0x1]
      %v505 = vld [vmem:[%s462 + $0x50] sm:$0x1]
      %v506 = vld [vmem:[%s462 + $0x5c] sm:$0x1]
      %v507 = vld [vmem:[%s462 + $0x68] sm:$0x1]
      %v508 = vld [vmem:[%s462 + $0x74] sm:$0x1]
      %v509 = vld [vmem:[%s462 + $0x80] sm:$0x1]
      %v510 = vld [vmem:[%s462 + $0x8c] sm:$0x1]
      %v511 = vld [vmem:[%s462 + $0x98] sm:$0x1]
      %v512 = vld [vmem:[%s462 + $0xa4] sm:$0x1]
      %v513 = vld [vmem:[%s462 + $0xb0] sm:$0x1]
      %v514 = vld [vmem:[%s462 + $0xbc] sm:$0x1]
      %v515 = vld [vmem:[%s462 + $0xc8] sm:$0x1]
      %v516 = vld [vmem:[%s462 + $0xd4] sm:$0x1]
      %v517 = vld [vmem:[%s462] sm:$0xe]
      %v518 = vld [vmem:[%s462 + $0xc] sm:$0xe]
      %v519 = vld [vmem:[%s462 + $0x18] sm:$0xe]
      %v520 = vld [vmem:[%s462 + $0x24] sm:$0xe]
      %v521 = vld [vmem:[%s462 + $0x30] sm:$0xe]
      %v522 = vld [vmem:[%s462 + $0x3c] sm:$0xe]
      %v523 = vld [vmem:[%s462 + $0x48] sm:$0xe]
      %v524 = vld [vmem:[%s462 + $0x54] sm:$0xe]
      %v525 = vld [vmem:[%s462 + $0x60] sm:$0xe]
      %v526 = vld [vmem:[%s462 + $0x6c] sm:$0xe]
      %v527 = vld [vmem:[%s462 + $0x78] sm:$0xe]
      %v528 = vld [vmem:[%s462 + $0x84] sm:$0xe]
      %v529 = vld [vmem:[%s462 + $0x90] sm:$0xe]
      %v530 = vld [vmem:[%s462 + $0x9c] sm:$0xe]
      %v531 = vld [vmem:[%s462 + $0xa8] sm:$0xe]
      %v532 = vld [vmem:[%s462 + $0xb4] sm:$0xe]
      %v533 = vld [vmem:[%s462 + $0xc0] sm:$0xe]
      %v534 = vld [vmem:[%s462 + $0xcc] sm:$0xe]
      %v571 = vunpack.c.l.b16 %v317
      %v572 = vunpack.c.l.b16 %v318
      %v573 = vunpack.c.l.b16 %v319
      %v574 = vunpack.c.l.b16 %v320
      %v575 = vunpack.c.l.b16 %v321
      %v576 = vunpack.c.l.b16 %v322
      %v577 = vunpack.c.l.b16 %v323
      %v578 = vunpack.c.l.b16 %v324
      %v579 = vunpack.c.l.b16 %v325
      %v580 = vunpack.c.l.b16 %v326
      %v581 = vunpack.c.l.b16 %v327
      %v582 = vunpack.c.l.b16 %v328
      %v583 = vunpack.c.l.b16 %v329
      %v584 = vunpack.c.l.b16 %v330
      %v585 = vunpack.c.l.b16 %v331
      %v586 = vunpack.c.l.b16 %v332
      %v587 = vunpack.c.l.b16 %v333
      %v588 = vunpack.c.l.b16 %v334
      %v589 = vunpack.c.l.b16 %v335
      %v590 = vunpack.c.l.b16 %v336
      %v591 = vunpack.c.l.b16 %v337
      %v592 = vunpack.c.l.b16 %v338
      %v593 = vunpack.c.l.b16 %v339
      %v594 = vunpack.c.l.b16 %v340
      %v595 = vunpack.c.l.b16 %v341
      %v596 = vunpack.c.l.b16 %v342
      %v597 = vunpack.c.l.b16 %v343
      %v598 = vunpack.c.l.b16 %v344
      %v599 = vunpack.c.l.b16 %v345
      %v600 = vunpack.c.l.b16 %v346
      %v601 = vunpack.c.l.b16 %v347
      %v602 = vunpack.c.l.b16 %v348
      %v603 = vunpack.c.l.b16 %v349
      %v604 = vunpack.c.l.b16 %v350
      %v605 = vunpack.c.l.b16 %v351
      %v606 = vunpack.c.l.b16 %v352
      %v607 = vpack.c.b16 %v572, %v571
      %v608 = vpack.c.b16 %v574, %v573
      %v609 = vpack.c.b16 %v576, %v575
      %v610 = vpack.c.b16 %v578, %v577
      %v611 = vpack.c.b16 %v580, %v579
      %v612 = vpack.c.b16 %v582, %v581
      %v613 = vpack.c.b16 %v584, %v583
      %v614 = vpack.c.b16 %v586, %v585
      %v615 = vpack.c.b16 %v588, %v587
      %v616 = vpack.c.b16 %v590, %v589
      %v617 = vpack.c.b16 %v592, %v591
      %v618 = vpack.c.b16 %v594, %v593
      %v619 = vpack.c.b16 %v596, %v595
      %v620 = vpack.c.b16 %v598, %v597
      %v621 = vpack.c.b16 %v600, %v599
      %v622 = vpack.c.b16 %v602, %v601
      %v623 = vpack.c.b16 %v604, %v603
      %v624 = vpack.c.b16 %v606, %v605
      %v643 = vunpack.c.l.b16 %v353
      %v644 = vunpack.c.l.b16 %v354
      %v645 = vunpack.c.l.b16 %v355
      %v646 = vunpack.c.l.b16 %v356
      %v647 = vunpack.c.l.b16 %v357
      %v648 = vunpack.c.l.b16 %v358
      %v649 = vunpack.c.l.b16 %v359
      %v650 = vunpack.c.l.b16 %v360
      %v651 = vunpack.c.l.b16 %v361
      %v652 = vunpack.c.l.b16 %v362
      %v653 = vunpack.c.l.b16 %v363
      %v654 = vunpack.c.l.b16 %v364
      %v655 = vunpack.c.l.b16 %v365
      %v656 = vunpack.c.l.b16 %v366
      %v657 = vunpack.c.l.b16 %v367
      %v658 = vunpack.c.l.b16 %v368
      %v659 = vunpack.c.l.b16 %v369
      %v660 = vunpack.c.l.b16 %v370
      %v661 = vpack.c.b16 %v643, %v643
      %v662 = vpack.c.b16 %v644, %v644
      %v663 = vpack.c.b16 %v645, %v645
      %v664 = vpack.c.b16 %v646, %v646
      %v665 = vpack.c.b16 %v647, %v647
      %v666 = vpack.c.b16 %v648, %v648
      %v667 = vpack.c.b16 %v649, %v649
      %v668 = vpack.c.b16 %v650, %v650
      %v669 = vpack.c.b16 %v651, %v651
      %v670 = vpack.c.b16 %v652, %v652
      %v671 = vpack.c.b16 %v653, %v653
      %v672 = vpack.c.b16 %v654, %v654
      %v673 = vpack.c.b16 %v655, %v655
      %v674 = vpack.c.b16 %v656, %v656
      %v675 = vpack.c.b16 %v657, %v657
      %v676 = vpack.c.b16 %v658, %v658
      %v677 = vpack.c.b16 %v659, %v659
      %v678 = vpack.c.b16 %v660, %v660
      %vm679 = vsmask.f32 7424
      %v681 = vshrl.u32 %v607, 16
      %v683 = vshll.u32 %v607, 16
      %v685 = vrot.slane %v683, 1
      %v686 = vor.u32 %v681, %v685
      %v688 = vshll.u32 %v661, 16
      %v690 = vrot.slane %v688, 1
      %v691 = vsel %vm679, %v686, %v690
      %v693 = vshrl.u32 %v608, 16
      %v695 = vshll.u32 %v608, 16
      %v697 = vrot.slane %v695, 1
      %v698 = vor.u32 %v693, %v697
      %v700 = vshll.u32 %v662, 16
      %v702 = vrot.slane %v700, 1
      %v703 = vsel %vm679, %v698, %v702
      %v705 = vshrl.u32 %v609, 16
      %v707 = vshll.u32 %v609, 16
      %v709 = vrot.slane %v707, 1
      %v710 = vor.u32 %v705, %v709
      %v712 = vshll.u32 %v663, 16
      %v714 = vrot.slane %v712, 1
      %v715 = vsel %vm679, %v710, %v714
      %v717 = vshrl.u32 %v610, 16
      %v719 = vshll.u32 %v610, 16
      %v721 = vrot.slane %v719, 1
      %v722 = vor.u32 %v717, %v721
      %v724 = vshll.u32 %v664, 16
      %v726 = vrot.slane %v724, 1
      %v727 = vsel %vm679, %v722, %v726
      %v729 = vshrl.u32 %v611, 16
      %v731 = vshll.u32 %v611, 16
      %v733 = vrot.slane %v731, 1
      %v734 = vor.u32 %v729, %v733
      %v736 = vshll.u32 %v665, 16
      %v738 = vrot.slane %v736, 1
      %v739 = vsel %vm679, %v734, %v738
      %v741 = vshrl.u32 %v612, 16
      %v743 = vshll.u32 %v612, 16
      %v745 = vrot.slane %v743, 1
      %v746 = vor.u32 %v741, %v745
      %v748 = vshll.u32 %v666, 16
      %v750 = vrot.slane %v748, 1
      %v751 = vsel %vm679, %v746, %v750
      %v753 = vshrl.u32 %v613, 16
      %v755 = vshll.u32 %v613, 16
      %v757 = vrot.slane %v755, 1
      %v758 = vor.u32 %v753, %v757
      %v760 = vshll.u32 %v667, 16
      %v762 = vrot.slane %v760, 1
      %v763 = vsel %vm679, %v758, %v762
      %v765 = vshrl.u32 %v614, 16
      %v767 = vshll.u32 %v614, 16
      %v769 = vrot.slane %v767, 1
      %v770 = vor.u32 %v765, %v769
      %v772 = vshll.u32 %v668, 16
      %v774 = vrot.slane %v772, 1
      %v775 = vsel %vm679, %v770, %v774
      %v777 = vshrl.u32 %v615, 16
      %v779 = vshll.u32 %v615, 16
      %v781 = vrot.slane %v779, 1
      %v782 = vor.u32 %v777, %v781
      %v784 = vshll.u32 %v669, 16
      %v786 = vrot.slane %v784, 1
      %v787 = vsel %vm679, %v782, %v786
      %v789 = vshrl.u32 %v616, 16
      %v791 = vshll.u32 %v616, 16
      %v793 = vrot.slane %v791, 1
      %v794 = vor.u32 %v789, %v793
      %v796 = vshll.u32 %v670, 16
      %v798 = vrot.slane %v796, 1
      %v799 = vsel %vm679, %v794, %v798
      %v801 = vshrl.u32 %v617, 16
      %v803 = vshll.u32 %v617, 16
      %v805 = vrot.slane %v803, 1
      %v806 = vor.u32 %v801, %v805
      %v808 = vshll.u32 %v671, 16
      %v810 = vrot.slane %v808, 1
      %v811 = vsel %vm679, %v806, %v810
      %v813 = vshrl.u32 %v618, 16
      %v815 = vshll.u32 %v618, 16
      %v817 = vrot.slane %v815, 1
      %v818 = vor.u32 %v813, %v817
      %v820 = vshll.u32 %v672, 16
      %v822 = vrot.slane %v820, 1
      %v823 = vsel %vm679, %v818, %v822
      %v825 = vshrl.u32 %v619, 16
      %v827 = vshll.u32 %v619, 16
      %v829 = vrot.slane %v827, 1
      %v830 = vor.u32 %v825, %v829
      %v832 = vshll.u32 %v673, 16
      %v834 = vrot.slane %v832, 1
      %v835 = vsel %vm679, %v830, %v834
      %v837 = vshrl.u32 %v620, 16
      %v839 = vshll.u32 %v620, 16
      %v841 = vrot.slane %v839, 1
      %v842 = vor.u32 %v837, %v841
      %v844 = vshll.u32 %v674, 16
      %v846 = vrot.slane %v844, 1
      %v847 = vsel %vm679, %v842, %v846
      %v849 = vshrl.u32 %v621, 16
      %v851 = vshll.u32 %v621, 16
      %v853 = vrot.slane %v851, 1
      %v854 = vor.u32 %v849, %v853
      %v856 = vshll.u32 %v675, 16
      %v858 = vrot.slane %v856, 1
      %v859 = vsel %vm679, %v854, %v858
      %v861 = vshrl.u32 %v622, 16
      %v863 = vshll.u32 %v622, 16
      %v865 = vrot.slane %v863, 1
      %v866 = vor.u32 %v861, %v865
      %v868 = vshll.u32 %v676, 16
      %v870 = vrot.slane %v868, 1
      %v871 = vsel %vm679, %v866, %v870
      %v873 = vshrl.u32 %v623, 16
      %v875 = vshll.u32 %v623, 16
      %v877 = vrot.slane %v875, 1
      %v878 = vor.u32 %v873, %v877
      %v880 = vshll.u32 %v677, 16
      %v882 = vrot.slane %v880, 1
      %v883 = vsel %vm679, %v878, %v882
      %v885 = vshrl.u32 %v624, 16
      %v887 = vshll.u32 %v624, 16
      %v889 = vrot.slane %v887, 1
      %v890 = vor.u32 %v885, %v889
      %v892 = vshll.u32 %v678, 16
      %v894 = vrot.slane %v892, 1
      %v895 = vsel %vm679, %v890, %v894
      %896 = vrot.lane.b32.xlu0 %v691, 4
      %v897 = vpop.permute.xlu0 %896
      %898 = vrot.lane.b32.xlu0 %v703, 4
      %v899 = vpop.permute.xlu0 %898
      %900 = vrot.lane.b32.xlu0 %v715, 4
      %v901 = vpop.permute.xlu0 %900
      %902 = vrot.lane.b32.xlu0 %v727, 4
      %v903 = vpop.permute.xlu0 %902
      %904 = vrot.lane.b32.xlu0 %v739, 4
      %v905 = vpop.permute.xlu0 %904
      %906 = vrot.lane.b32.xlu0 %v751, 4
      %v907 = vpop.permute.xlu0 %906
      %908 = vrot.lane.b32.xlu0 %v763, 4
      %v909 = vpop.permute.xlu0 %908
      %910 = vrot.lane.b32.xlu0 %v775, 4
      %v911 = vpop.permute.xlu0 %910
      %912 = vrot.lane.b32.xlu0 %v787, 4
      %v913 = vpop.permute.xlu0 %912
      %914 = vrot.lane.b32.xlu0 %v799, 4
      %v915 = vpop.permute.xlu0 %914
      %916 = vrot.lane.b32.xlu0 %v811, 4
      %v917 = vpop.permute.xlu0 %916
      %918 = vrot.lane.b32.xlu0 %v823, 4
      %v919 = vpop.permute.xlu0 %918
      %920 = vrot.lane.b32.xlu0 %v835, 4
      %v921 = vpop.permute.xlu0 %920
      %922 = vrot.lane.b32.xlu0 %v847, 4
      %v923 = vpop.permute.xlu0 %922
      %924 = vrot.lane.b32.xlu0 %v859, 4
      %v925 = vpop.permute.xlu0 %924
      %926 = vrot.lane.b32.xlu0 %v871, 4
      %v927 = vpop.permute.xlu0 %926
      %928 = vrot.lane.b32.xlu0 %v883, 4
      %v929 = vpop.permute.xlu0 %928
      %930 = vrot.lane.b32.xlu0 %v895, 4
      %v931 = vpop.permute.xlu0 %930
      %v950 = vunpack.c.l.b16 %v371
      %v951 = vunpack.c.l.b16 %v372
      %v952 = vunpack.c.l.b16 %v373
      %v953 = vunpack.c.l.b16 %v374
      %v954 = vunpack.c.l.b16 %v375
      %v955 = vunpack.c.l.b16 %v376
      %v956 = vunpack.c.l.b16 %v377
      %v957 = vunpack.c.l.b16 %v378
      %v958 = vunpack.c.l.b16 %v379
      %v959 = vunpack.c.l.b16 %v380
      %v960 = vunpack.c.l.b16 %v381
      %v961 = vunpack.c.l.b16 %v382
      %v962 = vunpack.c.l.b16 %v383
      %v963 = vunpack.c.l.b16 %v384
      %v964 = vunpack.c.l.b16 %v385
      %v965 = vunpack.c.l.b16 %v386
      %v966 = vunpack.c.l.b16 %v387
      %v967 = vunpack.c.l.b16 %v388
      %v968 = vpack.c.b16 %v572, %v950
      %v969 = vpack.c.b16 %v574, %v951
      %v970 = vpack.c.b16 %v576, %v952
      %v971 = vpack.c.b16 %v578, %v953
      %v972 = vpack.c.b16 %v580, %v954
      %v973 = vpack.c.b16 %v582, %v955
      %v974 = vpack.c.b16 %v584, %v956
      %v975 = vpack.c.b16 %v586, %v957
      %v976 = vpack.c.b16 %v588, %v958
      %v977 = vpack.c.b16 %v590, %v959
      %v978 = vpack.c.b16 %v592, %v960
      %v979 = vpack.c.b16 %v594, %v961
      %v980 = vpack.c.b16 %v596, %v962
      %v981 = vpack.c.b16 %v598, %v963
      %v982 = vpack.c.b16 %v600, %v964
      %v983 = vpack.c.b16 %v602, %v965
      %v984 = vpack.c.b16 %v604, %v966
      %v985 = vpack.c.b16 %v606, %v967
      %vm986 = vcmask 1046528
      %v987 = vrot.slane %v968, 1
      %v988 = vrot.slane %v661, 1
      %v989 = vsel %vm986, %v987, %v988
      %v990 = vrot.slane %v969, 1
      %v991 = vrot.slane %v662, 1
      %v992 = vsel %vm986, %v990, %v991
      %v993 = vrot.slane %v970, 1
      %v994 = vrot.slane %v663, 1
      %v995 = vsel %vm986, %v993, %v994
      %v996 = vrot.slane %v971, 1
      %v997 = vrot.slane %v664, 1
      %v998 = vsel %vm986, %v996, %v997
      %v999 = vrot.slane %v972, 1
      %v1000 = vrot.slane %v665, 1
      %v1001 = vsel %vm986, %v999, %v1000
      %v1002 = vrot.slane %v973, 1
      %v1003 = vrot.slane %v666, 1
      %v1004 = vsel %vm986, %v1002, %v1003
      %v1005 = vrot.slane %v974, 1
      %v1006 = vrot.slane %v667, 1
      %v1007 = vsel %vm986, %v1005, %v1006
      %v1008 = vrot.slane %v975, 1
      %v1009 = vrot.slane %v668, 1
      %v1010 = vsel %vm986, %v1008, %v1009
      %v1011 = vrot.slane %v976, 1
      %v1012 = vrot.slane %v669, 1
      %v1013 = vsel %vm986, %v1011, %v1012
      %v1014 = vrot.slane %v977, 1
      %v1015 = vrot.slane %v670, 1
      %v1016 = vsel %vm986, %v1014, %v1015
      %v1017 = vrot.slane %v978, 1
      %v1018 = vrot.slane %v671, 1
      %v1019 = vsel %vm986, %v1017, %v1018
      %v1020 = vrot.slane %v979, 1
      %v1021 = vrot.slane %v672, 1
      %v1022 = vsel %vm986, %v1020, %v1021
      %v1023 = vrot.slane %v980, 1
      %v1024 = vrot.slane %v673, 1
      %v1025 = vsel %vm986, %v1023, %v1024
      %v1026 = vrot.slane %v981, 1
      %v1027 = vrot.slane %v674, 1
      %v1028 = vsel %vm986, %v1026, %v1027
      %v1029 = vrot.slane %v982, 1
      %v1030 = vrot.slane %v675, 1
      %v1031 = vsel %vm986, %v1029, %v1030
      %v1032 = vrot.slane %v983, 1
      %v1033 = vrot.slane %v676, 1
      %v1034 = vsel %vm986, %v1032, %v1033
      %v1035 = vrot.slane %v984, 1
      %v1036 = vrot.slane %v677, 1
      %v1037 = vsel %vm986, %v1035, %v1036
      %v1038 = vrot.slane %v985, 1
      %v1039 = vrot.slane %v678, 1
      %v1040 = vsel %vm986, %v1038, %v1039
      %1041 = vrot.lane.b32.xlu0 %v989, 8
      %v1042 = vpop.permute.xlu0 %1041
      %1043 = vrot.lane.b32.xlu0 %v992, 8
      %v1044 = vpop.permute.xlu0 %1043
      %1045 = vrot.lane.b32.xlu0 %v995, 8
      %v1046 = vpop.permute.xlu0 %1045
      %1047 = vrot.lane.b32.xlu0 %v998, 8
      %v1048 = vpop.permute.xlu0 %1047
      %1049 = vrot.lane.b32.xlu0 %v1001, 8
      %v1050 = vpop.permute.xlu0 %1049
      %1051 = vrot.lane.b32.xlu0 %v1004, 8
      %v1052 = vpop.permute.xlu0 %1051
      %1053 = vrot.lane.b32.xlu0 %v1007, 8
      %v1054 = vpop.permute.xlu0 %1053
      %1055 = vrot.lane.b32.xlu0 %v1010, 8
      %v1056 = vpop.permute.xlu0 %1055
      %1057 = vrot.lane.b32.xlu0 %v1013, 8
      %v1058 = vpop.permute.xlu0 %1057
      %1059 = vrot.lane.b32.xlu0 %v1016, 8
      %v1060 = vpop.permute.xlu0 %1059
      %1061 = vrot.lane.b32.xlu0 %v1019, 8
      %v1062 = vpop.permute.xlu0 %1061
      %1063 = vrot.lane.b32.xlu0 %v1022, 8
      %v1064 = vpop.permute.xlu0 %1063
      %1065 = vrot.lane.b32.xlu0 %v1025, 8
      %v1066 = vpop.permute.xlu0 %1065
      %1067 = vrot.lane.b32.xlu0 %v1028, 8
      %v1068 = vpop.permute.xlu0 %1067
      %1069 = vrot.lane.b32.xlu0 %v1031, 8
      %v1070 = vpop.permute.xlu0 %1069
      %1071 = vrot.lane.b32.xlu0 %v1034, 8
      %v1072 = vpop.permute.xlu0 %1071
      %1073 = vrot.lane.b32.xlu0 %v1037, 8
      %v1074 = vpop.permute.xlu0 %1073
      %1075 = vrot.lane.b32.xlu0 %v1040, 8
      %v1076 = vpop.permute.xlu0 %1075
      %v1113 = vunpack.c.l.b16 %v390
      %v1114 = vunpack.c.l.b16 %v391
      %v1115 = vunpack.c.l.b16 %v392
      %v1116 = vunpack.c.l.b16 %v393
      %v1117 = vunpack.c.l.b16 %v394
      %v1118 = vunpack.c.l.b16 %v395
      %v1119 = vunpack.c.l.b16 %v396
      %v1120 = vunpack.c.l.b16 %v397
      %v1121 = vunpack.c.l.b16 %v398
      %v1122 = vunpack.c.l.b16 %v399
      %v1123 = vunpack.c.l.b16 %v400
      %v1124 = vunpack.c.l.b16 %v401
      %v1125 = vunpack.c.l.b16 %v402
      %v1126 = vunpack.c.l.b16 %v403
      %v1127 = vunpack.c.l.b16 %v404
      %v1128 = vunpack.c.l.b16 %v405
      %v1129 = vunpack.c.l.b16 %v406
      %v1130 = vunpack.c.l.b16 %v407
      %v1131 = vunpack.c.l.b16 %v408
      %v1132 = vunpack.c.l.b16 %v409
      %v1133 = vunpack.c.l.b16 %v410
      %v1134 = vunpack.c.l.b16 %v411
      %v1135 = vunpack.c.l.b16 %v412
      %v1136 = vunpack.c.l.b16 %v413
      %v1137 = vunpack.c.l.b16 %v414
      %v1138 = vunpack.c.l.b16 %v415
      %v1139 = vunpack.c.l.b16 %v416
      %v1140 = vunpack.c.l.b16 %v417
      %v1141 = vunpack.c.l.b16 %v418
      %v1142 = vunpack.c.l.b16 %v419
      %v1143 = vunpack.c.l.b16 %v420
      %v1144 = vunpack.c.l.b16 %v421
      %v1145 = vunpack.c.l.b16 %v422
      %v1146 = vunpack.c.l.b16 %v423
      %v1147 = vunpack.c.l.b16 %v424
      %v1148 = vunpack.c.l.b16 %v425
      %v1149 = vpack.c.b16 %v1114, %v1113
      %v1150 = vpack.c.b16 %v1116, %v1115
      %v1151 = vpack.c.b16 %v1118, %v1117
      %v1152 = vpack.c.b16 %v1120, %v1119
      %v1153 = vpack.c.b16 %v1122, %v1121
      %v1154 = vpack.c.b16 %v1124, %v1123
      %v1155 = vpack.c.b16 %v1126, %v1125
      %v1156 = vpack.c.b16 %v1128, %v1127
      %v1157 = vpack.c.b16 %v1130, %v1129
      %v1158 = vpack.c.b16 %v1132, %v1131
      %v1159 = vpack.c.b16 %v1134, %v1133
      %v1160 = vpack.c.b16 %v1136, %v1135
      %v1161 = vpack.c.b16 %v1138, %v1137
      %v1162 = vpack.c.b16 %v1140, %v1139
      %v1163 = vpack.c.b16 %v1142, %v1141
      %v1164 = vpack.c.b16 %v1144, %v1143
      %v1165 = vpack.c.b16 %v1146, %v1145
      %v1166 = vpack.c.b16 %v1148, %v1147
      %1167 = vrot.lane.b32.xlu0 %v1149, 12
      %v1168 = vpop.permute.xlu0 %1167
      %1169 = vrot.lane.b32.xlu0 %v1150, 12
      %v1170 = vpop.permute.xlu0 %1169
      %1171 = vrot.lane.b32.xlu0 %v1151, 12
      %v1172 = vpop.permute.xlu0 %1171
      %1173 = vrot.lane.b32.xlu0 %v1152, 12
      %v1174 = vpop.permute.xlu0 %1173
      %1175 = vrot.lane.b32.xlu0 %v1153, 12
      %v1176 = vpop.permute.xlu0 %1175
      %1177 = vrot.lane.b32.xlu0 %v1154, 12
      %v1178 = vpop.permute.xlu0 %1177
      %1179 = vrot.lane.b32.xlu0 %v1155, 12
      %v1180 = vpop.permute.xlu0 %1179
      %1181 = vrot.lane.b32.xlu0 %v1156, 12
      %v1182 = vpop.permute.xlu0 %1181
      %1183 = vrot.lane.b32.xlu0 %v1157, 12
      %v1184 = vpop.permute.xlu0 %1183
      %1185 = vrot.lane.b32.xlu0 %v1158, 12
      %v1186 = vpop.permute.xlu0 %1185
      %1187 = vrot.lane.b32.xlu0 %v1159, 12
      %v1188 = vpop.permute.xlu0 %1187
      %1189 = vrot.lane.b32.xlu0 %v1160, 12
      %v1190 = vpop.permute.xlu0 %1189
      %1191 = vrot.lane.b32.xlu0 %v1161, 12
      %v1192 = vpop.permute.xlu0 %1191
      %1193 = vrot.lane.b32.xlu0 %v1162, 12
      %v1194 = vpop.permute.xlu0 %1193
      %1195 = vrot.lane.b32.xlu0 %v1163, 12
      %v1196 = vpop.permute.xlu0 %1195
      %1197 = vrot.lane.b32.xlu0 %v1164, 12
      %v1198 = vpop.permute.xlu0 %1197
      %1199 = vrot.lane.b32.xlu0 %v1165, 12
      %v1200 = vpop.permute.xlu0 %1199
      %1201 = vrot.lane.b32.xlu0 %v1166, 12
      %v1202 = vpop.permute.xlu0 %1201
      %v1221 = vunpack.c.l.b16 %v426
      %v1222 = vunpack.c.l.b16 %v427
      %v1223 = vunpack.c.l.b16 %v428
      %v1224 = vunpack.c.l.b16 %v429
      %v1225 = vunpack.c.l.b16 %v430
      %v1226 = vunpack.c.l.b16 %v431
      %v1227 = vunpack.c.l.b16 %v432
      %v1228 = vunpack.c.l.b16 %v433
      %v1229 = vunpack.c.l.b16 %v434
      %v1230 = vunpack.c.l.b16 %v435
      %v1231 = vunpack.c.l.b16 %v436
      %v1232 = vunpack.c.l.b16 %v437
      %v1233 = vunpack.c.l.b16 %v438
      %v1234 = vunpack.c.l.b16 %v439
      %v1235 = vunpack.c.l.b16 %v440
      %v1236 = vunpack.c.l.b16 %v441
      %v1237 = vunpack.c.l.b16 %v442
      %v1238 = vunpack.c.l.b16 %v443
      %v1239 = vpack.c.b16 %v1221, %v1221
      %v1240 = vpack.c.b16 %v1222, %v1222
      %v1241 = vpack.c.b16 %v1223, %v1223
      %v1242 = vpack.c.b16 %v1224, %v1224
      %v1243 = vpack.c.b16 %v1225, %v1225
      %v1244 = vpack.c.b16 %v1226, %v1226
      %v1245 = vpack.c.b16 %v1227, %v1227
      %v1246 = vpack.c.b16 %v1228, %v1228
      %v1247 = vpack.c.b16 %v1229, %v1229
      %v1248 = vpack.c.b16 %v1230, %v1230
      %v1249 = vpack.c.b16 %v1231, %v1231
      %v1250 = vpack.c.b16 %v1232, %v1232
      %v1251 = vpack.c.b16 %v1233, %v1233
      %v1252 = vpack.c.b16 %v1234, %v1234
      %v1253 = vpack.c.b16 %v1235, %v1235
      %v1254 = vpack.c.b16 %v1236, %v1236
      %v1255 = vpack.c.b16 %v1237, %v1237
      %v1256 = vpack.c.b16 %v1238, %v1238
      %v1258 = vshrl.u32 %v1149, 16
      %v1260 = vshll.u32 %v1149, 16
      %v1262 = vrot.slane %v1260, 1
      %v1263 = vor.u32 %v1258, %v1262
      %v1265 = vshll.u32 %v1239, 16
      %v1267 = vrot.slane %v1265, 1
      %v1268 = vsel %vm679, %v1263, %v1267
      %v1270 = vshrl.u32 %v1150, 16
      %v1272 = vshll.u32 %v1150, 16
      %v1274 = vrot.slane %v1272, 1
      %v1275 = vor.u32 %v1270, %v1274
      %v1277 = vshll.u32 %v1240, 16
      %v1279 = vrot.slane %v1277, 1
      %v1280 = vsel %vm679, %v1275, %v1279
      %v1282 = vshrl.u32 %v1151, 16
      %v1284 = vshll.u32 %v1151, 16
      %v1286 = vrot.slane %v1284, 1
      %v1287 = vor.u32 %v1282, %v1286
      %v1289 = vshll.u32 %v1241, 16
      %v1291 = vrot.slane %v1289, 1
      %v1292 = vsel %vm679, %v1287, %v1291
      %v1294 = vshrl.u32 %v1152, 16
      %v1296 = vshll.u32 %v1152, 16
      %v1298 = vrot.slane %v1296, 1
      %v1299 = vor.u32 %v1294, %v1298
      %v1301 = vshll.u32 %v1242, 16
      %v1303 = vrot.slane %v1301, 1
      %v1304 = vsel %vm679, %v1299, %v1303
      %v1306 = vshrl.u32 %v1153, 16
      %v1308 = vshll.u32 %v1153, 16
      %v1310 = vrot.slane %v1308, 1
      %v1311 = vor.u32 %v1306, %v1310
      %v1313 = vshll.u32 %v1243, 16
      %v1315 = vrot.slane %v1313, 1
      %v1316 = vsel %vm679, %v1311, %v1315
      %v1318 = vshrl.u32 %v1154, 16
      %v1320 = vshll.u32 %v1154, 16
      %v1322 = vrot.slane %v1320, 1
      %v1323 = vor.u32 %v1318, %v1322
      %v1325 = vshll.u32 %v1244, 16
      %v1327 = vrot.slane %v1325, 1
      %v1328 = vsel %vm679, %v1323, %v1327
      %v1330 = vshrl.u32 %v1155, 16
      %v1332 = vshll.u32 %v1155, 16
      %v1334 = vrot.slane %v1332, 1
      %v1335 = vor.u32 %v1330, %v1334
      %v1337 = vshll.u32 %v1245, 16
      %v1339 = vrot.slane %v1337, 1
      %v1340 = vsel %vm679, %v1335, %v1339
      %v1342 = vshrl.u32 %v1156, 16
      %v1344 = vshll.u32 %v1156, 16
      %v1346 = vrot.slane %v1344, 1
      %v1347 = vor.u32 %v1342, %v1346
      %v1349 = vshll.u32 %v1246, 16
      %v1351 = vrot.slane %v1349, 1
      %v1352 = vsel %vm679, %v1347, %v1351
      %v1354 = vshrl.u32 %v1157, 16
      %v1356 = vshll.u32 %v1157, 16
      %v1358 = vrot.slane %v1356, 1
      %v1359 = vor.u32 %v1354, %v1358
      %v1361 = vshll.u32 %v1247, 16
      %v1363 = vrot.slane %v1361, 1
      %v1364 = vsel %vm679, %v1359, %v1363
      %v1366 = vshrl.u32 %v1158, 16
      %v1368 = vshll.u32 %v1158, 16
      %v1370 = vrot.slane %v1368, 1
      %v1371 = vor.u32 %v1366, %v1370
      %v1373 = vshll.u32 %v1248, 16
      %v1375 = vrot.slane %v1373, 1
      %v1376 = vsel %vm679, %v1371, %v1375
      %v1378 = vshrl.u32 %v1159, 16
      %v1380 = vshll.u32 %v1159, 16
      %v1382 = vrot.slane %v1380, 1
      %v1383 = vor.u32 %v1378, %v1382
      %v1385 = vshll.u32 %v1249, 16
      %v1387 = vrot.slane %v1385, 1
      %v1388 = vsel %vm679, %v1383, %v1387
      %v1390 = vshrl.u32 %v1160, 16
      %v1392 = vshll.u32 %v1160, 16
      %v1394 = vrot.slane %v1392, 1
      %v1395 = vor.u32 %v1390, %v1394
      %v1397 = vshll.u32 %v1250, 16
      %v1399 = vrot.slane %v1397, 1
      %v1400 = vsel %vm679, %v1395, %v1399
      %v1402 = vshrl.u32 %v1161, 16
      %v1404 = vshll.u32 %v1161, 16
      %v1406 = vrot.slane %v1404, 1
      %v1407 = vor.u32 %v1402, %v1406
      %v1409 = vshll.u32 %v1251, 16
      %v1411 = vrot.slane %v1409, 1
      %v1412 = vsel %vm679, %v1407, %v1411
      %v1414 = vshrl.u32 %v1162, 16
      %v1416 = vshll.u32 %v1162, 16
      %v1418 = vrot.slane %v1416, 1
      %v1419 = vor.u32 %v1414, %v1418
      %v1421 = vshll.u32 %v1252, 16
      %v1423 = vrot.slane %v1421, 1
      %v1424 = vsel %vm679, %v1419, %v1423
      %v1426 = vshrl.u32 %v1163, 16
      %v1428 = vshll.u32 %v1163, 16
      %v1430 = vrot.slane %v1428, 1
      %v1431 = vor.u32 %v1426, %v1430
      %v1433 = vshll.u32 %v1253, 16
      %v1435 = vrot.slane %v1433, 1
      %v1436 = vsel %vm679, %v1431, %v1435
      %v1438 = vshrl.u32 %v1164, 16
      %v1440 = vshll.u32 %v1164, 16
      %v1442 = vrot.slane %v1440, 1
      %v1443 = vor.u32 %v1438, %v1442
      %v1445 = vshll.u32 %v1254, 16
      %v1447 = vrot.slane %v1445, 1
      %v1448 = vsel %vm679, %v1443, %v1447
      %v1450 = vshrl.u32 %v1165, 16
      %v1452 = vshll.u32 %v1165, 16
      %v1454 = vrot.slane %v1452, 1
      %v1455 = vor.u32 %v1450, %v1454
      %v1457 = vshll.u32 %v1255, 16
      %v1459 = vrot.slane %v1457, 1
      %v1460 = vsel %vm679, %v1455, %v1459
      %v1462 = vshrl.u32 %v1166, 16
      %v1464 = vshll.u32 %v1166, 16
      %v1466 = vrot.slane %v1464, 1
      %v1467 = vor.u32 %v1462, %v1466
      %v1469 = vshll.u32 %v1256, 16
      %v1471 = vrot.slane %v1469, 1
      %v1472 = vsel %vm679, %v1467, %v1471
      %1473 = vrot.lane.b32.xlu0 %v1268, 16
      %v1474 = vpop.permute.xlu0 %1473
      %1475 = vrot.lane.b32.xlu0 %v1280, 16
      %v1476 = vpop.permute.xlu0 %1475
      %1477 = vrot.lane.b32.xlu0 %v1292, 16
      %v1478 = vpop.permute.xlu0 %1477
      %1479 = vrot.lane.b32.xlu0 %v1304, 16
      %v1480 = vpop.permute.xlu0 %1479
      %1481 = vrot.lane.b32.xlu0 %v1316, 16
      %v1482 = vpop.permute.xlu0 %1481
      %1483 = vrot.lane.b32.xlu0 %v1328, 16
      %v1484 = vpop.permute.xlu0 %1483
      %1485 = vrot.lane.b32.xlu0 %v1340, 16
      %v1486 = vpop.permute.xlu0 %1485
      %1487 = vrot.lane.b32.xlu0 %v1352, 16
      %v1488 = vpop.permute.xlu0 %1487
      %1489 = vrot.lane.b32.xlu0 %v1364, 16
      %v1490 = vpop.permute.xlu0 %1489
      %1491 = vrot.lane.b32.xlu0 %v1376, 16
      %v1492 = vpop.permute.xlu0 %1491
      %1493 = vrot.lane.b32.xlu0 %v1388, 16
      %v1494 = vpop.permute.xlu0 %1493
      %1495 = vrot.lane.b32.xlu0 %v1400, 16
      %v1496 = vpop.permute.xlu0 %1495
      %1497 = vrot.lane.b32.xlu0 %v1412, 16
      %v1498 = vpop.permute.xlu0 %1497
      %1499 = vrot.lane.b32.xlu0 %v1424, 16
      %v1500 = vpop.permute.xlu0 %1499
      %1501 = vrot.lane.b32.xlu0 %v1436, 16
      %v1502 = vpop.permute.xlu0 %1501
      %1503 = vrot.lane.b32.xlu0 %v1448, 16
      %v1504 = vpop.permute.xlu0 %1503
      %1505 = vrot.lane.b32.xlu0 %v1460, 16
      %v1506 = vpop.permute.xlu0 %1505
      %1507 = vrot.lane.b32.xlu0 %v1472, 16
      %v1508 = vpop.permute.xlu0 %1507
      %v1527 = vunpack.c.l.b16 %v444
      %v1528 = vunpack.c.l.b16 %v445
      %v1529 = vunpack.c.l.b16 %v446
      %v1530 = vunpack.c.l.b16 %v447
      %v1531 = vunpack.c.l.b16 %v448
      %v1532 = vunpack.c.l.b16 %v449
      %v1533 = vunpack.c.l.b16 %v450
      %v1534 = vunpack.c.l.b16 %v451
      %v1535 = vunpack.c.l.b16 %v452
      %v1536 = vunpack.c.l.b16 %v453
      %v1537 = vunpack.c.l.b16 %v454
      %v1538 = vunpack.c.l.b16 %v455
      %v1539 = vunpack.c.l.b16 %v456
      %v1540 = vunpack.c.l.b16 %v457
      %v1541 = vunpack.c.l.b16 %v458
      %v1542 = vunpack.c.l.b16 %v459
      %v1543 = vunpack.c.l.b16 %v460
      %v1544 = vunpack.c.l.b16 %v461
      %v1545 = vpack.c.b16 %v1114, %v1527
      %v1546 = vpack.c.b16 %v1116, %v1528
      %v1547 = vpack.c.b16 %v1118, %v1529
      %v1548 = vpack.c.b16 %v1120, %v1530
      %v1549 = vpack.c.b16 %v1122, %v1531
      %v1550 = vpack.c.b16 %v1124, %v1532
      %v1551 = vpack.c.b16 %v1126, %v1533
      %v1552 = vpack.c.b16 %v1128, %v1534
      %v1553 = vpack.c.b16 %v1130, %v1535
      %v1554 = vpack.c.b16 %v1132, %v1536
      %v1555 = vpack.c.b16 %v1134, %v1537
      %v1556 = vpack.c.b16 %v1136, %v1538
      %v1557 = vpack.c.b16 %v1138, %v1539
      %v1558 = vpack.c.b16 %v1140, %v1540
      %v1559 = vpack.c.b16 %v1142, %v1541
      %v1560 = vpack.c.b16 %v1144, %v1542
      %v1561 = vpack.c.b16 %v1146, %v1543
      %v1562 = vpack.c.b16 %v1148, %v1544
      %v1563 = vrot.slane %v1545, 1
      %v1564 = vrot.slane %v1239, 1
      %v1565 = vsel %vm986, %v1563, %v1564
      %v1566 = vrot.slane %v1546, 1
      %v1567 = vrot.slane %v1240, 1
      %v1568 = vsel %vm986, %v1566, %v1567
      %v1569 = vrot.slane %v1547, 1
      %v1570 = vrot.slane %v1241, 1
      %v1571 = vsel %vm986, %v1569, %v1570
      %v1572 = vrot.slane %v1548, 1
      %v1573 = vrot.slane %v1242, 1
      %v1574 = vsel %vm986, %v1572, %v1573
      %v1575 = vrot.slane %v1549, 1
      %v1576 = vrot.slane %v1243, 1
      %v1577 = vsel %vm986, %v1575, %v1576
      %v1578 = vrot.slane %v1550, 1
      %v1579 = vrot.slane %v1244, 1
      %v1580 = vsel %vm986, %v1578, %v1579
      %v1581 = vrot.slane %v1551, 1
      %v1582 = vrot.slane %v1245, 1
      %v1583 = vsel %vm986, %v1581, %v1582
      %v1584 = vrot.slane %v1552, 1
      %v1585 = vrot.slane %v1246, 1
      %v1586 = vsel %vm986, %v1584, %v1585
      %v1587 = vrot.slane %v1553, 1
      %v1588 = vrot.slane %v1247, 1
      %v1589 = vsel %vm986, %v1587, %v1588
      %v1590 = vrot.slane %v1554, 1
      %v1591 = vrot.slane %v1248, 1
      %v1592 = vsel %vm986, %v1590, %v1591
      %v1593 = vrot.slane %v1555, 1
      %v1594 = vrot.slane %v1249, 1
      %v1595 = vsel %vm986, %v1593, %v1594
      %v1596 = vrot.slane %v1556, 1
      %v1597 = vrot.slane %v1250, 1
      %v1598 = vsel %vm986, %v1596, %v1597
      %v1599 = vrot.slane %v1557, 1
      %v1600 = vrot.slane %v1251, 1
      %v1601 = vsel %vm986, %v1599, %v1600
      %v1602 = vrot.slane %v1558, 1
      %v1603 = vrot.slane %v1252, 1
      %v1604 = vsel %vm986, %v1602, %v1603
      %v1605 = vrot.slane %v1559, 1
      %v1606 = vrot.slane %v1253, 1
      %v1607 = vsel %vm986, %v1605, %v1606
      %v1608 = vrot.slane %v1560, 1
      %v1609 = vrot.slane %v1254, 1
      %v1610 = vsel %vm986, %v1608, %v1609
      %v1611 = vrot.slane %v1561, 1
      %v1612 = vrot.slane %v1255, 1
      %v1613 = vsel %vm986, %v1611, %v1612
      %v1614 = vrot.slane %v1562, 1
      %v1615 = vrot.slane %v1256, 1
      %v1616 = vsel %vm986, %v1614, %v1615
      %1617 = vrot.lane.b32.xlu0 %v1565, 20
      %v1618 = vpop.permute.xlu0 %1617
      %1619 = vrot.lane.b32.xlu0 %v1568, 20
      %v1620 = vpop.permute.xlu0 %1619
      %1621 = vrot.lane.b32.xlu0 %v1571, 20
      %v1622 = vpop.permute.xlu0 %1621
      %1623 = vrot.lane.b32.xlu0 %v1574, 20
      %v1624 = vpop.permute.xlu0 %1623
      %1625 = vrot.lane.b32.xlu0 %v1577, 20
      %v1626 = vpop.permute.xlu0 %1625
      %1627 = vrot.lane.b32.xlu0 %v1580, 20
      %v1628 = vpop.permute.xlu0 %1627
      %1629 = vrot.lane.b32.xlu0 %v1583, 20
      %v1630 = vpop.permute.xlu0 %1629
      %1631 = vrot.lane.b32.xlu0 %v1586, 20
      %v1632 = vpop.permute.xlu0 %1631
      %1633 = vrot.lane.b32.xlu0 %v1589, 20
      %v1634 = vpop.permute.xlu0 %1633
      %1635 = vrot.lane.b32.xlu0 %v1592, 20
      %v1636 = vpop.permute.xlu0 %1635
      %1637 = vrot.lane.b32.xlu0 %v1595, 20
      %v1638 = vpop.permute.xlu0 %1637
      %1639 = vrot.lane.b32.xlu0 %v1598, 20
      %v1640 = vpop.permute.xlu0 %1639
      %1641 = vrot.lane.b32.xlu0 %v1601, 20
      %v1642 = vpop.permute.xlu0 %1641
      %1643 = vrot.lane.b32.xlu0 %v1604, 20
      %v1644 = vpop.permute.xlu0 %1643
      %1645 = vrot.lane.b32.xlu0 %v1607, 20
      %v1646 = vpop.permute.xlu0 %1645
      %1647 = vrot.lane.b32.xlu0 %v1610, 20
      %v1648 = vpop.permute.xlu0 %1647
      %1649 = vrot.lane.b32.xlu0 %v1613, 20
      %v1650 = vpop.permute.xlu0 %1649
      %1651 = vrot.lane.b32.xlu0 %v1616, 20
      %v1652 = vpop.permute.xlu0 %1651
      %v1689 = vunpack.c.l.b16 %v463
      %v1690 = vunpack.c.l.b16 %v464
      %v1691 = vunpack.c.l.b16 %v465
      %v1692 = vunpack.c.l.b16 %v466
      %v1693 = vunpack.c.l.b16 %v467
      %v1694 = vunpack.c.l.b16 %v468
      %v1695 = vunpack.c.l.b16 %v469
      %v1696 = vunpack.c.l.b16 %v470
      %v1697 = vunpack.c.l.b16 %v471
      %v1698 = vunpack.c.l.b16 %v472
      %v1699 = vunpack.c.l.b16 %v473
      %v1700 = vunpack.c.l.b16 %v474
      %v1701 = vunpack.c.l.b16 %v475
      %v1702 = vunpack.c.l.b16 %v476
      %v1703 = vunpack.c.l.b16 %v477
      %v1704 = vunpack.c.l.b16 %v478
      %v1705 = vunpack.c.l.b16 %v479
      %v1706 = vunpack.c.l.b16 %v480
      %v1707 = vunpack.c.l.b16 %v481
      %v1708 = vunpack.c.l.b16 %v482
      %v1709 = vunpack.c.l.b16 %v483
      %v1710 = vunpack.c.l.b16 %v484
      %v1711 = vunpack.c.l.b16 %v485
      %v1712 = vunpack.c.l.b16 %v486
      %v1713 = vunpack.c.l.b16 %v487
      %v1714 = vunpack.c.l.b16 %v488
      %v1715 = vunpack.c.l.b16 %v489
      %v1716 = vunpack.c.l.b16 %v490
      %v1717 = vunpack.c.l.b16 %v491
      %v1718 = vunpack.c.l.b16 %v492
      %v1719 = vunpack.c.l.b16 %v493
      %v1720 = vunpack.c.l.b16 %v494
      %v1721 = vunpack.c.l.b16 %v495
      %v1722 = vunpack.c.l.b16 %v496
      %v1723 = vunpack.c.l.b16 %v497
      %v1724 = vunpack.c.l.b16 %v498
      %v1725 = vpack.c.b16 %v1690, %v1689
      %v1726 = vpack.c.b16 %v1692, %v1691
      %v1727 = vpack.c.b16 %v1694, %v1693
      %v1728 = vpack.c.b16 %v1696, %v1695
      %v1729 = vpack.c.b16 %v1698, %v1697
      %v1730 = vpack.c.b16 %v1700, %v1699
      %v1731 = vpack.c.b16 %v1702, %v1701
      %v1732 = vpack.c.b16 %v1704, %v1703
      %v1733 = vpack.c.b16 %v1706, %v1705
      %v1734 = vpack.c.b16 %v1708, %v1707
      %v1735 = vpack.c.b16 %v1710, %v1709
      %v1736 = vpack.c.b16 %v1712, %v1711
      %v1737 = vpack.c.b16 %v1714, %v1713
      %v1738 = vpack.c.b16 %v1716, %v1715
      %v1739 = vpack.c.b16 %v1718, %v1717
      %v1740 = vpack.c.b16 %v1720, %v1719
      %v1741 = vpack.c.b16 %v1722, %v1721
      %v1742 = vpack.c.b16 %v1724, %v1723
      %1743 = vrot.lane.b32.xlu0 %v1725, 24
      %v1744 = vpop.permute.xlu0 %1743
      %1745 = vrot.lane.b32.xlu0 %v1726, 24
      %v1746 = vpop.permute.xlu0 %1745
      %1747 = vrot.lane.b32.xlu0 %v1727, 24
      %v1748 = vpop.permute.xlu0 %1747
      %1749 = vrot.lane.b32.xlu0 %v1728, 24
      %v1750 = vpop.permute.xlu0 %1749
      %1751 = vrot.lane.b32.xlu0 %v1729, 24
      %v1752 = vpop.permute.xlu0 %1751
      %1753 = vrot.lane.b32.xlu0 %v1730, 24
      %v1754 = vpop.permute.xlu0 %1753
      %1755 = vrot.lane.b32.xlu0 %v1731, 24
      %v1756 = vpop.permute.xlu0 %1755
      %1757 = vrot.lane.b32.xlu0 %v1732, 24
      %v1758 = vpop.permute.xlu0 %1757
      %1759 = vrot.lane.b32.xlu0 %v1733, 24
      %v1760 = vpop.permute.xlu0 %1759
      %1761 = vrot.lane.b32.xlu0 %v1734, 24
      %v1762 = vpop.permute.xlu0 %1761
      %1763 = vrot.lane.b32.xlu0 %v1735, 24
      %v1764 = vpop.permute.xlu0 %1763
      %1765 = vrot.lane.b32.xlu0 %v1736, 24
      %v1766 = vpop.permute.xlu0 %1765
      %1767 = vrot.lane.b32.xlu0 %v1737, 24
      %v1768 = vpop.permute.xlu0 %1767
      %1769 = vrot.lane.b32.xlu0 %v1738, 24
      %v1770 = vpop.permute.xlu0 %1769
      %1771 = vrot.lane.b32.xlu0 %v1739, 24
      %v1772 = vpop.permute.xlu0 %1771
      %1773 = vrot.lane.b32.xlu0 %v1740, 24
      %v1774 = vpop.permute.xlu0 %1773
      %1775 = vrot.lane.b32.xlu0 %v1741, 24
      %v1776 = vpop.permute.xlu0 %1775
      %1777 = vrot.lane.b32.xlu0 %v1742, 24
      %v1778 = vpop.permute.xlu0 %1777
      %v1797 = vunpack.c.l.b16 %v499
      %v1798 = vunpack.c.l.b16 %v500
      %v1799 = vunpack.c.l.b16 %v501
      %v1800 = vunpack.c.l.b16 %v502
      %v1801 = vunpack.c.l.b16 %v503
      %v1802 = vunpack.c.l.b16 %v504
      %v1803 = vunpack.c.l.b16 %v505
      %v1804 = vunpack.c.l.b16 %v506
      %v1805 = vunpack.c.l.b16 %v507
      %v1806 = vunpack.c.l.b16 %v508
      %v1807 = vunpack.c.l.b16 %v509
      %v1808 = vunpack.c.l.b16 %v510
      %v1809 = vunpack.c.l.b16 %v511
      %v1810 = vunpack.c.l.b16 %v512
      %v1811 = vunpack.c.l.b16 %v513
      %v1812 = vunpack.c.l.b16 %v514
      %v1813 = vunpack.c.l.b16 %v515
      %v1814 = vunpack.c.l.b16 %v516
      %v1815 = vpack.c.b16 %v1797, %v1797
      %v1816 = vpack.c.b16 %v1798, %v1798
      %v1817 = vpack.c.b16 %v1799, %v1799
      %v1818 = vpack.c.b16 %v1800, %v1800
      %v1819 = vpack.c.b16 %v1801, %v1801
      %v1820 = vpack.c.b16 %v1802, %v1802
      %v1821 = vpack.c.b16 %v1803, %v1803
      %v1822 = vpack.c.b16 %v1804, %v1804
      %v1823 = vpack.c.b16 %v1805, %v1805
      %v1824 = vpack.c.b16 %v1806, %v1806
      %v1825 = vpack.c.b16 %v1807, %v1807
      %v1826 = vpack.c.b16 %v1808, %v1808
      %v1827 = vpack.c.b16 %v1809, %v1809
      %v1828 = vpack.c.b16 %v1810, %v1810
      %v1829 = vpack.c.b16 %v1811, %v1811
      %v1830 = vpack.c.b16 %v1812, %v1812
      %v1831 = vpack.c.b16 %v1813, %v1813
      %v1832 = vpack.c.b16 %v1814, %v1814
      %v1834 = vshrl.u32 %v1725, 16
      %v1836 = vshll.u32 %v1725, 16
      %v1838 = vrot.slane %v1836, 1
      %v1839 = vor.u32 %v1834, %v1838
      %v1841 = vshll.u32 %v1815, 16
      %v1843 = vrot.slane %v1841, 1
      %v1844 = vsel %vm679, %v1839, %v1843
      %v1846 = vshrl.u32 %v1726, 16
      %v1848 = vshll.u32 %v1726, 16
      %v1850 = vrot.slane %v1848, 1
      %v1851 = vor.u32 %v1846, %v1850
      %v1853 = vshll.u32 %v1816, 16
      %v1855 = vrot.slane %v1853, 1
      %v1856 = vsel %vm679, %v1851, %v1855
      %v1858 = vshrl.u32 %v1727, 16
      %v1860 = vshll.u32 %v1727, 16
      %v1862 = vrot.slane %v1860, 1
      %v1863 = vor.u32 %v1858, %v1862
      %v1865 = vshll.u32 %v1817, 16
      %v1867 = vrot.slane %v1865, 1
      %v1868 = vsel %vm679, %v1863, %v1867
      %v1870 = vshrl.u32 %v1728, 16
      %v1872 = vshll.u32 %v1728, 16
      %v1874 = vrot.slane %v1872, 1
      %v1875 = vor.u32 %v1870, %v1874
      %v1877 = vshll.u32 %v1818, 16
      %v1879 = vrot.slane %v1877, 1
      %v1880 = vsel %vm679, %v1875, %v1879
      %v1882 = vshrl.u32 %v1729, 16
      %v1884 = vshll.u32 %v1729, 16
      %v1886 = vrot.slane %v1884, 1
      %v1887 = vor.u32 %v1882, %v1886
      %v1889 = vshll.u32 %v1819, 16
      %v1891 = vrot.slane %v1889, 1
      %v1892 = vsel %vm679, %v1887, %v1891
      %v1894 = vshrl.u32 %v1730, 16
      %v1896 = vshll.u32 %v1730, 16
      %v1898 = vrot.slane %v1896, 1
      %v1899 = vor.u32 %v1894, %v1898
      %v1901 = vshll.u32 %v1820, 16
      %v1903 = vrot.slane %v1901, 1
      %v1904 = vsel %vm679, %v1899, %v1903
      %v1906 = vshrl.u32 %v1731, 16
      %v1908 = vshll.u32 %v1731, 16
      %v1910 = vrot.slane %v1908, 1
      %v1911 = vor.u32 %v1906, %v1910
      %v1913 = vshll.u32 %v1821, 16
      %v1915 = vrot.slane %v1913, 1
      %v1916 = vsel %vm679, %v1911, %v1915
      %v1918 = vshrl.u32 %v1732, 16
      %v1920 = vshll.u32 %v1732, 16
      %v1922 = vrot.slane %v1920, 1
      %v1923 = vor.u32 %v1918, %v1922
      %v1925 = vshll.u32 %v1822, 16
      %v1927 = vrot.slane %v1925, 1
      %v1928 = vsel %vm679, %v1923, %v1927
      %v1930 = vshrl.u32 %v1733, 16
      %v1932 = vshll.u32 %v1733, 16
      %v1934 = vrot.slane %v1932, 1
      %v1935 = vor.u32 %v1930, %v1934
      %v1937 = vshll.u32 %v1823, 16
      %v1939 = vrot.slane %v1937, 1
      %v1940 = vsel %vm679, %v1935, %v1939
      %v1942 = vshrl.u32 %v1734, 16
      %v1944 = vshll.u32 %v1734, 16
      %v1946 = vrot.slane %v1944, 1
      %v1947 = vor.u32 %v1942, %v1946
      %v1949 = vshll.u32 %v1824, 16
      %v1951 = vrot.slane %v1949, 1
      %v1952 = vsel %vm679, %v1947, %v1951
      %v1954 = vshrl.u32 %v1735, 16
      %v1956 = vshll.u32 %v1735, 16
      %v1958 = vrot.slane %v1956, 1
      %v1959 = vor.u32 %v1954, %v1958
      %v1961 = vshll.u32 %v1825, 16
      %v1963 = vrot.slane %v1961, 1
      %v1964 = vsel %vm679, %v1959, %v1963
      %v1966 = vshrl.u32 %v1736, 16
      %v1968 = vshll.u32 %v1736, 16
      %v1970 = vrot.slane %v1968, 1
      %v1971 = vor.u32 %v1966, %v1970
      %v1973 = vshll.u32 %v1826, 16
      %v1975 = vrot.slane %v1973, 1
      %v1976 = vsel %vm679, %v1971, %v1975
      %v1978 = vshrl.u32 %v1737, 16
      %v1980 = vshll.u32 %v1737, 16
      %v1982 = vrot.slane %v1980, 1
      %v1983 = vor.u32 %v1978, %v1982
      %v1985 = vshll.u32 %v1827, 16
      %v1987 = vrot.slane %v1985, 1
      %v1988 = vsel %vm679, %v1983, %v1987
      %v1990 = vshrl.u32 %v1738, 16
      %v1992 = vshll.u32 %v1738, 16
      %v1994 = vrot.slane %v1992, 1
      %v1995 = vor.u32 %v1990, %v1994
      %v1997 = vshll.u32 %v1828, 16
      %v1999 = vrot.slane %v1997, 1
      %v2000 = vsel %vm679, %v1995, %v1999
      %v2002 = vshrl.u32 %v1739, 16
      %v2004 = vshll.u32 %v1739, 16
      %v2006 = vrot.slane %v2004, 1
      %v2007 = vor.u32 %v2002, %v2006
      %v2009 = vshll.u32 %v1829, 16
      %v2011 = vrot.slane %v2009, 1
      %v2012 = vsel %vm679, %v2007, %v2011
      %v2014 = vshrl.u32 %v1740, 16
      %v2016 = vshll.u32 %v1740, 16
      %v2018 = vrot.slane %v2016, 1
      %v2019 = vor.u32 %v2014, %v2018
      %v2021 = vshll.u32 %v1830, 16
      %v2023 = vrot.slane %v2021, 1
      %v2024 = vsel %vm679, %v2019, %v2023
      %v2026 = vshrl.u32 %v1741, 16
      %v2028 = vshll.u32 %v1741, 16
      %v2030 = vrot.slane %v2028, 1
      %v2031 = vor.u32 %v2026, %v2030
      %v2033 = vshll.u32 %v1831, 16
      %v2035 = vrot.slane %v2033, 1
      %v2036 = vsel %vm679, %v2031, %v2035
      %v2038 = vshrl.u32 %v1742, 16
      %v2040 = vshll.u32 %v1742, 16
      %v2042 = vrot.slane %v2040, 1
      %v2043 = vor.u32 %v2038, %v2042
      %v2045 = vshll.u32 %v1832, 16
      %v2047 = vrot.slane %v2045, 1
      %v2048 = vsel %vm679, %v2043, %v2047
      %2049 = vrot.lane.b32.xlu0 %v1844, 28
      %v2050 = vpop.permute.xlu0 %2049
      %2051 = vrot.lane.b32.xlu0 %v1856, 28
      %v2052 = vpop.permute.xlu0 %2051
      %2053 = vrot.lane.b32.xlu0 %v1868, 28
      %v2054 = vpop.permute.xlu0 %2053
      %2055 = vrot.lane.b32.xlu0 %v1880, 28
      %v2056 = vpop.permute.xlu0 %2055
      %2057 = vrot.lane.b32.xlu0 %v1892, 28
      %v2058 = vpop.permute.xlu0 %2057
      %2059 = vrot.lane.b32.xlu0 %v1904, 28
      %v2060 = vpop.permute.xlu0 %2059
      %2061 = vrot.lane.b32.xlu0 %v1916, 28
      %v2062 = vpop.permute.xlu0 %2061
      %2063 = vrot.lane.b32.xlu0 %v1928, 28
      %v2064 = vpop.permute.xlu0 %2063
      %2065 = vrot.lane.b32.xlu0 %v1940, 28
      %v2066 = vpop.permute.xlu0 %2065
      %2067 = vrot.lane.b32.xlu0 %v1952, 28
      %v2068 = vpop.permute.xlu0 %2067
      %2069 = vrot.lane.b32.xlu0 %v1964, 28
      %v2070 = vpop.permute.xlu0 %2069
      %2071 = vrot.lane.b32.xlu0 %v1976, 28
      %v2072 = vpop.permute.xlu0 %2071
      %2073 = vrot.lane.b32.xlu0 %v1988, 28
      %v2074 = vpop.permute.xlu0 %2073
      %2075 = vrot.lane.b32.xlu0 %v2000, 28
      %v2076 = vpop.permute.xlu0 %2075
      %2077 = vrot.lane.b32.xlu0 %v2012, 28
      %v2078 = vpop.permute.xlu0 %2077
      %2079 = vrot.lane.b32.xlu0 %v2024, 28
      %v2080 = vpop.permute.xlu0 %2079
      %2081 = vrot.lane.b32.xlu0 %v2036, 28
      %v2082 = vpop.permute.xlu0 %2081
      %2083 = vrot.lane.b32.xlu0 %v2048, 28
      %v2084 = vpop.permute.xlu0 %2083
      %v2103 = vunpack.c.l.b16 %v517
      %v2104 = vunpack.c.l.b16 %v518
      %v2105 = vunpack.c.l.b16 %v519
      %v2106 = vunpack.c.l.b16 %v520
      %v2107 = vunpack.c.l.b16 %v521
      %v2108 = vunpack.c.l.b16 %v522
      %v2109 = vunpack.c.l.b16 %v523
      %v2110 = vunpack.c.l.b16 %v524
      %v2111 = vunpack.c.l.b16 %v525
      %v2112 = vunpack.c.l.b16 %v526
      %v2113 = vunpack.c.l.b16 %v527
      %v2114 = vunpack.c.l.b16 %v528
      %v2115 = vunpack.c.l.b16 %v529
      %v2116 = vunpack.c.l.b16 %v530
      %v2117 = vunpack.c.l.b16 %v531
      %v2118 = vunpack.c.l.b16 %v532
      %v2119 = vunpack.c.l.b16 %v533
      %v2120 = vunpack.c.l.b16 %v534
      %v2121 = vpack.c.b16 %v1690, %v2103
      %v2122 = vpack.c.b16 %v1692, %v2104
      %v2123 = vpack.c.b16 %v1694, %v2105
      %v2124 = vpack.c.b16 %v1696, %v2106
      %v2125 = vpack.c.b16 %v1698, %v2107
      %v2126 = vpack.c.b16 %v1700, %v2108
      %v2127 = vpack.c.b16 %v1702, %v2109
      %v2128 = vpack.c.b16 %v1704, %v2110
      %v2129 = vpack.c.b16 %v1706, %v2111
      %v2130 = vpack.c.b16 %v1708, %v2112
      %v2131 = vpack.c.b16 %v1710, %v2113
      %v2132 = vpack.c.b16 %v1712, %v2114
      %v2133 = vpack.c.b16 %v1714, %v2115
      %v2134 = vpack.c.b16 %v1716, %v2116
      %v2135 = vpack.c.b16 %v1718, %v2117
      %v2136 = vpack.c.b16 %v1720, %v2118
      %v2137 = vpack.c.b16 %v1722, %v2119
      %v2138 = vpack.c.b16 %v1724, %v2120
      %v2139 = vrot.slane %v2121, 1
      %v2140 = vrot.slane %v1815, 1
      %v2141 = vsel %vm986, %v2139, %v2140
      %v2142 = vrot.slane %v2122, 1
      %v2143 = vrot.slane %v1816, 1
      %v2144 = vsel %vm986, %v2142, %v2143
      %v2145 = vrot.slane %v2123, 1
      %v2146 = vrot.slane %v1817, 1
      %v2147 = vsel %vm986, %v2145, %v2146
      %v2148 = vrot.slane %v2124, 1
      %v2149 = vrot.slane %v1818, 1
      %v2150 = vsel %vm986, %v2148, %v2149
      %v2151 = vrot.slane %v2125, 1
      %v2152 = vrot.slane %v1819, 1
      %v2153 = vsel %vm986, %v2151, %v2152
      %v2154 = vrot.slane %v2126, 1
      %v2155 = vrot.slane %v1820, 1
      %v2156 = vsel %vm986, %v2154, %v2155
      %v2157 = vrot.slane %v2127, 1
      %v2158 = vrot.slane %v1821, 1
      %v2159 = vsel %vm986, %v2157, %v2158
      %v2160 = vrot.slane %v2128, 1
      %v2161 = vrot.slane %v1822, 1
      %v2162 = vsel %vm986, %v2160, %v2161
      %v2163 = vrot.slane %v2129, 1
      %v2164 = vrot.slane %v1823, 1
      %v2165 = vsel %vm986, %v2163, %v2164
      %v2166 = vrot.slane %v2130, 1
      %v2167 = vrot.slane %v1824, 1
      %v2168 = vsel %vm986, %v2166, %v2167
      %v2169 = vrot.slane %v2131, 1
      %v2170 = vrot.slane %v1825, 1
      %v2171 = vsel %vm986, %v2169, %v2170
      %v2172 = vrot.slane %v2132, 1
      %v2173 = vrot.slane %v1826, 1
      %v2174 = vsel %vm986, %v2172, %v2173
      %v2175 = vrot.slane %v2133, 1
      %v2176 = vrot.slane %v1827, 1
      %v2177 = vsel %vm986, %v2175, %v2176
      %v2178 = vrot.slane %v2134, 1
      %v2179 = vrot.slane %v1828, 1
      %v2180 = vsel %vm986, %v2178, %v2179
      %v2181 = vrot.slane %v2135, 1
      %v2182 = vrot.slane %v1829, 1
      %v2183 = vsel %vm986, %v2181, %v2182
      %v2184 = vrot.slane %v2136, 1
      %v2185 = vrot.slane %v1830, 1
      %v2186 = vsel %vm986, %v2184, %v2185
      %v2187 = vrot.slane %v2137, 1
      %v2188 = vrot.slane %v1831, 1
      %v2189 = vsel %vm986, %v2187, %v2188
      %v2190 = vrot.slane %v2138, 1
      %v2191 = vrot.slane %v1832, 1
      %v2192 = vsel %vm986, %v2190, %v2191
      %2193 = vrot.lane.b32.xlu0 %v2141, 32
      %v2194 = vpop.permute.xlu0 %2193
      %2195 = vrot.lane.b32.xlu0 %v2144, 32
      %v2196 = vpop.permute.xlu0 %2195
      %2197 = vrot.lane.b32.xlu0 %v2147, 32
      %v2198 = vpop.permute.xlu0 %2197
      %2199 = vrot.lane.b32.xlu0 %v2150, 32
      %v2200 = vpop.permute.xlu0 %2199
      %2201 = vrot.lane.b32.xlu0 %v2153, 32
      %v2202 = vpop.permute.xlu0 %2201
      %2203 = vrot.lane.b32.xlu0 %v2156, 32
      %v2204 = vpop.permute.xlu0 %2203
      %2205 = vrot.lane.b32.xlu0 %v2159, 32
      %v2206 = vpop.permute.xlu0 %2205
      %2207 = vrot.lane.b32.xlu0 %v2162, 32
      %v2208 = vpop.permute.xlu0 %2207
      %2209 = vrot.lane.b32.xlu0 %v2165, 32
      %v2210 = vpop.permute.xlu0 %2209
      %2211 = vrot.lane.b32.xlu0 %v2168, 32
      %v2212 = vpop.permute.xlu0 %2211
      %2213 = vrot.lane.b32.xlu0 %v2171, 32
      %v2214 = vpop.permute.xlu0 %2213
      %2215 = vrot.lane.b32.xlu0 %v2174, 32
      %v2216 = vpop.permute.xlu0 %2215
      %2217 = vrot.lane.b32.xlu0 %v2177, 32
      %v2218 = vpop.permute.xlu0 %2217
      %2219 = vrot.lane.b32.xlu0 %v2180, 32
      %v2220 = vpop.permute.xlu0 %2219
      %2221 = vrot.lane.b32.xlu0 %v2183, 32
      %v2222 = vpop.permute.xlu0 %2221
      %2223 = vrot.lane.b32.xlu0 %v2186, 32
      %v2224 = vpop.permute.xlu0 %2223
      %2225 = vrot.lane.b32.xlu0 %v2189, 32
      %v2226 = vpop.permute.xlu0 %2225
      %2227 = vrot.lane.b32.xlu0 %v2192, 32
      %v2228 = vpop.permute.xlu0 %2227
      %vm2229 = vcmask 31744
      %v2231 = vsel %vm2229, %v607, %v897
      %v2233 = vsel %vm2229, %v608, %v899
      %v2235 = vsel %vm2229, %v609, %v901
      %v2237 = vsel %vm2229, %v610, %v903
      %v2239 = vsel %vm2229, %v611, %v905
      %v2241 = vsel %vm2229, %v612, %v907
      %v2243 = vsel %vm2229, %v613, %v909
      %v2245 = vsel %vm2229, %v614, %v911
      %v2247 = vsel %vm2229, %v615, %v913
      %v2249 = vsel %vm2229, %v616, %v915
      %v2251 = vsel %vm2229, %v617, %v917
      %v2253 = vsel %vm2229, %v618, %v919
      %v2255 = vsel %vm2229, %v619, %v921
      %v2257 = vsel %vm2229, %v620, %v923
      %v2259 = vsel %vm2229, %v621, %v925
      %v2261 = vsel %vm2229, %v622, %v927
      %v2263 = vsel %vm2229, %v623, %v929
      %v2265 = vsel %vm2229, %v624, %v931
      %vm2266 = vcmask 64512
      %v2268 = vsel %vm2266, %v2231, %v1042
      %v2270 = vsel %vm2266, %v2233, %v1044
      %v2272 = vsel %vm2266, %v2235, %v1046
      %v2274 = vsel %vm2266, %v2237, %v1048
      %v2276 = vsel %vm2266, %v2239, %v1050
      %v2278 = vsel %vm2266, %v2241, %v1052
      %v2280 = vsel %vm2266, %v2243, %v1054
      %v2282 = vsel %vm2266, %v2245, %v1056
      %v2284 = vsel %vm2266, %v2247, %v1058
      %v2286 = vsel %vm2266, %v2249, %v1060
      %v2288 = vsel %vm2266, %v2251, %v1062
      %v2290 = vsel %vm2266, %v2253, %v1064
      %v2292 = vsel %vm2266, %v2255, %v1066
      %v2294 = vsel %vm2266, %v2257, %v1068
      %v2296 = vsel %vm2266, %v2259, %v1070
      %v2298 = vsel %vm2266, %v2261, %v1072
      %v2300 = vsel %vm2266, %v2263, %v1074
      %v2302 = vsel %vm2266, %v2265, %v1076
      %vm2303 = vcmask 97280
      %v2305 = vsel %vm2303, %v2268, %v1168
      %v2307 = vsel %vm2303, %v2270, %v1170
      %v2309 = vsel %vm2303, %v2272, %v1172
      %v2311 = vsel %vm2303, %v2274, %v1174
      %v2313 = vsel %vm2303, %v2276, %v1176
      %v2315 = vsel %vm2303, %v2278, %v1178
      %v2317 = vsel %vm2303, %v2280, %v1180
      %v2319 = vsel %vm2303, %v2282, %v1182
      %v2321 = vsel %vm2303, %v2284, %v1184
      %v2323 = vsel %vm2303, %v2286, %v1186
      %v2325 = vsel %vm2303, %v2288, %v1188
      %v2327 = vsel %vm2303, %v2290, %v1190
      %v2329 = vsel %vm2303, %v2292, %v1192
      %v2331 = vsel %vm2303, %v2294, %v1194
      %v2333 = vsel %vm2303, %v2296, %v1196
      %v2335 = vsel %vm2303, %v2298, %v1198
      %v2337 = vsel %vm2303, %v2300, %v1200
      %v2339 = vsel %vm2303, %v2302, %v1202
      %vm2340 = vcmask 130048
      %v2342 = vsel %vm2340, %v2305, %v1474
      %v2344 = vsel %vm2340, %v2307, %v1476
      %v2346 = vsel %vm2340, %v2309, %v1478
      %v2348 = vsel %vm2340, %v2311, %v1480
      %v2350 = vsel %vm2340, %v2313, %v1482
      %v2352 = vsel %vm2340, %v2315, %v1484
      %v2354 = vsel %vm2340, %v2317, %v1486
      %v2356 = vsel %vm2340, %v2319, %v1488
      %v2358 = vsel %vm2340, %v2321, %v1490
      %v2360 = vsel %vm2340, %v2323, %v1492
      %v2362 = vsel %vm2340, %v2325, %v1494
      %v2364 = vsel %vm2340, %v2327, %v1496
      %v2366 = vsel %vm2340, %v2329, %v1498
      %v2368 = vsel %vm2340, %v2331, %v1500
      %v2370 = vsel %vm2340, %v2333, %v1502
      %v2372 = vsel %vm2340, %v2335, %v1504
      %v2374 = vsel %vm2340, %v2337, %v1506
      %v2376 = vsel %vm2340, %v2339, %v1508
      %vm2377 = vcmask 162816
      %v2379 = vsel %vm2377, %v2342, %v1618
      %v2381 = vsel %vm2377, %v2344, %v1620
      %v2383 = vsel %vm2377, %v2346, %v1622
      %v2385 = vsel %vm2377, %v2348, %v1624
      %v2387 = vsel %vm2377, %v2350, %v1626
      %v2389 = vsel %vm2377, %v2352, %v1628
      %v2391 = vsel %vm2377, %v2354, %v1630
      %v2393 = vsel %vm2377, %v2356, %v1632
      %v2395 = vsel %vm2377, %v2358, %v1634
      %v2397 = vsel %vm2377, %v2360, %v1636
      %v2399 = vsel %vm2377, %v2362, %v1638
      %v2401 = vsel %vm2377, %v2364, %v1640
      %v2403 = vsel %vm2377, %v2366, %v1642
      %v2405 = vsel %vm2377, %v2368, %v1644
      %v2407 = vsel %vm2377, %v2370, %v1646
      %v2409 = vsel %vm2377, %v2372, %v1648
      %v2411 = vsel %vm2377, %v2374, %v1650
      %v2413 = vsel %vm2377, %v2376, %v1652
      %vm2414 = vcmask 195584
      %v2416 = vsel %vm2414, %v2379, %v1744
      %v2418 = vsel %vm2414, %v2381, %v1746
      %v2420 = vsel %vm2414, %v2383, %v1748
      %v2422 = vsel %vm2414, %v2385, %v1750
      %v2424 = vsel %vm2414, %v2387, %v1752
      %v2426 = vsel %vm2414, %v2389, %v1754
      %v2428 = vsel %vm2414, %v2391, %v1756
      %v2430 = vsel %vm2414, %v2393, %v1758
      %v2432 = vsel %vm2414, %v2395, %v1760
      %v2434 = vsel %vm2414, %v2397, %v1762
      %v2436 = vsel %vm2414, %v2399, %v1764
      %v2438 = vsel %vm2414, %v2401, %v1766
      %v2440 = vsel %vm2414, %v2403, %v1768
      %v2442 = vsel %vm2414, %v2405, %v1770
      %v2444 = vsel %vm2414, %v2407, %v1772
      %v2446 = vsel %vm2414, %v2409, %v1774
      %v2448 = vsel %vm2414, %v2411, %v1776
      %v2450 = vsel %vm2414, %v2413, %v1778
      %vm2451 = vcmask 228352
      %v2453 = vsel %vm2451, %v2416, %v2050
      %v2455 = vsel %vm2451, %v2418, %v2052
      %v2457 = vsel %vm2451, %v2420, %v2054
      %v2459 = vsel %vm2451, %v2422, %v2056
      %v2461 = vsel %vm2451, %v2424, %v2058
      %v2463 = vsel %vm2451, %v2426, %v2060
      %v2465 = vsel %vm2451, %v2428, %v2062
      %v2467 = vsel %vm2451, %v2430, %v2064
      %v2469 = vsel %vm2451, %v2432, %v2066
      %v2471 = vsel %vm2451, %v2434, %v2068
      %v2473 = vsel %vm2451, %v2436, %v2070
      %v2475 = vsel %vm2451, %v2438, %v2072
      %v2477 = vsel %vm2451, %v2440, %v2074
      %v2479 = vsel %vm2451, %v2442, %v2076
      %v2481 = vsel %vm2451, %v2444, %v2078
      %v2483 = vsel %vm2451, %v2446, %v2080
      %v2485 = vsel %vm2451, %v2448, %v2082
      %v2487 = vsel %vm2451, %v2450, %v2084
      %vm2488 = vcmask 261120
      %v2490 = vsel %vm2488, %v2453, %v2194
      %v2492 = vsel %vm2488, %v2455, %v2196
      %v2494 = vsel %vm2488, %v2457, %v2198
      %v2496 = vsel %vm2488, %v2459, %v2200
      %v2498 = vsel %vm2488, %v2461, %v2202
      %v2500 = vsel %vm2488, %v2463, %v2204
      %v2502 = vsel %vm2488, %v2465, %v2206
      %v2504 = vsel %vm2488, %v2467, %v2208
      %v2506 = vsel %vm2488, %v2469, %v2210
      %v2508 = vsel %vm2488, %v2471, %v2212
      %v2510 = vsel %vm2488, %v2473, %v2214
      %v2512 = vsel %vm2488, %v2475, %v2216
      %v2514 = vsel %vm2488, %v2477, %v2218
      %v2516 = vsel %vm2488, %v2479, %v2220
      %v2518 = vsel %vm2488, %v2481, %v2222
      %v2520 = vsel %vm2488, %v2483, %v2224
      %v2522 = vsel %vm2488, %v2485, %v2226
      %v2524 = vsel %vm2488, %v2487, %v2228
      %v2525 = vld [vmem:[%s1] sm:$0xff]
      %v2526 = vld [vmem:[%s1 + $0x8] sm:$0xff]
      %v2527 = vld [vmem:[%s1 + $0x10] sm:$0xff]
      %v2528 = vld [vmem:[%s1 + $0x18] sm:$0xff]
      %v2529 = vld [vmem:[%s1 + $0x20] sm:$0x33]
      %v2530 = vld [vmem:[%s2] sm:$0x3]
      %v2532 = vlaneseq
      %v2533 = vshrl.u32 %v2532, 7
      %v2534 = vsub.s32 0, %v2533
      %v2535 = vrot.slane %v2530, %v2534
      %v2536 = vlaneseq
      %v2537 = vshrl.u32 %v2536, 7
      %v2538 = vsub.s32 1, %v2537
      %v2539 = vrot.slane %v2530, %v2538
      %v2547 = vunpack.c.l.b16 %v2525
      %v2548 = vunpack.c.h.b16 %v2525
      %v2549 = vunpack.c.l.b16 %v2526
      %v2550 = vunpack.c.h.b16 %v2526
      %v2551 = vunpack.c.l.b16 %v2527
      %v2552 = vunpack.c.h.b16 %v2527
      %v2553 = vunpack.c.l.b16 %v2528
      %v2554 = vunpack.c.h.b16 %v2528
      %v2555 = vunpack.c.l.b16 %v2529
      %v2556 = vunpack.c.h.b16 %v2529
      %v2557 = vpack.c.b16 %v2549, %v2547
      %v2558 = vpack.c.b16 %v2550, %v2548
      %v2559 = vpack.c.b16 %v2553, %v2551
      %v2560 = vpack.c.b16 %v2554, %v2552
      %v2561 = vpack.c.b16 %v2555, %v2555
      %v2562 = vpack.c.b16 %v2556, %v2556
      %vm2567 = vcmask 293888
      %v2568 = vsel %vm2567, %v2490, 0
      %v2570 = vsel %vm2567, %v2492, 0
      %v2572 = vsel %vm2567, %v2494, 0
      %v2574 = vsel %vm2567, %v2496, 0
      %v2576 = vsel %vm2567, %v2498, 0
      %v2578 = vsel %vm2567, %v2500, 0
      %v2580 = vsel %vm2567, %v2502, 0
      %v2582 = vsel %vm2567, %v2504, 0
      %v2584 = vsel %vm2567, %v2506, 0
      %v2586 = vsel %vm2567, %v2508, 0
      %v2588 = vsel %vm2567, %v2510, 0
      %v2590 = vsel %vm2567, %v2512, 0
      %v2592 = vsel %vm2567, %v2514, 0
      %v2594 = vsel %vm2567, %v2516, 0
      %v2596 = vsel %vm2567, %v2518, 0
      %v2598 = vsel %vm2567, %v2520, 0
      %v2600 = vsel %vm2567, %v2522, 0
      %v2602 = vsel %vm2567, %v2524, 0
      %vm2604 = vcmask 1041408
      %v2606 = vsel %vm2604, %v2561, 0
      %v2609 = vsel %vm2604, %v2562, 0
      %2611 = vmatprep.subr.bf16.mxu0 %v2558
      %2612 = vmatpush1.bf16.msra.mxu0 %v2557
      %2613 = vmatprep.subr.bf16.mxu0 %v2560
      %2614 = vmatpush1.bf16.msra.mxu0 %v2559
      %2615 = vmatprep.subr.bf16.mxu0 %v2609
      %2616 = vmatpush1.bf16.msra.mxu0 %v2606
      %2617 = vmatprep.subr.bf16.mxu0 0
      %2618 = vmatpush1.bf16.msra.mxu0 0
      %2619 = vmatprep.subr.bf16.mxu0 0
      %2620 = vmatpush1.bf16.msra.mxu0 0
      %2621 = vmatprep.subr.bf16.mxu0 0
      %2622 = vmatpush1.bf16.msra.mxu0 0
      %2623 = vmatprep.subr.bf16.mxu0 0
      %2624 = vmatpush1.bf16.msra.mxu0 0
      %2625 = vmatprep.subr.bf16.mxu0 0
      %2626 = vmatpush1.bf16.msra.mxu0 0
      %2627 = vmatprep.subr.bf16.mxu0 0
      %2628 = vmatpush1.bf16.msra.mxu0 0
      %2629 = vmatprep.subr.bf16.mxu0 0
      %2630 = vmatpush1.bf16.msra.mxu0 0
      %2631 = vmatprep.subr.bf16.mxu0 0
      %2632 = vmatpush1.bf16.msra.mxu0 0
      %2633 = vmatprep.subr.bf16.mxu0 0
      %2634 = vmatpush1.bf16.msra.mxu0 0
      %2635 = vmatprep.subr.bf16.mxu0 0
      %2636 = vmatpush1.bf16.msra.mxu0 0
      %2637 = vmatprep.subr.bf16.mxu0 0
      %2638 = vmatpush1.bf16.msra.mxu0 0
      %2639 = vmatprep.subr.bf16.mxu0 0
      %2640 = vmatpush1.bf16.msra.mxu0 0
      %2641 = vmatprep.subr.bf16.mxu0 0
      %2642 = vmatpush1.bf16.msra.mxu0 0
      %2643 = vmatprep.mubr.bf16.mxu0 0
      %2644 = vmatmul.mubr.bf16.gmra.mrb[0].mxu0 %v2568
      %v2645 = vpop.f32.mrb[0].mxu0
      %v2646 = vadd.f32 %v2535, %v2645
      %v2647 = vpop.f32.mrb[0].mxu0
      %v2648 = vadd.f32 %v2539, %v2647
      %v2649 = vpop.f32.mrb[0].mxu0
      %v2650 = vadd.f32 %v2535, %v2649
      %v2651 = vpop.f32.mrb[0].mxu0
      %v2652 = vadd.f32 %v2539, %v2651
      %2653 = vmatprep.mubr.bf16.mxu0 0
      %2654 = vmatmul.mubr.bf16.gmra.mrb[0].mxu0 %v2570
      %v2655 = vpop.f32.mrb[0].mxu0
      %v2656 = vadd.f32 %v2535, %v2655
      %v2657 = vpop.f32.mrb[0].mxu0
      %v2658 = vadd.f32 %v2539, %v2657
      %v2659 = vpop.f32.mrb[0].mxu0
      %v2660 = vadd.f32 %v2535, %v2659
      %v2661 = vpop.f32.mrb[0].mxu0
      %v2662 = vadd.f32 %v2539, %v2661
      %2663 = vmatprep.mubr.bf16.mxu0 0
      %2664 = vmatmul.mubr.bf16.gmra.mrb[0].mxu0 %v2572
      %v2665 = vpop.f32.mrb[0].mxu0
      %v2666 = vadd.f32 %v2535, %v2665
      %v2667 = vpop.f32.mrb[0].mxu0
      %v2668 = vadd.f32 %v2539, %v2667
      %v2669 = vpop.f32.mrb[0].mxu0
      %v2670 = vadd.f32 %v2535, %v2669
      %v2671 = vpop.f32.mrb[0].mxu0
      %v2672 = vadd.f32 %v2539, %v2671
      %2673 = vmatprep.mubr.bf16.mxu0 0
      %2674 = vmatmul.mubr.bf16.gmra.mrb[0].mxu0 %v2574
      %v2675 = vpop.f32.mrb[0].mxu0
      %v2676 = vadd.f32 %v2535, %v2675
      %v2677 = vpop.f32.mrb[0].mxu0
      %v2678 = vadd.f32 %v2539, %v2677
      %v2679 = vpop.f32.mrb[0].mxu0
      %v2680 = vadd.f32 %v2535, %v2679
      %v2681 = vpop.f32.mrb[0].mxu0
      %v2682 = vadd.f32 %v2539, %v2681
      %2683 = vmatprep.mubr.bf16.mxu0 0
      %2684 = vmatmul.mubr.bf16.gmra.mrb[0].mxu0 %v2576
      %v2685 = vpop.f32.mrb[0].mxu0
      %v2686 = vadd.f32 %v2535, %v2685
      %v2687 = vpop.f32.mrb[0].mxu0
      %v2688 = vadd.f32 %v2539, %v2687
      %v2689 = vpop.f32.mrb[0].mxu0
      %v2690 = vadd.f32 %v2535, %v2689
      %v2691 = vpop.f32.mrb[0].mxu0
      %v2692 = vadd.f32 %v2539, %v2691
      %2693 = vmatprep.mubr.bf16.mxu0 0
      %2694 = vmatmul.mubr.bf16.gmra.mrb[0].mxu0 %v2578
      %v2695 = vpop.f32.mrb[0].mxu0
      %v2696 = vadd.f32 %v2535, %v2695
      %v2697 = vpop.f32.mrb[0].mxu0
      %v2698 = vadd.f32 %v2539, %v2697
      %v2699 = vpop.f32.mrb[0].mxu0
      %v2700 = vadd.f32 %v2535, %v2699
      %v2701 = vpop.f32.mrb[0].mxu0
      %v2702 = vadd.f32 %v2539, %v2701
      %2703 = vmatprep.mubr.bf16.mxu0 0
      %2704 = vmatmul.mubr.bf16.gmra.mrb[0].mxu0 %v2580
      %v2705 = vpop.f32.mrb[0].mxu0
      %v2706 = vadd.f32 %v2535, %v2705
      %v2707 = vpop.f32.mrb[0].mxu0
      %v2708 = vadd.f32 %v2539, %v2707
      %v2709 = vpop.f32.mrb[0].mxu0
      %v2710 = vadd.f32 %v2535, %v2709
      %v2711 = vpop.f32.mrb[0].mxu0
      %v2712 = vadd.f32 %v2539, %v2711
      %2713 = vmatprep.mubr.bf16.mxu0 0
      %2714 = vmatmul.mubr.bf16.gmra.mrb[0].mxu0 %v2582
      %v2715 = vpop.f32.mrb[0].mxu0
      %v2716 = vadd.f32 %v2535, %v2715
      %v2717 = vpop.f32.mrb[0].mxu0
      %v2718 = vadd.f32 %v2539, %v2717
      %v2719 = vpop.f32.mrb[0].mxu0
      %v2720 = vadd.f32 %v2535, %v2719
      %v2721 = vpop.f32.mrb[0].mxu0
      %v2722 = vadd.f32 %v2539, %v2721
      %2723 = vmatprep.mubr.bf16.mxu0 0
      %2724 = vmatmul.mubr.bf16.gmra.mrb[0].mxu0 %v2584
      %v2725 = vpop.f32.mrb[0].mxu0
      %v2726 = vadd.f32 %v2535, %v2725
      %v2727 = vpop.f32.mrb[0].mxu0
      %v2728 = vadd.f32 %v2539, %v2727
      %v2729 = vpop.f32.mrb[0].mxu0
      %v2730 = vadd.f32 %v2535, %v2729
      %v2731 = vpop.f32.mrb[0].mxu0
      %v2732 = vadd.f32 %v2539, %v2731
      %2733 = vmatprep.mubr.bf16.mxu0 0
      %2734 = vmatmul.mubr.bf16.gmra.mrb[0].mxu0 %v2586
      %v2735 = vpop.f32.mrb[0].mxu0
      %v2736 = vadd.f32 %v2535, %v2735
      %v2737 = vpop.f32.mrb[0].mxu0
      %v2738 = vadd.f32 %v2539, %v2737
      %v2739 = vpop.f32.mrb[0].mxu0
      %v2740 = vadd.f32 %v2535, %v2739
      %v2741 = vpop.f32.mrb[0].mxu0
      %v2742 = vadd.f32 %v2539, %v2741
      %2743 = vmatprep.mubr.bf16.mxu0 0
      %2744 = vmatmul.mubr.bf16.gmra.mrb[0].mxu0 %v2588
      %v2745 = vpop.f32.mrb[0].mxu0
      %v2746 = vadd.f32 %v2535, %v2745
      %v2747 = vpop.f32.mrb[0].mxu0
      %v2748 = vadd.f32 %v2539, %v2747
      %v2749 = vpop.f32.mrb[0].mxu0
      %v2750 = vadd.f32 %v2535, %v2749
      %v2751 = vpop.f32.mrb[0].mxu0
      %v2752 = vadd.f32 %v2539, %v2751
      %2753 = vmatprep.mubr.bf16.mxu0 0
      %2754 = vmatmul.mubr.bf16.gmra.mrb[0].mxu0 %v2590
      %v2755 = vpop.f32.mrb[0].mxu0
      %v2756 = vadd.f32 %v2535, %v2755
      %v2757 = vpop.f32.mrb[0].mxu0
      %v2758 = vadd.f32 %v2539, %v2757
      %v2759 = vpop.f32.mrb[0].mxu0
      %v2760 = vadd.f32 %v2535, %v2759
      %v2761 = vpop.f32.mrb[0].mxu0
      %v2762 = vadd.f32 %v2539, %v2761
      %2763 = vmatprep.mubr.bf16.mxu0 0
      %2764 = vmatmul.mubr.bf16.gmra.mrb[0].mxu0 %v2592
      %v2765 = vpop.f32.mrb[0].mxu0
      %v2766 = vadd.f32 %v2535, %v2765
      %v2767 = vpop.f32.mrb[0].mxu0
      %v2768 = vadd.f32 %v2539, %v2767
      %v2769 = vpop.f32.mrb[0].mxu0
      %v2770 = vadd.f32 %v2535, %v2769
      %v2771 = vpop.f32.mrb[0].mxu0
      %v2772 = vadd.f32 %v2539, %v2771
      %2773 = vmatprep.mubr.bf16.mxu0 0
      %2774 = vmatmul.mubr.bf16.gmra.mrb[0].mxu0 %v2594
      %v2775 = vpop.f32.mrb[0].mxu0
      %v2776 = vadd.f32 %v2535, %v2775
      %v2777 = vpop.f32.mrb[0].mxu0
      %v2778 = vadd.f32 %v2539, %v2777
      %v2779 = vpop.f32.mrb[0].mxu0
      %v2780 = vadd.f32 %v2535, %v2779
      %v2781 = vpop.f32.mrb[0].mxu0
      %v2782 = vadd.f32 %v2539, %v2781
      %2783 = vmatprep.mubr.bf16.mxu0 0
      %2784 = vmatmul.mubr.bf16.gmra.mrb[0].mxu0 %v2596
      %v2785 = vpop.f32.mrb[0].mxu0
      %v2786 = vadd.f32 %v2535, %v2785
      %v2787 = vpop.f32.mrb[0].mxu0
      %v2788 = vadd.f32 %v2539, %v2787
      %v2789 = vpop.f32.mrb[0].mxu0
      %v2790 = vadd.f32 %v2535, %v2789
      %v2791 = vpop.f32.mrb[0].mxu0
      %v2792 = vadd.f32 %v2539, %v2791
      %2793 = vmatprep.mubr.bf16.mxu0 0
      %2794 = vmatmul.mubr.bf16.gmra.mrb[0].mxu0 %v2598
      %v2795 = vpop.f32.mrb[0].mxu0
      %v2796 = vadd.f32 %v2535, %v2795
      %v2797 = vpop.f32.mrb[0].mxu0
      %v2798 = vadd.f32 %v2539, %v2797
      %v2799 = vpop.f32.mrb[0].mxu0
      %v2800 = vadd.f32 %v2535, %v2799
      %v2801 = vpop.f32.mrb[0].mxu0
      %v2802 = vadd.f32 %v2539, %v2801
      %2803 = vmatprep.mubr.bf16.mxu0 0
      %2804 = vmatmul.mubr.bf16.gmra.mrb[0].mxu0 %v2600
      %v2805 = vpop.f32.mrb[0].mxu0
      %v2806 = vadd.f32 %v2535, %v2805
      %v2807 = vpop.f32.mrb[0].mxu0
      %v2808 = vadd.f32 %v2539, %v2807
      %v2809 = vpop.f32.mrb[0].mxu0
      %v2810 = vadd.f32 %v2535, %v2809
      %v2811 = vpop.f32.mrb[0].mxu0
      %v2812 = vadd.f32 %v2539, %v2811
      %2813 = vmatprep.mubr.bf16.mxu0 0
      %2814 = vmatmul.mubr.bf16.gmra.mrb[0].mxu0 %v2602
      %v2815 = vpop.f32.mrb[0].mxu0
      %v2816 = vadd.f32 %v2535, %v2815
      %v2817 = vpop.f32.mrb[0].mxu0
      %v2818 = vadd.f32 %v2539, %v2817
      %v2819 = vpop.f32.mrb[0].mxu0
      %v2820 = vadd.f32 %v2535, %v2819
      %v2821 = vpop.f32.mrb[0].mxu0
      %v2822 = vadd.f32 %v2539, %v2821
      %2823 = vdwg.mxu0
      %v2824 = vmax.f32 %v2646, 0.0
      %v2825 = vmax.f32 %v2648, 0.0
      %v2826 = vmax.f32 %v2650, 0.0
      %v2827 = vmax.f32 %v2652, 0.0
      %v2828 = vmax.f32 %v2656, 0.0
      %v2829 = vmax.f32 %v2658, 0.0
      %v2830 = vmax.f32 %v2660, 0.0
      %v2831 = vmax.f32 %v2662, 0.0
      %v2832 = vmax.f32 %v2666, 0.0
      %v2833 = vmax.f32 %v2668, 0.0
      %v2834 = vmax.f32 %v2670, 0.0
      %v2835 = vmax.f32 %v2672, 0.0
      %v2836 = vmax.f32 %v2676, 0.0
      %v2837 = vmax.f32 %v2678, 0.0
      %v2838 = vmax.f32 %v2680, 0.0
      %v2839 = vmax.f32 %v2682, 0.0
      %v2840 = vmax.f32 %v2686, 0.0
      %v2841 = vmax.f32 %v2688, 0.0
      %v2842 = vmax.f32 %v2690, 0.0
      %v2843 = vmax.f32 %v2692, 0.0
      %v2844 = vmax.f32 %v2696, 0.0
      %v2845 = vmax.f32 %v2698, 0.0
      %v2846 = vmax.f32 %v2700, 0.0
      %v2847 = vmax.f32 %v2702, 0.0
      %v2848 = vmax.f32 %v2706, 0.0
      %v2849 = vmax.f32 %v2708, 0.0
      %v2850 = vmax.f32 %v2710, 0.0
      %v2851 = vmax.f32 %v2712, 0.0
      %v2852 = vmax.f32 %v2716, 0.0
      %v2853 = vmax.f32 %v2718, 0.0
      %v2854 = vmax.f32 %v2720, 0.0
      %v2855 = vmax.f32 %v2722, 0.0
      %v2856 = vmax.f32 %v2726, 0.0
      %v2857 = vmax.f32 %v2728, 0.0
      %v2858 = vmax.f32 %v2730, 0.0
      %v2859 = vmax.f32 %v2732, 0.0
      %v2860 = vmax.f32 %v2736, 0.0
      %v2861 = vmax.f32 %v2738, 0.0
      %v2862 = vmax.f32 %v2740, 0.0
      %v2863 = vmax.f32 %v2742, 0.0
      %v2864 = vmax.f32 %v2746, 0.0
      %v2865 = vmax.f32 %v2748, 0.0
      %v2866 = vmax.f32 %v2750, 0.0
      %v2867 = vmax.f32 %v2752, 0.0
      %v2868 = vmax.f32 %v2756, 0.0
      %v2869 = vmax.f32 %v2758, 0.0
      %v2870 = vmax.f32 %v2760, 0.0
      %v2871 = vmax.f32 %v2762, 0.0
      %v2872 = vmax.f32 %v2766, 0.0
      %v2873 = vmax.f32 %v2768, 0.0
      %v2874 = vmax.f32 %v2770, 0.0
      %v2875 = vmax.f32 %v2772, 0.0
      %v2876 = vmax.f32 %v2776, 0.0
      %v2877 = vmax.f32 %v2778, 0.0
      %v2878 = vmax.f32 %v2780, 0.0
      %v2879 = vmax.f32 %v2782, 0.0
      %v2880 = vmax.f32 %v2786, 0.0
      %v2881 = vmax.f32 %v2788, 0.0
      %v2882 = vmax.f32 %v2790, 0.0
      %v2883 = vmax.f32 %v2792, 0.0
      %v2884 = vmax.f32 %v2796, 0.0
      %v2885 = vmax.f32 %v2798, 0.0
      %v2886 = vmax.f32 %v2800, 0.0
      %v2887 = vmax.f32 %v2802, 0.0
      %v2888 = vmax.f32 %v2806, 0.0
      %v2889 = vmax.f32 %v2808, 0.0
      %v2890 = vmax.f32 %v2810, 0.0
      %v2891 = vmax.f32 %v2812, 0.0
      %v2892 = vmax.f32 %v2816, 0.0
      %v2893 = vmax.f32 %v2818, 0.0
      %v2894 = vmax.f32 %v2820, 0.0
      %v2895 = vmax.f32 %v2822, 0.0
      %s2896 = smul.u32 %s23, 16
      %s2897 = ssub.s32 %s2896, 1
      %v2898 = vstv %s2897
      %v2899 = vadd.s32 %v2898, 1
      %v2900 = vadd.s32 %v2898, 2
      %v2901 = vadd.s32 %v2898, 3
      %v2902 = vadd.s32 %v2898, 4
      %v2903 = vadd.s32 %v2898, 5
      %v2904 = vadd.s32 %v2898, 6
      %v2905 = vadd.s32 %v2898, 7
      %v2906 = vadd.s32 %v2898, 8
      %v2907 = vadd.s32 %v2898, 9
      %v2908 = vadd.s32 %v2898, 10
      %v2909 = vadd.s32 %v2898, 11
      %v2910 = vadd.s32 %v2898, 12
      %v2911 = vadd.s32 %v2898, 13
      %v2912 = vadd.s32 %v2898, 14
      %v2913 = vadd.s32 %v2898, 15
      %v2914 = vadd.s32 %v2898, 16
      %v2915 = vadd.s32 %v2898, 17
      %vm2916 = vcmp.ge.s32.totalorder %v2898, 0
      %vm2917 = vcmp.ge.s32.totalorder %v2899, 0
      %vm2918 = vcmp.ge.s32.totalorder %v2900, 0
      %vm2919 = vcmp.ge.s32.totalorder %v2901, 0
      %vm2920 = vcmp.ge.s32.totalorder %v2902, 0
      %vm2921 = vcmp.ge.s32.totalorder %v2903, 0
      %vm2922 = vcmp.ge.s32.totalorder %v2904, 0
      %vm2923 = vcmp.ge.s32.totalorder %v2905, 0
      %vm2924 = vcmp.ge.s32.totalorder %v2906, 0
      %vm2925 = vcmp.ge.s32.totalorder %v2907, 0
      %vm2926 = vcmp.ge.s32.totalorder %v2908, 0
      %vm2927 = vcmp.ge.s32.totalorder %v2909, 0
      %vm2928 = vcmp.ge.s32.totalorder %v2910, 0
      %vm2929 = vcmp.ge.s32.totalorder %v2911, 0
      %vm2930 = vcmp.ge.s32.totalorder %v2912, 0
      %vm2931 = vcmp.ge.s32.totalorder %v2913, 0
      %vm2932 = vcmp.ge.s32.totalorder %v2914, 0
      %vm2933 = vcmp.ge.s32.totalorder %v2915, 0
      %vm2934 = vcmp.lt.s32.totalorder %v2898, 16
      %vm2935 = vcmp.lt.s32.totalorder %v2899, 16
      %vm2936 = vcmp.lt.s32.totalorder %v2900, 16
      %vm2937 = vcmp.lt.s32.totalorder %v2901, 16
      %vm2938 = vcmp.lt.s32.totalorder %v2902, 16
      %vm2939 = vcmp.lt.s32.totalorder %v2903, 16
      %vm2940 = vcmp.lt.s32.totalorder %v2904, 16
      %vm2941 = vcmp.lt.s32.totalorder %v2905, 16
      %vm2942 = vcmp.lt.s32.totalorder %v2906, 16
      %vm2943 = vcmp.lt.s32.totalorder %v2907, 16
      %vm2944 = vcmp.lt.s32.totalorder %v2908, 16
      %vm2945 = vcmp.lt.s32.totalorder %v2909, 16
      %vm2946 = vcmp.lt.s32.totalorder %v2910, 16
      %vm2947 = vcmp.lt.s32.totalorder %v2911, 16
      %vm2948 = vcmp.lt.s32.totalorder %v2912, 16
      %vm2949 = vcmp.lt.s32.totalorder %v2913, 16
      %vm2950 = vcmp.lt.s32.totalorder %v2914, 16
      %vm2951 = vcmp.lt.s32.totalorder %v2915, 16
      %vm2952 = vmand %vm2916, %vm2934
      %vm2953 = vmand %vm2917, %vm2935
      %vm2954 = vmand %vm2918, %vm2936
      %vm2955 = vmand %vm2919, %vm2937
      %vm2956 = vmand %vm2920, %vm2938
      %vm2957 = vmand %vm2921, %vm2939
      %vm2958 = vmand %vm2922, %vm2940
      %vm2959 = vmand %vm2923, %vm2941
      %vm2960 = vmand %vm2924, %vm2942
      %vm2961 = vmand %vm2925, %vm2943
      %vm2962 = vmand %vm2926, %vm2944
      %vm2963 = vmand %vm2927, %vm2945
      %vm2964 = vmand %vm2928, %vm2946
      %vm2965 = vmand %vm2929, %vm2947
      %vm2966 = vmand %vm2930, %vm2948
      %vm2967 = vmand %vm2931, %vm2949
      %vm2968 = vmand %vm2932, %vm2950
      %vm2969 = vmand %vm2933, %vm2951
      %v2970 = vsel %vm2952, 1, 0
      %v2971 = vsel %vm2953, 1, 0
      %v2972 = vsel %vm2954, 1, 0
      %v2973 = vsel %vm2955, 1, 0
      %v2974 = vsel %vm2956, 1, 0
      %v2975 = vsel %vm2957, 1, 0
      %v2976 = vsel %vm2958, 1, 0
      %v2977 = vsel %vm2959, 1, 0
      %v2978 = vsel %vm2960, 1, 0
      %v2979 = vsel %vm2961, 1, 0
      %v2980 = vsel %vm2962, 1, 0
      %v2981 = vsel %vm2963, 1, 0
      %v2982 = vsel %vm2964, 1, 0
      %v2983 = vsel %vm2965, 1, 0
      %v2984 = vsel %vm2966, 1, 0
      %v2985 = vsel %vm2967, 1, 0
      %v2986 = vsel %vm2968, 1, 0
      %v2987 = vsel %vm2969, 1, 0
      %vm2988 = vcmp.eq.s32.totalorder %v2970, 1
      %vm2989 = vcmp.eq.s32.totalorder %v2971, 1
      %vm2990 = vcmp.eq.s32.totalorder %v2972, 1
      %vm2991 = vcmp.eq.s32.totalorder %v2973, 1
      %vm2992 = vcmp.eq.s32.totalorder %v2974, 1
      %vm2993 = vcmp.eq.s32.totalorder %v2975, 1
      %vm2994 = vcmp.eq.s32.totalorder %v2976, 1
      %vm2995 = vcmp.eq.s32.totalorder %v2977, 1
      %vm2996 = vcmp.eq.s32.totalorder %v2978, 1
      %vm2997 = vcmp.eq.s32.totalorder %v2979, 1
      %vm2998 = vcmp.eq.s32.totalorder %v2980, 1
      %vm2999 = vcmp.eq.s32.totalorder %v2981, 1
      %vm3000 = vcmp.eq.s32.totalorder %v2982, 1
      %vm3001 = vcmp.eq.s32.totalorder %v2983, 1
      %vm3002 = vcmp.eq.s32.totalorder %v2984, 1
      %vm3003 = vcmp.eq.s32.totalorder %v2985, 1
      %vm3004 = vcmp.eq.s32.totalorder %v2986, 1
      %vm3005 = vcmp.eq.s32.totalorder %v2987, 1
      %v3006 = vsel %vm2988, %v2824, 0.0
      %v3007 = vsel %vm2988, %v2825, 0.0
      %v3008 = vsel %vm2988, %v2826, 0.0
      %v3009 = vsel %vm2988, %v2827, 0.0
      %v3010 = vsel %vm2989, %v2828, 0.0
      %v3011 = vsel %vm2989, %v2829, 0.0
      %v3012 = vsel %vm2989, %v2830, 0.0
      %v3013 = vsel %vm2989, %v2831, 0.0
      %v3014 = vsel %vm2990, %v2832, 0.0
      %v3015 = vsel %vm2990, %v2833, 0.0
      %v3016 = vsel %vm2990, %v2834, 0.0
      %v3017 = vsel %vm2990, %v2835, 0.0
      %v3018 = vsel %vm2991, %v2836, 0.0
      %v3019 = vsel %vm2991, %v2837, 0.0
      %v3020 = vsel %vm2991, %v2838, 0.0
      %v3021 = vsel %vm2991, %v2839, 0.0
      %v3022 = vsel %vm2992, %v2840, 0.0
      %v3023 = vsel %vm2992, %v2841, 0.0
      %v3024 = vsel %vm2992, %v2842, 0.0
      %v3025 = vsel %vm2992, %v2843, 0.0
      %v3026 = vsel %vm2993, %v2844, 0.0
      %v3027 = vsel %vm2993, %v2845, 0.0
      %v3028 = vsel %vm2993, %v2846, 0.0
      %v3029 = vsel %vm2993, %v2847, 0.0
      %v3030 = vsel %vm2994, %v2848, 0.0
      %v3031 = vsel %vm2994, %v2849, 0.0
      %v3032 = vsel %vm2994, %v2850, 0.0
      %v3033 = vsel %vm2994, %v2851, 0.0
      %v3034 = vsel %vm2995, %v2852, 0.0
      %v3035 = vsel %vm2995, %v2853, 0.0
      %v3036 = vsel %vm2995, %v2854, 0.0
      %v3037 = vsel %vm2995, %v2855, 0.0
      %v3038 = vsel %vm2996, %v2856, 0.0
      %v3039 = vsel %vm2996, %v2857, 0.0
      %v3040 = vsel %vm2996, %v2858, 0.0
      %v3041 = vsel %vm2996, %v2859, 0.0
      %v3042 = vsel %vm2997, %v2860, 0.0
      %v3043 = vsel %vm2997, %v2861, 0.0
      %v3044 = vsel %vm2997, %v2862, 0.0
      %v3045 = vsel %vm2997, %v2863, 0.0
      %v3046 = vsel %vm2998, %v2864, 0.0
      %v3047 = vsel %vm2998, %v2865, 0.0
      %v3048 = vsel %vm2998, %v2866, 0.0
      %v3049 = vsel %vm2998, %v2867, 0.0
      %v3050 = vsel %vm2999, %v2868, 0.0
      %v3051 = vsel %vm2999, %v2869, 0.0
      %v3052 = vsel %vm2999, %v2870, 0.0
      %v3053 = vsel %vm2999, %v2871, 0.0
      %v3054 = vsel %vm3000, %v2872, 0.0
      %v3055 = vsel %vm3000, %v2873, 0.0
      %v3056 = vsel %vm3000, %v2874, 0.0
      %v3057 = vsel %vm3000, %v2875, 0.0
      %v3058 = vsel %vm3001, %v2876, 0.0
      %v3059 = vsel %vm3001, %v2877, 0.0
      %v3060 = vsel %vm3001, %v2878, 0.0
      %v3061 = vsel %vm3001, %v2879, 0.0
      %v3062 = vsel %vm3002, %v2880, 0.0
      %v3063 = vsel %vm3002, %v2881, 0.0
      %v3064 = vsel %vm3002, %v2882, 0.0
      %v3065 = vsel %vm3002, %v2883, 0.0
      %v3066 = vsel %vm3003, %v2884, 0.0
      %v3067 = vsel %vm3003, %v2885, 0.0
      %v3068 = vsel %vm3003, %v2886, 0.0
      %v3069 = vsel %vm3003, %v2887, 0.0
      %v3070 = vsel %vm3004, %v2888, 0.0
      %v3071 = vsel %vm3004, %v2889, 0.0
      %v3072 = vsel %vm3004, %v2890, 0.0
      %v3073 = vsel %vm3004, %v2891, 0.0
      %v3074 = vsel %vm3005, %v2892, 0.0
      %v3075 = vsel %vm3005, %v2893, 0.0
      %v3076 = vsel %vm3005, %v2894, 0.0
      %v3077 = vsel %vm3005, %v2895, 0.0
      %v3078 = vlaneseq
      %v3079 = vshrl.u32 %v3078, 7
      %v3080 = vadd.s32 %v3079, 8
      %vm3081 = vcmp.eq.s32.totalorder %v3079, 0
      %vm3082 = vcmp.eq.s32.totalorder %v3080, 0
      %v3083 = vrot.slane %v3006, 7
      %v3084 = vrot.slane %v3007, 7
      %v3085 = vrot.slane %v3010, 7
      %v3086 = vrot.slane %v3011, 7
      %v3087 = vrot.slane %v3014, 7
      %v3088 = vrot.slane %v3015, 7
      %v3089 = vrot.slane %v3018, 7
      %v3090 = vrot.slane %v3019, 7
      %v3091 = vrot.slane %v3022, 7
      %v3092 = vrot.slane %v3023, 7
      %v3093 = vrot.slane %v3026, 7
      %v3094 = vrot.slane %v3027, 7
      %v3095 = vrot.slane %v3030, 7
      %v3096 = vrot.slane %v3031, 7
      %v3097 = vrot.slane %v3034, 7
      %v3098 = vrot.slane %v3035, 7
      %v3099 = vrot.slane %v3038, 7
      %v3100 = vrot.slane %v3039, 7
      %v3101 = vrot.slane %v3042, 7
      %v3102 = vrot.slane %v3043, 7
      %v3103 = vrot.slane %v3046, 7
      %v3104 = vrot.slane %v3047, 7
      %v3105 = vrot.slane %v3050, 7
      %v3106 = vrot.slane %v3051, 7
      %v3107 = vrot.slane %v3054, 7
      %v3108 = vrot.slane %v3055, 7
      %v3109 = vrot.slane %v3058, 7
      %v3110 = vrot.slane %v3059, 7
      %v3111 = vrot.slane %v3062, 7
      %v3112 = vrot.slane %v3063, 7
      %v3113 = vrot.slane %v3066, 7
      %v3114 = vrot.slane %v3067, 7
      %v3115 = vrot.slane %v3070, 7
      %v3116 = vrot.slane %v3071, 7
      %v3117 = vrot.slane %v3074, 7
      %v3118 = vrot.slane %v3075, 7
      %v3119 = vrot.slane %v3008, 7
      %v3120 = vrot.slane %v3009, 7
      %v3121 = vrot.slane %v3012, 7
      %v3122 = vrot.slane %v3013, 7
      %v3123 = vrot.slane %v3016, 7
      %v3124 = vrot.slane %v3017, 7
      %v3125 = vrot.slane %v3020, 7
      %v3126 = vrot.slane %v3021, 7
      %v3127 = vrot.slane %v3024, 7
      %v3128 = vrot.slane %v3025, 7
      %v3129 = vrot.slane %v3028, 7
      %v3130 = vrot.slane %v3029, 7
      %v3131 = vrot.slane %v3032, 7
      %v3132 = vrot.slane %v3033, 7
      %v3133 = vrot.slane %v3036, 7
      %v3134 = vrot.slane %v3037, 7
      %v3135 = vrot.slane %v3040, 7
      %v3136 = vrot.slane %v3041, 7
      %v3137 = vrot.slane %v3044, 7
      %v3138 = vrot.slane %v3045, 7
      %v3139 = vrot.slane %v3048, 7
      %v3140 = vrot.slane %v3049, 7
      %v3141 = vrot.slane %v3052, 7
      %v3142 = vrot.slane %v3053, 7
      %v3143 = vrot.slane %v3056, 7
      %v3144 = vrot.slane %v3057, 7
      %v3145 = vrot.slane %v3060, 7
      %v3146 = vrot.slane %v3061, 7
      %v3147 = vrot.slane %v3064, 7
      %v3148 = vrot.slane %v3065, 7
      %v3149 = vrot.slane %v3068, 7
      %v3150 = vrot.slane %v3069, 7
      %v3151 = vrot.slane %v3072, 7
      %v3152 = vrot.slane %v3073, 7
      %v3153 = vrot.slane %v3076, 7
      %v3154 = vrot.slane %v3077, 7
      %vm3155 = vcmp.lt.s32.totalorder %v3079, 1
      %v3156 = vsel %vm3155, %v3083, %v3119
      %v3157 = vsel %vm3155, %v3084, %v3120
      %v3158 = vsel %vm3155, %v3085, %v3121
      %v3159 = vsel %vm3155, %v3086, %v3122
      %v3160 = vsel %vm3155, %v3087, %v3123
      %v3161 = vsel %vm3155, %v3088, %v3124
      %v3162 = vsel %vm3155, %v3089, %v3125
      %v3163 = vsel %vm3155, %v3090, %v3126
      %v3164 = vsel %vm3155, %v3091, %v3127
      %v3165 = vsel %vm3155, %v3092, %v3128
      %v3166 = vsel %vm3155, %v3093, %v3129
      %v3167 = vsel %vm3155, %v3094, %v3130
      %v3168 = vsel %vm3155, %v3095, %v3131
      %v3169 = vsel %vm3155, %v3096, %v3132
      %v3170 = vsel %vm3155, %v3097, %v3133
      %v3171 = vsel %vm3155, %v3098, %v3134
      %v3172 = vsel %vm3155, %v3099, %v3135
      %v3173 = vsel %vm3155, %v3100, %v3136
      %v3174 = vsel %vm3155, %v3101, %v3137
      %v3175 = vsel %vm3155, %v3102, %v3138
      %v3176 = vsel %vm3155, %v3103, %v3139
      %v3177 = vsel %vm3155, %v3104, %v3140
      %v3178 = vsel %vm3155, %v3105, %v3141
      %v3179 = vsel %vm3155, %v3106, %v3142
      %v3180 = vsel %vm3155, %v3107, %v3143
      %v3181 = vsel %vm3155, %v3108, %v3144
      %v3182 = vsel %vm3155, %v3109, %v3145
      %v3183 = vsel %vm3155, %v3110, %v3146
      %v3184 = vsel %vm3155, %v3111, %v3147
      %v3185 = vsel %vm3155, %v3112, %v3148
      %v3186 = vsel %vm3155, %v3113, %v3149
      %v3187 = vsel %vm3155, %v3114, %v3150
      %v3188 = vsel %vm3155, %v3115, %v3151
      %v3189 = vsel %vm3155, %v3116, %v3152
      %v3190 = vsel %vm3155, %v3117, %v3153
      %v3191 = vsel %vm3155, %v3118, %v3154
      %v3192 = vsel %vm3155, %v3119, %v3083
      %v3193 = vsel %vm3155, %v3120, %v3084
      %v3194 = vsel %vm3155, %v3121, %v3085
      %v3195 = vsel %vm3155, %v3122, %v3086
      %v3196 = vsel %vm3155, %v3123, %v3087
      %v3197 = vsel %vm3155, %v3124, %v3088
      %v3198 = vsel %vm3155, %v3125, %v3089
      %v3199 = vsel %vm3155, %v3126, %v3090
      %v3200 = vsel %vm3155, %v3127, %v3091
      %v3201 = vsel %vm3155, %v3128, %v3092
      %v3202 = vsel %vm3155, %v3129, %v3093
      %v3203 = vsel %vm3155, %v3130, %v3094
      %v3204 = vsel %vm3155, %v3131, %v3095
      %v3205 = vsel %vm3155, %v3132, %v3096
      %v3206 = vsel %vm3155, %v3133, %v3097
      %v3207 = vsel %vm3155, %v3134, %v3098
      %v3208 = vsel %vm3155, %v3135, %v3099
      %v3209 = vsel %vm3155, %v3136, %v3100
      %v3210 = vsel %vm3155, %v3137, %v3101
      %v3211 = vsel %vm3155, %v3138, %v3102
      %v3212 = vsel %vm3155, %v3139, %v3103
      %v3213 = vsel %vm3155, %v3140, %v3104
      %v3214 = vsel %vm3155, %v3141, %v3105
      %v3215 = vsel %vm3155, %v3142, %v3106
      %v3216 = vsel %vm3155, %v3143, %v3107
      %v3217 = vsel %vm3155, %v3144, %v3108
      %v3218 = vsel %vm3155, %v3145, %v3109
      %v3219 = vsel %vm3155, %v3146, %v3110
      %v3220 = vsel %vm3155, %v3147, %v3111
      %v3221 = vsel %vm3155, %v3148, %v3112
      %v3222 = vsel %vm3155, %v3149, %v3113
      %v3223 = vsel %vm3155, %v3150, %v3114
      %v3224 = vsel %vm3155, %v3151, %v3115
      %v3225 = vsel %vm3155, %v3152, %v3116
      %v3226 = vsel %vm3155, %v3153, %v3117
      %v3227 = vsel %vm3155, %v3154, %v3118
      %v3228 = vsel %vm3081, 1, 0
      %v3229 = vsel %vm3082, 1, 0
      %vm3230 = vcmp.eq.s32.totalorder %v3228, 1
      %vm3231 = vcmp.eq.s32.totalorder %v3229, 1
      %v3232 = vsel %vm3230, 0.0, %v3192
      %v3233 = vsel %vm3230, 0.0, %v3193
      %v3234 = vsel %vm3231, 0.0, %v3156
      %v3235 = vsel %vm3231, 0.0, %v3157
      %v3236 = vsel %vm3230, 0.0, %v3194
      %v3237 = vsel %vm3230, 0.0, %v3195
      %v3238 = vsel %vm3231, 0.0, %v3158
      %v3239 = vsel %vm3231, 0.0, %v3159
      %v3240 = vsel %vm3230, 0.0, %v3196
      %v3241 = vsel %vm3230, 0.0, %v3197
      %v3242 = vsel %vm3231, 0.0, %v3160
      %v3243 = vsel %vm3231, 0.0, %v3161
      %v3244 = vsel %vm3230, 0.0, %v3198
      %v3245 = vsel %vm3230, 0.0, %v3199
      %v3246 = vsel %vm3231, 0.0, %v3162
      %v3247 = vsel %vm3231, 0.0, %v3163
      %v3248 = vsel %vm3230, 0.0, %v3200
      %v3249 = vsel %vm3230, 0.0, %v3201
      %v3250 = vsel %vm3231, 0.0, %v3164
      %v3251 = vsel %vm3231, 0.0, %v3165
      %v3252 = vsel %vm3230, 0.0, %v3202
      %v3253 = vsel %vm3230, 0.0, %v3203
      %v3254 = vsel %vm3231, 0.0, %v3166
      %v3255 = vsel %vm3231, 0.0, %v3167
      %v3256 = vsel %vm3230, 0.0, %v3204
      %v3257 = vsel %vm3230, 0.0, %v3205
      %v3258 = vsel %vm3231, 0.0, %v3168
      %v3259 = vsel %vm3231, 0.0, %v3169
      %v3260 = vsel %vm3230, 0.0, %v3206
      %v3261 = vsel %vm3230, 0.0, %v3207
      %v3262 = vsel %vm3231, 0.0, %v3170
      %v3263 = vsel %vm3231, 0.0, %v3171
      %v3264 = vsel %vm3230, 0.0, %v3208
      %v3265 = vsel %vm3230, 0.0, %v3209
      %v3266 = vsel %vm3231, 0.0, %v3172
      %v3267 = vsel %vm3231, 0.0, %v3173
      %v3268 = vsel %vm3230, 0.0, %v3210
      %v3269 = vsel %vm3230, 0.0, %v3211
      %v3270 = vsel %vm3231, 0.0, %v3174
      %v3271 = vsel %vm3231, 0.0, %v3175
      %v3272 = vsel %vm3230, 0.0, %v3212
      %v3273 = vsel %vm3230, 0.0, %v3213
      %v3274 = vsel %vm3231, 0.0, %v3176
      %v3275 = vsel %vm3231, 0.0, %v3177
      %v3276 = vsel %vm3230, 0.0, %v3214
      %v3277 = vsel %vm3230, 0.0, %v3215
      %v3278 = vsel %vm3231, 0.0, %v3178
      %v3279 = vsel %vm3231, 0.0, %v3179
      %v3280 = vsel %vm3230, 0.0, %v3216
      %v3281 = vsel %vm3230, 0.0, %v3217
      %v3282 = vsel %vm3231, 0.0, %v3180
      %v3283 = vsel %vm3231, 0.0, %v3181
      %v3284 = vsel %vm3230, 0.0, %v3218
      %v3285 = vsel %vm3230, 0.0, %v3219
      %v3286 = vsel %vm3231, 0.0, %v3182
      %v3287 = vsel %vm3231, 0.0, %v3183
      %v3288 = vsel %vm3230, 0.0, %v3220
      %v3289 = vsel %vm3230, 0.0, %v3221
      %v3290 = vsel %vm3231, 0.0, %v3184
      %v3291 = vsel %vm3231, 0.0, %v3185
      %v3292 = vsel %vm3230, 0.0, %v3222
      %v3293 = vsel %vm3230, 0.0, %v3223
      %v3294 = vsel %vm3231, 0.0, %v3186
      %v3295 = vsel %vm3231, 0.0, %v3187
      %v3296 = vsel %vm3230, 0.0, %v3224
      %v3297 = vsel %vm3230, 0.0, %v3225
      %v3298 = vsel %vm3231, 0.0, %v3188
      %v3299 = vsel %vm3231, 0.0, %v3189
      %v3300 = vsel %vm3230, 0.0, %v3226
      %v3301 = vsel %vm3230, 0.0, %v3227
      %v3302 = vsel %vm3231, 0.0, %v3190
      %v3303 = vsel %vm3231, 0.0, %v3191
      %vm3304 = vcmp.eq.s32.totalorder %v3079, 15
      %vm3305 = vcmp.eq.s32.totalorder %v3080, 15
      %v3306 = vrot.slane %v3006, 1
      %v3307 = vrot.slane %v3007, 1
      %v3308 = vrot.slane %v3010, 1
      %v3309 = vrot.slane %v3011, 1
      %v3310 = vrot.slane %v3014, 1
      %v3311 = vrot.slane %v3015, 1
      %v3312 = vrot.slane %v3018, 1
      %v3313 = vrot.slane %v3019, 1
      %v3314 = vrot.slane %v3022, 1
      %v3315 = vrot.slane %v3023, 1
      %v3316 = vrot.slane %v3026, 1
      %v3317 = vrot.slane %v3027, 1
      %v3318 = vrot.slane %v3030, 1
      %v3319 = vrot.slane %v3031, 1
      %v3320 = vrot.slane %v3034, 1
      %v3321 = vrot.slane %v3035, 1
      %v3322 = vrot.slane %v3038, 1
      %v3323 = vrot.slane %v3039, 1
      %v3324 = vrot.slane %v3042, 1
      %v3325 = vrot.slane %v3043, 1
      %v3326 = vrot.slane %v3046, 1
      %v3327 = vrot.slane %v3047, 1
      %v3328 = vrot.slane %v3050, 1
      %v3329 = vrot.slane %v3051, 1
      %v3330 = vrot.slane %v3054, 1
      %v3331 = vrot.slane %v3055, 1
      %v3332 = vrot.slane %v3058, 1
      %v3333 = vrot.slane %v3059, 1
      %v3334 = vrot.slane %v3062, 1
      %v3335 = vrot.slane %v3063, 1
      %v3336 = vrot.slane %v3066, 1
      %v3337 = vrot.slane %v3067, 1
      %v3338 = vrot.slane %v3070, 1
      %v3339 = vrot.slane %v3071, 1
      %v3340 = vrot.slane %v3074, 1
      %v3341 = vrot.slane %v3075, 1
      %v3342 = vrot.slane %v3008, 1
      %v3343 = vrot.slane %v3009, 1
      %v3344 = vrot.slane %v3012, 1
      %v3345 = vrot.slane %v3013, 1
      %v3346 = vrot.slane %v3016, 1
      %v3347 = vrot.slane %v3017, 1
      %v3348 = vrot.slane %v3020, 1
      %v3349 = vrot.slane %v3021, 1
      %v3350 = vrot.slane %v3024, 1
      %v3351 = vrot.slane %v3025, 1
      %v3352 = vrot.slane %v3028, 1
      %v3353 = vrot.slane %v3029, 1
      %v3354 = vrot.slane %v3032, 1
      %v3355 = vrot.slane %v3033, 1
      %v3356 = vrot.slane %v3036, 1
      %v3357 = vrot.slane %v3037, 1
      %v3358 = vrot.slane %v3040, 1
      %v3359 = vrot.slane %v3041, 1
      %v3360 = vrot.slane %v3044, 1
      %v3361 = vrot.slane %v3045, 1
      %v3362 = vrot.slane %v3048, 1
      %v3363 = vrot.slane %v3049, 1
      %v3364 = vrot.slane %v3052, 1
      %v3365 = vrot.slane %v3053, 1
      %v3366 = vrot.slane %v3056, 1
      %v3367 = vrot.slane %v3057, 1
      %v3368 = vrot.slane %v3060, 1
      %v3369 = vrot.slane %v3061, 1
      %v3370 = vrot.slane %v3064, 1
      %v3371 = vrot.slane %v3065, 1
      %v3372 = vrot.slane %v3068, 1
      %v3373 = vrot.slane %v3069, 1
      %v3374 = vrot.slane %v3072, 1
      %v3375 = vrot.slane %v3073, 1
      %v3376 = vrot.slane %v3076, 1
      %v3377 = vrot.slane %v3077, 1
      %vm3378 = vcmp.lt.s32.totalorder %v3079, 7
      %v3379 = vsel %vm3378, %v3306, %v3342
      %v3380 = vsel %vm3378, %v3307, %v3343
      %v3381 = vsel %vm3378, %v3308, %v3344
      %v3382 = vsel %vm3378, %v3309, %v3345
      %v3383 = vsel %vm3378, %v3310, %v3346
      %v3384 = vsel %vm3378, %v3311, %v3347
      %v3385 = vsel %vm3378, %v3312, %v3348
      %v3386 = vsel %vm3378, %v3313, %v3349
      %v3387 = vsel %vm3378, %v3314, %v3350
      %v3388 = vsel %vm3378, %v3315, %v3351
      %v3389 = vsel %vm3378, %v3316, %v3352
      %v3390 = vsel %vm3378, %v3317, %v3353
      %v3391 = vsel %vm3378, %v3318, %v3354
      %v3392 = vsel %vm3378, %v3319, %v3355
      %v3393 = vsel %vm3378, %v3320, %v3356
      %v3394 = vsel %vm3378, %v3321, %v3357
      %v3395 = vsel %vm3378, %v3322, %v3358
      %v3396 = vsel %vm3378, %v3323, %v3359
      %v3397 = vsel %vm3378, %v3324, %v3360
      %v3398 = vsel %vm3378, %v3325, %v3361
      %v3399 = vsel %vm3378, %v3326, %v3362
      %v3400 = vsel %vm3378, %v3327, %v3363
      %v3401 = vsel %vm3378, %v3328, %v3364
      %v3402 = vsel %vm3378, %v3329, %v3365
      %v3403 = vsel %vm3378, %v3330, %v3366
      %v3404 = vsel %vm3378, %v3331, %v3367
      %v3405 = vsel %vm3378, %v3332, %v3368
      %v3406 = vsel %vm3378, %v3333, %v3369
      %v3407 = vsel %vm3378, %v3334, %v3370
      %v3408 = vsel %vm3378, %v3335, %v3371
      %v3409 = vsel %vm3378, %v3336, %v3372
      %v3410 = vsel %vm3378, %v3337, %v3373
      %v3411 = vsel %vm3378, %v3338, %v3374
      %v3412 = vsel %vm3378, %v3339, %v3375
      %v3413 = vsel %vm3378, %v3340, %v3376
      %v3414 = vsel %vm3378, %v3341, %v3377
      %v3415 = vsel %vm3378, %v3342, %v3306
      %v3416 = vsel %vm3378, %v3343, %v3307
      %v3417 = vsel %vm3378, %v3344, %v3308
      %v3418 = vsel %vm3378, %v3345, %v3309
      %v3419 = vsel %vm3378, %v3346, %v3310
      %v3420 = vsel %vm3378, %v3347, %v3311
      %v3421 = vsel %vm3378, %v3348, %v3312
      %v3422 = vsel %vm3378, %v3349, %v3313
      %v3423 = vsel %vm3378, %v3350, %v3314
      %v3424 = vsel %vm3378, %v3351, %v3315
      %v3425 = vsel %vm3378, %v3352, %v3316
      %v3426 = vsel %vm3378, %v3353, %v3317
      %v3427 = vsel %vm3378, %v3354, %v3318
      %v3428 = vsel %vm3378, %v3355, %v3319
      %v3429 = vsel %vm3378, %v3356, %v3320
      %v3430 = vsel %vm3378, %v3357, %v3321
      %v3431 = vsel %vm3378, %v3358, %v3322
      %v3432 = vsel %vm3378, %v3359, %v3323
      %v3433 = vsel %vm3378, %v3360, %v3324
      %v3434 = vsel %vm3378, %v3361, %v3325
      %v3435 = vsel %vm3378, %v3362, %v3326
      %v3436 = vsel %vm3378, %v3363, %v3327
      %v3437 = vsel %vm3378, %v3364, %v3328
      %v3438 = vsel %vm3378, %v3365, %v3329
      %v3439 = vsel %vm3378, %v3366, %v3330
      %v3440 = vsel %vm3378, %v3367, %v3331
      %v3441 = vsel %vm3378, %v3368, %v3332
      %v3442 = vsel %vm3378, %v3369, %v3333
      %v3443 = vsel %vm3378, %v3370, %v3334
      %v3444 = vsel %vm3378, %v3371, %v3335
      %v3445 = vsel %vm3378, %v3372, %v3336
      %v3446 = vsel %vm3378, %v3373, %v3337
      %v3447 = vsel %vm3378, %v3374, %v3338
      %v3448 = vsel %vm3378, %v3375, %v3339
      %v3449 = vsel %vm3378, %v3376, %v3340
      %v3450 = vsel %vm3378, %v3377, %v3341
      %v3451 = vsel %vm3304, 1, 0
      %v3452 = vsel %vm3305, 1, 0
      %vm3453 = vcmp.eq.s32.totalorder %v3451, 1
      %vm3454 = vcmp.eq.s32.totalorder %v3452, 1
      %v3455 = vsel %vm3453, 0.0, %v3379
      %v3456 = vsel %vm3453, 0.0, %v3380
      %v3457 = vsel %vm3454, 0.0, %v3415
      %v3458 = vsel %vm3454, 0.0, %v3416
      %v3459 = vsel %vm3453, 0.0, %v3381
      %v3460 = vsel %vm3453, 0.0, %v3382
      %v3461 = vsel %vm3454, 0.0, %v3417
      %v3462 = vsel %vm3454, 0.0, %v3418
      %v3463 = vsel %vm3453, 0.0, %v3383
      %v3464 = vsel %vm3453, 0.0, %v3384
      %v3465 = vsel %vm3454, 0.0, %v3419
      %v3466 = vsel %vm3454, 0.0, %v3420
      %v3467 = vsel %vm3453, 0.0, %v3385
      %v3468 = vsel %vm3453, 0.0, %v3386
      %v3469 = vsel %vm3454, 0.0, %v3421
      %v3470 = vsel %vm3454, 0.0, %v3422
      %v3471 = vsel %vm3453, 0.0, %v3387
      %v3472 = vsel %vm3453, 0.0, %v3388
      %v3473 = vsel %vm3454, 0.0, %v3423
      %v3474 = vsel %vm3454, 0.0, %v3424
      %v3475 = vsel %vm3453, 0.0, %v3389
      %v3476 = vsel %vm3453, 0.0, %v3390
      %v3477 = vsel %vm3454, 0.0, %v3425
      %v3478 = vsel %vm3454, 0.0, %v3426
      %v3479 = vsel %vm3453, 0.0, %v3391
      %v3480 = vsel %vm3453, 0.0, %v3392
      %v3481 = vsel %vm3454, 0.0, %v3427
      %v3482 = vsel %vm3454, 0.0, %v3428
      %v3483 = vsel %vm3453, 0.0, %v3393
      %v3484 = vsel %vm3453, 0.0, %v3394
      %v3485 = vsel %vm3454, 0.0, %v3429
      %v3486 = vsel %vm3454, 0.0, %v3430
      %v3487 = vsel %vm3453, 0.0, %v3395
      %v3488 = vsel %vm3453, 0.0, %v3396
      %v3489 = vsel %vm3454, 0.0, %v3431
      %v3490 = vsel %vm3454, 0.0, %v3432
      %v3491 = vsel %vm3453, 0.0, %v3397
      %v3492 = vsel %vm3453, 0.0, %v3398
      %v3493 = vsel %vm3454, 0.0, %v3433
      %v3494 = vsel %vm3454, 0.0, %v3434
      %v3495 = vsel %vm3453, 0.0, %v3399
      %v3496 = vsel %vm3453, 0.0, %v3400
      %v3497 = vsel %vm3454, 0.0, %v3435
      %v3498 = vsel %vm3454, 0.0, %v3436
      %v3499 = vsel %vm3453, 0.0, %v3401
      %v3500 = vsel %vm3453, 0.0, %v3402
      %v3501 = vsel %vm3454, 0.0, %v3437
      %v3502 = vsel %vm3454, 0.0, %v3438
      %v3503 = vsel %vm3453, 0.0, %v3403
      %v3504 = vsel %vm3453, 0.0, %v3404
      %v3505 = vsel %vm3454, 0.0, %v3439
      %v3506 = vsel %vm3454, 0.0, %v3440
      %v3507 = vsel %vm3453, 0.0, %v3405
      %v3508 = vsel %vm3453, 0.0, %v3406
      %v3509 = vsel %vm3454, 0.0, %v3441
      %v3510 = vsel %vm3454, 0.0, %v3442
      %v3511 = vsel %vm3453, 0.0, %v3407
      %v3512 = vsel %vm3453, 0.0, %v3408
      %v3513 = vsel %vm3454, 0.0, %v3443
      %v3514 = vsel %vm3454, 0.0, %v3444
      %v3515 = vsel %vm3453, 0.0, %v3409
      %v3516 = vsel %vm3453, 0.0, %v3410
      %v3517 = vsel %vm3454, 0.0, %v3445
      %v3518 = vsel %vm3454, 0.0, %v3446
      %v3519 = vsel %vm3453, 0.0, %v3411
      %v3520 = vsel %vm3453, 0.0, %v3412
      %v3521 = vsel %vm3454, 0.0, %v3447
      %v3522 = vsel %vm3454, 0.0, %v3448
      %v3523 = vsel %vm3453, 0.0, %v3413
      %v3524 = vsel %vm3453, 0.0, %v3414
      %v3525 = vsel %vm3454, 0.0, %v3449
      %v3526 = vsel %vm3454, 0.0, %v3450
      %v3527 = vpack.c.bf16 %v3234, %v3232
      %v3528 = vpack.c.bf16 %v3235, %v3233
      %v3529 = vpack.c.bf16 %v3238, %v3236
      %v3530 = vpack.c.bf16 %v3239, %v3237
      %v3531 = vpack.c.bf16 %v3242, %v3240
      %v3532 = vpack.c.bf16 %v3243, %v3241
      %v3533 = vpack.c.bf16 %v3246, %v3244
      %v3534 = vpack.c.bf16 %v3247, %v3245
      %v3535 = vpack.c.bf16 %v3250, %v3248
      %v3536 = vpack.c.bf16 %v3251, %v3249
      %v3537 = vpack.c.bf16 %v3254, %v3252
      %v3538 = vpack.c.bf16 %v3255, %v3253
      %v3539 = vpack.c.bf16 %v3258, %v3256
      %v3540 = vpack.c.bf16 %v3259, %v3257
      %v3541 = vpack.c.bf16 %v3262, %v3260
      %v3542 = vpack.c.bf16 %v3263, %v3261
      %v3543 = vpack.c.bf16 %v3266, %v3264
      %v3544 = vpack.c.bf16 %v3267, %v3265
      %v3545 = vpack.c.bf16 %v3270, %v3268
      %v3546 = vpack.c.bf16 %v3271, %v3269
      %v3547 = vpack.c.bf16 %v3274, %v3272
      %v3548 = vpack.c.bf16 %v3275, %v3273
      %v3549 = vpack.c.bf16 %v3278, %v3276
      %v3550 = vpack.c.bf16 %v3279, %v3277
      %v3551 = vpack.c.bf16 %v3282, %v3280
      %v3552 = vpack.c.bf16 %v3283, %v3281
      %v3553 = vpack.c.bf16 %v3286, %v3284
      %v3554 = vpack.c.bf16 %v3287, %v3285
      %v3555 = vpack.c.bf16 %v3290, %v3288
      %v3556 = vpack.c.bf16 %v3291, %v3289
      %v3557 = vpack.c.bf16 %v3294, %v3292
      %v3558 = vpack.c.bf16 %v3295, %v3293
      %v3559 = vpack.c.bf16 %v3298, %v3296
      %v3560 = vpack.c.bf16 %v3299, %v3297
      %v3561 = vpack.c.bf16 %v3302, %v3300
      %v3562 = vpack.c.bf16 %v3303, %v3301
      %v3563 = vpack.c.bf16 %v3008, %v3006
      %v3564 = vpack.c.bf16 %v3009, %v3007
      %v3565 = vpack.c.bf16 %v3012, %v3010
      %v3566 = vpack.c.bf16 %v3013, %v3011
      %v3567 = vpack.c.bf16 %v3016, %v3014
      %v3568 = vpack.c.bf16 %v3017, %v3015
      %v3569 = vpack.c.bf16 %v3020, %v3018
      %v3570 = vpack.c.bf16 %v3021, %v3019
      %v3571 = vpack.c.bf16 %v3024, %v3022
      %v3572 = vpack.c.bf16 %v3025, %v3023
      %v3573 = vpack.c.bf16 %v3028, %v3026
      %v3574 = vpack.c.bf16 %v3029, %v3027
      %v3575 = vpack.c.bf16 %v3032, %v3030
      %v3576 = vpack.c.bf16 %v3033, %v3031
      %v3577 = vpack.c.bf16 %v3036, %v3034
      %v3578 = vpack.c.bf16 %v3037, %v3035
      %v3579 = vpack.c.bf16 %v3040, %v3038
      %v3580 = vpack.c.bf16 %v3041, %v3039
      %v3581 = vpack.c.bf16 %v3044, %v3042
      %v3582 = vpack.c.bf16 %v3045, %v3043
      %v3583 = vpack.c.bf16 %v3048, %v3046
      %v3584 = vpack.c.bf16 %v3049, %v3047
      %v3585 = vpack.c.bf16 %v3052, %v3050
      %v3586 = vpack.c.bf16 %v3053, %v3051
      %v3587 = vpack.c.bf16 %v3056, %v3054
      %v3588 = vpack.c.bf16 %v3057, %v3055
      %v3589 = vpack.c.bf16 %v3060, %v3058
      %v3590 = vpack.c.bf16 %v3061, %v3059
      %v3591 = vpack.c.bf16 %v3064, %v3062
      %v3592 = vpack.c.bf16 %v3065, %v3063
      %v3593 = vpack.c.bf16 %v3068, %v3066
      %v3594 = vpack.c.bf16 %v3069, %v3067
      %v3595 = vpack.c.bf16 %v3072, %v3070
      %v3596 = vpack.c.bf16 %v3073, %v3071
      %v3597 = vpack.c.bf16 %v3076, %v3074
      %v3598 = vpack.c.bf16 %v3077, %v3075
      %v3599 = vpack.c.bf16 %v3457, %v3455
      %v3600 = vpack.c.bf16 %v3458, %v3456
      %v3601 = vpack.c.bf16 %v3461, %v3459
      %v3602 = vpack.c.bf16 %v3462, %v3460
      %v3603 = vpack.c.bf16 %v3465, %v3463
      %v3604 = vpack.c.bf16 %v3466, %v3464
      %v3605 = vpack.c.bf16 %v3469, %v3467
      %v3606 = vpack.c.bf16 %v3470, %v3468
      %v3607 = vpack.c.bf16 %v3473, %v3471
      %v3608 = vpack.c.bf16 %v3474, %v3472
      %v3609 = vpack.c.bf16 %v3477, %v3475
      %v3610 = vpack.c.bf16 %v3478, %v3476
      %v3611 = vpack.c.bf16 %v3481, %v3479
      %v3612 = vpack.c.bf16 %v3482, %v3480
      %v3613 = vpack.c.bf16 %v3485, %v3483
      %v3614 = vpack.c.bf16 %v3486, %v3484
      %v3615 = vpack.c.bf16 %v3489, %v3487
      %v3616 = vpack.c.bf16 %v3490, %v3488
      %v3617 = vpack.c.bf16 %v3493, %v3491
      %v3618 = vpack.c.bf16 %v3494, %v3492
      %v3619 = vpack.c.bf16 %v3497, %v3495
      %v3620 = vpack.c.bf16 %v3498, %v3496
      %v3621 = vpack.c.bf16 %v3501, %v3499
      %v3622 = vpack.c.bf16 %v3502, %v3500
      %v3623 = vpack.c.bf16 %v3505, %v3503
      %v3624 = vpack.c.bf16 %v3506, %v3504
      %v3625 = vpack.c.bf16 %v3509, %v3507
      %v3626 = vpack.c.bf16 %v3510, %v3508
      %v3627 = vpack.c.bf16 %v3513, %v3511
      %v3628 = vpack.c.bf16 %v3514, %v3512
      %v3629 = vpack.c.bf16 %v3517, %v3515
      %v3630 = vpack.c.bf16 %v3518, %v3516
      %v3631 = vpack.c.bf16 %v3521, %v3519
      %v3632 = vpack.c.bf16 %v3522, %v3520
      %v3633 = vpack.c.bf16 %v3525, %v3523
      %v3634 = vpack.c.bf16 %v3526, %v3524
      %v3635 = vld [vmem:[%s3] sm:$0xff]
      %v3636 = vld [vmem:[%s3 + $0x8] sm:$0xff]
      %v3637 = vld [vmem:[%s3 + $0x10] sm:$0xff]
      %v3638 = vld [vmem:[%s3 + $0x18] sm:$0xff]
      %v3639 = vld [vmem:[%s3 + $0x20] sm:$0xff]
      %v3640 = vld [vmem:[%s3 + $0x28] sm:$0xff]
      %v3641 = vld [vmem:[%s3 + $0x30] sm:$0xff]
      %v3642 = vld [vmem:[%s3 + $0x38] sm:$0xff]
      %v3643 = vld [vmem:[%s3 + $0x40] sm:$0xff]
      %v3644 = vld [vmem:[%s3 + $0x48] sm:$0xff]
      %v3645 = vld [vmem:[%s3 + $0x50] sm:$0xff]
      %v3646 = vld [vmem:[%s3 + $0x58] sm:$0xff]
      %v3647 = vld [vmem:[%s3 + $0x60] sm:$0xff]
      %v3648 = vld [vmem:[%s3 + $0x68] sm:$0xff]
      %v3649 = vld [vmem:[%s3 + $0x70] sm:$0xff]
      %v3650 = vld [vmem:[%s3 + $0x78] sm:$0xff]
      %v3651 = vld [vmem:[%s3 + $0x80] sm:$0xff]
      %v3652 = vld [vmem:[%s3 + $0x88] sm:$0xff]
      %v3653 = vld [vmem:[%s3 + $0x90] sm:$0xff]
      %v3654 = vld [vmem:[%s3 + $0x98] sm:$0xff]
      %v3655 = vld [vmem:[%s3 + $0xa0] sm:$0xff]
      %v3656 = vld [vmem:[%s3 + $0xa8] sm:$0xff]
      %v3657 = vld [vmem:[%s3 + $0xb0] sm:$0xff]
      %v3658 = vld [vmem:[%s3 + $0xb8] sm:$0xff]
      %v3659 = vld [vmem:[%s3 + $0xc0] sm:$0xff]
      %v3660 = vld [vmem:[%s3 + $0xc8] sm:$0xff]
      %v3661 = vld [vmem:[%s3 + $0xd0] sm:$0xff]
      %v3662 = vld [vmem:[%s3 + $0xd8] sm:$0xff]
      %v3663 = vld [vmem:[%s3 + $0xe0] sm:$0xff]
      %v3664 = vld [vmem:[%s3 + $0xe8] sm:$0xff]
      %v3665 = vld [vmem:[%s3 + $0xf0] sm:$0xff]
      %v3666 = vld [vmem:[%s3 + $0xf8] sm:$0xff]
      %s3667 = scalar_lea.vmem %s3, 256
      %v3668 = vld [vmem:[%s3667] sm:$0xff]
      %v3669 = vld [vmem:[%s3667 + $0x8] sm:$0xff]
      %v3670 = vld [vmem:[%s3667 + $0x10] sm:$0xff]
      %v3671 = vld [vmem:[%s3667 + $0x18] sm:$0xff]
      %v3672 = vld [vmem:[%s3667 + $0x20] sm:$0xff]
      %v3673 = vld [vmem:[%s3667 + $0x28] sm:$0xff]
      %v3674 = vld [vmem:[%s3667 + $0x30] sm:$0xff]
      %v3675 = vld [vmem:[%s3667 + $0x38] sm:$0xff]
      %v3676 = vld [vmem:[%s3667 + $0x40] sm:$0xff]
      %v3677 = vld [vmem:[%s3667 + $0x48] sm:$0xff]
      %v3678 = vld [vmem:[%s3667 + $0x50] sm:$0xff]
      %v3679 = vld [vmem:[%s3667 + $0x58] sm:$0xff]
      %v3680 = vld [vmem:[%s3667 + $0x60] sm:$0xff]
      %v3681 = vld [vmem:[%s3667 + $0x68] sm:$0xff]
      %v3682 = vld [vmem:[%s3667 + $0x70] sm:$0xff]
      %v3683 = vld [vmem:[%s3667 + $0x78] sm:$0xff]
      %v3684 = vld [vmem:[%s3667 + $0x80] sm:$0xff]
      %v3685 = vld [vmem:[%s3667 + $0x88] sm:$0xff]
      %v3686 = vld [vmem:[%s3667 + $0x90] sm:$0xff]
      %v3687 = vld [vmem:[%s3667 + $0x98] sm:$0xff]
      %v3688 = vld [vmem:[%s3667 + $0xa0] sm:$0xff]
      %v3689 = vld [vmem:[%s3667 + $0xa8] sm:$0xff]
      %v3690 = vld [vmem:[%s3667 + $0xb0] sm:$0xff]
      %v3691 = vld [vmem:[%s3667 + $0xb8] sm:$0xff]
      %v3692 = vld [vmem:[%s3667 + $0xc0] sm:$0xff]
      %v3693 = vld [vmem:[%s3667 + $0xc8] sm:$0xff]
      %v3694 = vld [vmem:[%s3667 + $0xd0] sm:$0xff]
      %v3695 = vld [vmem:[%s3667 + $0xd8] sm:$0xff]
      %v3696 = vld [vmem:[%s3667 + $0xe0] sm:$0xff]
      %v3697 = vld [vmem:[%s3667 + $0xe8] sm:$0xff]
      %v3698 = vld [vmem:[%s3667 + $0xf0] sm:$0xff]
      %v3699 = vld [vmem:[%s3667 + $0xf8] sm:$0xff]
      %v3732 = vunpack.c.l.b16 %v3668
      %v3733 = vunpack.c.h.b16 %v3668
      %v3734 = vunpack.c.l.b16 %v3669
      %v3735 = vunpack.c.h.b16 %v3669
      %v3736 = vunpack.c.l.b16 %v3670
      %v3737 = vunpack.c.h.b16 %v3670
      %v3738 = vunpack.c.l.b16 %v3671
      %v3739 = vunpack.c.h.b16 %v3671
      %v3740 = vunpack.c.l.b16 %v3672
      %v3741 = vunpack.c.h.b16 %v3672
      %v3742 = vunpack.c.l.b16 %v3673
      %v3743 = vunpack.c.h.b16 %v3673
      %v3744 = vunpack.c.l.b16 %v3674
      %v3745 = vunpack.c.h.b16 %v3674
      %v3746 = vunpack.c.l.b16 %v3675
      %v3747 = vunpack.c.h.b16 %v3675
      %v3748 = vunpack.c.l.b16 %v3676
      %v3749 = vunpack.c.h.b16 %v3676
      %v3750 = vunpack.c.l.b16 %v3677
      %v3751 = vunpack.c.h.b16 %v3677
      %v3752 = vunpack.c.l.b16 %v3678
      %v3753 = vunpack.c.h.b16 %v3678
      %v3754 = vunpack.c.l.b16 %v3679
      %v3755 = vunpack.c.h.b16 %v3679
      %v3756 = vunpack.c.l.b16 %v3680
      %v3757 = vunpack.c.h.b16 %v3680
      %v3758 = vunpack.c.l.b16 %v3681
      %v3759 = vunpack.c.h.b16 %v3681
      %v3760 = vunpack.c.l.b16 %v3682
      %v3761 = vunpack.c.h.b16 %v3682
      %v3762 = vunpack.c.l.b16 %v3683
      %v3763 = vunpack.c.h.b16 %v3683
      %v3764 = vunpack.c.l.b16 %v3684
      %v3765 = vunpack.c.h.b16 %v3684
      %v3766 = vunpack.c.l.b16 %v3685
      %v3767 = vunpack.c.h.b16 %v3685
      %v3768 = vunpack.c.l.b16 %v3686
      %v3769 = vunpack.c.h.b16 %v3686
      %v3770 = vunpack.c.l.b16 %v3687
      %v3771 = vunpack.c.h.b16 %v3687
      %v3772 = vunpack.c.l.b16 %v3688
      %v3773 = vunpack.c.h.b16 %v3688
      %v3774 = vunpack.c.l.b16 %v3689
      %v3775 = vunpack.c.h.b16 %v3689
      %v3776 = vunpack.c.l.b16 %v3690
      %v3777 = vunpack.c.h.b16 %v3690
      %v3778 = vunpack.c.l.b16 %v3691
      %v3779 = vunpack.c.h.b16 %v3691
      %v3780 = vunpack.c.l.b16 %v3692
      %v3781 = vunpack.c.h.b16 %v3692
      %v3782 = vunpack.c.l.b16 %v3693
      %v3783 = vunpack.c.h.b16 %v3693
      %v3784 = vunpack.c.l.b16 %v3694
      %v3785 = vunpack.c.h.b16 %v3694
      %v3786 = vunpack.c.l.b16 %v3695
      %v3787 = vunpack.c.h.b16 %v3695
      %v3788 = vunpack.c.l.b16 %v3696
      %v3789 = vunpack.c.h.b16 %v3696
      %v3790 = vunpack.c.l.b16 %v3697
      %v3791 = vunpack.c.h.b16 %v3697
      %v3792 = vunpack.c.l.b16 %v3698
      %v3793 = vunpack.c.h.b16 %v3698
      %v3794 = vunpack.c.l.b16 %v3699
      %v3795 = vunpack.c.h.b16 %v3699
      %v3796 = vpack.c.b16 %v3734, %v3732
      %v3797 = vpack.c.b16 %v3735, %v3733
      %v3798 = vpack.c.b16 %v3738, %v3736
      %v3799 = vpack.c.b16 %v3739, %v3737
      %v3800 = vpack.c.b16 %v3742, %v3740
      %v3801 = vpack.c.b16 %v3743, %v3741
      %v3802 = vpack.c.b16 %v3746, %v3744
      %v3803 = vpack.c.b16 %v3747, %v3745
      %v3804 = vpack.c.b16 %v3750, %v3748
      %v3805 = vpack.c.b16 %v3751, %v3749
      %v3806 = vpack.c.b16 %v3754, %v3752
      %v3807 = vpack.c.b16 %v3755, %v3753
      %v3808 = vpack.c.b16 %v3758, %v3756
      %v3809 = vpack.c.b16 %v3759, %v3757
      %v3810 = vpack.c.b16 %v3762, %v3760
      %v3811 = vpack.c.b16 %v3763, %v3761
      %v3812 = vpack.c.b16 %v3766, %v3764
      %v3813 = vpack.c.b16 %v3767, %v3765
      %v3814 = vpack.c.b16 %v3770, %v3768
      %v3815 = vpack.c.b16 %v3771, %v3769
      %v3816 = vpack.c.b16 %v3774, %v3772
      %v3817 = vpack.c.b16 %v3775, %v3773
      %v3818 = vpack.c.b16 %v3778, %v3776
      %v3819 = vpack.c.b16 %v3779, %v3777
      %v3820 = vpack.c.b16 %v3782, %v3780
      %v3821 = vpack.c.b16 %v3783, %v3781
      %v3822 = vpack.c.b16 %v3786, %v3784
      %v3823 = vpack.c.b16 %v3787, %v3785
      %v3824 = vpack.c.b16 %v3790, %v3788
      %v3825 = vpack.c.b16 %v3791, %v3789
      %v3826 = vpack.c.b16 %v3794, %v3792
      %v3827 = vpack.c.b16 %v3795, %v3793
      %3860 = vmatprep.subr.bf16.mxu0 %v3797
      %3861 = vmatpush1.bf16.msra.mxu0 %v3796
      %3862 = vmatprep.subr.bf16.mxu0 %v3799
      %3863 = vmatpush1.bf16.msra.mxu0 %v3798
      %3864 = vmatprep.subr.bf16.mxu0 %v3801
      %3865 = vmatpush1.bf16.msra.mxu0 %v3800
      %3866 = vmatprep.subr.bf16.mxu0 %v3803
      %3867 = vmatpush1.bf16.msra.mxu0 %v3802
      %3868 = vmatprep.subr.bf16.mxu0 %v3805
      %3869 = vmatpush1.bf16.msra.mxu0 %v3804
      %3870 = vmatprep.subr.bf16.mxu0 %v3807
      %3871 = vmatpush1.bf16.msra.mxu0 %v3806
      %3872 = vmatprep.subr.bf16.mxu0 %v3809
      %3873 = vmatpush1.bf16.msra.mxu0 %v3808
      %3874 = vmatprep.subr.bf16.mxu0 %v3811
      %3875 = vmatpush1.bf16.msra.mxu0 %v3810
      %3876 = vmatprep.subr.bf16.mxu0 %v3813
      %3877 = vmatpush1.bf16.msra.mxu0 %v3812
      %3878 = vmatprep.subr.bf16.mxu0 %v3815
      %3879 = vmatpush1.bf16.msra.mxu0 %v3814
      %3880 = vmatprep.subr.bf16.mxu0 %v3817
      %3881 = vmatpush1.bf16.msra.mxu0 %v3816
      %3882 = vmatprep.subr.bf16.mxu0 %v3819
      %3883 = vmatpush1.bf16.msra.mxu0 %v3818
      %3884 = vmatprep.subr.bf16.mxu0 %v3821
      %3885 = vmatpush1.bf16.msra.mxu0 %v3820
      %3886 = vmatprep.subr.bf16.mxu0 %v3823
      %3887 = vmatpush1.bf16.msra.mxu0 %v3822
      %3888 = vmatprep.subr.bf16.mxu0 %v3825
      %3889 = vmatpush1.bf16.msra.mxu0 %v3824
      %3890 = vmatprep.subr.bf16.mxu0 %v3827
      %3891 = vmatpush1.bf16.msra.mxu0 %v3826
      %3892 = vmatprep.mubr.bf16.mxu0 %v3564
      %3893 = vmatmul.mubr.bf16.gmra.mrb[0].mxu0 %v3563
      %v3894 = vpop.f32.mrb[0].mxu0
      %v3895 = vadd.f32 0.0, %v3894
      %v3896 = vpop.f32.mrb[0].mxu0
      %v3897 = vadd.f32 0.0, %v3896
      %v3898 = vpop.f32.mrb[0].mxu0
      %v3899 = vadd.f32 0.0, %v3898
      %v3900 = vpop.f32.mrb[0].mxu0
      %v3901 = vadd.f32 0.0, %v3900
      %3902 = vmatprep.mubr.bf16.mxu0 %v3566
      %3903 = vmatmul.mubr.bf16.gmra.mrb[0].mxu0 %v3565
      %v3904 = vpop.f32.mrb[0].mxu0
      %v3905 = vadd.f32 0.0, %v3904
      %v3906 = vpop.f32.mrb[0].mxu0
      %v3907 = vadd.f32 0.0, %v3906
      %v3908 = vpop.f32.mrb[0].mxu0
      %v3909 = vadd.f32 0.0, %v3908
      %v3910 = vpop.f32.mrb[0].mxu0
      %v3911 = vadd.f32 0.0, %v3910
      %3912 = vmatprep.mubr.bf16.mxu0 %v3568
      %3913 = vmatmul.mubr.bf16.gmra.mrb[0].mxu0 %v3567
      %v3914 = vpop.f32.mrb[0].mxu0
      %v3915 = vadd.f32 0.0, %v3914
      %v3916 = vpop.f32.mrb[0].mxu0
      %v3917 = vadd.f32 0.0, %v3916
      %v3918 = vpop.f32.mrb[0].mxu0
      %v3919 = vadd.f32 0.0, %v3918
      %v3920 = vpop.f32.mrb[0].mxu0
      %v3921 = vadd.f32 0.0, %v3920
      %3922 = vmatprep.mubr.bf16.mxu0 %v3570
      %3923 = vmatmul.mubr.bf16.gmra.mrb[0].mxu0 %v3569
      %v3924 = vpop.f32.mrb[0].mxu0
      %v3925 = vadd.f32 0.0, %v3924
      %v3926 = vpop.f32.mrb[0].mxu0
      %v3927 = vadd.f32 0.0, %v3926
      %v3928 = vpop.f32.mrb[0].mxu0
      %v3929 = vadd.f32 0.0, %v3928
      %v3930 = vpop.f32.mrb[0].mxu0
      %v3931 = vadd.f32 0.0, %v3930
      %3932 = vmatprep.mubr.bf16.mxu0 %v3572
      %3933 = vmatmul.mubr.bf16.gmra.mrb[0].mxu0 %v3571
      %v3934 = vpop.f32.mrb[0].mxu0
      %v3935 = vadd.f32 0.0, %v3934
      %v3936 = vpop.f32.mrb[0].mxu0
      %v3937 = vadd.f32 0.0, %v3936
      %v3938 = vpop.f32.mrb[0].mxu0
      %v3939 = vadd.f32 0.0, %v3938
      %v3940 = vpop.f32.mrb[0].mxu0
      %v3941 = vadd.f32 0.0, %v3940
      %3942 = vmatprep.mubr.bf16.mxu0 %v3574
      %3943 = vmatmul.mubr.bf16.gmra.mrb[0].mxu0 %v3573
      %v3944 = vpop.f32.mrb[0].mxu0
      %v3945 = vadd.f32 0.0, %v3944
      %v3946 = vpop.f32.mrb[0].mxu0
      %v3947 = vadd.f32 0.0, %v3946
      %v3948 = vpop.f32.mrb[0].mxu0
      %v3949 = vadd.f32 0.0, %v3948
      %v3950 = vpop.f32.mrb[0].mxu0
      %v3951 = vadd.f32 0.0, %v3950
      %3952 = vmatprep.mubr.bf16.mxu0 %v3576
      %3953 = vmatmul.mubr.bf16.gmra.mrb[0].mxu0 %v3575
      %v3954 = vpop.f32.mrb[0].mxu0
      %v3955 = vadd.f32 0.0, %v3954
      %v3956 = vpop.f32.mrb[0].mxu0
      %v3957 = vadd.f32 0.0, %v3956
      %v3958 = vpop.f32.mrb[0].mxu0
      %v3959 = vadd.f32 0.0, %v3958
      %v3960 = vpop.f32.mrb[0].mxu0
      %v3961 = vadd.f32 0.0, %v3960
      %3962 = vmatprep.mubr.bf16.mxu0 %v3578
      %3963 = vmatmul.mubr.bf16.gmra.mrb[0].mxu0 %v3577
      %v3964 = vpop.f32.mrb[0].mxu0
      %v3965 = vadd.f32 0.0, %v3964
      %v3966 = vpop.f32.mrb[0].mxu0
      %v3967 = vadd.f32 0.0, %v3966
      %v3968 = vpop.f32.mrb[0].mxu0
      %v3969 = vadd.f32 0.0, %v3968
      %v3970 = vpop.f32.mrb[0].mxu0
      %v3971 = vadd.f32 0.0, %v3970
      %3972 = vmatprep.mubr.bf16.mxu0 %v3580
      %3973 = vmatmul.mubr.bf16.gmra.mrb[0].mxu0 %v3579
      %v3974 = vpop.f32.mrb[0].mxu0
      %v3975 = vadd.f32 0.0, %v3974
      %v3976 = vpop.f32.mrb[0].mxu0
      %v3977 = vadd.f32 0.0, %v3976
      %v3978 = vpop.f32.mrb[0].mxu0
      %v3979 = vadd.f32 0.0, %v3978
      %v3980 = vpop.f32.mrb[0].mxu0
      %v3981 = vadd.f32 0.0, %v3980
      %3982 = vmatprep.mubr.bf16.mxu0 %v3582
      %3983 = vmatmul.mubr.bf16.gmra.mrb[0].mxu0 %v3581
      %v3984 = vpop.f32.mrb[0].mxu0
      %v3985 = vadd.f32 0.0, %v3984
      %v3986 = vpop.f32.mrb[0].mxu0
      %v3987 = vadd.f32 0.0, %v3986
      %v3988 = vpop.f32.mrb[0].mxu0
      %v3989 = vadd.f32 0.0, %v3988
      %v3990 = vpop.f32.mrb[0].mxu0
      %v3991 = vadd.f32 0.0, %v3990
      %3992 = vmatprep.mubr.bf16.mxu0 %v3584
      %3993 = vmatmul.mubr.bf16.gmra.mrb[0].mxu0 %v3583
      %v3994 = vpop.f32.mrb[0].mxu0
      %v3995 = vadd.f32 0.0, %v3994
      %v3996 = vpop.f32.mrb[0].mxu0
      %v3997 = vadd.f32 0.0, %v3996
      %v3998 = vpop.f32.mrb[0].mxu0
      %v3999 = vadd.f32 0.0, %v3998
      %v4000 = vpop.f32.mrb[0].mxu0
      %v4001 = vadd.f32 0.0, %v4000
      %4002 = vmatprep.mubr.bf16.mxu0 %v3586
      %4003 = vmatmul.mubr.bf16.gmra.mrb[0].mxu0 %v3585
      %v4004 = vpop.f32.mrb[0].mxu0
      %v4005 = vadd.f32 0.0, %v4004
      %v4006 = vpop.f32.mrb[0].mxu0
      %v4007 = vadd.f32 0.0, %v4006
      %v4008 = vpop.f32.mrb[0].mxu0
      %v4009 = vadd.f32 0.0, %v4008
      %v4010 = vpop.f32.mrb[0].mxu0
      %v4011 = vadd.f32 0.0, %v4010
      %4012 = vmatprep.mubr.bf16.mxu0 %v3588
      %4013 = vmatmul.mubr.bf16.gmra.mrb[0].mxu0 %v3587
      %v4014 = vpop.f32.mrb[0].mxu0
      %v4015 = vadd.f32 0.0, %v4014
      %v4016 = vpop.f32.mrb[0].mxu0
      %v4017 = vadd.f32 0.0, %v4016
      %v4018 = vpop.f32.mrb[0].mxu0
      %v4019 = vadd.f32 0.0, %v4018
      %v4020 = vpop.f32.mrb[0].mxu0
      %v4021 = vadd.f32 0.0, %v4020
      %4022 = vmatprep.mubr.bf16.mxu0 %v3590
      %4023 = vmatmul.mubr.bf16.gmra.mrb[0].mxu0 %v3589
      %v4024 = vpop.f32.mrb[0].mxu0
      %v4025 = vadd.f32 0.0, %v4024
      %v4026 = vpop.f32.mrb[0].mxu0
      %v4027 = vadd.f32 0.0, %v4026
      %v4028 = vpop.f32.mrb[0].mxu0
      %v4029 = vadd.f32 0.0, %v4028
      %v4030 = vpop.f32.mrb[0].mxu0
      %v4031 = vadd.f32 0.0, %v4030
      %4032 = vmatprep.mubr.bf16.mxu0 %v3592
      %4033 = vmatmul.mubr.bf16.gmra.mrb[0].mxu0 %v3591
      %v4034 = vpop.f32.mrb[0].mxu0
      %v4035 = vadd.f32 0.0, %v4034
      %v4036 = vpop.f32.mrb[0].mxu0
      %v4037 = vadd.f32 0.0, %v4036
      %v4038 = vpop.f32.mrb[0].mxu0
      %v4039 = vadd.f32 0.0, %v4038
      %v4040 = vpop.f32.mrb[0].mxu0
      %v4041 = vadd.f32 0.0, %v4040
      %4042 = vmatprep.mubr.bf16.mxu0 %v3594
      %4043 = vmatmul.mubr.bf16.gmra.mrb[0].mxu0 %v3593
      %v4044 = vpop.f32.mrb[0].mxu0
      %v4045 = vadd.f32 0.0, %v4044
      %v4046 = vpop.f32.mrb[0].mxu0
      %v4047 = vadd.f32 0.0, %v4046
      %v4048 = vpop.f32.mrb[0].mxu0
      %v4049 = vadd.f32 0.0, %v4048
      %v4050 = vpop.f32.mrb[0].mxu0
      %v4051 = vadd.f32 0.0, %v4050
      %4052 = vdwg.mxu0
      %v4085 = vunpack.c.l.b16 %v3635
      %v4086 = vunpack.c.h.b16 %v3635
      %v4087 = vunpack.c.l.b16 %v3636
      %v4088 = vunpack.c.h.b16 %v3636
      %v4089 = vunpack.c.l.b16 %v3637
      %v4090 = vunpack.c.h.b16 %v3637
      %v4091 = vunpack.c.l.b16 %v3638
      %v4092 = vunpack.c.h.b16 %v3638
      %v4093 = vunpack.c.l.b16 %v3639
      %v4094 = vunpack.c.h.b16 %v3639
      %v4095 = vunpack.c.l.b16 %v3640
      %v4096 = vunpack.c.h.b16 %v3640
      %v4097 = vunpack.c.l.b16 %v3641
      %v4098 = vunpack.c.h.b16 %v3641
      %v4099 = vunpack.c.l.b16 %v3642
      %v4100 = vunpack.c.h.b16 %v3642
      %v4101 = vunpack.c.l.b16 %v3643
      %v4102 = vunpack.c.h.b16 %v3643
      %v4103 = vunpack.c.l.b16 %v3644
      %v4104 = vunpack.c.h.b16 %v3644
      %v4105 = vunpack.c.l.b16 %v3645
      %v4106 = vunpack.c.h.b16 %v3645
      %v4107 = vunpack.c.l.b16 %v3646
      %v4108 = vunpack.c.h.b16 %v3646
      %v4109 = vunpack.c.l.b16 %v3647
      %v4110 = vunpack.c.h.b16 %v3647
      %v4111 = vunpack.c.l.b16 %v3648
      %v4112 = vunpack.c.h.b16 %v3648
      %v4113 = vunpack.c.l.b16 %v3649
      %v4114 = vunpack.c.h.b16 %v3649
      %v4115 = vunpack.c.l.b16 %v3650
      %v4116 = vunpack.c.h.b16 %v3650
      %v4117 = vunpack.c.l.b16 %v3651
      %v4118 = vunpack.c.h.b16 %v3651
      %v4119 = vunpack.c.l.b16 %v3652
      %v4120 = vunpack.c.h.b16 %v3652
      %v4121 = vunpack.c.l.b16 %v3653
      %v4122 = vunpack.c.h.b16 %v3653
      %v4123 = vunpack.c.l.b16 %v3654
      %v4124 = vunpack.c.h.b16 %v3654
      %v4125 = vunpack.c.l.b16 %v3655
      %v4126 = vunpack.c.h.b16 %v3655
      %v4127 = vunpack.c.l.b16 %v3656
      %v4128 = vunpack.c.h.b16 %v3656
      %v4129 = vunpack.c.l.b16 %v3657
      %v4130 = vunpack.c.h.b16 %v3657
      %v4131 = vunpack.c.l.b16 %v3658
      %v4132 = vunpack.c.h.b16 %v3658
      %v4133 = vunpack.c.l.b16 %v3659
      %v4134 = vunpack.c.h.b16 %v3659
      %v4135 = vunpack.c.l.b16 %v3660
      %v4136 = vunpack.c.h.b16 %v3660
      %v4137 = vunpack.c.l.b16 %v3661
      %v4138 = vunpack.c.h.b16 %v3661
      %v4139 = vunpack.c.l.b16 %v3662
      %v4140 = vunpack.c.h.b16 %v3662
      %v4141 = vunpack.c.l.b16 %v3663
      %v4142 = vunpack.c.h.b16 %v3663
      %v4143 = vunpack.c.l.b16 %v3664
      %v4144 = vunpack.c.h.b16 %v3664
      %v4145 = vunpack.c.l.b16 %v3665
      %v4146 = vunpack.c.h.b16 %v3665
      %v4147 = vunpack.c.l.b16 %v3666
      %v4148 = vunpack.c.h.b16 %v3666
      %v4149 = vpack.c.b16 %v4087, %v4085
      %v4150 = vpack.c.b16 %v4088, %v4086
      %v4151 = vpack.c.b16 %v4091, %v4089
      %v4152 = vpack.c.b16 %v4092, %v4090
      %v4153 = vpack.c.b16 %v4095, %v4093
      %v4154 = vpack.c.b16 %v4096, %v4094
      %v4155 = vpack.c.b16 %v4099, %v4097
      %v4156 = vpack.c.b16 %v4100, %v4098
      %v4157 = vpack.c.b16 %v4103, %v4101
      %v4158 = vpack.c.b16 %v4104, %v4102
      %v4159 = vpack.c.b16 %v4107, %v4105
      %v4160 = vpack.c.b16 %v4108, %v4106
      %v4161 = vpack.c.b16 %v4111, %v4109
      %v4162 = vpack.c.b16 %v4112, %v4110
      %v4163 = vpack.c.b16 %v4115, %v4113
      %v4164 = vpack.c.b16 %v4116, %v4114
      %v4165 = vpack.c.b16 %v4119, %v4117
      %v4166 = vpack.c.b16 %v4120, %v4118
      %v4167 = vpack.c.b16 %v4123, %v4121
      %v4168 = vpack.c.b16 %v4124, %v4122
      %v4169 = vpack.c.b16 %v4127, %v4125
      %v4170 = vpack.c.b16 %v4128, %v4126
      %v4171 = vpack.c.b16 %v4131, %v4129
      %v4172 = vpack.c.b16 %v4132, %v4130
      %v4173 = vpack.c.b16 %v4135, %v4133
      %v4174 = vpack.c.b16 %v4136, %v4134
      %v4175 = vpack.c.b16 %v4139, %v4137
      %v4176 = vpack.c.b16 %v4140, %v4138
      %v4177 = vpack.c.b16 %v4143, %v4141
      %v4178 = vpack.c.b16 %v4144, %v4142
      %v4179 = vpack.c.b16 %v4147, %v4145
      %v4180 = vpack.c.b16 %v4148, %v4146
      %4213 = vmatprep.subr.bf16.mxu0 %v4150
      %4214 = vmatpush1.bf16.msra.mxu0 %v4149
      %4215 = vmatprep.subr.bf16.mxu0 %v4152
      %4216 = vmatpush1.bf16.msra.mxu0 %v4151
      %4217 = vmatprep.subr.bf16.mxu0 %v4154
      %4218 = vmatpush1.bf16.msra.mxu0 %v4153
      %4219 = vmatprep.subr.bf16.mxu0 %v4156
      %4220 = vmatpush1.bf16.msra.mxu0 %v4155
      %4221 = vmatprep.subr.bf16.mxu0 %v4158
      %4222 = vmatpush1.bf16.msra.mxu0 %v4157
      %4223 = vmatprep.subr.bf16.mxu0 %v4160
      %4224 = vmatpush1.bf16.msra.mxu0 %v4159
      %4225 = vmatprep.subr.bf16.mxu0 %v4162
      %4226 = vmatpush1.bf16.msra.mxu0 %v4161
      %4227 = vmatprep.subr.bf16.mxu0 %v4164
      %4228 = vmatpush1.bf16.msra.mxu0 %v4163
      %4229 = vmatprep.subr.bf16.mxu0 %v4166
      %4230 = vmatpush1.bf16.msra.mxu0 %v4165
      %4231 = vmatprep.subr.bf16.mxu0 %v4168
      %4232 = vmatpush1.bf16.msra.mxu0 %v4167
      %4233 = vmatprep.subr.bf16.mxu0 %v4170
      %4234 = vmatpush1.bf16.msra.mxu0 %v4169
      %4235 = vmatprep.subr.bf16.mxu0 %v4172
      %4236 = vmatpush1.bf16.msra.mxu0 %v4171
      %4237 = vmatprep.subr.bf16.mxu0 %v4174
      %4238 = vmatpush1.bf16.msra.mxu0 %v4173
      %4239 = vmatprep.subr.bf16.mxu0 %v4176
      %4240 = vmatpush1.bf16.msra.mxu0 %v4175
      %4241 = vmatprep.subr.bf16.mxu0 %v4178
      %4242 = vmatpush1.bf16.msra.mxu0 %v4177
      %4243 = vmatprep.subr.bf16.mxu0 %v4180
      %4244 = vmatpush1.bf16.msra.mxu0 %v4179
      %4245 = vmatprep.mubr.bf16.mxu0 %v3528
      %4246 = vmatmul.mubr.bf16.gmra.mrb[0].mxu0 %v3527
      %v4247 = vpop.f32.mrb[0].mxu0
      %v4248 = vadd.f32 %v3895, %v4247
      %v4249 = vpop.f32.mrb[0].mxu0
      %v4250 = vadd.f32 %v3897, %v4249
      %v4251 = vpop.f32.mrb[0].mxu0
      %v4252 = vadd.f32 %v3899, %v4251
      %v4253 = vpop.f32.mrb[0].mxu0
      %v4254 = vadd.f32 %v3901, %v4253
      %4255 = vmatprep.mubr.bf16.mxu0 %v3530
      %4256 = vmatmul.mubr.bf16.gmra.mrb[0].mxu0 %v3529
      %v4257 = vpop.f32.mrb[0].mxu0
      %v4258 = vadd.f32 %v3905, %v4257
      %v4259 = vpop.f32.mrb[0].mxu0
      %v4260 = vadd.f32 %v3907, %v4259
      %v4261 = vpop.f32.mrb[0].mxu0
      %v4262 = vadd.f32 %v3909, %v4261
      %v4263 = vpop.f32.mrb[0].mxu0
      %v4264 = vadd.f32 %v3911, %v4263
      %4265 = vmatprep.mubr.bf16.mxu0 %v3532
      %4266 = vmatmul.mubr.bf16.gmra.mrb[0].mxu0 %v3531
      %v4267 = vpop.f32.mrb[0].mxu0
      %v4268 = vadd.f32 %v3915, %v4267
      %v4269 = vpop.f32.mrb[0].mxu0
      %v4270 = vadd.f32 %v3917, %v4269
      %v4271 = vpop.f32.mrb[0].mxu0
      %v4272 = vadd.f32 %v3919, %v4271
      %v4273 = vpop.f32.mrb[0].mxu0
      %v4274 = vadd.f32 %v3921, %v4273
      %4275 = vmatprep.mubr.bf16.mxu0 %v3534
      %4276 = vmatmul.mubr.bf16.gmra.mrb[0].mxu0 %v3533
      %v4277 = vpop.f32.mrb[0].mxu0
      %v4278 = vadd.f32 %v3925, %v4277
      %v4279 = vpop.f32.mrb[0].mxu0
      %v4280 = vadd.f32 %v3927, %v4279
      %v4281 = vpop.f32.mrb[0].mxu0
      %v4282 = vadd.f32 %v3929, %v4281
      %v4283 = vpop.f32.mrb[0].mxu0
      %v4284 = vadd.f32 %v3931, %v4283
      %4285 = vmatprep.mubr.bf16.mxu0 %v3536
      %4286 = vmatmul.mubr.bf16.gmra.mrb[0].mxu0 %v3535
      %v4287 = vpop.f32.mrb[0].mxu0
      %v4288 = vadd.f32 %v3935, %v4287
      %v4289 = vpop.f32.mrb[0].mxu0
      %v4290 = vadd.f32 %v3937, %v4289
      %v4291 = vpop.f32.mrb[0].mxu0
      %v4292 = vadd.f32 %v3939, %v4291
      %v4293 = vpop.f32.mrb[0].mxu0
      %v4294 = vadd.f32 %v3941, %v4293
      %4295 = vmatprep.mubr.bf16.mxu0 %v3538
      %4296 = vmatmul.mubr.bf16.gmra.mrb[0].mxu0 %v3537
      %v4297 = vpop.f32.mrb[0].mxu0
      %v4298 = vadd.f32 %v3945, %v4297
      %v4299 = vpop.f32.mrb[0].mxu0
      %v4300 = vadd.f32 %v3947, %v4299
      %v4301 = vpop.f32.mrb[0].mxu0
      %v4302 = vadd.f32 %v3949, %v4301
      %v4303 = vpop.f32.mrb[0].mxu0
      %v4304 = vadd.f32 %v3951, %v4303
      %4305 = vmatprep.mubr.bf16.mxu0 %v3540
      %4306 = vmatmul.mubr.bf16.gmra.mrb[0].mxu0 %v3539
      %v4307 = vpop.f32.mrb[0].mxu0
      %v4308 = vadd.f32 %v3955, %v4307
      %v4309 = vpop.f32.mrb[0].mxu0
      %v4310 = vadd.f32 %v3957, %v4309
      %v4311 = vpop.f32.mrb[0].mxu0
      %v4312 = vadd.f32 %v3959, %v4311
      %v4313 = vpop.f32.mrb[0].mxu0
      %v4314 = vadd.f32 %v3961, %v4313
      %4315 = vmatprep.mubr.bf16.mxu0 %v3542
      %4316 = vmatmul.mubr.bf16.gmra.mrb[0].mxu0 %v3541
      %v4317 = vpop.f32.mrb[0].mxu0
      %v4318 = vadd.f32 %v3965, %v4317
      %v4319 = vpop.f32.mrb[0].mxu0
      %v4320 = vadd.f32 %v3967, %v4319
      %v4321 = vpop.f32.mrb[0].mxu0
      %v4322 = vadd.f32 %v3969, %v4321
      %v4323 = vpop.f32.mrb[0].mxu0
      %v4324 = vadd.f32 %v3971, %v4323
      %4325 = vmatprep.mubr.bf16.mxu0 %v3544
      %4326 = vmatmul.mubr.bf16.gmra.mrb[0].mxu0 %v3543
      %v4327 = vpop.f32.mrb[0].mxu0
      %v4328 = vadd.f32 %v3975, %v4327
      %v4329 = vpop.f32.mrb[0].mxu0
      %v4330 = vadd.f32 %v3977, %v4329
      %v4331 = vpop.f32.mrb[0].mxu0
      %v4332 = vadd.f32 %v3979, %v4331
      %v4333 = vpop.f32.mrb[0].mxu0
      %v4334 = vadd.f32 %v3981, %v4333
      %4335 = vmatprep.mubr.bf16.mxu0 %v3546
      %4336 = vmatmul.mubr.bf16.gmra.mrb[0].mxu0 %v3545
      %v4337 = vpop.f32.mrb[0].mxu0
      %v4338 = vadd.f32 %v3985, %v4337
      %v4339 = vpop.f32.mrb[0].mxu0
      %v4340 = vadd.f32 %v3987, %v4339
      %v4341 = vpop.f32.mrb[0].mxu0
      %v4342 = vadd.f32 %v3989, %v4341
      %v4343 = vpop.f32.mrb[0].mxu0
      %v4344 = vadd.f32 %v3991, %v4343
      %4345 = vmatprep.mubr.bf16.mxu0 %v3548
      %4346 = vmatmul.mubr.bf16.gmra.mrb[0].mxu0 %v3547
      %v4347 = vpop.f32.mrb[0].mxu0
      %v4348 = vadd.f32 %v3995, %v4347
      %v4349 = vpop.f32.mrb[0].mxu0
      %v4350 = vadd.f32 %v3997, %v4349
      %v4351 = vpop.f32.mrb[0].mxu0
      %v4352 = vadd.f32 %v3999, %v4351
      %v4353 = vpop.f32.mrb[0].mxu0
      %v4354 = vadd.f32 %v4001, %v4353
      %4355 = vmatprep.mubr.bf16.mxu0 %v3550
      %4356 = vmatmul.mubr.bf16.gmra.mrb[0].mxu0 %v3549
      %v4357 = vpop.f32.mrb[0].mxu0
      %v4358 = vadd.f32 %v4005, %v4357
      %v4359 = vpop.f32.mrb[0].mxu0
      %v4360 = vadd.f32 %v4007, %v4359
      %v4361 = vpop.f32.mrb[0].mxu0
      %v4362 = vadd.f32 %v4009, %v4361
      %v4363 = vpop.f32.mrb[0].mxu0
      %v4364 = vadd.f32 %v4011, %v4363
      %4365 = vmatprep.mubr.bf16.mxu0 %v3552
      %4366 = vmatmul.mubr.bf16.gmra.mrb[0].mxu0 %v3551
      %v4367 = vpop.f32.mrb[0].mxu0
      %v4368 = vadd.f32 %v4015, %v4367
      %v4369 = vpop.f32.mrb[0].mxu0
      %v4370 = vadd.f32 %v4017, %v4369
      %v4371 = vpop.f32.mrb[0].mxu0
      %v4372 = vadd.f32 %v4019, %v4371
      %v4373 = vpop.f32.mrb[0].mxu0
      %v4374 = vadd.f32 %v4021, %v4373
      %4375 = vmatprep.mubr.bf16.mxu0 %v3554
      %4376 = vmatmul.mubr.bf16.gmra.mrb[0].mxu0 %v3553
      %v4377 = vpop.f32.mrb[0].mxu0
      %v4378 = vadd.f32 %v4025, %v4377
      %v4379 = vpop.f32.mrb[0].mxu0
      %v4380 = vadd.f32 %v4027, %v4379
      %v4381 = vpop.f32.mrb[0].mxu0
      %v4382 = vadd.f32 %v4029, %v4381
      %v4383 = vpop.f32.mrb[0].mxu0
      %v4384 = vadd.f32 %v4031, %v4383
      %4385 = vmatprep.mubr.bf16.mxu0 %v3556
      %4386 = vmatmul.mubr.bf16.gmra.mrb[0].mxu0 %v3555
      %v4387 = vpop.f32.mrb[0].mxu0
      %v4388 = vadd.f32 %v4035, %v4387
      %v4389 = vpop.f32.mrb[0].mxu0
      %v4390 = vadd.f32 %v4037, %v4389
      %v4391 = vpop.f32.mrb[0].mxu0
      %v4392 = vadd.f32 %v4039, %v4391
      %v4393 = vpop.f32.mrb[0].mxu0
      %v4394 = vadd.f32 %v4041, %v4393
      %4395 = vmatprep.mubr.bf16.mxu0 %v3558
      %4396 = vmatmul.mubr.bf16.gmra.mrb[0].mxu0 %v3557
      %v4397 = vpop.f32.mrb[0].mxu0
      %v4398 = vadd.f32 %v4045, %v4397
      %v4399 = vpop.f32.mrb[0].mxu0
      %v4400 = vadd.f32 %v4047, %v4399
      %v4401 = vpop.f32.mrb[0].mxu0
      %v4402 = vadd.f32 %v4049, %v4401
      %v4403 = vpop.f32.mrb[0].mxu0
      %v4404 = vadd.f32 %v4051, %v4403
      %4405 = vdwg.mxu0
      %s4406 = scalar_lea.vmem %s3, 512
      %v4407 = vld [vmem:[%s4406] sm:$0xff]
      %v4408 = vld [vmem:[%s4406 + $0x8] sm:$0xff]
      %v4409 = vld [vmem:[%s4406 + $0x10] sm:$0xff]
      %v4410 = vld [vmem:[%s4406 + $0x18] sm:$0xff]
      %v4411 = vld [vmem:[%s4406 + $0x20] sm:$0xff]
      %v4412 = vld [vmem:[%s4406 + $0x28] sm:$0xff]
      %v4413 = vld [vmem:[%s4406 + $0x30] sm:$0xff]
      %v4414 = vld [vmem:[%s4406 + $0x38] sm:$0xff]
      %v4415 = vld [vmem:[%s4406 + $0x40] sm:$0xff]
      %v4416 = vld [vmem:[%s4406 + $0x48] sm:$0xff]
      %v4417 = vld [vmem:[%s4406 + $0x50] sm:$0xff]
      %v4418 = vld [vmem:[%s4406 + $0x58] sm:$0xff]
      %v4419 = vld [vmem:[%s4406 + $0x60] sm:$0xff]
      %v4420 = vld [vmem:[%s4406 + $0x68] sm:$0xff]
      %v4421 = vld [vmem:[%s4406 + $0x70] sm:$0xff]
      %v4422 = vld [vmem:[%s4406 + $0x78] sm:$0xff]
      %v4423 = vld [vmem:[%s4406 + $0x80] sm:$0xff]
      %v4424 = vld [vmem:[%s4406 + $0x88] sm:$0xff]
      %v4425 = vld [vmem:[%s4406 + $0x90] sm:$0xff]
      %v4426 = vld [vmem:[%s4406 + $0x98] sm:$0xff]
      %v4427 = vld [vmem:[%s4406 + $0xa0] sm:$0xff]
      %v4428 = vld [vmem:[%s4406 + $0xa8] sm:$0xff]
      %v4429 = vld [vmem:[%s4406 + $0xb0] sm:$0xff]
      %v4430 = vld [vmem:[%s4406 + $0xb8] sm:$0xff]
      %v4431 = vld [vmem:[%s4406 + $0xc0] sm:$0xff]
      %v4432 = vld [vmem:[%s4406 + $0xc8] sm:$0xff]
      %v4433 = vld [vmem:[%s4406 + $0xd0] sm:$0xff]
      %v4434 = vld [vmem:[%s4406 + $0xd8] sm:$0xff]
      %v4435 = vld [vmem:[%s4406 + $0xe0] sm:$0xff]
      %v4436 = vld [vmem:[%s4406 + $0xe8] sm:$0xff]
      %v4437 = vld [vmem:[%s4406 + $0xf0] sm:$0xff]
      %v4438 = vld [vmem:[%s4406 + $0xf8] sm:$0xff]
      %v4471 = vunpack.c.l.b16 %v4407
      %v4472 = vunpack.c.h.b16 %v4407
      %v4473 = vunpack.c.l.b16 %v4408
      %v4474 = vunpack.c.h.b16 %v4408
      %v4475 = vunpack.c.l.b16 %v4409
      %v4476 = vunpack.c.h.b16 %v4409
      %v4477 = vunpack.c.l.b16 %v4410
      %v4478 = vunpack.c.h.b16 %v4410
      %v4479 = vunpack.c.l.b16 %v4411
      %v4480 = vunpack.c.h.b16 %v4411
      %v4481 = vunpack.c.l.b16 %v4412
      %v4482 = vunpack.c.h.b16 %v4412
      %v4483 = vunpack.c.l.b16 %v4413
      %v4484 = vunpack.c.h.b16 %v4413
      %v4485 = vunpack.c.l.b16 %v4414
      %v4486 = vunpack.c.h.b16 %v4414
      %v4487 = vunpack.c.l.b16 %v4415
      %v4488 = vunpack.c.h.b16 %v4415
      %v4489 = vunpack.c.l.b16 %v4416
      %v4490 = vunpack.c.h.b16 %v4416
      %v4491 = vunpack.c.l.b16 %v4417
      %v4492 = vunpack.c.h.b16 %v4417
      %v4493 = vunpack.c.l.b16 %v4418
      %v4494 = vunpack.c.h.b16 %v4418
      %v4495 = vunpack.c.l.b16 %v4419
      %v4496 = vunpack.c.h.b16 %v4419
      %v4497 = vunpack.c.l.b16 %v4420
      %v4498 = vunpack.c.h.b16 %v4420
      %v4499 = vunpack.c.l.b16 %v4421
      %v4500 = vunpack.c.h.b16 %v4421
      %v4501 = vunpack.c.l.b16 %v4422
      %v4502 = vunpack.c.h.b16 %v4422
      %v4503 = vunpack.c.l.b16 %v4423
      %v4504 = vunpack.c.h.b16 %v4423
      %v4505 = vunpack.c.l.b16 %v4424
      %v4506 = vunpack.c.h.b16 %v4424
      %v4507 = vunpack.c.l.b16 %v4425
      %v4508 = vunpack.c.h.b16 %v4425
      %v4509 = vunpack.c.l.b16 %v4426
      %v4510 = vunpack.c.h.b16 %v4426
      %v4511 = vunpack.c.l.b16 %v4427
      %v4512 = vunpack.c.h.b16 %v4427
      %v4513 = vunpack.c.l.b16 %v4428
      %v4514 = vunpack.c.h.b16 %v4428
      %v4515 = vunpack.c.l.b16 %v4429
      %v4516 = vunpack.c.h.b16 %v4429
      %v4517 = vunpack.c.l.b16 %v4430
      %v4518 = vunpack.c.h.b16 %v4430
      %v4519 = vunpack.c.l.b16 %v4431
      %v4520 = vunpack.c.h.b16 %v4431
      %v4521 = vunpack.c.l.b16 %v4432
      %v4522 = vunpack.c.h.b16 %v4432
      %v4523 = vunpack.c.l.b16 %v4433
      %v4524 = vunpack.c.h.b16 %v4433
      %v4525 = vunpack.c.l.b16 %v4434
      %v4526 = vunpack.c.h.b16 %v4434
      %v4527 = vunpack.c.l.b16 %v4435
      %v4528 = vunpack.c.h.b16 %v4435
      %v4529 = vunpack.c.l.b16 %v4436
      %v4530 = vunpack.c.h.b16 %v4436
      %v4531 = vunpack.c.l.b16 %v4437
      %v4532 = vunpack.c.h.b16 %v4437
      %v4533 = vunpack.c.l.b16 %v4438
      %v4534 = vunpack.c.h.b16 %v4438
      %v4535 = vpack.c.b16 %v4473, %v4471
      %v4536 = vpack.c.b16 %v4474, %v4472
      %v4537 = vpack.c.b16 %v4477, %v4475
      %v4538 = vpack.c.b16 %v4478, %v4476
      %v4539 = vpack.c.b16 %v4481, %v4479
      %v4540 = vpack.c.b16 %v4482, %v4480
      %v4541 = vpack.c.b16 %v4485, %v4483
      %v4542 = vpack.c.b16 %v4486, %v4484
      %v4543 = vpack.c.b16 %v4489, %v4487
      %v4544 = vpack.c.b16 %v4490, %v4488
      %v4545 = vpack.c.b16 %v4493, %v4491
      %v4546 = vpack.c.b16 %v4494, %v4492
      %v4547 = vpack.c.b16 %v4497, %v4495
      %v4548 = vpack.c.b16 %v4498, %v4496
      %v4549 = vpack.c.b16 %v4501, %v4499
      %v4550 = vpack.c.b16 %v4502, %v4500
      %v4551 = vpack.c.b16 %v4505, %v4503
      %v4552 = vpack.c.b16 %v4506, %v4504
      %v4553 = vpack.c.b16 %v4509, %v4507
      %v4554 = vpack.c.b16 %v4510, %v4508
      %v4555 = vpack.c.b16 %v4513, %v4511
      %v4556 = vpack.c.b16 %v4514, %v4512
      %v4557 = vpack.c.b16 %v4517, %v4515
      %v4558 = vpack.c.b16 %v4518, %v4516
      %v4559 = vpack.c.b16 %v4521, %v4519
      %v4560 = vpack.c.b16 %v4522, %v4520
      %v4561 = vpack.c.b16 %v4525, %v4523
      %v4562 = vpack.c.b16 %v4526, %v4524
      %v4563 = vpack.c.b16 %v4529, %v4527
      %v4564 = vpack.c.b16 %v4530, %v4528
      %v4565 = vpack.c.b16 %v4533, %v4531
      %v4566 = vpack.c.b16 %v4534, %v4532
      %4599 = vmatprep.subr.bf16.mxu0 %v4536
      %4600 = vmatpush1.bf16.msra.mxu0 %v4535
      %4601 = vmatprep.subr.bf16.mxu0 %v4538
      %4602 = vmatpush1.bf16.msra.mxu0 %v4537
      %4603 = vmatprep.subr.bf16.mxu0 %v4540
      %4604 = vmatpush1.bf16.msra.mxu0 %v4539
      %4605 = vmatprep.subr.bf16.mxu0 %v4542
      %4606 = vmatpush1.bf16.msra.mxu0 %v4541
      %4607 = vmatprep.subr.bf16.mxu0 %v4544
      %4608 = vmatpush1.bf16.msra.mxu0 %v4543
      %4609 = vmatprep.subr.bf16.mxu0 %v4546
      %4610 = vmatpush1.bf16.msra.mxu0 %v4545
      %4611 = vmatprep.subr.bf16.mxu0 %v4548
      %4612 = vmatpush1.bf16.msra.mxu0 %v4547
      %4613 = vmatprep.subr.bf16.mxu0 %v4550
      %4614 = vmatpush1.bf16.msra.mxu0 %v4549
      %4615 = vmatprep.subr.bf16.mxu0 %v4552
      %4616 = vmatpush1.bf16.msra.mxu0 %v4551
      %4617 = vmatprep.subr.bf16.mxu0 %v4554
      %4618 = vmatpush1.bf16.msra.mxu0 %v4553
      %4619 = vmatprep.subr.bf16.mxu0 %v4556
      %4620 = vmatpush1.bf16.msra.mxu0 %v4555
      %4621 = vmatprep.subr.bf16.mxu0 %v4558
      %4622 = vmatpush1.bf16.msra.mxu0 %v4557
      %4623 = vmatprep.subr.bf16.mxu0 %v4560
      %4624 = vmatpush1.bf16.msra.mxu0 %v4559
      %4625 = vmatprep.subr.bf16.mxu0 %v4562
      %4626 = vmatpush1.bf16.msra.mxu0 %v4561
      %4627 = vmatprep.subr.bf16.mxu0 %v4564
      %4628 = vmatpush1.bf16.msra.mxu0 %v4563
      %4629 = vmatprep.subr.bf16.mxu0 %v4566
      %4630 = vmatpush1.bf16.msra.mxu0 %v4565
      %4631 = vmatprep.mubr.bf16.mxu0 %v3600
      %4632 = vmatmul.mubr.bf16.gmra.mrb[0].mxu0 %v3599
      %v4633 = vpop.f32.mrb[0].mxu0
      %v4634 = vadd.f32 0.0, %v4633
      %v4635 = vpop.f32.mrb[0].mxu0
      %v4636 = vadd.f32 0.0, %v4635
      %v4637 = vpop.f32.mrb[0].mxu0
      %v4638 = vadd.f32 0.0, %v4637
      %v4639 = vpop.f32.mrb[0].mxu0
      %v4640 = vadd.f32 0.0, %v4639
      %4641 = vmatprep.mubr.bf16.mxu0 %v3602
      %4642 = vmatmul.mubr.bf16.gmra.mrb[0].mxu0 %v3601
      %v4643 = vpop.f32.mrb[0].mxu0
      %v4644 = vadd.f32 0.0, %v4643
      %v4645 = vpop.f32.mrb[0].mxu0
      %v4646 = vadd.f32 0.0, %v4645
      %v4647 = vpop.f32.mrb[0].mxu0
      %v4648 = vadd.f32 0.0, %v4647
      %v4649 = vpop.f32.mrb[0].mxu0
      %v4650 = vadd.f32 0.0, %v4649
      %4651 = vmatprep.mubr.bf16.mxu0 %v3604
      %4652 = vmatmul.mubr.bf16.gmra.mrb[0].mxu0 %v3603
      %v4653 = vpop.f32.mrb[0].mxu0
      %v4654 = vadd.f32 0.0, %v4653
      %v4655 = vpop.f32.mrb[0].mxu0
      %v4656 = vadd.f32 0.0, %v4655
      %v4657 = vpop.f32.mrb[0].mxu0
      %v4658 = vadd.f32 0.0, %v4657
      %v4659 = vpop.f32.mrb[0].mxu0
      %v4660 = vadd.f32 0.0, %v4659
      %4661 = vmatprep.mubr.bf16.mxu0 %v3606
      %4662 = vmatmul.mubr.bf16.gmra.mrb[0].mxu0 %v3605
      %v4663 = vpop.f32.mrb[0].mxu0
      %v4664 = vadd.f32 0.0, %v4663
      %v4665 = vpop.f32.mrb[0].mxu0
      %v4666 = vadd.f32 0.0, %v4665
      %v4667 = vpop.f32.mrb[0].mxu0
      %v4668 = vadd.f32 0.0, %v4667
      %v4669 = vpop.f32.mrb[0].mxu0
      %v4670 = vadd.f32 0.0, %v4669
      %4671 = vmatprep.mubr.bf16.mxu0 %v3608
      %4672 = vmatmul.mubr.bf16.gmra.mrb[0].mxu0 %v3607
      %v4673 = vpop.f32.mrb[0].mxu0
      %v4674 = vadd.f32 0.0, %v4673
      %v4675 = vpop.f32.mrb[0].mxu0
      %v4676 = vadd.f32 0.0, %v4675
      %v4677 = vpop.f32.mrb[0].mxu0
      %v4678 = vadd.f32 0.0, %v4677
      %v4679 = vpop.f32.mrb[0].mxu0
      %v4680 = vadd.f32 0.0, %v4679
      %4681 = vmatprep.mubr.bf16.mxu0 %v3610
      %4682 = vmatmul.mubr.bf16.gmra.mrb[0].mxu0 %v3609
      %v4683 = vpop.f32.mrb[0].mxu0
      %v4684 = vadd.f32 0.0, %v4683
      %v4685 = vpop.f32.mrb[0].mxu0
      %v4686 = vadd.f32 0.0, %v4685
      %v4687 = vpop.f32.mrb[0].mxu0
      %v4688 = vadd.f32 0.0, %v4687
      %v4689 = vpop.f32.mrb[0].mxu0
      %v4690 = vadd.f32 0.0, %v4689
      %4691 = vmatprep.mubr.bf16.mxu0 %v3612
      %4692 = vmatmul.mubr.bf16.gmra.mrb[0].mxu0 %v3611
      %v4693 = vpop.f32.mrb[0].mxu0
      %v4694 = vadd.f32 0.0, %v4693
      %v4695 = vpop.f32.mrb[0].mxu0
      %v4696 = vadd.f32 0.0, %v4695
      %v4697 = vpop.f32.mrb[0].mxu0
      %v4698 = vadd.f32 0.0, %v4697
      %v4699 = vpop.f32.mrb[0].mxu0
      %v4700 = vadd.f32 0.0, %v4699
      %4701 = vmatprep.mubr.bf16.mxu0 %v3614
      %4702 = vmatmul.mubr.bf16.gmra.mrb[0].mxu0 %v3613
      %v4703 = vpop.f32.mrb[0].mxu0
      %v4704 = vadd.f32 0.0, %v4703
      %v4705 = vpop.f32.mrb[0].mxu0
      %v4706 = vadd.f32 0.0, %v4705
      %v4707 = vpop.f32.mrb[0].mxu0
      %v4708 = vadd.f32 0.0, %v4707
      %v4709 = vpop.f32.mrb[0].mxu0
      %v4710 = vadd.f32 0.0, %v4709
      %4711 = vmatprep.mubr.bf16.mxu0 %v3616
      %4712 = vmatmul.mubr.bf16.gmra.mrb[0].mxu0 %v3615
      %v4713 = vpop.f32.mrb[0].mxu0
      %v4714 = vadd.f32 0.0, %v4713
      %v4715 = vpop.f32.mrb[0].mxu0
      %v4716 = vadd.f32 0.0, %v4715
      %v4717 = vpop.f32.mrb[0].mxu0
      %v4718 = vadd.f32 0.0, %v4717
      %v4719 = vpop.f32.mrb[0].mxu0
      %v4720 = vadd.f32 0.0, %v4719
      %4721 = vmatprep.mubr.bf16.mxu0 %v3618
      %4722 = vmatmul.mubr.bf16.gmra.mrb[0].mxu0 %v3617
      %v4723 = vpop.f32.mrb[0].mxu0
      %v4724 = vadd.f32 0.0, %v4723
      %v4725 = vpop.f32.mrb[0].mxu0
      %v4726 = vadd.f32 0.0, %v4725
      %v4727 = vpop.f32.mrb[0].mxu0
      %v4728 = vadd.f32 0.0, %v4727
      %v4729 = vpop.f32.mrb[0].mxu0
      %v4730 = vadd.f32 0.0, %v4729
      %4731 = vmatprep.mubr.bf16.mxu0 %v3620
      %4732 = vmatmul.mubr.bf16.gmra.mrb[0].mxu0 %v3619
      %v4733 = vpop.f32.mrb[0].mxu0
      %v4734 = vadd.f32 0.0, %v4733
      %v4735 = vpop.f32.mrb[0].mxu0
      %v4736 = vadd.f32 0.0, %v4735
      %v4737 = vpop.f32.mrb[0].mxu0
      %v4738 = vadd.f32 0.0, %v4737
      %v4739 = vpop.f32.mrb[0].mxu0
      %v4740 = vadd.f32 0.0, %v4739
      %4741 = vmatprep.mubr.bf16.mxu0 %v3622
      %4742 = vmatmul.mubr.bf16.gmra.mrb[0].mxu0 %v3621
      %v4743 = vpop.f32.mrb[0].mxu0
      %v4744 = vadd.f32 0.0, %v4743
      %v4745 = vpop.f32.mrb[0].mxu0
      %v4746 = vadd.f32 0.0, %v4745
      %v4747 = vpop.f32.mrb[0].mxu0
      %v4748 = vadd.f32 0.0, %v4747
      %v4749 = vpop.f32.mrb[0].mxu0
      %v4750 = vadd.f32 0.0, %v4749
      %4751 = vmatprep.mubr.bf16.mxu0 %v3624
      %4752 = vmatmul.mubr.bf16.gmra.mrb[0].mxu0 %v3623
      %v4753 = vpop.f32.mrb[0].mxu0
      %v4754 = vadd.f32 0.0, %v4753
      %v4755 = vpop.f32.mrb[0].mxu0
      %v4756 = vadd.f32 0.0, %v4755
      %v4757 = vpop.f32.mrb[0].mxu0
      %v4758 = vadd.f32 0.0, %v4757
      %v4759 = vpop.f32.mrb[0].mxu0
      %v4760 = vadd.f32 0.0, %v4759
      %4761 = vmatprep.mubr.bf16.mxu0 %v3626
      %4762 = vmatmul.mubr.bf16.gmra.mrb[0].mxu0 %v3625
      %v4763 = vpop.f32.mrb[0].mxu0
      %v4764 = vadd.f32 0.0, %v4763
      %v4765 = vpop.f32.mrb[0].mxu0
      %v4766 = vadd.f32 0.0, %v4765
      %v4767 = vpop.f32.mrb[0].mxu0
      %v4768 = vadd.f32 0.0, %v4767
      %v4769 = vpop.f32.mrb[0].mxu0
      %v4770 = vadd.f32 0.0, %v4769
      %4771 = vmatprep.mubr.bf16.mxu0 %v3628
      %4772 = vmatmul.mubr.bf16.gmra.mrb[0].mxu0 %v3627
      %v4773 = vpop.f32.mrb[0].mxu0
      %v4774 = vadd.f32 0.0, %v4773
      %v4775 = vpop.f32.mrb[0].mxu0
      %v4776 = vadd.f32 0.0, %v4775
      %v4777 = vpop.f32.mrb[0].mxu0
      %v4778 = vadd.f32 0.0, %v4777
      %v4779 = vpop.f32.mrb[0].mxu0
      %v4780 = vadd.f32 0.0, %v4779
      %4781 = vmatprep.mubr.bf16.mxu0 %v3630
      %4782 = vmatmul.mubr.bf16.gmra.mrb[0].mxu0 %v3629
      %v4783 = vpop.f32.mrb[0].mxu0
      %v4784 = vadd.f32 0.0, %v4783
      %v4785 = vpop.f32.mrb[0].mxu0
      %v4786 = vadd.f32 0.0, %v4785
      %v4787 = vpop.f32.mrb[0].mxu0
      %v4788 = vadd.f32 0.0, %v4787
      %v4789 = vpop.f32.mrb[0].mxu0
      %v4790 = vadd.f32 0.0, %v4789
      %4791 = vdwg.mxu0
      %v4792 = vadd.f32 %v4248, %v4634
      %v4793 = vadd.f32 %v4250, %v4636
      %v4794 = vadd.f32 %v4252, %v4638
      %v4795 = vadd.f32 %v4254, %v4640
      %v4796 = vadd.f32 %v4258, %v4644
      %v4797 = vadd.f32 %v4260, %v4646
      %v4798 = vadd.f32 %v4262, %v4648
      %v4799 = vadd.f32 %v4264, %v4650
      %v4800 = vadd.f32 %v4268, %v4654
      %v4801 = vadd.f32 %v4270, %v4656
      %v4802 = vadd.f32 %v4272, %v4658
      %v4803 = vadd.f32 %v4274, %v4660
      %v4804 = vadd.f32 %v4278, %v4664
      %v4805 = vadd.f32 %v4280, %v4666
      %v4806 = vadd.f32 %v4282, %v4668
      %v4807 = vadd.f32 %v4284, %v4670
      %v4808 = vadd.f32 %v4288, %v4674
      %v4809 = vadd.f32 %v4290, %v4676
      %v4810 = vadd.f32 %v4292, %v4678
      %v4811 = vadd.f32 %v4294, %v4680
      %v4812 = vadd.f32 %v4298, %v4684
      %v4813 = vadd.f32 %v4300, %v4686
      %v4814 = vadd.f32 %v4302, %v4688
      %v4815 = vadd.f32 %v4304, %v4690
      %v4816 = vadd.f32 %v4308, %v4694
      %v4817 = vadd.f32 %v4310, %v4696
      %v4818 = vadd.f32 %v4312, %v4698
      %v4819 = vadd.f32 %v4314, %v4700
      %v4820 = vadd.f32 %v4318, %v4704
      %v4821 = vadd.f32 %v4320, %v4706
      %v4822 = vadd.f32 %v4322, %v4708
      %v4823 = vadd.f32 %v4324, %v4710
      %v4824 = vadd.f32 %v4328, %v4714
      %v4825 = vadd.f32 %v4330, %v4716
      %v4826 = vadd.f32 %v4332, %v4718
      %v4827 = vadd.f32 %v4334, %v4720
      %v4828 = vadd.f32 %v4338, %v4724
      %v4829 = vadd.f32 %v4340, %v4726
      %v4830 = vadd.f32 %v4342, %v4728
      %v4831 = vadd.f32 %v4344, %v4730
      %v4832 = vadd.f32 %v4348, %v4734
      %v4833 = vadd.f32 %v4350, %v4736
      %v4834 = vadd.f32 %v4352, %v4738
      %v4835 = vadd.f32 %v4354, %v4740
      %v4836 = vadd.f32 %v4358, %v4744
      %v4837 = vadd.f32 %v4360, %v4746
      %v4838 = vadd.f32 %v4362, %v4748
      %v4839 = vadd.f32 %v4364, %v4750
      %v4840 = vadd.f32 %v4368, %v4754
      %v4841 = vadd.f32 %v4370, %v4756
      %v4842 = vadd.f32 %v4372, %v4758
      %v4843 = vadd.f32 %v4374, %v4760
      %v4844 = vadd.f32 %v4378, %v4764
      %v4845 = vadd.f32 %v4380, %v4766
      %v4846 = vadd.f32 %v4382, %v4768
      %v4847 = vadd.f32 %v4384, %v4770
      %v4848 = vadd.f32 %v4388, %v4774
      %v4849 = vadd.f32 %v4390, %v4776
      %v4850 = vadd.f32 %v4392, %v4778
      %v4851 = vadd.f32 %v4394, %v4780
      %v4852 = vadd.f32 %v4398, %v4784
      %v4853 = vadd.f32 %v4400, %v4786
      %v4854 = vadd.f32 %v4402, %v4788
      %v4855 = vadd.f32 %v4404, %v4790
      %s4856 = scalar_lea.vmem %s3, 768
      %v4857 = vld [vmem:[%s4856] sm:$0xff]
      %v4858 = vld [vmem:[%s4856 + $0x8] sm:$0xff]
      %v4859 = vld [vmem:[%s4856 + $0x10] sm:$0xff]
      %v4860 = vld [vmem:[%s4856 + $0x18] sm:$0xff]
      %v4861 = vld [vmem:[%s4856 + $0x20] sm:$0xff]
      %v4862 = vld [vmem:[%s4856 + $0x28] sm:$0xff]
      %v4863 = vld [vmem:[%s4856 + $0x30] sm:$0xff]
      %v4864 = vld [vmem:[%s4856 + $0x38] sm:$0xff]
      %v4865 = vld [vmem:[%s4856 + $0x40] sm:$0xff]
      %v4866 = vld [vmem:[%s4856 + $0x48] sm:$0xff]
      %v4867 = vld [vmem:[%s4856 + $0x50] sm:$0xff]
      %v4868 = vld [vmem:[%s4856 + $0x58] sm:$0xff]
      %v4869 = vld [vmem:[%s4856 + $0x60] sm:$0xff]
      %v4870 = vld [vmem:[%s4856 + $0x68] sm:$0xff]
      %v4871 = vld [vmem:[%s4856 + $0x70] sm:$0xff]
      %v4872 = vld [vmem:[%s4856 + $0x78] sm:$0xff]
      %v4873 = vld [vmem:[%s4856 + $0x80] sm:$0xff]
      %v4874 = vld [vmem:[%s4856 + $0x88] sm:$0xff]
      %v4875 = vld [vmem:[%s4856 + $0x90] sm:$0xff]
      %v4876 = vld [vmem:[%s4856 + $0x98] sm:$0xff]
      %v4877 = vld [vmem:[%s4856 + $0xa0] sm:$0xff]
      %v4878 = vld [vmem:[%s4856 + $0xa8] sm:$0xff]
      %v4879 = vld [vmem:[%s4856 + $0xb0] sm:$0xff]
      %v4880 = vld [vmem:[%s4856 + $0xb8] sm:$0xff]
      %v4881 = vld [vmem:[%s4856 + $0xc0] sm:$0xff]
      %v4882 = vld [vmem:[%s4856 + $0xc8] sm:$0xff]
      %v4883 = vld [vmem:[%s4856 + $0xd0] sm:$0xff]
      %v4884 = vld [vmem:[%s4856 + $0xd8] sm:$0xff]
      %v4885 = vld [vmem:[%s4856 + $0xe0] sm:$0xff]
      %v4886 = vld [vmem:[%s4856 + $0xe8] sm:$0xff]
      %v4887 = vld [vmem:[%s4856 + $0xf0] sm:$0xff]
      %v4888 = vld [vmem:[%s4856 + $0xf8] sm:$0xff]
      %v4921 = vunpack.c.l.b16 %v4857
      %v4922 = vunpack.c.h.b16 %v4857
      %v4923 = vunpack.c.l.b16 %v4858
      %v4924 = vunpack.c.h.b16 %v4858
      %v4925 = vunpack.c.l.b16 %v4859
      %v4926 = vunpack.c.h.b16 %v4859
      %v4927 = vunpack.c.l.b16 %v4860
      %v4928 = vunpack.c.h.b16 %v4860
      %v4929 = vunpack.c.l.b16 %v4861
      %v4930 = vunpack.c.h.b16 %v4861
      %v4931 = vunpack.c.l.b16 %v4862
      %v4932 = vunpack.c.h.b16 %v4862
      %v4933 = vunpack.c.l.b16 %v4863
      %v4934 = vunpack.c.h.b16 %v4863
      %v4935 = vunpack.c.l.b16 %v4864
      %v4936 = vunpack.c.h.b16 %v4864
      %v4937 = vunpack.c.l.b16 %v4865
      %v4938 = vunpack.c.h.b16 %v4865
      %v4939 = vunpack.c.l.b16 %v4866
      %v4940 = vunpack.c.h.b16 %v4866
      %v4941 = vunpack.c.l.b16 %v4867
      %v4942 = vunpack.c.h.b16 %v4867
      %v4943 = vunpack.c.l.b16 %v4868
      %v4944 = vunpack.c.h.b16 %v4868
      %v4945 = vunpack.c.l.b16 %v4869
      %v4946 = vunpack.c.h.b16 %v4869
      %v4947 = vunpack.c.l.b16 %v4870
      %v4948 = vunpack.c.h.b16 %v4870
      %v4949 = vunpack.c.l.b16 %v4871
      %v4950 = vunpack.c.h.b16 %v4871
      %v4951 = vunpack.c.l.b16 %v4872
      %v4952 = vunpack.c.h.b16 %v4872
      %v4953 = vunpack.c.l.b16 %v4873
      %v4954 = vunpack.c.h.b16 %v4873
      %v4955 = vunpack.c.l.b16 %v4874
      %v4956 = vunpack.c.h.b16 %v4874
      %v4957 = vunpack.c.l.b16 %v4875
      %v4958 = vunpack.c.h.b16 %v4875
      %v4959 = vunpack.c.l.b16 %v4876
      %v4960 = vunpack.c.h.b16 %v4876
      %v4961 = vunpack.c.l.b16 %v4877
      %v4962 = vunpack.c.h.b16 %v4877
      %v4963 = vunpack.c.l.b16 %v4878
      %v4964 = vunpack.c.h.b16 %v4878
      %v4965 = vunpack.c.l.b16 %v4879
      %v4966 = vunpack.c.h.b16 %v4879
      %v4967 = vunpack.c.l.b16 %v4880
      %v4968 = vunpack.c.h.b16 %v4880
      %v4969 = vunpack.c.l.b16 %v4881
      %v4970 = vunpack.c.h.b16 %v4881
      %v4971 = vunpack.c.l.b16 %v4882
      %v4972 = vunpack.c.h.b16 %v4882
      %v4973 = vunpack.c.l.b16 %v4883
      %v4974 = vunpack.c.h.b16 %v4883
      %v4975 = vunpack.c.l.b16 %v4884
      %v4976 = vunpack.c.h.b16 %v4884
      %v4977 = vunpack.c.l.b16 %v4885
      %v4978 = vunpack.c.h.b16 %v4885
      %v4979 = vunpack.c.l.b16 %v4886
      %v4980 = vunpack.c.h.b16 %v4886
      %v4981 = vunpack.c.l.b16 %v4887
      %v4982 = vunpack.c.h.b16 %v4887
      %v4983 = vunpack.c.l.b16 %v4888
      %v4984 = vunpack.c.h.b16 %v4888
      %v4985 = vpack.c.b16 %v4923, %v4921
      %v4986 = vpack.c.b16 %v4924, %v4922
      %v4987 = vpack.c.b16 %v4927, %v4925
      %v4988 = vpack.c.b16 %v4928, %v4926
      %v4989 = vpack.c.b16 %v4931, %v4929
      %v4990 = vpack.c.b16 %v4932, %v4930
      %v4991 = vpack.c.b16 %v4935, %v4933
      %v4992 = vpack.c.b16 %v4936, %v4934
      %v4993 = vpack.c.b16 %v4939, %v4937
      %v4994 = vpack.c.b16 %v4940, %v4938
      %v4995 = vpack.c.b16 %v4943, %v4941
      %v4996 = vpack.c.b16 %v4944, %v4942
      %v4997 = vpack.c.b16 %v4947, %v4945
      %v4998 = vpack.c.b16 %v4948, %v4946
      %v4999 = vpack.c.b16 %v4951, %v4949
      %v5000 = vpack.c.b16 %v4952, %v4950
      %v5001 = vpack.c.b16 %v4955, %v4953
      %v5002 = vpack.c.b16 %v4956, %v4954
      %v5003 = vpack.c.b16 %v4959, %v4957
      %v5004 = vpack.c.b16 %v4960, %v4958
      %v5005 = vpack.c.b16 %v4963, %v4961
      %v5006 = vpack.c.b16 %v4964, %v4962
      %v5007 = vpack.c.b16 %v4967, %v4965
      %v5008 = vpack.c.b16 %v4968, %v4966
      %v5009 = vpack.c.b16 %v4971, %v4969
      %v5010 = vpack.c.b16 %v4972, %v4970
      %v5011 = vpack.c.b16 %v4975, %v4973
      %v5012 = vpack.c.b16 %v4976, %v4974
      %v5013 = vpack.c.b16 %v4979, %v4977
      %v5014 = vpack.c.b16 %v4980, %v4978
      %v5015 = vpack.c.b16 %v4983, %v4981
      %v5016 = vpack.c.b16 %v4984, %v4982
      %5049 = vmatprep.subr.bf16.mxu0 %v4986
      %5050 = vmatpush1.bf16.msra.mxu0 %v4985
      %5051 = vmatprep.subr.bf16.mxu0 %v4988
      %5052 = vmatpush1.bf16.msra.mxu0 %v4987
      %5053 = vmatprep.subr.bf16.mxu0 %v4990
      %5054 = vmatpush1.bf16.msra.mxu0 %v4989
      %5055 = vmatprep.subr.bf16.mxu0 %v4992
      %5056 = vmatpush1.bf16.msra.mxu0 %v4991
      %5057 = vmatprep.subr.bf16.mxu0 %v4994
      %5058 = vmatpush1.bf16.msra.mxu0 %v4993
      %5059 = vmatprep.subr.bf16.mxu0 %v4996
      %5060 = vmatpush1.bf16.msra.mxu0 %v4995
      %5061 = vmatprep.subr.bf16.mxu0 %v4998
      %5062 = vmatpush1.bf16.msra.mxu0 %v4997
      %5063 = vmatprep.subr.bf16.mxu0 %v5000
      %5064 = vmatpush1.bf16.msra.mxu0 %v4999
      %5065 = vmatprep.subr.bf16.mxu0 %v5002
      %5066 = vmatpush1.bf16.msra.mxu0 %v5001
      %5067 = vmatprep.subr.bf16.mxu0 %v5004
      %5068 = vmatpush1.bf16.msra.mxu0 %v5003
      %5069 = vmatprep.subr.bf16.mxu0 %v5006
      %5070 = vmatpush1.bf16.msra.mxu0 %v5005
      %5071 = vmatprep.subr.bf16.mxu0 %v5008
      %5072 = vmatpush1.bf16.msra.mxu0 %v5007
      %5073 = vmatprep.subr.bf16.mxu0 %v5010
      %5074 = vmatpush1.bf16.msra.mxu0 %v5009
      %5075 = vmatprep.subr.bf16.mxu0 %v5012
      %5076 = vmatpush1.bf16.msra.mxu0 %v5011
      %5077 = vmatprep.subr.bf16.mxu0 %v5014
      %5078 = vmatpush1.bf16.msra.mxu0 %v5013
      %5079 = vmatprep.subr.bf16.mxu0 %v5016
      %5080 = vmatpush1.bf16.msra.mxu0 %v5015
      %5081 = vmatprep.mubr.bf16.mxu0 %v3530
      %5082 = vmatmul.mubr.bf16.gmra.mrb[0].mxu0 %v3529
      %v5083 = vpop.f32.mrb[0].mxu0
      %v5084 = vadd.f32 0.0, %v5083
      %v5085 = vpop.f32.mrb[0].mxu0
      %v5086 = vadd.f32 0.0, %v5085
      %v5087 = vpop.f32.mrb[0].mxu0
      %v5088 = vadd.f32 0.0, %v5087
      %v5089 = vpop.f32.mrb[0].mxu0
      %v5090 = vadd.f32 0.0, %v5089
      %5091 = vmatprep.mubr.bf16.mxu0 %v3532
      %5092 = vmatmul.mubr.bf16.gmra.mrb[0].mxu0 %v3531
      %v5093 = vpop.f32.mrb[0].mxu0
      %v5094 = vadd.f32 0.0, %v5093
      %v5095 = vpop.f32.mrb[0].mxu0
      %v5096 = vadd.f32 0.0, %v5095
      %v5097 = vpop.f32.mrb[0].mxu0
      %v5098 = vadd.f32 0.0, %v5097
      %v5099 = vpop.f32.mrb[0].mxu0
      %v5100 = vadd.f32 0.0, %v5099
      %5101 = vmatprep.mubr.bf16.mxu0 %v3534
      %5102 = vmatmul.mubr.bf16.gmra.mrb[0].mxu0 %v3533
      %v5103 = vpop.f32.mrb[0].mxu0
      %v5104 = vadd.f32 0.0, %v5103
      %v5105 = vpop.f32.mrb[0].mxu0
      %v5106 = vadd.f32 0.0, %v5105
      %v5107 = vpop.f32.mrb[0].mxu0
      %v5108 = vadd.f32 0.0, %v5107
      %v5109 = vpop.f32.mrb[0].mxu0
      %v5110 = vadd.f32 0.0, %v5109
      %5111 = vmatprep.mubr.bf16.mxu0 %v3536
      %5112 = vmatmul.mubr.bf16.gmra.mrb[0].mxu0 %v3535
      %v5113 = vpop.f32.mrb[0].mxu0
      %v5114 = vadd.f32 0.0, %v5113
      %v5115 = vpop.f32.mrb[0].mxu0
      %v5116 = vadd.f32 0.0, %v5115
      %v5117 = vpop.f32.mrb[0].mxu0
      %v5118 = vadd.f32 0.0, %v5117
      %v5119 = vpop.f32.mrb[0].mxu0
      %v5120 = vadd.f32 0.0, %v5119
      %5121 = vmatprep.mubr.bf16.mxu0 %v3538
      %5122 = vmatmul.mubr.bf16.gmra.mrb[0].mxu0 %v3537
      %v5123 = vpop.f32.mrb[0].mxu0
      %v5124 = vadd.f32 0.0, %v5123
      %v5125 = vpop.f32.mrb[0].mxu0
      %v5126 = vadd.f32 0.0, %v5125
      %v5127 = vpop.f32.mrb[0].mxu0
      %v5128 = vadd.f32 0.0, %v5127
      %v5129 = vpop.f32.mrb[0].mxu0
      %v5130 = vadd.f32 0.0, %v5129
      %5131 = vmatprep.mubr.bf16.mxu0 %v3540
      %5132 = vmatmul.mubr.bf16.gmra.mrb[0].mxu0 %v3539
      %v5133 = vpop.f32.mrb[0].mxu0
      %v5134 = vadd.f32 0.0, %v5133
      %v5135 = vpop.f32.mrb[0].mxu0
      %v5136 = vadd.f32 0.0, %v5135
      %v5137 = vpop.f32.mrb[0].mxu0
      %v5138 = vadd.f32 0.0, %v5137
      %v5139 = vpop.f32.mrb[0].mxu0
      %v5140 = vadd.f32 0.0, %v5139
      %5141 = vmatprep.mubr.bf16.mxu0 %v3542
      %5142 = vmatmul.mubr.bf16.gmra.mrb[0].mxu0 %v3541
      %v5143 = vpop.f32.mrb[0].mxu0
      %v5144 = vadd.f32 0.0, %v5143
      %v5145 = vpop.f32.mrb[0].mxu0
      %v5146 = vadd.f32 0.0, %v5145
      %v5147 = vpop.f32.mrb[0].mxu0
      %v5148 = vadd.f32 0.0, %v5147
      %v5149 = vpop.f32.mrb[0].mxu0
      %v5150 = vadd.f32 0.0, %v5149
      %5151 = vmatprep.mubr.bf16.mxu0 %v3544
      %5152 = vmatmul.mubr.bf16.gmra.mrb[0].mxu0 %v3543
      %v5153 = vpop.f32.mrb[0].mxu0
      %v5154 = vadd.f32 0.0, %v5153
      %v5155 = vpop.f32.mrb[0].mxu0
      %v5156 = vadd.f32 0.0, %v5155
      %v5157 = vpop.f32.mrb[0].mxu0
      %v5158 = vadd.f32 0.0, %v5157
      %v5159 = vpop.f32.mrb[0].mxu0
      %v5160 = vadd.f32 0.0, %v5159
      %5161 = vmatprep.mubr.bf16.mxu0 %v3546
      %5162 = vmatmul.mubr.bf16.gmra.mrb[0].mxu0 %v3545
      %v5163 = vpop.f32.mrb[0].mxu0
      %v5164 = vadd.f32 0.0, %v5163
      %v5165 = vpop.f32.mrb[0].mxu0
      %v5166 = vadd.f32 0.0, %v5165
      %v5167 = vpop.f32.mrb[0].mxu0
      %v5168 = vadd.f32 0.0, %v5167
      %v5169 = vpop.f32.mrb[0].mxu0
      %v5170 = vadd.f32 0.0, %v5169
      %5171 = vmatprep.mubr.bf16.mxu0 %v3548
      %5172 = vmatmul.mubr.bf16.gmra.mrb[0].mxu0 %v3547
      %v5173 = vpop.f32.mrb[0].mxu0
      %v5174 = vadd.f32 0.0, %v5173
      %v5175 = vpop.f32.mrb[0].mxu0
      %v5176 = vadd.f32 0.0, %v5175
      %v5177 = vpop.f32.mrb[0].mxu0
      %v5178 = vadd.f32 0.0, %v5177
      %v5179 = vpop.f32.mrb[0].mxu0
      %v5180 = vadd.f32 0.0, %v5179
      %5181 = vmatprep.mubr.bf16.mxu0 %v3550
      %5182 = vmatmul.mubr.bf16.gmra.mrb[0].mxu0 %v3549
      %v5183 = vpop.f32.mrb[0].mxu0
      %v5184 = vadd.f32 0.0, %v5183
      %v5185 = vpop.f32.mrb[0].mxu0
      %v5186 = vadd.f32 0.0, %v5185
      %v5187 = vpop.f32.mrb[0].mxu0
      %v5188 = vadd.f32 0.0, %v5187
      %v5189 = vpop.f32.mrb[0].mxu0
      %v5190 = vadd.f32 0.0, %v5189
      %5191 = vmatprep.mubr.bf16.mxu0 %v3552
      %5192 = vmatmul.mubr.bf16.gmra.mrb[0].mxu0 %v3551
      %v5193 = vpop.f32.mrb[0].mxu0
      %v5194 = vadd.f32 0.0, %v5193
      %v5195 = vpop.f32.mrb[0].mxu0
      %v5196 = vadd.f32 0.0, %v5195
      %v5197 = vpop.f32.mrb[0].mxu0
      %v5198 = vadd.f32 0.0, %v5197
      %v5199 = vpop.f32.mrb[0].mxu0
      %v5200 = vadd.f32 0.0, %v5199
      %5201 = vmatprep.mubr.bf16.mxu0 %v3554
      %5202 = vmatmul.mubr.bf16.gmra.mrb[0].mxu0 %v3553
      %v5203 = vpop.f32.mrb[0].mxu0
      %v5204 = vadd.f32 0.0, %v5203
      %v5205 = vpop.f32.mrb[0].mxu0
      %v5206 = vadd.f32 0.0, %v5205
      %v5207 = vpop.f32.mrb[0].mxu0
      %v5208 = vadd.f32 0.0, %v5207
      %v5209 = vpop.f32.mrb[0].mxu0
      %v5210 = vadd.f32 0.0, %v5209
      %5211 = vmatprep.mubr.bf16.mxu0 %v3556
      %5212 = vmatmul.mubr.bf16.gmra.mrb[0].mxu0 %v3555
      %v5213 = vpop.f32.mrb[0].mxu0
      %v5214 = vadd.f32 0.0, %v5213
      %v5215 = vpop.f32.mrb[0].mxu0
      %v5216 = vadd.f32 0.0, %v5215
      %v5217 = vpop.f32.mrb[0].mxu0
      %v5218 = vadd.f32 0.0, %v5217
      %v5219 = vpop.f32.mrb[0].mxu0
      %v5220 = vadd.f32 0.0, %v5219
      %5221 = vmatprep.mubr.bf16.mxu0 %v3558
      %5222 = vmatmul.mubr.bf16.gmra.mrb[0].mxu0 %v3557
      %v5223 = vpop.f32.mrb[0].mxu0
      %v5224 = vadd.f32 0.0, %v5223
      %v5225 = vpop.f32.mrb[0].mxu0
      %v5226 = vadd.f32 0.0, %v5225
      %v5227 = vpop.f32.mrb[0].mxu0
      %v5228 = vadd.f32 0.0, %v5227
      %v5229 = vpop.f32.mrb[0].mxu0
      %v5230 = vadd.f32 0.0, %v5229
      %5231 = vmatprep.mubr.bf16.mxu0 %v3560
      %5232 = vmatmul.mubr.bf16.gmra.mrb[0].mxu0 %v3559
      %v5233 = vpop.f32.mrb[0].mxu0
      %v5234 = vadd.f32 0.0, %v5233
      %v5235 = vpop.f32.mrb[0].mxu0
      %v5236 = vadd.f32 0.0, %v5235
      %v5237 = vpop.f32.mrb[0].mxu0
      %v5238 = vadd.f32 0.0, %v5237
      %v5239 = vpop.f32.mrb[0].mxu0
      %v5240 = vadd.f32 0.0, %v5239
      %5241 = vdwg.mxu0
      %v5242 = vadd.f32 %v4792, %v5084
      %v5243 = vadd.f32 %v4793, %v5086
      %v5244 = vadd.f32 %v4794, %v5088
      %v5245 = vadd.f32 %v4795, %v5090
      %v5246 = vadd.f32 %v4796, %v5094
      %v5247 = vadd.f32 %v4797, %v5096
      %v5248 = vadd.f32 %v4798, %v5098
      %v5249 = vadd.f32 %v4799, %v5100
      %v5250 = vadd.f32 %v4800, %v5104
      %v5251 = vadd.f32 %v4801, %v5106
      %v5252 = vadd.f32 %v4802, %v5108
      %v5253 = vadd.f32 %v4803, %v5110
      %v5254 = vadd.f32 %v4804, %v5114
      %v5255 = vadd.f32 %v4805, %v5116
      %v5256 = vadd.f32 %v4806, %v5118
      %v5257 = vadd.f32 %v4807, %v5120
      %v5258 = vadd.f32 %v4808, %v5124
      %v5259 = vadd.f32 %v4809, %v5126
      %v5260 = vadd.f32 %v4810, %v5128
      %v5261 = vadd.f32 %v4811, %v5130
      %v5262 = vadd.f32 %v4812, %v5134
      %v5263 = vadd.f32 %v4813, %v5136
      %v5264 = vadd.f32 %v4814, %v5138
      %v5265 = vadd.f32 %v4815, %v5140
      %v5266 = vadd.f32 %v4816, %v5144
      %v5267 = vadd.f32 %v4817, %v5146
      %v5268 = vadd.f32 %v4818, %v5148
      %v5269 = vadd.f32 %v4819, %v5150
      %v5270 = vadd.f32 %v4820, %v5154
      %v5271 = vadd.f32 %v4821, %v5156
      %v5272 = vadd.f32 %v4822, %v5158
      %v5273 = vadd.f32 %v4823, %v5160
      %v5274 = vadd.f32 %v4824, %v5164
      %v5275 = vadd.f32 %v4825, %v5166
      %v5276 = vadd.f32 %v4826, %v5168
      %v5277 = vadd.f32 %v4827, %v5170
      %v5278 = vadd.f32 %v4828, %v5174
      %v5279 = vadd.f32 %v4829, %v5176
      %v5280 = vadd.f32 %v4830, %v5178
      %v5281 = vadd.f32 %v4831, %v5180
      %v5282 = vadd.f32 %v4832, %v5184
      %v5283 = vadd.f32 %v4833, %v5186
      %v5284 = vadd.f32 %v4834, %v5188
      %v5285 = vadd.f32 %v4835, %v5190
      %v5286 = vadd.f32 %v4836, %v5194
      %v5287 = vadd.f32 %v4837, %v5196
      %v5288 = vadd.f32 %v4838, %v5198
      %v5289 = vadd.f32 %v4839, %v5200
      %v5290 = vadd.f32 %v4840, %v5204
      %v5291 = vadd.f32 %v4841, %v5206
      %v5292 = vadd.f32 %v4842, %v5208
      %v5293 = vadd.f32 %v4843, %v5210
      %v5294 = vadd.f32 %v4844, %v5214
      %v5295 = vadd.f32 %v4845, %v5216
      %v5296 = vadd.f32 %v4846, %v5218
      %v5297 = vadd.f32 %v4847, %v5220
      %v5298 = vadd.f32 %v4848, %v5224
      %v5299 = vadd.f32 %v4849, %v5226
      %v5300 = vadd.f32 %v4850, %v5228
      %v5301 = vadd.f32 %v4851, %v5230
      %v5302 = vadd.f32 %v4852, %v5234
      %v5303 = vadd.f32 %v4853, %v5236
      %v5304 = vadd.f32 %v4854, %v5238
      %v5305 = vadd.f32 %v4855, %v5240
      %s5306 = scalar_lea.vmem %s3, 1024
      %v5307 = vld [vmem:[%s5306] sm:$0xff]
      %v5308 = vld [vmem:[%s5306 + $0x8] sm:$0xff]
      %v5309 = vld [vmem:[%s5306 + $0x10] sm:$0xff]
      %v5310 = vld [vmem:[%s5306 + $0x18] sm:$0xff]
      %v5311 = vld [vmem:[%s5306 + $0x20] sm:$0xff]
      %v5312 = vld [vmem:[%s5306 + $0x28] sm:$0xff]
      %v5313 = vld [vmem:[%s5306 + $0x30] sm:$0xff]
      %v5314 = vld [vmem:[%s5306 + $0x38] sm:$0xff]
      %v5315 = vld [vmem:[%s5306 + $0x40] sm:$0xff]
      %v5316 = vld [vmem:[%s5306 + $0x48] sm:$0xff]
      %v5317 = vld [vmem:[%s5306 + $0x50] sm:$0xff]
      %v5318 = vld [vmem:[%s5306 + $0x58] sm:$0xff]
      %v5319 = vld [vmem:[%s5306 + $0x60] sm:$0xff]
      %v5320 = vld [vmem:[%s5306 + $0x68] sm:$0xff]
      %v5321 = vld [vmem:[%s5306 + $0x70] sm:$0xff]
      %v5322 = vld [vmem:[%s5306 + $0x78] sm:$0xff]
      %v5323 = vld [vmem:[%s5306 + $0x80] sm:$0xff]
      %v5324 = vld [vmem:[%s5306 + $0x88] sm:$0xff]
      %v5325 = vld [vmem:[%s5306 + $0x90] sm:$0xff]
      %v5326 = vld [vmem:[%s5306 + $0x98] sm:$0xff]
      %v5327 = vld [vmem:[%s5306 + $0xa0] sm:$0xff]
      %v5328 = vld [vmem:[%s5306 + $0xa8] sm:$0xff]
      %v5329 = vld [vmem:[%s5306 + $0xb0] sm:$0xff]
      %v5330 = vld [vmem:[%s5306 + $0xb8] sm:$0xff]
      %v5331 = vld [vmem:[%s5306 + $0xc0] sm:$0xff]
      %v5332 = vld [vmem:[%s5306 + $0xc8] sm:$0xff]
      %v5333 = vld [vmem:[%s5306 + $0xd0] sm:$0xff]
      %v5334 = vld [vmem:[%s5306 + $0xd8] sm:$0xff]
      %v5335 = vld [vmem:[%s5306 + $0xe0] sm:$0xff]
      %v5336 = vld [vmem:[%s5306 + $0xe8] sm:$0xff]
      %v5337 = vld [vmem:[%s5306 + $0xf0] sm:$0xff]
      %v5338 = vld [vmem:[%s5306 + $0xf8] sm:$0xff]
      %v5371 = vunpack.c.l.b16 %v5307
      %v5372 = vunpack.c.h.b16 %v5307
      %v5373 = vunpack.c.l.b16 %v5308
      %v5374 = vunpack.c.h.b16 %v5308
      %v5375 = vunpack.c.l.b16 %v5309
      %v5376 = vunpack.c.h.b16 %v5309
      %v5377 = vunpack.c.l.b16 %v5310
      %v5378 = vunpack.c.h.b16 %v5310
      %v5379 = vunpack.c.l.b16 %v5311
      %v5380 = vunpack.c.h.b16 %v5311
      %v5381 = vunpack.c.l.b16 %v5312
      %v5382 = vunpack.c.h.b16 %v5312
      %v5383 = vunpack.c.l.b16 %v5313
      %v5384 = vunpack.c.h.b16 %v5313
      %v5385 = vunpack.c.l.b16 %v5314
      %v5386 = vunpack.c.h.b16 %v5314
      %v5387 = vunpack.c.l.b16 %v5315
      %v5388 = vunpack.c.h.b16 %v5315
      %v5389 = vunpack.c.l.b16 %v5316
      %v5390 = vunpack.c.h.b16 %v5316
      %v5391 = vunpack.c.l.b16 %v5317
      %v5392 = vunpack.c.h.b16 %v5317
      %v5393 = vunpack.c.l.b16 %v5318
      %v5394 = vunpack.c.h.b16 %v5318
      %v5395 = vunpack.c.l.b16 %v5319
      %v5396 = vunpack.c.h.b16 %v5319
      %v5397 = vunpack.c.l.b16 %v5320
      %v5398 = vunpack.c.h.b16 %v5320
      %v5399 = vunpack.c.l.b16 %v5321
      %v5400 = vunpack.c.h.b16 %v5321
      %v5401 = vunpack.c.l.b16 %v5322
      %v5402 = vunpack.c.h.b16 %v5322
      %v5403 = vunpack.c.l.b16 %v5323
      %v5404 = vunpack.c.h.b16 %v5323
      %v5405 = vunpack.c.l.b16 %v5324
      %v5406 = vunpack.c.h.b16 %v5324
      %v5407 = vunpack.c.l.b16 %v5325
      %v5408 = vunpack.c.h.b16 %v5325
      %v5409 = vunpack.c.l.b16 %v5326
      %v5410 = vunpack.c.h.b16 %v5326
      %v5411 = vunpack.c.l.b16 %v5327
      %v5412 = vunpack.c.h.b16 %v5327
      %v5413 = vunpack.c.l.b16 %v5328
      %v5414 = vunpack.c.h.b16 %v5328
      %v5415 = vunpack.c.l.b16 %v5329
      %v5416 = vunpack.c.h.b16 %v5329
      %v5417 = vunpack.c.l.b16 %v5330
      %v5418 = vunpack.c.h.b16 %v5330
      %v5419 = vunpack.c.l.b16 %v5331
      %v5420 = vunpack.c.h.b16 %v5331
      %v5421 = vunpack.c.l.b16 %v5332
      %v5422 = vunpack.c.h.b16 %v5332
      %v5423 = vunpack.c.l.b16 %v5333
      %v5424 = vunpack.c.h.b16 %v5333
      %v5425 = vunpack.c.l.b16 %v5334
      %v5426 = vunpack.c.h.b16 %v5334
      %v5427 = vunpack.c.l.b16 %v5335
      %v5428 = vunpack.c.h.b16 %v5335
      %v5429 = vunpack.c.l.b16 %v5336
      %v5430 = vunpack.c.h.b16 %v5336
      %v5431 = vunpack.c.l.b16 %v5337
      %v5432 = vunpack.c.h.b16 %v5337
      %v5433 = vunpack.c.l.b16 %v5338
      %v5434 = vunpack.c.h.b16 %v5338
      %v5435 = vpack.c.b16 %v5373, %v5371
      %v5436 = vpack.c.b16 %v5374, %v5372
      %v5437 = vpack.c.b16 %v5377, %v5375
      %v5438 = vpack.c.b16 %v5378, %v5376
      %v5439 = vpack.c.b16 %v5381, %v5379
      %v5440 = vpack.c.b16 %v5382, %v5380
      %v5441 = vpack.c.b16 %v5385, %v5383
      %v5442 = vpack.c.b16 %v5386, %v5384
      %v5443 = vpack.c.b16 %v5389, %v5387
      %v5444 = vpack.c.b16 %v5390, %v5388
      %v5445 = vpack.c.b16 %v5393, %v5391
      %v5446 = vpack.c.b16 %v5394, %v5392
      %v5447 = vpack.c.b16 %v5397, %v5395
      %v5448 = vpack.c.b16 %v5398, %v5396
      %v5449 = vpack.c.b16 %v5401, %v5399
      %v5450 = vpack.c.b16 %v5402, %v5400
      %v5451 = vpack.c.b16 %v5405, %v5403
      %v5452 = vpack.c.b16 %v5406, %v5404
      %v5453 = vpack.c.b16 %v5409, %v5407
      %v5454 = vpack.c.b16 %v5410, %v5408
      %v5455 = vpack.c.b16 %v5413, %v5411
      %v5456 = vpack.c.b16 %v5414, %v5412
      %v5457 = vpack.c.b16 %v5417, %v5415
      %v5458 = vpack.c.b16 %v5418, %v5416
      %v5459 = vpack.c.b16 %v5421, %v5419
      %v5460 = vpack.c.b16 %v5422, %v5420
      %v5461 = vpack.c.b16 %v5425, %v5423
      %v5462 = vpack.c.b16 %v5426, %v5424
      %v5463 = vpack.c.b16 %v5429, %v5427
      %v5464 = vpack.c.b16 %v5430, %v5428
      %v5465 = vpack.c.b16 %v5433, %v5431
      %v5466 = vpack.c.b16 %v5434, %v5432
      %5499 = vmatprep.subr.bf16.mxu0 %v5436
      %5500 = vmatpush1.bf16.msra.mxu0 %v5435
      %5501 = vmatprep.subr.bf16.mxu0 %v5438
      %5502 = vmatpush1.bf16.msra.mxu0 %v5437
      %5503 = vmatprep.subr.bf16.mxu0 %v5440
      %5504 = vmatpush1.bf16.msra.mxu0 %v5439
      %5505 = vmatprep.subr.bf16.mxu0 %v5442
      %5506 = vmatpush1.bf16.msra.mxu0 %v5441
      %5507 = vmatprep.subr.bf16.mxu0 %v5444
      %5508 = vmatpush1.bf16.msra.mxu0 %v5443
      %5509 = vmatprep.subr.bf16.mxu0 %v5446
      %5510 = vmatpush1.bf16.msra.mxu0 %v5445
      %5511 = vmatprep.subr.bf16.mxu0 %v5448
      %5512 = vmatpush1.bf16.msra.mxu0 %v5447
      %5513 = vmatprep.subr.bf16.mxu0 %v5450
      %5514 = vmatpush1.bf16.msra.mxu0 %v5449
      %5515 = vmatprep.subr.bf16.mxu0 %v5452
      %5516 = vmatpush1.bf16.msra.mxu0 %v5451
      %5517 = vmatprep.subr.bf16.mxu0 %v5454
      %5518 = vmatpush1.bf16.msra.mxu0 %v5453
      %5519 = vmatprep.subr.bf16.mxu0 %v5456
      %5520 = vmatpush1.bf16.msra.mxu0 %v5455
      %5521 = vmatprep.subr.bf16.mxu0 %v5458
      %5522 = vmatpush1.bf16.msra.mxu0 %v5457
      %5523 = vmatprep.subr.bf16.mxu0 %v5460
      %5524 = vmatpush1.bf16.msra.mxu0 %v5459
      %5525 = vmatprep.subr.bf16.mxu0 %v5462
      %5526 = vmatpush1.bf16.msra.mxu0 %v5461
      %5527 = vmatprep.subr.bf16.mxu0 %v5464
      %5528 = vmatpush1.bf16.msra.mxu0 %v5463
      %5529 = vmatprep.subr.bf16.mxu0 %v5466
      %5530 = vmatpush1.bf16.msra.mxu0 %v5465
      %5531 = vmatprep.mubr.bf16.mxu0 %v3566
      %5532 = vmatmul.mubr.bf16.gmra.mrb[0].mxu0 %v3565
      %v5533 = vpop.f32.mrb[0].mxu0
      %v5534 = vadd.f32 0.0, %v5533
      %v5535 = vpop.f32.mrb[0].mxu0
      %v5536 = vadd.f32 0.0, %v5535
      %v5537 = vpop.f32.mrb[0].mxu0
      %v5538 = vadd.f32 0.0, %v5537
      %v5539 = vpop.f32.mrb[0].mxu0
      %v5540 = vadd.f32 0.0, %v5539
      %5541 = vmatprep.mubr.bf16.mxu0 %v3568
      %5542 = vmatmul.mubr.bf16.gmra.mrb[0].mxu0 %v3567
      %v5543 = vpop.f32.mrb[0].mxu0
      %v5544 = vadd.f32 0.0, %v5543
      %v5545 = vpop.f32.mrb[0].mxu0
      %v5546 = vadd.f32 0.0, %v5545
      %v5547 = vpop.f32.mrb[0].mxu0
      %v5548 = vadd.f32 0.0, %v5547
      %v5549 = vpop.f32.mrb[0].mxu0
      %v5550 = vadd.f32 0.0, %v5549
      %5551 = vmatprep.mubr.bf16.mxu0 %v3570
      %5552 = vmatmul.mubr.bf16.gmra.mrb[0].mxu0 %v3569
      %v5553 = vpop.f32.mrb[0].mxu0
      %v5554 = vadd.f32 0.0, %v5553
      %v5555 = vpop.f32.mrb[0].mxu0
      %v5556 = vadd.f32 0.0, %v5555
      %v5557 = vpop.f32.mrb[0].mxu0
      %v5558 = vadd.f32 0.0, %v5557
      %v5559 = vpop.f32.mrb[0].mxu0
      %v5560 = vadd.f32 0.0, %v5559
      %5561 = vmatprep.mubr.bf16.mxu0 %v3572
      %5562 = vmatmul.mubr.bf16.gmra.mrb[0].mxu0 %v3571
      %v5563 = vpop.f32.mrb[0].mxu0
      %v5564 = vadd.f32 0.0, %v5563
      %v5565 = vpop.f32.mrb[0].mxu0
      %v5566 = vadd.f32 0.0, %v5565
      %v5567 = vpop.f32.mrb[0].mxu0
      %v5568 = vadd.f32 0.0, %v5567
      %v5569 = vpop.f32.mrb[0].mxu0
      %v5570 = vadd.f32 0.0, %v5569
      %5571 = vmatprep.mubr.bf16.mxu0 %v3574
      %5572 = vmatmul.mubr.bf16.gmra.mrb[0].mxu0 %v3573
      %v5573 = vpop.f32.mrb[0].mxu0
      %v5574 = vadd.f32 0.0, %v5573
      %v5575 = vpop.f32.mrb[0].mxu0
      %v5576 = vadd.f32 0.0, %v5575
      %v5577 = vpop.f32.mrb[0].mxu0
      %v5578 = vadd.f32 0.0, %v5577
      %v5579 = vpop.f32.mrb[0].mxu0
      %v5580 = vadd.f32 0.0, %v5579
      %5581 = vmatprep.mubr.bf16.mxu0 %v3576
      %5582 = vmatmul.mubr.bf16.gmra.mrb[0].mxu0 %v3575
      %v5583 = vpop.f32.mrb[0].mxu0
      %v5584 = vadd.f32 0.0, %v5583
      %v5585 = vpop.f32.mrb[0].mxu0
      %v5586 = vadd.f32 0.0, %v5585
      %v5587 = vpop.f32.mrb[0].mxu0
      %v5588 = vadd.f32 0.0, %v5587
      %v5589 = vpop.f32.mrb[0].mxu0
      %v5590 = vadd.f32 0.0, %v5589
      %5591 = vmatprep.mubr.bf16.mxu0 %v3578
      %5592 = vmatmul.mubr.bf16.gmra.mrb[0].mxu0 %v3577
      %v5593 = vpop.f32.mrb[0].mxu0
      %v5594 = vadd.f32 0.0, %v5593
      %v5595 = vpop.f32.mrb[0].mxu0
      %v5596 = vadd.f32 0.0, %v5595
      %v5597 = vpop.f32.mrb[0].mxu0
      %v5598 = vadd.f32 0.0, %v5597
      %v5599 = vpop.f32.mrb[0].mxu0
      %v5600 = vadd.f32 0.0, %v5599
      %5601 = vmatprep.mubr.bf16.mxu0 %v3580
      %5602 = vmatmul.mubr.bf16.gmra.mrb[0].mxu0 %v3579
      %v5603 = vpop.f32.mrb[0].mxu0
      %v5604 = vadd.f32 0.0, %v5603
      %v5605 = vpop.f32.mrb[0].mxu0
      %v5606 = vadd.f32 0.0, %v5605
      %v5607 = vpop.f32.mrb[0].mxu0
      %v5608 = vadd.f32 0.0, %v5607
      %v5609 = vpop.f32.mrb[0].mxu0
      %v5610 = vadd.f32 0.0, %v5609
      %5611 = vmatprep.mubr.bf16.mxu0 %v3582
      %5612 = vmatmul.mubr.bf16.gmra.mrb[0].mxu0 %v3581
      %v5613 = vpop.f32.mrb[0].mxu0
      %v5614 = vadd.f32 0.0, %v5613
      %v5615 = vpop.f32.mrb[0].mxu0
      %v5616 = vadd.f32 0.0, %v5615
      %v5617 = vpop.f32.mrb[0].mxu0
      %v5618 = vadd.f32 0.0, %v5617
      %v5619 = vpop.f32.mrb[0].mxu0
      %v5620 = vadd.f32 0.0, %v5619
      %5621 = vmatprep.mubr.bf16.mxu0 %v3584
      %5622 = vmatmul.mubr.bf16.gmra.mrb[0].mxu0 %v3583
      %v5623 = vpop.f32.mrb[0].mxu0
      %v5624 = vadd.f32 0.0, %v5623
      %v5625 = vpop.f32.mrb[0].mxu0
      %v5626 = vadd.f32 0.0, %v5625
      %v5627 = vpop.f32.mrb[0].mxu0
      %v5628 = vadd.f32 0.0, %v5627
      %v5629 = vpop.f32.mrb[0].mxu0
      %v5630 = vadd.f32 0.0, %v5629
      %5631 = vmatprep.mubr.bf16.mxu0 %v3586
      %5632 = vmatmul.mubr.bf16.gmra.mrb[0].mxu0 %v3585
      %v5633 = vpop.f32.mrb[0].mxu0
      %v5634 = vadd.f32 0.0, %v5633
      %v5635 = vpop.f32.mrb[0].mxu0
      %v5636 = vadd.f32 0.0, %v5635
      %v5637 = vpop.f32.mrb[0].mxu0
      %v5638 = vadd.f32 0.0, %v5637
      %v5639 = vpop.f32.mrb[0].mxu0
      %v5640 = vadd.f32 0.0, %v5639
      %5641 = vmatprep.mubr.bf16.mxu0 %v3588
      %5642 = vmatmul.mubr.bf16.gmra.mrb[0].mxu0 %v3587
      %v5643 = vpop.f32.mrb[0].mxu0
      %v5644 = vadd.f32 0.0, %v5643
      %v5645 = vpop.f32.mrb[0].mxu0
      %v5646 = vadd.f32 0.0, %v5645
      %v5647 = vpop.f32.mrb[0].mxu0
      %v5648 = vadd.f32 0.0, %v5647
      %v5649 = vpop.f32.mrb[0].mxu0
      %v5650 = vadd.f32 0.0, %v5649
      %5651 = vmatprep.mubr.bf16.mxu0 %v3590
      %5652 = vmatmul.mubr.bf16.gmra.mrb[0].mxu0 %v3589
      %v5653 = vpop.f32.mrb[0].mxu0
      %v5654 = vadd.f32 0.0, %v5653
      %v5655 = vpop.f32.mrb[0].mxu0
      %v5656 = vadd.f32 0.0, %v5655
      %v5657 = vpop.f32.mrb[0].mxu0
      %v5658 = vadd.f32 0.0, %v5657
      %v5659 = vpop.f32.mrb[0].mxu0
      %v5660 = vadd.f32 0.0, %v5659
      %5661 = vmatprep.mubr.bf16.mxu0 %v3592
      %5662 = vmatmul.mubr.bf16.gmra.mrb[0].mxu0 %v3591
      %v5663 = vpop.f32.mrb[0].mxu0
      %v5664 = vadd.f32 0.0, %v5663
      %v5665 = vpop.f32.mrb[0].mxu0
      %v5666 = vadd.f32 0.0, %v5665
      %v5667 = vpop.f32.mrb[0].mxu0
      %v5668 = vadd.f32 0.0, %v5667
      %v5669 = vpop.f32.mrb[0].mxu0
      %v5670 = vadd.f32 0.0, %v5669
      %5671 = vmatprep.mubr.bf16.mxu0 %v3594
      %5672 = vmatmul.mubr.bf16.gmra.mrb[0].mxu0 %v3593
      %v5673 = vpop.f32.mrb[0].mxu0
      %v5674 = vadd.f32 0.0, %v5673
      %v5675 = vpop.f32.mrb[0].mxu0
      %v5676 = vadd.f32 0.0, %v5675
      %v5677 = vpop.f32.mrb[0].mxu0
      %v5678 = vadd.f32 0.0, %v5677
      %v5679 = vpop.f32.mrb[0].mxu0
      %v5680 = vadd.f32 0.0, %v5679
      %5681 = vmatprep.mubr.bf16.mxu0 %v3596
      %5682 = vmatmul.mubr.bf16.gmra.mrb[0].mxu0 %v3595
      %v5683 = vpop.f32.mrb[0].mxu0
      %v5684 = vadd.f32 0.0, %v5683
      %v5685 = vpop.f32.mrb[0].mxu0
      %v5686 = vadd.f32 0.0, %v5685
      %v5687 = vpop.f32.mrb[0].mxu0
      %v5688 = vadd.f32 0.0, %v5687
      %v5689 = vpop.f32.mrb[0].mxu0
      %v5690 = vadd.f32 0.0, %v5689
      %5691 = vdwg.mxu0
      %v5692 = vadd.f32 %v5242, %v5534
      %v5693 = vadd.f32 %v5243, %v5536
      %v5694 = vadd.f32 %v5244, %v5538
      %v5695 = vadd.f32 %v5245, %v5540
      %v5696 = vadd.f32 %v5246, %v5544
      %v5697 = vadd.f32 %v5247, %v5546
      %v5698 = vadd.f32 %v5248, %v5548
      %v5699 = vadd.f32 %v5249, %v5550
      %v5700 = vadd.f32 %v5250, %v5554
      %v5701 = vadd.f32 %v5251, %v5556
      %v5702 = vadd.f32 %v5252, %v5558
      %v5703 = vadd.f32 %v5253, %v5560
      %v5704 = vadd.f32 %v5254, %v5564
      %v5705 = vadd.f32 %v5255, %v5566
      %v5706 = vadd.f32 %v5256, %v5568
      %v5707 = vadd.f32 %v5257, %v5570
      %v5708 = vadd.f32 %v5258, %v5574
      %v5709 = vadd.f32 %v5259, %v5576
      %v5710 = vadd.f32 %v5260, %v5578
      %v5711 = vadd.f32 %v5261, %v5580
      %v5712 = vadd.f32 %v5262, %v5584
      %v5713 = vadd.f32 %v5263, %v5586
      %v5714 = vadd.f32 %v5264, %v5588
      %v5715 = vadd.f32 %v5265, %v5590
      %v5716 = vadd.f32 %v5266, %v5594
      %v5717 = vadd.f32 %v5267, %v5596
      %v5718 = vadd.f32 %v5268, %v5598
      %v5719 = vadd.f32 %v5269, %v5600
      %v5720 = vadd.f32 %v5270, %v5604
      %v5721 = vadd.f32 %v5271, %v5606
      %v5722 = vadd.f32 %v5272, %v5608
      %v5723 = vadd.f32 %v5273, %v5610
      %v5724 = vadd.f32 %v5274, %v5614
      %v5725 = vadd.f32 %v5275, %v5616
      %v5726 = vadd.f32 %v5276, %v5618
      %v5727 = vadd.f32 %v5277, %v5620
      %v5728 = vadd.f32 %v5278, %v5624
      %v5729 = vadd.f32 %v5279, %v5626
      %v5730 = vadd.f32 %v5280, %v5628
      %v5731 = vadd.f32 %v5281, %v5630
      %v5732 = vadd.f32 %v5282, %v5634
      %v5733 = vadd.f32 %v5283, %v5636
      %v5734 = vadd.f32 %v5284, %v5638
      %v5735 = vadd.f32 %v5285, %v5640
      %v5736 = vadd.f32 %v5286, %v5644
      %v5737 = vadd.f32 %v5287, %v5646
      %v5738 = vadd.f32 %v5288, %v5648
      %v5739 = vadd.f32 %v5289, %v5650
      %v5740 = vadd.f32 %v5290, %v5654
      %v5741 = vadd.f32 %v5291, %v5656
      %v5742 = vadd.f32 %v5292, %v5658
      %v5743 = vadd.f32 %v5293, %v5660
      %v5744 = vadd.f32 %v5294, %v5664
      %v5745 = vadd.f32 %v5295, %v5666
      %v5746 = vadd.f32 %v5296, %v5668
      %v5747 = vadd.f32 %v5297, %v5670
      %v5748 = vadd.f32 %v5298, %v5674
      %v5749 = vadd.f32 %v5299, %v5676
      %v5750 = vadd.f32 %v5300, %v5678
      %v5751 = vadd.f32 %v5301, %v5680
      %v5752 = vadd.f32 %v5302, %v5684
      %v5753 = vadd.f32 %v5303, %v5686
      %v5754 = vadd.f32 %v5304, %v5688
      %v5755 = vadd.f32 %v5305, %v5690
      %s5756 = scalar_lea.vmem %s3, 1280
      %v5757 = vld [vmem:[%s5756] sm:$0xff]
      %v5758 = vld [vmem:[%s5756 + $0x8] sm:$0xff]
      %v5759 = vld [vmem:[%s5756 + $0x10] sm:$0xff]
      %v5760 = vld [vmem:[%s5756 + $0x18] sm:$0xff]
      %v5761 = vld [vmem:[%s5756 + $0x20] sm:$0xff]
      %v5762 = vld [vmem:[%s5756 + $0x28] sm:$0xff]
      %v5763 = vld [vmem:[%s5756 + $0x30] sm:$0xff]
      %v5764 = vld [vmem:[%s5756 + $0x38] sm:$0xff]
      %v5765 = vld [vmem:[%s5756 + $0x40] sm:$0xff]
      %v5766 = vld [vmem:[%s5756 + $0x48] sm:$0xff]
      %v5767 = vld [vmem:[%s5756 + $0x50] sm:$0xff]
      %v5768 = vld [vmem:[%s5756 + $0x58] sm:$0xff]
      %v5769 = vld [vmem:[%s5756 + $0x60] sm:$0xff]
      %v5770 = vld [vmem:[%s5756 + $0x68] sm:$0xff]
      %v5771 = vld [vmem:[%s5756 + $0x70] sm:$0xff]
      %v5772 = vld [vmem:[%s5756 + $0x78] sm:$0xff]
      %v5773 = vld [vmem:[%s5756 + $0x80] sm:$0xff]
      %v5774 = vld [vmem:[%s5756 + $0x88] sm:$0xff]
      %v5775 = vld [vmem:[%s5756 + $0x90] sm:$0xff]
      %v5776 = vld [vmem:[%s5756 + $0x98] sm:$0xff]
      %v5777 = vld [vmem:[%s5756 + $0xa0] sm:$0xff]
      %v5778 = vld [vmem:[%s5756 + $0xa8] sm:$0xff]
      %v5779 = vld [vmem:[%s5756 + $0xb0] sm:$0xff]
      %v5780 = vld [vmem:[%s5756 + $0xb8] sm:$0xff]
      %v5781 = vld [vmem:[%s5756 + $0xc0] sm:$0xff]
      %v5782 = vld [vmem:[%s5756 + $0xc8] sm:$0xff]
      %v5783 = vld [vmem:[%s5756 + $0xd0] sm:$0xff]
      %v5784 = vld [vmem:[%s5756 + $0xd8] sm:$0xff]
      %v5785 = vld [vmem:[%s5756 + $0xe0] sm:$0xff]
      %v5786 = vld [vmem:[%s5756 + $0xe8] sm:$0xff]
      %v5787 = vld [vmem:[%s5756 + $0xf0] sm:$0xff]
      %v5788 = vld [vmem:[%s5756 + $0xf8] sm:$0xff]
      %v5821 = vunpack.c.l.b16 %v5757
      %v5822 = vunpack.c.h.b16 %v5757
      %v5823 = vunpack.c.l.b16 %v5758
      %v5824 = vunpack.c.h.b16 %v5758
      %v5825 = vunpack.c.l.b16 %v5759
      %v5826 = vunpack.c.h.b16 %v5759
      %v5827 = vunpack.c.l.b16 %v5760
      %v5828 = vunpack.c.h.b16 %v5760
      %v5829 = vunpack.c.l.b16 %v5761
      %v5830 = vunpack.c.h.b16 %v5761
      %v5831 = vunpack.c.l.b16 %v5762
      %v5832 = vunpack.c.h.b16 %v5762
      %v5833 = vunpack.c.l.b16 %v5763
      %v5834 = vunpack.c.h.b16 %v5763
      %v5835 = vunpack.c.l.b16 %v5764
      %v5836 = vunpack.c.h.b16 %v5764
      %v5837 = vunpack.c.l.b16 %v5765
      %v5838 = vunpack.c.h.b16 %v5765
      %v5839 = vunpack.c.l.b16 %v5766
      %v5840 = vunpack.c.h.b16 %v5766
      %v5841 = vunpack.c.l.b16 %v5767
      %v5842 = vunpack.c.h.b16 %v5767
      %v5843 = vunpack.c.l.b16 %v5768
      %v5844 = vunpack.c.h.b16 %v5768
      %v5845 = vunpack.c.l.b16 %v5769
      %v5846 = vunpack.c.h.b16 %v5769
      %v5847 = vunpack.c.l.b16 %v5770
      %v5848 = vunpack.c.h.b16 %v5770
      %v5849 = vunpack.c.l.b16 %v5771
      %v5850 = vunpack.c.h.b16 %v5771
      %v5851 = vunpack.c.l.b16 %v5772
      %v5852 = vunpack.c.h.b16 %v5772
      %v5853 = vunpack.c.l.b16 %v5773
      %v5854 = vunpack.c.h.b16 %v5773
      %v5855 = vunpack.c.l.b16 %v5774
      %v5856 = vunpack.c.h.b16 %v5774
      %v5857 = vunpack.c.l.b16 %v5775
      %v5858 = vunpack.c.h.b16 %v5775
      %v5859 = vunpack.c.l.b16 %v5776
      %v5860 = vunpack.c.h.b16 %v5776
      %v5861 = vunpack.c.l.b16 %v5777
      %v5862 = vunpack.c.h.b16 %v5777
      %v5863 = vunpack.c.l.b16 %v5778
      %v5864 = vunpack.c.h.b16 %v5778
      %v5865 = vunpack.c.l.b16 %v5779
      %v5866 = vunpack.c.h.b16 %v5779
      %v5867 = vunpack.c.l.b16 %v5780
      %v5868 = vunpack.c.h.b16 %v5780
      %v5869 = vunpack.c.l.b16 %v5781
      %v5870 = vunpack.c.h.b16 %v5781
      %v5871 = vunpack.c.l.b16 %v5782
      %v5872 = vunpack.c.h.b16 %v5782
      %v5873 = vunpack.c.l.b16 %v5783
      %v5874 = vunpack.c.h.b16 %v5783
      %v5875 = vunpack.c.l.b16 %v5784
      %v5876 = vunpack.c.h.b16 %v5784
      %v5877 = vunpack.c.l.b16 %v5785
      %v5878 = vunpack.c.h.b16 %v5785
      %v5879 = vunpack.c.l.b16 %v5786
      %v5880 = vunpack.c.h.b16 %v5786
      %v5881 = vunpack.c.l.b16 %v5787
      %v5882 = vunpack.c.h.b16 %v5787
      %v5883 = vunpack.c.l.b16 %v5788
      %v5884 = vunpack.c.h.b16 %v5788
      %v5885 = vpack.c.b16 %v5823, %v5821
      %v5886 = vpack.c.b16 %v5824, %v5822
      %v5887 = vpack.c.b16 %v5827, %v5825
      %v5888 = vpack.c.b16 %v5828, %v5826
      %v5889 = vpack.c.b16 %v5831, %v5829
      %v5890 = vpack.c.b16 %v5832, %v5830
      %v5891 = vpack.c.b16 %v5835, %v5833
      %v5892 = vpack.c.b16 %v5836, %v5834
      %v5893 = vpack.c.b16 %v5839, %v5837
      %v5894 = vpack.c.b16 %v5840, %v5838
      %v5895 = vpack.c.b16 %v5843, %v5841
      %v5896 = vpack.c.b16 %v5844, %v5842
      %v5897 = vpack.c.b16 %v5847, %v5845
      %v5898 = vpack.c.b16 %v5848, %v5846
      %v5899 = vpack.c.b16 %v5851, %v5849
      %v5900 = vpack.c.b16 %v5852, %v5850
      %v5901 = vpack.c.b16 %v5855, %v5853
      %v5902 = vpack.c.b16 %v5856, %v5854
      %v5903 = vpack.c.b16 %v5859, %v5857
      %v5904 = vpack.c.b16 %v5860, %v5858
      %v5905 = vpack.c.b16 %v5863, %v5861
      %v5906 = vpack.c.b16 %v5864, %v5862
      %v5907 = vpack.c.b16 %v5867, %v5865
      %v5908 = vpack.c.b16 %v5868, %v5866
      %v5909 = vpack.c.b16 %v5871, %v5869
      %v5910 = vpack.c.b16 %v5872, %v5870
      %v5911 = vpack.c.b16 %v5875, %v5873
      %v5912 = vpack.c.b16 %v5876, %v5874
      %v5913 = vpack.c.b16 %v5879, %v5877
      %v5914 = vpack.c.b16 %v5880, %v5878
      %v5915 = vpack.c.b16 %v5883, %v5881
      %v5916 = vpack.c.b16 %v5884, %v5882
      %5949 = vmatprep.subr.bf16.mxu0 %v5886
      %5950 = vmatpush1.bf16.msra.mxu0 %v5885
      %5951 = vmatprep.subr.bf16.mxu0 %v5888
      %5952 = vmatpush1.bf16.msra.mxu0 %v5887
      %5953 = vmatprep.subr.bf16.mxu0 %v5890
      %5954 = vmatpush1.bf16.msra.mxu0 %v5889
      %5955 = vmatprep.subr.bf16.mxu0 %v5892
      %5956 = vmatpush1.bf16.msra.mxu0 %v5891
      %5957 = vmatprep.subr.bf16.mxu0 %v5894
      %5958 = vmatpush1.bf16.msra.mxu0 %v5893
      %5959 = vmatprep.subr.bf16.mxu0 %v5896
      %5960 = vmatpush1.bf16.msra.mxu0 %v5895
      %5961 = vmatprep.subr.bf16.mxu0 %v5898
      %5962 = vmatpush1.bf16.msra.mxu0 %v5897
      %5963 = vmatprep.subr.bf16.mxu0 %v5900
      %5964 = vmatpush1.bf16.msra.mxu0 %v5899
      %5965 = vmatprep.subr.bf16.mxu0 %v5902
      %5966 = vmatpush1.bf16.msra.mxu0 %v5901
      %5967 = vmatprep.subr.bf16.mxu0 %v5904
      %5968 = vmatpush1.bf16.msra.mxu0 %v5903
      %5969 = vmatprep.subr.bf16.mxu0 %v5906
      %5970 = vmatpush1.bf16.msra.mxu0 %v5905
      %5971 = vmatprep.subr.bf16.mxu0 %v5908
      %5972 = vmatpush1.bf16.msra.mxu0 %v5907
      %5973 = vmatprep.subr.bf16.mxu0 %v5910
      %5974 = vmatpush1.bf16.msra.mxu0 %v5909
      %5975 = vmatprep.subr.bf16.mxu0 %v5912
      %5976 = vmatpush1.bf16.msra.mxu0 %v5911
      %5977 = vmatprep.subr.bf16.mxu0 %v5914
      %5978 = vmatpush1.bf16.msra.mxu0 %v5913
      %5979 = vmatprep.subr.bf16.mxu0 %v5916
      %5980 = vmatpush1.bf16.msra.mxu0 %v5915
      %5981 = vmatprep.mubr.bf16.mxu0 %v3602
      %5982 = vmatmul.mubr.bf16.gmra.mrb[0].mxu0 %v3601
      %v5983 = vpop.f32.mrb[0].mxu0
      %v5984 = vadd.f32 0.0, %v5983
      %v5985 = vpop.f32.mrb[0].mxu0
      %v5986 = vadd.f32 0.0, %v5985
      %v5987 = vpop.f32.mrb[0].mxu0
      %v5988 = vadd.f32 0.0, %v5987
      %v5989 = vpop.f32.mrb[0].mxu0
      %v5990 = vadd.f32 0.0, %v5989
      %5991 = vmatprep.mubr.bf16.mxu0 %v3604
      %5992 = vmatmul.mubr.bf16.gmra.mrb[0].mxu0 %v3603
      %v5993 = vpop.f32.mrb[0].mxu0
      %v5994 = vadd.f32 0.0, %v5993
      %v5995 = vpop.f32.mrb[0].mxu0
      %v5996 = vadd.f32 0.0, %v5995
      %v5997 = vpop.f32.mrb[0].mxu0
      %v5998 = vadd.f32 0.0, %v5997
      %v5999 = vpop.f32.mrb[0].mxu0
      %v6000 = vadd.f32 0.0, %v5999
      %6001 = vmatprep.mubr.bf16.mxu0 %v3606
      %6002 = vmatmul.mubr.bf16.gmra.mrb[0].mxu0 %v3605
      %v6003 = vpop.f32.mrb[0].mxu0
      %v6004 = vadd.f32 0.0, %v6003
      %v6005 = vpop.f32.mrb[0].mxu0
      %v6006 = vadd.f32 0.0, %v6005
      %v6007 = vpop.f32.mrb[0].mxu0
      %v6008 = vadd.f32 0.0, %v6007
      %v6009 = vpop.f32.mrb[0].mxu0
      %v6010 = vadd.f32 0.0, %v6009
      %6011 = vmatprep.mubr.bf16.mxu0 %v3608
      %6012 = vmatmul.mubr.bf16.gmra.mrb[0].mxu0 %v3607
      %v6013 = vpop.f32.mrb[0].mxu0
      %v6014 = vadd.f32 0.0, %v6013
      %v6015 = vpop.f32.mrb[0].mxu0
      %v6016 = vadd.f32 0.0, %v6015
      %v6017 = vpop.f32.mrb[0].mxu0
      %v6018 = vadd.f32 0.0, %v6017
      %v6019 = vpop.f32.mrb[0].mxu0
      %v6020 = vadd.f32 0.0, %v6019
      %6021 = vmatprep.mubr.bf16.mxu0 %v3610
      %6022 = vmatmul.mubr.bf16.gmra.mrb[0].mxu0 %v3609
      %v6023 = vpop.f32.mrb[0].mxu0
      %v6024 = vadd.f32 0.0, %v6023
      %v6025 = vpop.f32.mrb[0].mxu0
      %v6026 = vadd.f32 0.0, %v6025
      %v6027 = vpop.f32.mrb[0].mxu0
      %v6028 = vadd.f32 0.0, %v6027
      %v6029 = vpop.f32.mrb[0].mxu0
      %v6030 = vadd.f32 0.0, %v6029
      %6031 = vmatprep.mubr.bf16.mxu0 %v3612
      %6032 = vmatmul.mubr.bf16.gmra.mrb[0].mxu0 %v3611
      %v6033 = vpop.f32.mrb[0].mxu0
      %v6034 = vadd.f32 0.0, %v6033
      %v6035 = vpop.f32.mrb[0].mxu0
      %v6036 = vadd.f32 0.0, %v6035
      %v6037 = vpop.f32.mrb[0].mxu0
      %v6038 = vadd.f32 0.0, %v6037
      %v6039 = vpop.f32.mrb[0].mxu0
      %v6040 = vadd.f32 0.0, %v6039
      %6041 = vmatprep.mubr.bf16.mxu0 %v3614
      %6042 = vmatmul.mubr.bf16.gmra.mrb[0].mxu0 %v3613
      %v6043 = vpop.f32.mrb[0].mxu0
      %v6044 = vadd.f32 0.0, %v6043
      %v6045 = vpop.f32.mrb[0].mxu0
      %v6046 = vadd.f32 0.0, %v6045
      %v6047 = vpop.f32.mrb[0].mxu0
      %v6048 = vadd.f32 0.0, %v6047
      %v6049 = vpop.f32.mrb[0].mxu0
      %v6050 = vadd.f32 0.0, %v6049
      %6051 = vmatprep.mubr.bf16.mxu0 %v3616
      %6052 = vmatmul.mubr.bf16.gmra.mrb[0].mxu0 %v3615
      %v6053 = vpop.f32.mrb[0].mxu0
      %v6054 = vadd.f32 0.0, %v6053
      %v6055 = vpop.f32.mrb[0].mxu0
      %v6056 = vadd.f32 0.0, %v6055
      %v6057 = vpop.f32.mrb[0].mxu0
      %v6058 = vadd.f32 0.0, %v6057
      %v6059 = vpop.f32.mrb[0].mxu0
      %v6060 = vadd.f32 0.0, %v6059
      %6061 = vmatprep.mubr.bf16.mxu0 %v3618
      %6062 = vmatmul.mubr.bf16.gmra.mrb[0].mxu0 %v3617
      %v6063 = vpop.f32.mrb[0].mxu0
      %v6064 = vadd.f32 0.0, %v6063
      %v6065 = vpop.f32.mrb[0].mxu0
      %v6066 = vadd.f32 0.0, %v6065
      %v6067 = vpop.f32.mrb[0].mxu0
      %v6068 = vadd.f32 0.0, %v6067
      %v6069 = vpop.f32.mrb[0].mxu0
      %v6070 = vadd.f32 0.0, %v6069
      %6071 = vmatprep.mubr.bf16.mxu0 %v3620
      %6072 = vmatmul.mubr.bf16.gmra.mrb[0].mxu0 %v3619
      %v6073 = vpop.f32.mrb[0].mxu0
      %v6074 = vadd.f32 0.0, %v6073
      %v6075 = vpop.f32.mrb[0].mxu0
      %v6076 = vadd.f32 0.0, %v6075
      %v6077 = vpop.f32.mrb[0].mxu0
      %v6078 = vadd.f32 0.0, %v6077
      %v6079 = vpop.f32.mrb[0].mxu0
      %v6080 = vadd.f32 0.0, %v6079
      %6081 = vmatprep.mubr.bf16.mxu0 %v3622
      %6082 = vmatmul.mubr.bf16.gmra.mrb[0].mxu0 %v3621
      %v6083 = vpop.f32.mrb[0].mxu0
      %v6084 = vadd.f32 0.0, %v6083
      %v6085 = vpop.f32.mrb[0].mxu0
      %v6086 = vadd.f32 0.0, %v6085
      %v6087 = vpop.f32.mrb[0].mxu0
      %v6088 = vadd.f32 0.0, %v6087
      %v6089 = vpop.f32.mrb[0].mxu0
      %v6090 = vadd.f32 0.0, %v6089
      %6091 = vmatprep.mubr.bf16.mxu0 %v3624
      %6092 = vmatmul.mubr.bf16.gmra.mrb[0].mxu0 %v3623
      %v6093 = vpop.f32.mrb[0].mxu0
      %v6094 = vadd.f32 0.0, %v6093
      %v6095 = vpop.f32.mrb[0].mxu0
      %v6096 = vadd.f32 0.0, %v6095
      %v6097 = vpop.f32.mrb[0].mxu0
      %v6098 = vadd.f32 0.0, %v6097
      %v6099 = vpop.f32.mrb[0].mxu0
      %v6100 = vadd.f32 0.0, %v6099
      %6101 = vmatprep.mubr.bf16.mxu0 %v3626
      %6102 = vmatmul.mubr.bf16.gmra.mrb[0].mxu0 %v3625
      %v6103 = vpop.f32.mrb[0].mxu0
      %v6104 = vadd.f32 0.0, %v6103
      %v6105 = vpop.f32.mrb[0].mxu0
      %v6106 = vadd.f32 0.0, %v6105
      %v6107 = vpop.f32.mrb[0].mxu0
      %v6108 = vadd.f32 0.0, %v6107
      %v6109 = vpop.f32.mrb[0].mxu0
      %v6110 = vadd.f32 0.0, %v6109
      %6111 = vmatprep.mubr.bf16.mxu0 %v3628
      %6112 = vmatmul.mubr.bf16.gmra.mrb[0].mxu0 %v3627
      %v6113 = vpop.f32.mrb[0].mxu0
      %v6114 = vadd.f32 0.0, %v6113
      %v6115 = vpop.f32.mrb[0].mxu0
      %v6116 = vadd.f32 0.0, %v6115
      %v6117 = vpop.f32.mrb[0].mxu0
      %v6118 = vadd.f32 0.0, %v6117
      %v6119 = vpop.f32.mrb[0].mxu0
      %v6120 = vadd.f32 0.0, %v6119
      %6121 = vmatprep.mubr.bf16.mxu0 %v3630
      %6122 = vmatmul.mubr.bf16.gmra.mrb[0].mxu0 %v3629
      %v6123 = vpop.f32.mrb[0].mxu0
      %v6124 = vadd.f32 0.0, %v6123
      %v6125 = vpop.f32.mrb[0].mxu0
      %v6126 = vadd.f32 0.0, %v6125
      %v6127 = vpop.f32.mrb[0].mxu0
      %v6128 = vadd.f32 0.0, %v6127
      %v6129 = vpop.f32.mrb[0].mxu0
      %v6130 = vadd.f32 0.0, %v6129
      %6131 = vmatprep.mubr.bf16.mxu0 %v3632
      %6132 = vmatmul.mubr.bf16.gmra.mrb[0].mxu0 %v3631
      %v6133 = vpop.f32.mrb[0].mxu0
      %v6134 = vadd.f32 0.0, %v6133
      %v6135 = vpop.f32.mrb[0].mxu0
      %v6136 = vadd.f32 0.0, %v6135
      %v6137 = vpop.f32.mrb[0].mxu0
      %v6138 = vadd.f32 0.0, %v6137
      %v6139 = vpop.f32.mrb[0].mxu0
      %v6140 = vadd.f32 0.0, %v6139
      %6141 = vdwg.mxu0
      %v6142 = vadd.f32 %v5692, %v5984
      %v6143 = vadd.f32 %v5693, %v5986
      %v6144 = vadd.f32 %v5694, %v5988
      %v6145 = vadd.f32 %v5695, %v5990
      %v6146 = vadd.f32 %v5696, %v5994
      %v6147 = vadd.f32 %v5697, %v5996
      %v6148 = vadd.f32 %v5698, %v5998
      %v6149 = vadd.f32 %v5699, %v6000
      %v6150 = vadd.f32 %v5700, %v6004
      %v6151 = vadd.f32 %v5701, %v6006
      %v6152 = vadd.f32 %v5702, %v6008
      %v6153 = vadd.f32 %v5703, %v6010
      %v6154 = vadd.f32 %v5704, %v6014
      %v6155 = vadd.f32 %v5705, %v6016
      %v6156 = vadd.f32 %v5706, %v6018
      %v6157 = vadd.f32 %v5707, %v6020
      %v6158 = vadd.f32 %v5708, %v6024
      %v6159 = vadd.f32 %v5709, %v6026
      %v6160 = vadd.f32 %v5710, %v6028
      %v6161 = vadd.f32 %v5711, %v6030
      %v6162 = vadd.f32 %v5712, %v6034
      %v6163 = vadd.f32 %v5713, %v6036
      %v6164 = vadd.f32 %v5714, %v6038
      %v6165 = vadd.f32 %v5715, %v6040
      %v6166 = vadd.f32 %v5716, %v6044
      %v6167 = vadd.f32 %v5717, %v6046
      %v6168 = vadd.f32 %v5718, %v6048
      %v6169 = vadd.f32 %v5719, %v6050
      %v6170 = vadd.f32 %v5720, %v6054
      %v6171 = vadd.f32 %v5721, %v6056
      %v6172 = vadd.f32 %v5722, %v6058
      %v6173 = vadd.f32 %v5723, %v6060
      %v6174 = vadd.f32 %v5724, %v6064
      %v6175 = vadd.f32 %v5725, %v6066
      %v6176 = vadd.f32 %v5726, %v6068
      %v6177 = vadd.f32 %v5727, %v6070
      %v6178 = vadd.f32 %v5728, %v6074
      %v6179 = vadd.f32 %v5729, %v6076
      %v6180 = vadd.f32 %v5730, %v6078
      %v6181 = vadd.f32 %v5731, %v6080
      %v6182 = vadd.f32 %v5732, %v6084
      %v6183 = vadd.f32 %v5733, %v6086
      %v6184 = vadd.f32 %v5734, %v6088
      %v6185 = vadd.f32 %v5735, %v6090
      %v6186 = vadd.f32 %v5736, %v6094
      %v6187 = vadd.f32 %v5737, %v6096
      %v6188 = vadd.f32 %v5738, %v6098
      %v6189 = vadd.f32 %v5739, %v6100
      %v6190 = vadd.f32 %v5740, %v6104
      %v6191 = vadd.f32 %v5741, %v6106
      %v6192 = vadd.f32 %v5742, %v6108
      %v6193 = vadd.f32 %v5743, %v6110
      %v6194 = vadd.f32 %v5744, %v6114
      %v6195 = vadd.f32 %v5745, %v6116
      %v6196 = vadd.f32 %v5746, %v6118
      %v6197 = vadd.f32 %v5747, %v6120
      %v6198 = vadd.f32 %v5748, %v6124
      %v6199 = vadd.f32 %v5749, %v6126
      %v6200 = vadd.f32 %v5750, %v6128
      %v6201 = vadd.f32 %v5751, %v6130
      %v6202 = vadd.f32 %v5752, %v6134
      %v6203 = vadd.f32 %v5753, %v6136
      %v6204 = vadd.f32 %v5754, %v6138
      %v6205 = vadd.f32 %v5755, %v6140
      %s6206 = scalar_lea.vmem %s3, 1536
      %v6207 = vld [vmem:[%s6206] sm:$0xff]
      %v6208 = vld [vmem:[%s6206 + $0x8] sm:$0xff]
      %v6209 = vld [vmem:[%s6206 + $0x10] sm:$0xff]
      %v6210 = vld [vmem:[%s6206 + $0x18] sm:$0xff]
      %v6211 = vld [vmem:[%s6206 + $0x20] sm:$0xff]
      %v6212 = vld [vmem:[%s6206 + $0x28] sm:$0xff]
      %v6213 = vld [vmem:[%s6206 + $0x30] sm:$0xff]
      %v6214 = vld [vmem:[%s6206 + $0x38] sm:$0xff]
      %v6215 = vld [vmem:[%s6206 + $0x40] sm:$0xff]
      %v6216 = vld [vmem:[%s6206 + $0x48] sm:$0xff]
      %v6217 = vld [vmem:[%s6206 + $0x50] sm:$0xff]
      %v6218 = vld [vmem:[%s6206 + $0x58] sm:$0xff]
      %v6219 = vld [vmem:[%s6206 + $0x60] sm:$0xff]
      %v6220 = vld [vmem:[%s6206 + $0x68] sm:$0xff]
      %v6221 = vld [vmem:[%s6206 + $0x70] sm:$0xff]
      %v6222 = vld [vmem:[%s6206 + $0x78] sm:$0xff]
      %v6223 = vld [vmem:[%s6206 + $0x80] sm:$0xff]
      %v6224 = vld [vmem:[%s6206 + $0x88] sm:$0xff]
      %v6225 = vld [vmem:[%s6206 + $0x90] sm:$0xff]
      %v6226 = vld [vmem:[%s6206 + $0x98] sm:$0xff]
      %v6227 = vld [vmem:[%s6206 + $0xa0] sm:$0xff]
      %v6228 = vld [vmem:[%s6206 + $0xa8] sm:$0xff]
      %v6229 = vld [vmem:[%s6206 + $0xb0] sm:$0xff]
      %v6230 = vld [vmem:[%s6206 + $0xb8] sm:$0xff]
      %v6231 = vld [vmem:[%s6206 + $0xc0] sm:$0xff]
      %v6232 = vld [vmem:[%s6206 + $0xc8] sm:$0xff]
      %v6233 = vld [vmem:[%s6206 + $0xd0] sm:$0xff]
      %v6234 = vld [vmem:[%s6206 + $0xd8] sm:$0xff]
      %v6235 = vld [vmem:[%s6206 + $0xe0] sm:$0xff]
      %v6236 = vld [vmem:[%s6206 + $0xe8] sm:$0xff]
      %v6237 = vld [vmem:[%s6206 + $0xf0] sm:$0xff]
      %v6238 = vld [vmem:[%s6206 + $0xf8] sm:$0xff]
      %v6271 = vunpack.c.l.b16 %v6207
      %v6272 = vunpack.c.h.b16 %v6207
      %v6273 = vunpack.c.l.b16 %v6208
      %v6274 = vunpack.c.h.b16 %v6208
      %v6275 = vunpack.c.l.b16 %v6209
      %v6276 = vunpack.c.h.b16 %v6209
      %v6277 = vunpack.c.l.b16 %v6210
      %v6278 = vunpack.c.h.b16 %v6210
      %v6279 = vunpack.c.l.b16 %v6211
      %v6280 = vunpack.c.h.b16 %v6211
      %v6281 = vunpack.c.l.b16 %v6212
      %v6282 = vunpack.c.h.b16 %v6212
      %v6283 = vunpack.c.l.b16 %v6213
      %v6284 = vunpack.c.h.b16 %v6213
      %v6285 = vunpack.c.l.b16 %v6214
      %v6286 = vunpack.c.h.b16 %v6214
      %v6287 = vunpack.c.l.b16 %v6215
      %v6288 = vunpack.c.h.b16 %v6215
      %v6289 = vunpack.c.l.b16 %v6216
      %v6290 = vunpack.c.h.b16 %v6216
      %v6291 = vunpack.c.l.b16 %v6217
      %v6292 = vunpack.c.h.b16 %v6217
      %v6293 = vunpack.c.l.b16 %v6218
      %v6294 = vunpack.c.h.b16 %v6218
      %v6295 = vunpack.c.l.b16 %v6219
      %v6296 = vunpack.c.h.b16 %v6219
      %v6297 = vunpack.c.l.b16 %v6220
      %v6298 = vunpack.c.h.b16 %v6220
      %v6299 = vunpack.c.l.b16 %v6221
      %v6300 = vunpack.c.h.b16 %v6221
      %v6301 = vunpack.c.l.b16 %v6222
      %v6302 = vunpack.c.h.b16 %v6222
      %v6303 = vunpack.c.l.b16 %v6223
      %v6304 = vunpack.c.h.b16 %v6223
      %v6305 = vunpack.c.l.b16 %v6224
      %v6306 = vunpack.c.h.b16 %v6224
      %v6307 = vunpack.c.l.b16 %v6225
      %v6308 = vunpack.c.h.b16 %v6225
      %v6309 = vunpack.c.l.b16 %v6226
      %v6310 = vunpack.c.h.b16 %v6226
      %v6311 = vunpack.c.l.b16 %v6227
      %v6312 = vunpack.c.h.b16 %v6227
      %v6313 = vunpack.c.l.b16 %v6228
      %v6314 = vunpack.c.h.b16 %v6228
      %v6315 = vunpack.c.l.b16 %v6229
      %v6316 = vunpack.c.h.b16 %v6229
      %v6317 = vunpack.c.l.b16 %v6230
      %v6318 = vunpack.c.h.b16 %v6230
      %v6319 = vunpack.c.l.b16 %v6231
      %v6320 = vunpack.c.h.b16 %v6231
      %v6321 = vunpack.c.l.b16 %v6232
      %v6322 = vunpack.c.h.b16 %v6232
      %v6323 = vunpack.c.l.b16 %v6233
      %v6324 = vunpack.c.h.b16 %v6233
      %v6325 = vunpack.c.l.b16 %v6234
      %v6326 = vunpack.c.h.b16 %v6234
      %v6327 = vunpack.c.l.b16 %v6235
      %v6328 = vunpack.c.h.b16 %v6235
      %v6329 = vunpack.c.l.b16 %v6236
      %v6330 = vunpack.c.h.b16 %v6236
      %v6331 = vunpack.c.l.b16 %v6237
      %v6332 = vunpack.c.h.b16 %v6237
      %v6333 = vunpack.c.l.b16 %v6238
      %v6334 = vunpack.c.h.b16 %v6238
      %v6335 = vpack.c.b16 %v6273, %v6271
      %v6336 = vpack.c.b16 %v6274, %v6272
      %v6337 = vpack.c.b16 %v6277, %v6275
      %v6338 = vpack.c.b16 %v6278, %v6276
      %v6339 = vpack.c.b16 %v6281, %v6279
      %v6340 = vpack.c.b16 %v6282, %v6280
      %v6341 = vpack.c.b16 %v6285, %v6283
      %v6342 = vpack.c.b16 %v6286, %v6284
      %v6343 = vpack.c.b16 %v6289, %v6287
      %v6344 = vpack.c.b16 %v6290, %v6288
      %v6345 = vpack.c.b16 %v6293, %v6291
      %v6346 = vpack.c.b16 %v6294, %v6292
      %v6347 = vpack.c.b16 %v6297, %v6295
      %v6348 = vpack.c.b16 %v6298, %v6296
      %v6349 = vpack.c.b16 %v6301, %v6299
      %v6350 = vpack.c.b16 %v6302, %v6300
      %v6351 = vpack.c.b16 %v6305, %v6303
      %v6352 = vpack.c.b16 %v6306, %v6304
      %v6353 = vpack.c.b16 %v6309, %v6307
      %v6354 = vpack.c.b16 %v6310, %v6308
      %v6355 = vpack.c.b16 %v6313, %v6311
      %v6356 = vpack.c.b16 %v6314, %v6312
      %v6357 = vpack.c.b16 %v6317, %v6315
      %v6358 = vpack.c.b16 %v6318, %v6316
      %v6359 = vpack.c.b16 %v6321, %v6319
      %v6360 = vpack.c.b16 %v6322, %v6320
      %v6361 = vpack.c.b16 %v6325, %v6323
      %v6362 = vpack.c.b16 %v6326, %v6324
      %v6363 = vpack.c.b16 %v6329, %v6327
      %v6364 = vpack.c.b16 %v6330, %v6328
      %v6365 = vpack.c.b16 %v6333, %v6331
      %v6366 = vpack.c.b16 %v6334, %v6332
      %6399 = vmatprep.subr.bf16.mxu0 %v6336
      %6400 = vmatpush1.bf16.msra.mxu0 %v6335
      %6401 = vmatprep.subr.bf16.mxu0 %v6338
      %6402 = vmatpush1.bf16.msra.mxu0 %v6337
      %6403 = vmatprep.subr.bf16.mxu0 %v6340
      %6404 = vmatpush1.bf16.msra.mxu0 %v6339
      %6405 = vmatprep.subr.bf16.mxu0 %v6342
      %6406 = vmatpush1.bf16.msra.mxu0 %v6341
      %6407 = vmatprep.subr.bf16.mxu0 %v6344
      %6408 = vmatpush1.bf16.msra.mxu0 %v6343
      %6409 = vmatprep.subr.bf16.mxu0 %v6346
      %6410 = vmatpush1.bf16.msra.mxu0 %v6345
      %6411 = vmatprep.subr.bf16.mxu0 %v6348
      %6412 = vmatpush1.bf16.msra.mxu0 %v6347
      %6413 = vmatprep.subr.bf16.mxu0 %v6350
      %6414 = vmatpush1.bf16.msra.mxu0 %v6349
      %6415 = vmatprep.subr.bf16.mxu0 %v6352
      %6416 = vmatpush1.bf16.msra.mxu0 %v6351
      %6417 = vmatprep.subr.bf16.mxu0 %v6354
      %6418 = vmatpush1.bf16.msra.mxu0 %v6353
      %6419 = vmatprep.subr.bf16.mxu0 %v6356
      %6420 = vmatpush1.bf16.msra.mxu0 %v6355
      %6421 = vmatprep.subr.bf16.mxu0 %v6358
      %6422 = vmatpush1.bf16.msra.mxu0 %v6357
      %6423 = vmatprep.subr.bf16.mxu0 %v6360
      %6424 = vmatpush1.bf16.msra.mxu0 %v6359
      %6425 = vmatprep.subr.bf16.mxu0 %v6362
      %6426 = vmatpush1.bf16.msra.mxu0 %v6361
      %6427 = vmatprep.subr.bf16.mxu0 %v6364
      %6428 = vmatpush1.bf16.msra.mxu0 %v6363
      %6429 = vmatprep.subr.bf16.mxu0 %v6366
      %6430 = vmatpush1.bf16.msra.mxu0 %v6365
      %6431 = vmatprep.mubr.bf16.mxu0 %v3532
      %6432 = vmatmul.mubr.bf16.gmra.mrb[0].mxu0 %v3531
      %v6433 = vpop.f32.mrb[0].mxu0
      %v6434 = vadd.f32 0.0, %v6433
      %v6435 = vpop.f32.mrb[0].mxu0
      %v6436 = vadd.f32 0.0, %v6435
      %v6437 = vpop.f32.mrb[0].mxu0
      %v6438 = vadd.f32 0.0, %v6437
      %v6439 = vpop.f32.mrb[0].mxu0
      %v6440 = vadd.f32 0.0, %v6439
      %6441 = vmatprep.mubr.bf16.mxu0 %v3534
      %6442 = vmatmul.mubr.bf16.gmra.mrb[0].mxu0 %v3533
      %v6443 = vpop.f32.mrb[0].mxu0
      %v6444 = vadd.f32 0.0, %v6443
      %v6445 = vpop.f32.mrb[0].mxu0
      %v6446 = vadd.f32 0.0, %v6445
      %v6447 = vpop.f32.mrb[0].mxu0
      %v6448 = vadd.f32 0.0, %v6447
      %v6449 = vpop.f32.mrb[0].mxu0
      %v6450 = vadd.f32 0.0, %v6449
      %6451 = vmatprep.mubr.bf16.mxu0 %v3536
      %6452 = vmatmul.mubr.bf16.gmra.mrb[0].mxu0 %v3535
      %v6453 = vpop.f32.mrb[0].mxu0
      %v6454 = vadd.f32 0.0, %v6453
      %v6455 = vpop.f32.mrb[0].mxu0
      %v6456 = vadd.f32 0.0, %v6455
      %v6457 = vpop.f32.mrb[0].mxu0
      %v6458 = vadd.f32 0.0, %v6457
      %v6459 = vpop.f32.mrb[0].mxu0
      %v6460 = vadd.f32 0.0, %v6459
      %6461 = vmatprep.mubr.bf16.mxu0 %v3538
      %6462 = vmatmul.mubr.bf16.gmra.mrb[0].mxu0 %v3537
      %v6463 = vpop.f32.mrb[0].mxu0
      %v6464 = vadd.f32 0.0, %v6463
      %v6465 = vpop.f32.mrb[0].mxu0
      %v6466 = vadd.f32 0.0, %v6465
      %v6467 = vpop.f32.mrb[0].mxu0
      %v6468 = vadd.f32 0.0, %v6467
      %v6469 = vpop.f32.mrb[0].mxu0
      %v6470 = vadd.f32 0.0, %v6469
      %6471 = vmatprep.mubr.bf16.mxu0 %v3540
      %6472 = vmatmul.mubr.bf16.gmra.mrb[0].mxu0 %v3539
      %v6473 = vpop.f32.mrb[0].mxu0
      %v6474 = vadd.f32 0.0, %v6473
      %v6475 = vpop.f32.mrb[0].mxu0
      %v6476 = vadd.f32 0.0, %v6475
      %v6477 = vpop.f32.mrb[0].mxu0
      %v6478 = vadd.f32 0.0, %v6477
      %v6479 = vpop.f32.mrb[0].mxu0
      %v6480 = vadd.f32 0.0, %v6479
      %6481 = vmatprep.mubr.bf16.mxu0 %v3542
      %6482 = vmatmul.mubr.bf16.gmra.mrb[0].mxu0 %v3541
      %v6483 = vpop.f32.mrb[0].mxu0
      %v6484 = vadd.f32 0.0, %v6483
      %v6485 = vpop.f32.mrb[0].mxu0
      %v6486 = vadd.f32 0.0, %v6485
      %v6487 = vpop.f32.mrb[0].mxu0
      %v6488 = vadd.f32 0.0, %v6487
      %v6489 = vpop.f32.mrb[0].mxu0
      %v6490 = vadd.f32 0.0, %v6489
      %6491 = vmatprep.mubr.bf16.mxu0 %v3544
      %6492 = vmatmul.mubr.bf16.gmra.mrb[0].mxu0 %v3543
      %v6493 = vpop.f32.mrb[0].mxu0
      %v6494 = vadd.f32 0.0, %v6493
      %v6495 = vpop.f32.mrb[0].mxu0
      %v6496 = vadd.f32 0.0, %v6495
      %v6497 = vpop.f32.mrb[0].mxu0
      %v6498 = vadd.f32 0.0, %v6497
      %v6499 = vpop.f32.mrb[0].mxu0
      %v6500 = vadd.f32 0.0, %v6499
      %6501 = vmatprep.mubr.bf16.mxu0 %v3546
      %6502 = vmatmul.mubr.bf16.gmra.mrb[0].mxu0 %v3545
      %v6503 = vpop.f32.mrb[0].mxu0
      %v6504 = vadd.f32 0.0, %v6503
      %v6505 = vpop.f32.mrb[0].mxu0
      %v6506 = vadd.f32 0.0, %v6505
      %v6507 = vpop.f32.mrb[0].mxu0
      %v6508 = vadd.f32 0.0, %v6507
      %v6509 = vpop.f32.mrb[0].mxu0
      %v6510 = vadd.f32 0.0, %v6509
      %6511 = vmatprep.mubr.bf16.mxu0 %v3548
      %6512 = vmatmul.mubr.bf16.gmra.mrb[0].mxu0 %v3547
      %v6513 = vpop.f32.mrb[0].mxu0
      %v6514 = vadd.f32 0.0, %v6513
      %v6515 = vpop.f32.mrb[0].mxu0
      %v6516 = vadd.f32 0.0, %v6515
      %v6517 = vpop.f32.mrb[0].mxu0
      %v6518 = vadd.f32 0.0, %v6517
      %v6519 = vpop.f32.mrb[0].mxu0
      %v6520 = vadd.f32 0.0, %v6519
      %6521 = vmatprep.mubr.bf16.mxu0 %v3550
      %6522 = vmatmul.mubr.bf16.gmra.mrb[0].mxu0 %v3549
      %v6523 = vpop.f32.mrb[0].mxu0
      %v6524 = vadd.f32 0.0, %v6523
      %v6525 = vpop.f32.mrb[0].mxu0
      %v6526 = vadd.f32 0.0, %v6525
      %v6527 = vpop.f32.mrb[0].mxu0
      %v6528 = vadd.f32 0.0, %v6527
      %v6529 = vpop.f32.mrb[0].mxu0
      %v6530 = vadd.f32 0.0, %v6529
      %6531 = vmatprep.mubr.bf16.mxu0 %v3552
      %6532 = vmatmul.mubr.bf16.gmra.mrb[0].mxu0 %v3551
      %v6533 = vpop.f32.mrb[0].mxu0
      %v6534 = vadd.f32 0.0, %v6533
      %v6535 = vpop.f32.mrb[0].mxu0
      %v6536 = vadd.f32 0.0, %v6535
      %v6537 = vpop.f32.mrb[0].mxu0
      %v6538 = vadd.f32 0.0, %v6537
      %v6539 = vpop.f32.mrb[0].mxu0
      %v6540 = vadd.f32 0.0, %v6539
      %6541 = vmatprep.mubr.bf16.mxu0 %v3554
      %6542 = vmatmul.mubr.bf16.gmra.mrb[0].mxu0 %v3553
      %v6543 = vpop.f32.mrb[0].mxu0
      %v6544 = vadd.f32 0.0, %v6543
      %v6545 = vpop.f32.mrb[0].mxu0
      %v6546 = vadd.f32 0.0, %v6545
      %v6547 = vpop.f32.mrb[0].mxu0
      %v6548 = vadd.f32 0.0, %v6547
      %v6549 = vpop.f32.mrb[0].mxu0
      %v6550 = vadd.f32 0.0, %v6549
      %6551 = vmatprep.mubr.bf16.mxu0 %v3556
      %6552 = vmatmul.mubr.bf16.gmra.mrb[0].mxu0 %v3555
      %v6553 = vpop.f32.mrb[0].mxu0
      %v6554 = vadd.f32 0.0, %v6553
      %v6555 = vpop.f32.mrb[0].mxu0
      %v6556 = vadd.f32 0.0, %v6555
      %v6557 = vpop.f32.mrb[0].mxu0
      %v6558 = vadd.f32 0.0, %v6557
      %v6559 = vpop.f32.mrb[0].mxu0
      %v6560 = vadd.f32 0.0, %v6559
      %6561 = vmatprep.mubr.bf16.mxu0 %v3558
      %6562 = vmatmul.mubr.bf16.gmra.mrb[0].mxu0 %v3557
      %v6563 = vpop.f32.mrb[0].mxu0
      %v6564 = vadd.f32 0.0, %v6563
      %v6565 = vpop.f32.mrb[0].mxu0
      %v6566 = vadd.f32 0.0, %v6565
      %v6567 = vpop.f32.mrb[0].mxu0
      %v6568 = vadd.f32 0.0, %v6567
      %v6569 = vpop.f32.mrb[0].mxu0
      %v6570 = vadd.f32 0.0, %v6569
      %6571 = vmatprep.mubr.bf16.mxu0 %v3560
      %6572 = vmatmul.mubr.bf16.gmra.mrb[0].mxu0 %v3559
      %v6573 = vpop.f32.mrb[0].mxu0
      %v6574 = vadd.f32 0.0, %v6573
      %v6575 = vpop.f32.mrb[0].mxu0
      %v6576 = vadd.f32 0.0, %v6575
      %v6577 = vpop.f32.mrb[0].mxu0
      %v6578 = vadd.f32 0.0, %v6577
      %v6579 = vpop.f32.mrb[0].mxu0
      %v6580 = vadd.f32 0.0, %v6579
      %6581 = vmatprep.mubr.bf16.mxu0 %v3562
      %6582 = vmatmul.mubr.bf16.gmra.mrb[0].mxu0 %v3561
      %v6583 = vpop.f32.mrb[0].mxu0
      %v6584 = vadd.f32 0.0, %v6583
      %v6585 = vpop.f32.mrb[0].mxu0
      %v6586 = vadd.f32 0.0, %v6585
      %v6587 = vpop.f32.mrb[0].mxu0
      %v6588 = vadd.f32 0.0, %v6587
      %v6589 = vpop.f32.mrb[0].mxu0
      %v6590 = vadd.f32 0.0, %v6589
      %6591 = vdwg.mxu0
      %v6592 = vadd.f32 %v6142, %v6434
      %v6593 = vadd.f32 %v6143, %v6436
      %v6594 = vadd.f32 %v6144, %v6438
      %v6595 = vadd.f32 %v6145, %v6440
      %v6596 = vadd.f32 %v6146, %v6444
      %v6597 = vadd.f32 %v6147, %v6446
      %v6598 = vadd.f32 %v6148, %v6448
      %v6599 = vadd.f32 %v6149, %v6450
      %v6600 = vadd.f32 %v6150, %v6454
      %v6601 = vadd.f32 %v6151, %v6456
      %v6602 = vadd.f32 %v6152, %v6458
      %v6603 = vadd.f32 %v6153, %v6460
      %v6604 = vadd.f32 %v6154, %v6464
      %v6605 = vadd.f32 %v6155, %v6466
      %v6606 = vadd.f32 %v6156, %v6468
      %v6607 = vadd.f32 %v6157, %v6470
      %v6608 = vadd.f32 %v6158, %v6474
      %v6609 = vadd.f32 %v6159, %v6476
      %v6610 = vadd.f32 %v6160, %v6478
      %v6611 = vadd.f32 %v6161, %v6480
      %v6612 = vadd.f32 %v6162, %v6484
      %v6613 = vadd.f32 %v6163, %v6486
      %v6614 = vadd.f32 %v6164, %v6488
      %v6615 = vadd.f32 %v6165, %v6490
      %v6616 = vadd.f32 %v6166, %v6494
      %v6617 = vadd.f32 %v6167, %v6496
      %v6618 = vadd.f32 %v6168, %v6498
      %v6619 = vadd.f32 %v6169, %v6500
      %v6620 = vadd.f32 %v6170, %v6504
      %v6621 = vadd.f32 %v6171, %v6506
      %v6622 = vadd.f32 %v6172, %v6508
      %v6623 = vadd.f32 %v6173, %v6510
      %v6624 = vadd.f32 %v6174, %v6514
      %v6625 = vadd.f32 %v6175, %v6516
      %v6626 = vadd.f32 %v6176, %v6518
      %v6627 = vadd.f32 %v6177, %v6520
      %v6628 = vadd.f32 %v6178, %v6524
      %v6629 = vadd.f32 %v6179, %v6526
      %v6630 = vadd.f32 %v6180, %v6528
      %v6631 = vadd.f32 %v6181, %v6530
      %v6632 = vadd.f32 %v6182, %v6534
      %v6633 = vadd.f32 %v6183, %v6536
      %v6634 = vadd.f32 %v6184, %v6538
      %v6635 = vadd.f32 %v6185, %v6540
      %v6636 = vadd.f32 %v6186, %v6544
      %v6637 = vadd.f32 %v6187, %v6546
      %v6638 = vadd.f32 %v6188, %v6548
      %v6639 = vadd.f32 %v6189, %v6550
      %v6640 = vadd.f32 %v6190, %v6554
      %v6641 = vadd.f32 %v6191, %v6556
      %v6642 = vadd.f32 %v6192, %v6558
      %v6643 = vadd.f32 %v6193, %v6560
      %v6644 = vadd.f32 %v6194, %v6564
      %v6645 = vadd.f32 %v6195, %v6566
      %v6646 = vadd.f32 %v6196, %v6568
      %v6647 = vadd.f32 %v6197, %v6570
      %v6648 = vadd.f32 %v6198, %v6574
      %v6649 = vadd.f32 %v6199, %v6576
      %v6650 = vadd.f32 %v6200, %v6578
      %v6651 = vadd.f32 %v6201, %v6580
      %v6652 = vadd.f32 %v6202, %v6584
      %v6653 = vadd.f32 %v6203, %v6586
      %v6654 = vadd.f32 %v6204, %v6588
      %v6655 = vadd.f32 %v6205, %v6590
      %s6656 = scalar_lea.vmem %s3, 1792
      %v6657 = vld [vmem:[%s6656] sm:$0xff]
      %v6658 = vld [vmem:[%s6656 + $0x8] sm:$0xff]
      %v6659 = vld [vmem:[%s6656 + $0x10] sm:$0xff]
      %v6660 = vld [vmem:[%s6656 + $0x18] sm:$0xff]
      %v6661 = vld [vmem:[%s6656 + $0x20] sm:$0xff]
      %v6662 = vld [vmem:[%s6656 + $0x28] sm:$0xff]
      %v6663 = vld [vmem:[%s6656 + $0x30] sm:$0xff]
      %v6664 = vld [vmem:[%s6656 + $0x38] sm:$0xff]
      %v6665 = vld [vmem:[%s6656 + $0x40] sm:$0xff]
      %v6666 = vld [vmem:[%s6656 + $0x48] sm:$0xff]
      %v6667 = vld [vmem:[%s6656 + $0x50] sm:$0xff]
      %v6668 = vld [vmem:[%s6656 + $0x58] sm:$0xff]
      %v6669 = vld [vmem:[%s6656 + $0x60] sm:$0xff]
      %v6670 = vld [vmem:[%s6656 + $0x68] sm:$0xff]
      %v6671 = vld [vmem:[%s6656 + $0x70] sm:$0xff]
      %v6672 = vld [vmem:[%s6656 + $0x78] sm:$0xff]
      %v6673 = vld [vmem:[%s6656 + $0x80] sm:$0xff]
      %v6674 = vld [vmem:[%s6656 + $0x88] sm:$0xff]
      %v6675 = vld [vmem:[%s6656 + $0x90] sm:$0xff]
      %v6676 = vld [vmem:[%s6656 + $0x98] sm:$0xff]
      %v6677 = vld [vmem:[%s6656 + $0xa0] sm:$0xff]
      %v6678 = vld [vmem:[%s6656 + $0xa8] sm:$0xff]
      %v6679 = vld [vmem:[%s6656 + $0xb0] sm:$0xff]
      %v6680 = vld [vmem:[%s6656 + $0xb8] sm:$0xff]
      %v6681 = vld [vmem:[%s6656 + $0xc0] sm:$0xff]
      %v6682 = vld [vmem:[%s6656 + $0xc8] sm:$0xff]
      %v6683 = vld [vmem:[%s6656 + $0xd0] sm:$0xff]
      %v6684 = vld [vmem:[%s6656 + $0xd8] sm:$0xff]
      %v6685 = vld [vmem:[%s6656 + $0xe0] sm:$0xff]
      %v6686 = vld [vmem:[%s6656 + $0xe8] sm:$0xff]
      %v6687 = vld [vmem:[%s6656 + $0xf0] sm:$0xff]
      %v6688 = vld [vmem:[%s6656 + $0xf8] sm:$0xff]
      %v6721 = vunpack.c.l.b16 %v6657
      %v6722 = vunpack.c.h.b16 %v6657
      %v6723 = vunpack.c.l.b16 %v6658
      %v6724 = vunpack.c.h.b16 %v6658
      %v6725 = vunpack.c.l.b16 %v6659
      %v6726 = vunpack.c.h.b16 %v6659
      %v6727 = vunpack.c.l.b16 %v6660
      %v6728 = vunpack.c.h.b16 %v6660
      %v6729 = vunpack.c.l.b16 %v6661
      %v6730 = vunpack.c.h.b16 %v6661
      %v6731 = vunpack.c.l.b16 %v6662
      %v6732 = vunpack.c.h.b16 %v6662
      %v6733 = vunpack.c.l.b16 %v6663
      %v6734 = vunpack.c.h.b16 %v6663
      %v6735 = vunpack.c.l.b16 %v6664
      %v6736 = vunpack.c.h.b16 %v6664
      %v6737 = vunpack.c.l.b16 %v6665
      %v6738 = vunpack.c.h.b16 %v6665
      %v6739 = vunpack.c.l.b16 %v6666
      %v6740 = vunpack.c.h.b16 %v6666
      %v6741 = vunpack.c.l.b16 %v6667
      %v6742 = vunpack.c.h.b16 %v6667
      %v6743 = vunpack.c.l.b16 %v6668
      %v6744 = vunpack.c.h.b16 %v6668
      %v6745 = vunpack.c.l.b16 %v6669
      %v6746 = vunpack.c.h.b16 %v6669
      %v6747 = vunpack.c.l.b16 %v6670
      %v6748 = vunpack.c.h.b16 %v6670
      %v6749 = vunpack.c.l.b16 %v6671
      %v6750 = vunpack.c.h.b16 %v6671
      %v6751 = vunpack.c.l.b16 %v6672
      %v6752 = vunpack.c.h.b16 %v6672
      %v6753 = vunpack.c.l.b16 %v6673
      %v6754 = vunpack.c.h.b16 %v6673
      %v6755 = vunpack.c.l.b16 %v6674
      %v6756 = vunpack.c.h.b16 %v6674
      %v6757 = vunpack.c.l.b16 %v6675
      %v6758 = vunpack.c.h.b16 %v6675
      %v6759 = vunpack.c.l.b16 %v6676
      %v6760 = vunpack.c.h.b16 %v6676
      %v6761 = vunpack.c.l.b16 %v6677
      %v6762 = vunpack.c.h.b16 %v6677
      %v6763 = vunpack.c.l.b16 %v6678
      %v6764 = vunpack.c.h.b16 %v6678
      %v6765 = vunpack.c.l.b16 %v6679
      %v6766 = vunpack.c.h.b16 %v6679
      %v6767 = vunpack.c.l.b16 %v6680
      %v6768 = vunpack.c.h.b16 %v6680
      %v6769 = vunpack.c.l.b16 %v6681
      %v6770 = vunpack.c.h.b16 %v6681
      %v6771 = vunpack.c.l.b16 %v6682
      %v6772 = vunpack.c.h.b16 %v6682
      %v6773 = vunpack.c.l.b16 %v6683
      %v6774 = vunpack.c.h.b16 %v6683
      %v6775 = vunpack.c.l.b16 %v6684
      %v6776 = vunpack.c.h.b16 %v6684
      %v6777 = vunpack.c.l.b16 %v6685
      %v6778 = vunpack.c.h.b16 %v6685
      %v6779 = vunpack.c.l.b16 %v6686
      %v6780 = vunpack.c.h.b16 %v6686
      %v6781 = vunpack.c.l.b16 %v6687
      %v6782 = vunpack.c.h.b16 %v6687
      %v6783 = vunpack.c.l.b16 %v6688
      %v6784 = vunpack.c.h.b16 %v6688
      %v6785 = vpack.c.b16 %v6723, %v6721
      %v6786 = vpack.c.b16 %v6724, %v6722
      %v6787 = vpack.c.b16 %v6727, %v6725
      %v6788 = vpack.c.b16 %v6728, %v6726
      %v6789 = vpack.c.b16 %v6731, %v6729
      %v6790 = vpack.c.b16 %v6732, %v6730
      %v6791 = vpack.c.b16 %v6735, %v6733
      %v6792 = vpack.c.b16 %v6736, %v6734
      %v6793 = vpack.c.b16 %v6739, %v6737
      %v6794 = vpack.c.b16 %v6740, %v6738
      %v6795 = vpack.c.b16 %v6743, %v6741
      %v6796 = vpack.c.b16 %v6744, %v6742
      %v6797 = vpack.c.b16 %v6747, %v6745
      %v6798 = vpack.c.b16 %v6748, %v6746
      %v6799 = vpack.c.b16 %v6751, %v6749
      %v6800 = vpack.c.b16 %v6752, %v6750
      %v6801 = vpack.c.b16 %v6755, %v6753
      %v6802 = vpack.c.b16 %v6756, %v6754
      %v6803 = vpack.c.b16 %v6759, %v6757
      %v6804 = vpack.c.b16 %v6760, %v6758
      %v6805 = vpack.c.b16 %v6763, %v6761
      %v6806 = vpack.c.b16 %v6764, %v6762
      %v6807 = vpack.c.b16 %v6767, %v6765
      %v6808 = vpack.c.b16 %v6768, %v6766
      %v6809 = vpack.c.b16 %v6771, %v6769
      %v6810 = vpack.c.b16 %v6772, %v6770
      %v6811 = vpack.c.b16 %v6775, %v6773
      %v6812 = vpack.c.b16 %v6776, %v6774
      %v6813 = vpack.c.b16 %v6779, %v6777
      %v6814 = vpack.c.b16 %v6780, %v6778
      %v6815 = vpack.c.b16 %v6783, %v6781
      %v6816 = vpack.c.b16 %v6784, %v6782
      %6849 = vmatprep.subr.bf16.mxu0 %v6786
      %6850 = vmatpush1.bf16.msra.mxu0 %v6785
      %6851 = vmatprep.subr.bf16.mxu0 %v6788
      %6852 = vmatpush1.bf16.msra.mxu0 %v6787
      %6853 = vmatprep.subr.bf16.mxu0 %v6790
      %6854 = vmatpush1.bf16.msra.mxu0 %v6789
      %6855 = vmatprep.subr.bf16.mxu0 %v6792
      %6856 = vmatpush1.bf16.msra.mxu0 %v6791
      %6857 = vmatprep.subr.bf16.mxu0 %v6794
      %6858 = vmatpush1.bf16.msra.mxu0 %v6793
      %6859 = vmatprep.subr.bf16.mxu0 %v6796
      %6860 = vmatpush1.bf16.msra.mxu0 %v6795
      %6861 = vmatprep.subr.bf16.mxu0 %v6798
      %6862 = vmatpush1.bf16.msra.mxu0 %v6797
      %6863 = vmatprep.subr.bf16.mxu0 %v6800
      %6864 = vmatpush1.bf16.msra.mxu0 %v6799
      %6865 = vmatprep.subr.bf16.mxu0 %v6802
      %6866 = vmatpush1.bf16.msra.mxu0 %v6801
      %6867 = vmatprep.subr.bf16.mxu0 %v6804
      %6868 = vmatpush1.bf16.msra.mxu0 %v6803
      %6869 = vmatprep.subr.bf16.mxu0 %v6806
      %6870 = vmatpush1.bf16.msra.mxu0 %v6805
      %6871 = vmatprep.subr.bf16.mxu0 %v6808
      %6872 = vmatpush1.bf16.msra.mxu0 %v6807
      %6873 = vmatprep.subr.bf16.mxu0 %v6810
      %6874 = vmatpush1.bf16.msra.mxu0 %v6809
      %6875 = vmatprep.subr.bf16.mxu0 %v6812
      %6876 = vmatpush1.bf16.msra.mxu0 %v6811
      %6877 = vmatprep.subr.bf16.mxu0 %v6814
      %6878 = vmatpush1.bf16.msra.mxu0 %v6813
      %6879 = vmatprep.subr.bf16.mxu0 %v6816
      %6880 = vmatpush1.bf16.msra.mxu0 %v6815
      %6881 = vmatprep.mubr.bf16.mxu0 %v3568
      %6882 = vmatmul.mubr.bf16.gmra.mrb[0].mxu0 %v3567
      %v6883 = vpop.f32.mrb[0].mxu0
      %v6884 = vadd.f32 0.0, %v6883
      %v6885 = vpop.f32.mrb[0].mxu0
      %v6886 = vadd.f32 0.0, %v6885
      %v6887 = vpop.f32.mrb[0].mxu0
      %v6888 = vadd.f32 0.0, %v6887
      %v6889 = vpop.f32.mrb[0].mxu0
      %v6890 = vadd.f32 0.0, %v6889
      %6891 = vmatprep.mubr.bf16.mxu0 %v3570
      %6892 = vmatmul.mubr.bf16.gmra.mrb[0].mxu0 %v3569
      %v6893 = vpop.f32.mrb[0].mxu0
      %v6894 = vadd.f32 0.0, %v6893
      %v6895 = vpop.f32.mrb[0].mxu0
      %v6896 = vadd.f32 0.0, %v6895
      %v6897 = vpop.f32.mrb[0].mxu0
      %v6898 = vadd.f32 0.0, %v6897
      %v6899 = vpop.f32.mrb[0].mxu0
      %v6900 = vadd.f32 0.0, %v6899
      %6901 = vmatprep.mubr.bf16.mxu0 %v3572
      %6902 = vmatmul.mubr.bf16.gmra.mrb[0].mxu0 %v3571
      %v6903 = vpop.f32.mrb[0].mxu0
      %v6904 = vadd.f32 0.0, %v6903
      %v6905 = vpop.f32.mrb[0].mxu0
      %v6906 = vadd.f32 0.0, %v6905
      %v6907 = vpop.f32.mrb[0].mxu0
      %v6908 = vadd.f32 0.0, %v6907
      %v6909 = vpop.f32.mrb[0].mxu0
      %v6910 = vadd.f32 0.0, %v6909
      %6911 = vmatprep.mubr.bf16.mxu0 %v3574
      %6912 = vmatmul.mubr.bf16.gmra.mrb[0].mxu0 %v3573
      %v6913 = vpop.f32.mrb[0].mxu0
      %v6914 = vadd.f32 0.0, %v6913
      %v6915 = vpop.f32.mrb[0].mxu0
      %v6916 = vadd.f32 0.0, %v6915
      %v6917 = vpop.f32.mrb[0].mxu0
      %v6918 = vadd.f32 0.0, %v6917
      %v6919 = vpop.f32.mrb[0].mxu0
      %v6920 = vadd.f32 0.0, %v6919
      %6921 = vmatprep.mubr.bf16.mxu0 %v3576
      %6922 = vmatmul.mubr.bf16.gmra.mrb[0].mxu0 %v3575
      %v6923 = vpop.f32.mrb[0].mxu0
      %v6924 = vadd.f32 0.0, %v6923
      %v6925 = vpop.f32.mrb[0].mxu0
      %v6926 = vadd.f32 0.0, %v6925
      %v6927 = vpop.f32.mrb[0].mxu0
      %v6928 = vadd.f32 0.0, %v6927
      %v6929 = vpop.f32.mrb[0].mxu0
      %v6930 = vadd.f32 0.0, %v6929
      %6931 = vmatprep.mubr.bf16.mxu0 %v3578
      %6932 = vmatmul.mubr.bf16.gmra.mrb[0].mxu0 %v3577
      %v6933 = vpop.f32.mrb[0].mxu0
      %v6934 = vadd.f32 0.0, %v6933
      %v6935 = vpop.f32.mrb[0].mxu0
      %v6936 = vadd.f32 0.0, %v6935
      %v6937 = vpop.f32.mrb[0].mxu0
      %v6938 = vadd.f32 0.0, %v6937
      %v6939 = vpop.f32.mrb[0].mxu0
      %v6940 = vadd.f32 0.0, %v6939
      %6941 = vmatprep.mubr.bf16.mxu0 %v3580
      %6942 = vmatmul.mubr.bf16.gmra.mrb[0].mxu0 %v3579
      %v6943 = vpop.f32.mrb[0].mxu0
      %v6944 = vadd.f32 0.0, %v6943
      %v6945 = vpop.f32.mrb[0].mxu0
      %v6946 = vadd.f32 0.0, %v6945
      %v6947 = vpop.f32.mrb[0].mxu0
      %v6948 = vadd.f32 0.0, %v6947
      %v6949 = vpop.f32.mrb[0].mxu0
      %v6950 = vadd.f32 0.0, %v6949
      %6951 = vmatprep.mubr.bf16.mxu0 %v3582
      %6952 = vmatmul.mubr.bf16.gmra.mrb[0].mxu0 %v3581
      %v6953 = vpop.f32.mrb[0].mxu0
      %v6954 = vadd.f32 0.0, %v6953
      %v6955 = vpop.f32.mrb[0].mxu0
      %v6956 = vadd.f32 0.0, %v6955
      %v6957 = vpop.f32.mrb[0].mxu0
      %v6958 = vadd.f32 0.0, %v6957
      %v6959 = vpop.f32.mrb[0].mxu0
      %v6960 = vadd.f32 0.0, %v6959
      %6961 = vmatprep.mubr.bf16.mxu0 %v3584
      %6962 = vmatmul.mubr.bf16.gmra.mrb[0].mxu0 %v3583
      %v6963 = vpop.f32.mrb[0].mxu0
      %v6964 = vadd.f32 0.0, %v6963
      %v6965 = vpop.f32.mrb[0].mxu0
      %v6966 = vadd.f32 0.0, %v6965
      %v6967 = vpop.f32.mrb[0].mxu0
      %v6968 = vadd.f32 0.0, %v6967
      %v6969 = vpop.f32.mrb[0].mxu0
      %v6970 = vadd.f32 0.0, %v6969
      %6971 = vmatprep.mubr.bf16.mxu0 %v3586
      %6972 = vmatmul.mubr.bf16.gmra.mrb[0].mxu0 %v3585
      %v6973 = vpop.f32.mrb[0].mxu0
      %v6974 = vadd.f32 0.0, %v6973
      %v6975 = vpop.f32.mrb[0].mxu0
      %v6976 = vadd.f32 0.0, %v6975
      %v6977 = vpop.f32.mrb[0].mxu0
      %v6978 = vadd.f32 0.0, %v6977
      %v6979 = vpop.f32.mrb[0].mxu0
      %v6980 = vadd.f32 0.0, %v6979
      %6981 = vmatprep.mubr.bf16.mxu0 %v3588
      %6982 = vmatmul.mubr.bf16.gmra.mrb[0].mxu0 %v3587
      %v6983 = vpop.f32.mrb[0].mxu0
      %v6984 = vadd.f32 0.0, %v6983
      %v6985 = vpop.f32.mrb[0].mxu0
      %v6986 = vadd.f32 0.0, %v6985
      %v6987 = vpop.f32.mrb[0].mxu0
      %v6988 = vadd.f32 0.0, %v6987
      %v6989 = vpop.f32.mrb[0].mxu0
      %v6990 = vadd.f32 0.0, %v6989
      %6991 = vmatprep.mubr.bf16.mxu0 %v3590
      %6992 = vmatmul.mubr.bf16.gmra.mrb[0].mxu0 %v3589
      %v6993 = vpop.f32.mrb[0].mxu0
      %v6994 = vadd.f32 0.0, %v6993
      %v6995 = vpop.f32.mrb[0].mxu0
      %v6996 = vadd.f32 0.0, %v6995
      %v6997 = vpop.f32.mrb[0].mxu0
      %v6998 = vadd.f32 0.0, %v6997
      %v6999 = vpop.f32.mrb[0].mxu0
      %v7000 = vadd.f32 0.0, %v6999
      %7001 = vmatprep.mubr.bf16.mxu0 %v3592
      %7002 = vmatmul.mubr.bf16.gmra.mrb[0].mxu0 %v3591
      %v7003 = vpop.f32.mrb[0].mxu0
      %v7004 = vadd.f32 0.0, %v7003
      %v7005 = vpop.f32.mrb[0].mxu0
      %v7006 = vadd.f32 0.0, %v7005
      %v7007 = vpop.f32.mrb[0].mxu0
      %v7008 = vadd.f32 0.0, %v7007
      %v7009 = vpop.f32.mrb[0].mxu0
      %v7010 = vadd.f32 0.0, %v7009
      %7011 = vmatprep.mubr.bf16.mxu0 %v3594
      %7012 = vmatmul.mubr.bf16.gmra.mrb[0].mxu0 %v3593
      %v7013 = vpop.f32.mrb[0].mxu0
      %v7014 = vadd.f32 0.0, %v7013
      %v7015 = vpop.f32.mrb[0].mxu0
      %v7016 = vadd.f32 0.0, %v7015
      %v7017 = vpop.f32.mrb[0].mxu0
      %v7018 = vadd.f32 0.0, %v7017
      %v7019 = vpop.f32.mrb[0].mxu0
      %v7020 = vadd.f32 0.0, %v7019
      %7021 = vmatprep.mubr.bf16.mxu0 %v3596
      %7022 = vmatmul.mubr.bf16.gmra.mrb[0].mxu0 %v3595
      %v7023 = vpop.f32.mrb[0].mxu0
      %v7024 = vadd.f32 0.0, %v7023
      %v7025 = vpop.f32.mrb[0].mxu0
      %v7026 = vadd.f32 0.0, %v7025
      %v7027 = vpop.f32.mrb[0].mxu0
      %v7028 = vadd.f32 0.0, %v7027
      %v7029 = vpop.f32.mrb[0].mxu0
      %v7030 = vadd.f32 0.0, %v7029
      %7031 = vmatprep.mubr.bf16.mxu0 %v3598
      %7032 = vmatmul.mubr.bf16.gmra.mrb[0].mxu0 %v3597
      %v7033 = vpop.f32.mrb[0].mxu0
      %v7034 = vadd.f32 0.0, %v7033
      %v7035 = vpop.f32.mrb[0].mxu0
      %v7036 = vadd.f32 0.0, %v7035
      %v7037 = vpop.f32.mrb[0].mxu0
      %v7038 = vadd.f32 0.0, %v7037
      %v7039 = vpop.f32.mrb[0].mxu0
      %v7040 = vadd.f32 0.0, %v7039
      %7041 = vdwg.mxu0
      %v7042 = vadd.f32 %v6592, %v6884
      %v7043 = vadd.f32 %v6593, %v6886
      %v7044 = vadd.f32 %v6594, %v6888
      %v7045 = vadd.f32 %v6595, %v6890
      %v7046 = vadd.f32 %v6596, %v6894
      %v7047 = vadd.f32 %v6597, %v6896
      %v7048 = vadd.f32 %v6598, %v6898
      %v7049 = vadd.f32 %v6599, %v6900
      %v7050 = vadd.f32 %v6600, %v6904
      %v7051 = vadd.f32 %v6601, %v6906
      %v7052 = vadd.f32 %v6602, %v6908
      %v7053 = vadd.f32 %v6603, %v6910
      %v7054 = vadd.f32 %v6604, %v6914
      %v7055 = vadd.f32 %v6605, %v6916
      %v7056 = vadd.f32 %v6606, %v6918
      %v7057 = vadd.f32 %v6607, %v6920
      %v7058 = vadd.f32 %v6608, %v6924
      %v7059 = vadd.f32 %v6609, %v6926
      %v7060 = vadd.f32 %v6610, %v6928
      %v7061 = vadd.f32 %v6611, %v6930
      %v7062 = vadd.f32 %v6612, %v6934
      %v7063 = vadd.f32 %v6613, %v6936
      %v7064 = vadd.f32 %v6614, %v6938
      %v7065 = vadd.f32 %v6615, %v6940
      %v7066 = vadd.f32 %v6616, %v6944
      %v7067 = vadd.f32 %v6617, %v6946
      %v7068 = vadd.f32 %v6618, %v6948
      %v7069 = vadd.f32 %v6619, %v6950
      %v7070 = vadd.f32 %v6620, %v6954
      %v7071 = vadd.f32 %v6621, %v6956
      %v7072 = vadd.f32 %v6622, %v6958
      %v7073 = vadd.f32 %v6623, %v6960
      %v7074 = vadd.f32 %v6624, %v6964
      %v7075 = vadd.f32 %v6625, %v6966
      %v7076 = vadd.f32 %v6626, %v6968
      %v7077 = vadd.f32 %v6627, %v6970
      %v7078 = vadd.f32 %v6628, %v6974
      %v7079 = vadd.f32 %v6629, %v6976
      %v7080 = vadd.f32 %v6630, %v6978
      %v7081 = vadd.f32 %v6631, %v6980
      %v7082 = vadd.f32 %v6632, %v6984
      %v7083 = vadd.f32 %v6633, %v6986
      %v7084 = vadd.f32 %v6634, %v6988
      %v7085 = vadd.f32 %v6635, %v6990
      %v7086 = vadd.f32 %v6636, %v6994
      %v7087 = vadd.f32 %v6637, %v6996
      %v7088 = vadd.f32 %v6638, %v6998
      %v7089 = vadd.f32 %v6639, %v7000
      %v7090 = vadd.f32 %v6640, %v7004
      %v7091 = vadd.f32 %v6641, %v7006
      %v7092 = vadd.f32 %v6642, %v7008
      %v7093 = vadd.f32 %v6643, %v7010
      %v7094 = vadd.f32 %v6644, %v7014
      %v7095 = vadd.f32 %v6645, %v7016
      %v7096 = vadd.f32 %v6646, %v7018
      %v7097 = vadd.f32 %v6647, %v7020
      %v7098 = vadd.f32 %v6648, %v7024
      %v7099 = vadd.f32 %v6649, %v7026
      %v7100 = vadd.f32 %v6650, %v7028
      %v7101 = vadd.f32 %v6651, %v7030
      %v7102 = vadd.f32 %v6652, %v7034
      %v7103 = vadd.f32 %v6653, %v7036
      %v7104 = vadd.f32 %v6654, %v7038
      %v7105 = vadd.f32 %v6655, %v7040
      %s7106 = scalar_lea.vmem %s3, 2048
      %v7107 = vld [vmem:[%s7106] sm:$0xff]
      %v7108 = vld [vmem:[%s7106 + $0x8] sm:$0xff]
      %v7109 = vld [vmem:[%s7106 + $0x10] sm:$0xff]
      %v7110 = vld [vmem:[%s7106 + $0x18] sm:$0xff]
      %v7111 = vld [vmem:[%s7106 + $0x20] sm:$0xff]
      %v7112 = vld [vmem:[%s7106 + $0x28] sm:$0xff]
      %v7113 = vld [vmem:[%s7106 + $0x30] sm:$0xff]
      %v7114 = vld [vmem:[%s7106 + $0x38] sm:$0xff]
      %v7115 = vld [vmem:[%s7106 + $0x40] sm:$0xff]
      %v7116 = vld [vmem:[%s7106 + $0x48] sm:$0xff]
      %v7117 = vld [vmem:[%s7106 + $0x50] sm:$0xff]
      %v7118 = vld [vmem:[%s7106 + $0x58] sm:$0xff]
      %v7119 = vld [vmem:[%s7106 + $0x60] sm:$0xff]
      %v7120 = vld [vmem:[%s7106 + $0x68] sm:$0xff]
      %v7121 = vld [vmem:[%s7106 + $0x70] sm:$0xff]
      %v7122 = vld [vmem:[%s7106 + $0x78] sm:$0xff]
      %v7123 = vld [vmem:[%s7106 + $0x80] sm:$0xff]
      %v7124 = vld [vmem:[%s7106 + $0x88] sm:$0xff]
      %v7125 = vld [vmem:[%s7106 + $0x90] sm:$0xff]
      %v7126 = vld [vmem:[%s7106 + $0x98] sm:$0xff]
      %v7127 = vld [vmem:[%s7106 + $0xa0] sm:$0xff]
      %v7128 = vld [vmem:[%s7106 + $0xa8] sm:$0xff]
      %v7129 = vld [vmem:[%s7106 + $0xb0] sm:$0xff]
      %v7130 = vld [vmem:[%s7106 + $0xb8] sm:$0xff]
      %v7131 = vld [vmem:[%s7106 + $0xc0] sm:$0xff]
      %v7132 = vld [vmem:[%s7106 + $0xc8] sm:$0xff]
      %v7133 = vld [vmem:[%s7106 + $0xd0] sm:$0xff]
      %v7134 = vld [vmem:[%s7106 + $0xd8] sm:$0xff]
      %v7135 = vld [vmem:[%s7106 + $0xe0] sm:$0xff]
      %v7136 = vld [vmem:[%s7106 + $0xe8] sm:$0xff]
      %v7137 = vld [vmem:[%s7106 + $0xf0] sm:$0xff]
      %v7138 = vld [vmem:[%s7106 + $0xf8] sm:$0xff]
      %v7171 = vunpack.c.l.b16 %v7107
      %v7172 = vunpack.c.h.b16 %v7107
      %v7173 = vunpack.c.l.b16 %v7108
      %v7174 = vunpack.c.h.b16 %v7108
      %v7175 = vunpack.c.l.b16 %v7109
      %v7176 = vunpack.c.h.b16 %v7109
      %v7177 = vunpack.c.l.b16 %v7110
      %v7178 = vunpack.c.h.b16 %v7110
      %v7179 = vunpack.c.l.b16 %v7111
      %v7180 = vunpack.c.h.b16 %v7111
      %v7181 = vunpack.c.l.b16 %v7112
      %v7182 = vunpack.c.h.b16 %v7112
      %v7183 = vunpack.c.l.b16 %v7113
      %v7184 = vunpack.c.h.b16 %v7113
      %v7185 = vunpack.c.l.b16 %v7114
      %v7186 = vunpack.c.h.b16 %v7114
      %v7187 = vunpack.c.l.b16 %v7115
      %v7188 = vunpack.c.h.b16 %v7115
      %v7189 = vunpack.c.l.b16 %v7116
      %v7190 = vunpack.c.h.b16 %v7116
      %v7191 = vunpack.c.l.b16 %v7117
      %v7192 = vunpack.c.h.b16 %v7117
      %v7193 = vunpack.c.l.b16 %v7118
      %v7194 = vunpack.c.h.b16 %v7118
      %v7195 = vunpack.c.l.b16 %v7119
      %v7196 = vunpack.c.h.b16 %v7119
      %v7197 = vunpack.c.l.b16 %v7120
      %v7198 = vunpack.c.h.b16 %v7120
      %v7199 = vunpack.c.l.b16 %v7121
      %v7200 = vunpack.c.h.b16 %v7121
      %v7201 = vunpack.c.l.b16 %v7122
      %v7202 = vunpack.c.h.b16 %v7122
      %v7203 = vunpack.c.l.b16 %v7123
      %v7204 = vunpack.c.h.b16 %v7123
      %v7205 = vunpack.c.l.b16 %v7124
      %v7206 = vunpack.c.h.b16 %v7124
      %v7207 = vunpack.c.l.b16 %v7125
      %v7208 = vunpack.c.h.b16 %v7125
      %v7209 = vunpack.c.l.b16 %v7126
      %v7210 = vunpack.c.h.b16 %v7126
      %v7211 = vunpack.c.l.b16 %v7127
      %v7212 = vunpack.c.h.b16 %v7127
      %v7213 = vunpack.c.l.b16 %v7128
      %v7214 = vunpack.c.h.b16 %v7128
      %v7215 = vunpack.c.l.b16 %v7129
      %v7216 = vunpack.c.h.b16 %v7129
      %v7217 = vunpack.c.l.b16 %v7130
      %v7218 = vunpack.c.h.b16 %v7130
      %v7219 = vunpack.c.l.b16 %v7131
      %v7220 = vunpack.c.h.b16 %v7131
      %v7221 = vunpack.c.l.b16 %v7132
      %v7222 = vunpack.c.h.b16 %v7132
      %v7223 = vunpack.c.l.b16 %v7133
      %v7224 = vunpack.c.h.b16 %v7133
      %v7225 = vunpack.c.l.b16 %v7134
      %v7226 = vunpack.c.h.b16 %v7134
      %v7227 = vunpack.c.l.b16 %v7135
      %v7228 = vunpack.c.h.b16 %v7135
      %v7229 = vunpack.c.l.b16 %v7136
      %v7230 = vunpack.c.h.b16 %v7136
      %v7231 = vunpack.c.l.b16 %v7137
      %v7232 = vunpack.c.h.b16 %v7137
      %v7233 = vunpack.c.l.b16 %v7138
      %v7234 = vunpack.c.h.b16 %v7138
      %v7235 = vpack.c.b16 %v7173, %v7171
      %v7236 = vpack.c.b16 %v7174, %v7172
      %v7237 = vpack.c.b16 %v7177, %v7175
      %v7238 = vpack.c.b16 %v7178, %v7176
      %v7239 = vpack.c.b16 %v7181, %v7179
      %v7240 = vpack.c.b16 %v7182, %v7180
      %v7241 = vpack.c.b16 %v7185, %v7183
      %v7242 = vpack.c.b16 %v7186, %v7184
      %v7243 = vpack.c.b16 %v7189, %v7187
      %v7244 = vpack.c.b16 %v7190, %v7188
      %v7245 = vpack.c.b16 %v7193, %v7191
      %v7246 = vpack.c.b16 %v7194, %v7192
      %v7247 = vpack.c.b16 %v7197, %v7195
      %v7248 = vpack.c.b16 %v7198, %v7196
      %v7249 = vpack.c.b16 %v7201, %v7199
      %v7250 = vpack.c.b16 %v7202, %v7200
      %v7251 = vpack.c.b16 %v7205, %v7203
      %v7252 = vpack.c.b16 %v7206, %v7204
      %v7253 = vpack.c.b16 %v7209, %v7207
      %v7254 = vpack.c.b16 %v7210, %v7208
      %v7255 = vpack.c.b16 %v7213, %v7211
      %v7256 = vpack.c.b16 %v7214, %v7212
      %v7257 = vpack.c.b16 %v7217, %v7215
      %v7258 = vpack.c.b16 %v7218, %v7216
      %v7259 = vpack.c.b16 %v7221, %v7219
      %v7260 = vpack.c.b16 %v7222, %v7220
      %v7261 = vpack.c.b16 %v7225, %v7223
      %v7262 = vpack.c.b16 %v7226, %v7224
      %v7263 = vpack.c.b16 %v7229, %v7227
      %v7264 = vpack.c.b16 %v7230, %v7228
      %v7265 = vpack.c.b16 %v7233, %v7231
      %v7266 = vpack.c.b16 %v7234, %v7232
      %7299 = vmatprep.subr.bf16.mxu0 %v7236
      %7300 = vmatpush1.bf16.msra.mxu0 %v7235
      %7301 = vmatprep.subr.bf16.mxu0 %v7238
      %7302 = vmatpush1.bf16.msra.mxu0 %v7237
      %7303 = vmatprep.subr.bf16.mxu0 %v7240
      %7304 = vmatpush1.bf16.msra.mxu0 %v7239
      %7305 = vmatprep.subr.bf16.mxu0 %v7242
      %7306 = vmatpush1.bf16.msra.mxu0 %v7241
      %7307 = vmatprep.subr.bf16.mxu0 %v7244
      %7308 = vmatpush1.bf16.msra.mxu0 %v7243
      %7309 = vmatprep.subr.bf16.mxu0 %v7246
      %7310 = vmatpush1.bf16.msra.mxu0 %v7245
      %7311 = vmatprep.subr.bf16.mxu0 %v7248
      %7312 = vmatpush1.bf16.msra.mxu0 %v7247
      %7313 = vmatprep.subr.bf16.mxu0 %v7250
      %7314 = vmatpush1.bf16.msra.mxu0 %v7249
      %7315 = vmatprep.subr.bf16.mxu0 %v7252
      %7316 = vmatpush1.bf16.msra.mxu0 %v7251
      %7317 = vmatprep.subr.bf16.mxu0 %v7254
      %7318 = vmatpush1.bf16.msra.mxu0 %v7253
      %7319 = vmatprep.subr.bf16.mxu0 %v7256
      %7320 = vmatpush1.bf16.msra.mxu0 %v7255
      %7321 = vmatprep.subr.bf16.mxu0 %v7258
      %7322 = vmatpush1.bf16.msra.mxu0 %v7257
      %7323 = vmatprep.subr.bf16.mxu0 %v7260
      %7324 = vmatpush1.bf16.msra.mxu0 %v7259
      %7325 = vmatprep.subr.bf16.mxu0 %v7262
      %7326 = vmatpush1.bf16.msra.mxu0 %v7261
      %7327 = vmatprep.subr.bf16.mxu0 %v7264
      %7328 = vmatpush1.bf16.msra.mxu0 %v7263
      %7329 = vmatprep.subr.bf16.mxu0 %v7266
      %7330 = vmatpush1.bf16.msra.mxu0 %v7265
      %7331 = vmatprep.mubr.bf16.mxu0 %v3604
      %7332 = vmatmul.mubr.bf16.gmra.mrb[0].mxu0 %v3603
      %v7333 = vpop.f32.mrb[0].mxu0
      %v7334 = vadd.f32 0.0, %v7333
      %v7335 = vpop.f32.mrb[0].mxu0
      %v7336 = vadd.f32 0.0, %v7335
      %v7337 = vpop.f32.mrb[0].mxu0
      %v7338 = vadd.f32 0.0, %v7337
      %v7339 = vpop.f32.mrb[0].mxu0
      %v7340 = vadd.f32 0.0, %v7339
      %7341 = vmatprep.mubr.bf16.mxu0 %v3606
      %7342 = vmatmul.mubr.bf16.gmra.mrb[0].mxu0 %v3605
      %v7343 = vpop.f32.mrb[0].mxu0
      %v7344 = vadd.f32 0.0, %v7343
      %v7345 = vpop.f32.mrb[0].mxu0
      %v7346 = vadd.f32 0.0, %v7345
      %v7347 = vpop.f32.mrb[0].mxu0
      %v7348 = vadd.f32 0.0, %v7347
      %v7349 = vpop.f32.mrb[0].mxu0
      %v7350 = vadd.f32 0.0, %v7349
      %7351 = vmatprep.mubr.bf16.mxu0 %v3608
      %7352 = vmatmul.mubr.bf16.gmra.mrb[0].mxu0 %v3607
      %v7353 = vpop.f32.mrb[0].mxu0
      %v7354 = vadd.f32 0.0, %v7353
      %v7355 = vpop.f32.mrb[0].mxu0
      %v7356 = vadd.f32 0.0, %v7355
      %v7357 = vpop.f32.mrb[0].mxu0
      %v7358 = vadd.f32 0.0, %v7357
      %v7359 = vpop.f32.mrb[0].mxu0
      %v7360 = vadd.f32 0.0, %v7359
      %7361 = vmatprep.mubr.bf16.mxu0 %v3610
      %7362 = vmatmul.mubr.bf16.gmra.mrb[0].mxu0 %v3609
      %v7363 = vpop.f32.mrb[0].mxu0
      %v7364 = vadd.f32 0.0, %v7363
      %v7365 = vpop.f32.mrb[0].mxu0
      %v7366 = vadd.f32 0.0, %v7365
      %v7367 = vpop.f32.mrb[0].mxu0
      %v7368 = vadd.f32 0.0, %v7367
      %v7369 = vpop.f32.mrb[0].mxu0
      %v7370 = vadd.f32 0.0, %v7369
      %7371 = vmatprep.mubr.bf16.mxu0 %v3612
      %7372 = vmatmul.mubr.bf16.gmra.mrb[0].mxu0 %v3611
      %v7373 = vpop.f32.mrb[0].mxu0
      %v7374 = vadd.f32 0.0, %v7373
      %v7375 = vpop.f32.mrb[0].mxu0
      %v7376 = vadd.f32 0.0, %v7375
      %v7377 = vpop.f32.mrb[0].mxu0
      %v7378 = vadd.f32 0.0, %v7377
      %v7379 = vpop.f32.mrb[0].mxu0
      %v7380 = vadd.f32 0.0, %v7379
      %7381 = vmatprep.mubr.bf16.mxu0 %v3614
      %7382 = vmatmul.mubr.bf16.gmra.mrb[0].mxu0 %v3613
      %v7383 = vpop.f32.mrb[0].mxu0
      %v7384 = vadd.f32 0.0, %v7383
      %v7385 = vpop.f32.mrb[0].mxu0
      %v7386 = vadd.f32 0.0, %v7385
      %v7387 = vpop.f32.mrb[0].mxu0
      %v7388 = vadd.f32 0.0, %v7387
      %v7389 = vpop.f32.mrb[0].mxu0
      %v7390 = vadd.f32 0.0, %v7389
      %7391 = vmatprep.mubr.bf16.mxu0 %v3616
      %7392 = vmatmul.mubr.bf16.gmra.mrb[0].mxu0 %v3615
      %v7393 = vpop.f32.mrb[0].mxu0
      %v7394 = vadd.f32 0.0, %v7393
      %v7395 = vpop.f32.mrb[0].mxu0
      %v7396 = vadd.f32 0.0, %v7395
      %v7397 = vpop.f32.mrb[0].mxu0
      %v7398 = vadd.f32 0.0, %v7397
      %v7399 = vpop.f32.mrb[0].mxu0
      %v7400 = vadd.f32 0.0, %v7399
      %7401 = vmatprep.mubr.bf16.mxu0 %v3618
      %7402 = vmatmul.mubr.bf16.gmra.mrb[0].mxu0 %v3617
      %v7403 = vpop.f32.mrb[0].mxu0
      %v7404 = vadd.f32 0.0, %v7403
      %v7405 = vpop.f32.mrb[0].mxu0
      %v7406 = vadd.f32 0.0, %v7405
      %v7407 = vpop.f32.mrb[0].mxu0
      %v7408 = vadd.f32 0.0, %v7407
      %v7409 = vpop.f32.mrb[0].mxu0
      %v7410 = vadd.f32 0.0, %v7409
      %7411 = vmatprep.mubr.bf16.mxu0 %v3620
      %7412 = vmatmul.mubr.bf16.gmra.mrb[0].mxu0 %v3619
      %v7413 = vpop.f32.mrb[0].mxu0
      %v7414 = vadd.f32 0.0, %v7413
      %v7415 = vpop.f32.mrb[0].mxu0
      %v7416 = vadd.f32 0.0, %v7415
      %v7417 = vpop.f32.mrb[0].mxu0
      %v7418 = vadd.f32 0.0, %v7417
      %v7419 = vpop.f32.mrb[0].mxu0
      %v7420 = vadd.f32 0.0, %v7419
      %7421 = vmatprep.mubr.bf16.mxu0 %v3622
      %7422 = vmatmul.mubr.bf16.gmra.mrb[0].mxu0 %v3621
      %v7423 = vpop.f32.mrb[0].mxu0
      %v7424 = vadd.f32 0.0, %v7423
      %v7425 = vpop.f32.mrb[0].mxu0
      %v7426 = vadd.f32 0.0, %v7425
      %v7427 = vpop.f32.mrb[0].mxu0
      %v7428 = vadd.f32 0.0, %v7427
      %v7429 = vpop.f32.mrb[0].mxu0
      %v7430 = vadd.f32 0.0, %v7429
      %7431 = vmatprep.mubr.bf16.mxu0 %v3624
      %7432 = vmatmul.mubr.bf16.gmra.mrb[0].mxu0 %v3623
      %v7433 = vpop.f32.mrb[0].mxu0
      %v7434 = vadd.f32 0.0, %v7433
      %v7435 = vpop.f32.mrb[0].mxu0
      %v7436 = vadd.f32 0.0, %v7435
      %v7437 = vpop.f32.mrb[0].mxu0
      %v7438 = vadd.f32 0.0, %v7437
      %v7439 = vpop.f32.mrb[0].mxu0
      %v7440 = vadd.f32 0.0, %v7439
      %7441 = vmatprep.mubr.bf16.mxu0 %v3626
      %7442 = vmatmul.mubr.bf16.gmra.mrb[0].mxu0 %v3625
      %v7443 = vpop.f32.mrb[0].mxu0
      %v7444 = vadd.f32 0.0, %v7443
      %v7445 = vpop.f32.mrb[0].mxu0
      %v7446 = vadd.f32 0.0, %v7445
      %v7447 = vpop.f32.mrb[0].mxu0
      %v7448 = vadd.f32 0.0, %v7447
      %v7449 = vpop.f32.mrb[0].mxu0
      %v7450 = vadd.f32 0.0, %v7449
      %7451 = vmatprep.mubr.bf16.mxu0 %v3628
      %7452 = vmatmul.mubr.bf16.gmra.mrb[0].mxu0 %v3627
      %v7453 = vpop.f32.mrb[0].mxu0
      %v7454 = vadd.f32 0.0, %v7453
      %v7455 = vpop.f32.mrb[0].mxu0
      %v7456 = vadd.f32 0.0, %v7455
      %v7457 = vpop.f32.mrb[0].mxu0
      %v7458 = vadd.f32 0.0, %v7457
      %v7459 = vpop.f32.mrb[0].mxu0
      %v7460 = vadd.f32 0.0, %v7459
      %7461 = vmatprep.mubr.bf16.mxu0 %v3630
      %7462 = vmatmul.mubr.bf16.gmra.mrb[0].mxu0 %v3629
      %v7463 = vpop.f32.mrb[0].mxu0
      %v7464 = vadd.f32 0.0, %v7463
      %v7465 = vpop.f32.mrb[0].mxu0
      %v7466 = vadd.f32 0.0, %v7465
      %v7467 = vpop.f32.mrb[0].mxu0
      %v7468 = vadd.f32 0.0, %v7467
      %v7469 = vpop.f32.mrb[0].mxu0
      %v7470 = vadd.f32 0.0, %v7469
      %7471 = vmatprep.mubr.bf16.mxu0 %v3632
      %7472 = vmatmul.mubr.bf16.gmra.mrb[0].mxu0 %v3631
      %v7473 = vpop.f32.mrb[0].mxu0
      %v7474 = vadd.f32 0.0, %v7473
      %v7475 = vpop.f32.mrb[0].mxu0
      %v7476 = vadd.f32 0.0, %v7475
      %v7477 = vpop.f32.mrb[0].mxu0
      %v7478 = vadd.f32 0.0, %v7477
      %v7479 = vpop.f32.mrb[0].mxu0
      %v7480 = vadd.f32 0.0, %v7479
      %7481 = vmatprep.mubr.bf16.mxu0 %v3634
      %7482 = vmatmul.mubr.bf16.gmra.mrb[0].mxu0 %v3633
      %v7483 = vpop.f32.mrb[0].mxu0
      %v7484 = vadd.f32 0.0, %v7483
      %v7485 = vpop.f32.mrb[0].mxu0
      %v7486 = vadd.f32 0.0, %v7485
      %v7487 = vpop.f32.mrb[0].mxu0
      %v7488 = vadd.f32 0.0, %v7487
      %v7489 = vpop.f32.mrb[0].mxu0
      %v7490 = vadd.f32 0.0, %v7489
      %7491 = vdwg.mxu0
      %v7492 = vadd.f32 %v7042, %v7334
      %v7493 = vadd.f32 %v7043, %v7336
      %v7494 = vadd.f32 %v7044, %v7338
      %v7495 = vadd.f32 %v7045, %v7340
      %v7496 = vadd.f32 %v7046, %v7344
      %v7497 = vadd.f32 %v7047, %v7346
      %v7498 = vadd.f32 %v7048, %v7348
      %v7499 = vadd.f32 %v7049, %v7350
      %v7500 = vadd.f32 %v7050, %v7354
      %v7501 = vadd.f32 %v7051, %v7356
      %v7502 = vadd.f32 %v7052, %v7358
      %v7503 = vadd.f32 %v7053, %v7360
      %v7504 = vadd.f32 %v7054, %v7364
      %v7505 = vadd.f32 %v7055, %v7366
      %v7506 = vadd.f32 %v7056, %v7368
      %v7507 = vadd.f32 %v7057, %v7370
      %v7508 = vadd.f32 %v7058, %v7374
      %v7509 = vadd.f32 %v7059, %v7376
      %v7510 = vadd.f32 %v7060, %v7378
      %v7511 = vadd.f32 %v7061, %v7380
      %v7512 = vadd.f32 %v7062, %v7384
      %v7513 = vadd.f32 %v7063, %v7386
      %v7514 = vadd.f32 %v7064, %v7388
      %v7515 = vadd.f32 %v7065, %v7390
      %v7516 = vadd.f32 %v7066, %v7394
      %v7517 = vadd.f32 %v7067, %v7396
      %v7518 = vadd.f32 %v7068, %v7398
      %v7519 = vadd.f32 %v7069, %v7400
      %v7520 = vadd.f32 %v7070, %v7404
      %v7521 = vadd.f32 %v7071, %v7406
      %v7522 = vadd.f32 %v7072, %v7408
      %v7523 = vadd.f32 %v7073, %v7410
      %v7524 = vadd.f32 %v7074, %v7414
      %v7525 = vadd.f32 %v7075, %v7416
      %v7526 = vadd.f32 %v7076, %v7418
      %v7527 = vadd.f32 %v7077, %v7420
      %v7528 = vadd.f32 %v7078, %v7424
      %v7529 = vadd.f32 %v7079, %v7426
      %v7530 = vadd.f32 %v7080, %v7428
      %v7531 = vadd.f32 %v7081, %v7430
      %v7532 = vadd.f32 %v7082, %v7434
      %v7533 = vadd.f32 %v7083, %v7436
      %v7534 = vadd.f32 %v7084, %v7438
      %v7535 = vadd.f32 %v7085, %v7440
      %v7536 = vadd.f32 %v7086, %v7444
      %v7537 = vadd.f32 %v7087, %v7446
      %v7538 = vadd.f32 %v7088, %v7448
      %v7539 = vadd.f32 %v7089, %v7450
      %v7540 = vadd.f32 %v7090, %v7454
      %v7541 = vadd.f32 %v7091, %v7456
      %v7542 = vadd.f32 %v7092, %v7458
      %v7543 = vadd.f32 %v7093, %v7460
      %v7544 = vadd.f32 %v7094, %v7464
      %v7545 = vadd.f32 %v7095, %v7466
      %v7546 = vadd.f32 %v7096, %v7468
      %v7547 = vadd.f32 %v7097, %v7470
      %v7548 = vadd.f32 %v7098, %v7474
      %v7549 = vadd.f32 %v7099, %v7476
      %v7550 = vadd.f32 %v7100, %v7478
      %v7551 = vadd.f32 %v7101, %v7480
      %v7552 = vadd.f32 %v7102, %v7484
      %v7553 = vadd.f32 %v7103, %v7486
      %v7554 = vadd.f32 %v7104, %v7488
      %v7555 = vadd.f32 %v7105, %v7490
      %v7556 = vld [vmem:[%s4] sm:$0x3]
      %v7558 = vlaneseq
      %v7559 = vshrl.u32 %v7558, 7
      %v7560 = vsub.s32 0, %v7559
      %v7561 = vrot.slane %v7556, %v7560
      %v7562 = vlaneseq
      %v7563 = vshrl.u32 %v7562, 7
      %v7564 = vsub.s32 1, %v7563
      %v7565 = vrot.slane %v7556, %v7564
      %v7568 = vadd.f32 %v7492, %v7561
      %v7569 = vadd.f32 %v7493, %v7565
      %v7570 = vadd.f32 %v7494, %v7561
      %v7571 = vadd.f32 %v7495, %v7565
      %v7572 = vadd.f32 %v7496, %v7561
      %v7573 = vadd.f32 %v7497, %v7565
      %v7574 = vadd.f32 %v7498, %v7561
      %v7575 = vadd.f32 %v7499, %v7565
      %v7576 = vadd.f32 %v7500, %v7561
      %v7577 = vadd.f32 %v7501, %v7565
      %v7578 = vadd.f32 %v7502, %v7561
      %v7579 = vadd.f32 %v7503, %v7565
      %v7580 = vadd.f32 %v7504, %v7561
      %v7581 = vadd.f32 %v7505, %v7565
      %v7582 = vadd.f32 %v7506, %v7561
      %v7583 = vadd.f32 %v7507, %v7565
      %v7584 = vadd.f32 %v7508, %v7561
      %v7585 = vadd.f32 %v7509, %v7565
      %v7586 = vadd.f32 %v7510, %v7561
      %v7587 = vadd.f32 %v7511, %v7565
      %v7588 = vadd.f32 %v7512, %v7561
      %v7589 = vadd.f32 %v7513, %v7565
      %v7590 = vadd.f32 %v7514, %v7561
      %v7591 = vadd.f32 %v7515, %v7565
      %v7592 = vadd.f32 %v7516, %v7561
      %v7593 = vadd.f32 %v7517, %v7565
      %v7594 = vadd.f32 %v7518, %v7561
      %v7595 = vadd.f32 %v7519, %v7565
      %v7596 = vadd.f32 %v7520, %v7561
      %v7597 = vadd.f32 %v7521, %v7565
      %v7598 = vadd.f32 %v7522, %v7561
      %v7599 = vadd.f32 %v7523, %v7565
      %v7600 = vadd.f32 %v7524, %v7561
      %v7601 = vadd.f32 %v7525, %v7565
      %v7602 = vadd.f32 %v7526, %v7561
      %v7603 = vadd.f32 %v7527, %v7565
      %v7604 = vadd.f32 %v7528, %v7561
      %v7605 = vadd.f32 %v7529, %v7565
      %v7606 = vadd.f32 %v7530, %v7561
      %v7607 = vadd.f32 %v7531, %v7565
      %v7608 = vadd.f32 %v7532, %v7561
      %v7609 = vadd.f32 %v7533, %v7565
      %v7610 = vadd.f32 %v7534, %v7561
      %v7611 = vadd.f32 %v7535, %v7565
      %v7612 = vadd.f32 %v7536, %v7561
      %v7613 = vadd.f32 %v7537, %v7565
      %v7614 = vadd.f32 %v7538, %v7561
      %v7615 = vadd.f32 %v7539, %v7565
      %v7616 = vadd.f32 %v7540, %v7561
      %v7617 = vadd.f32 %v7541, %v7565
      %v7618 = vadd.f32 %v7542, %v7561
      %v7619 = vadd.f32 %v7543, %v7565
      %v7620 = vadd.f32 %v7544, %v7561
      %v7621 = vadd.f32 %v7545, %v7565
      %v7622 = vadd.f32 %v7546, %v7561
      %v7623 = vadd.f32 %v7547, %v7565
      %v7624 = vadd.f32 %v7548, %v7561
      %v7625 = vadd.f32 %v7549, %v7565
      %v7626 = vadd.f32 %v7550, %v7561
      %v7627 = vadd.f32 %v7551, %v7565
      %v7628 = vadd.f32 %v7552, %v7561
      %v7629 = vadd.f32 %v7553, %v7565
      %v7630 = vadd.f32 %v7554, %v7561
      %v7631 = vadd.f32 %v7555, %v7565
      %v7632 = vmax.f32 %v7568, 0.0
      %v7633 = vmax.f32 %v7569, 0.0
      %v7634 = vmax.f32 %v7570, 0.0
      %v7635 = vmax.f32 %v7571, 0.0
      %v7636 = vmax.f32 %v7572, 0.0
      %v7637 = vmax.f32 %v7573, 0.0
      %v7638 = vmax.f32 %v7574, 0.0
      %v7639 = vmax.f32 %v7575, 0.0
      %v7640 = vmax.f32 %v7576, 0.0
      %v7641 = vmax.f32 %v7577, 0.0
      %v7642 = vmax.f32 %v7578, 0.0
      %v7643 = vmax.f32 %v7579, 0.0
      %v7644 = vmax.f32 %v7580, 0.0
      %v7645 = vmax.f32 %v7581, 0.0
      %v7646 = vmax.f32 %v7582, 0.0
      %v7647 = vmax.f32 %v7583, 0.0
      %v7648 = vmax.f32 %v7584, 0.0
      %v7649 = vmax.f32 %v7585, 0.0
      %v7650 = vmax.f32 %v7586, 0.0
      %v7651 = vmax.f32 %v7587, 0.0
      %v7652 = vmax.f32 %v7588, 0.0
      %v7653 = vmax.f32 %v7589, 0.0
      %v7654 = vmax.f32 %v7590, 0.0
      %v7655 = vmax.f32 %v7591, 0.0
      %v7656 = vmax.f32 %v7592, 0.0
      %v7657 = vmax.f32 %v7593, 0.0
      %v7658 = vmax.f32 %v7594, 0.0
      %v7659 = vmax.f32 %v7595, 0.0
      %v7660 = vmax.f32 %v7596, 0.0
      %v7661 = vmax.f32 %v7597, 0.0
      %v7662 = vmax.f32 %v7598, 0.0
      %v7663 = vmax.f32 %v7599, 0.0
      %v7664 = vmax.f32 %v7600, 0.0
      %v7665 = vmax.f32 %v7601, 0.0
      %v7666 = vmax.f32 %v7602, 0.0
      %v7667 = vmax.f32 %v7603, 0.0
      %v7668 = vmax.f32 %v7604, 0.0
      %v7669 = vmax.f32 %v7605, 0.0
      %v7670 = vmax.f32 %v7606, 0.0
      %v7671 = vmax.f32 %v7607, 0.0
      %v7672 = vmax.f32 %v7608, 0.0
      %v7673 = vmax.f32 %v7609, 0.0
      %v7674 = vmax.f32 %v7610, 0.0
      %v7675 = vmax.f32 %v7611, 0.0
      %v7676 = vmax.f32 %v7612, 0.0
      %v7677 = vmax.f32 %v7613, 0.0
      %v7678 = vmax.f32 %v7614, 0.0
      %v7679 = vmax.f32 %v7615, 0.0
      %v7680 = vmax.f32 %v7616, 0.0
      %v7681 = vmax.f32 %v7617, 0.0
      %v7682 = vmax.f32 %v7618, 0.0
      %v7683 = vmax.f32 %v7619, 0.0
      %v7684 = vmax.f32 %v7620, 0.0
      %v7685 = vmax.f32 %v7621, 0.0
      %v7686 = vmax.f32 %v7622, 0.0
      %v7687 = vmax.f32 %v7623, 0.0
      %v7688 = vmax.f32 %v7624, 0.0
      %v7689 = vmax.f32 %v7625, 0.0
      %v7690 = vmax.f32 %v7626, 0.0
      %v7691 = vmax.f32 %v7627, 0.0
      %v7692 = vmax.f32 %v7628, 0.0
      %v7693 = vmax.f32 %v7629, 0.0
      %v7694 = vmax.f32 %v7630, 0.0
      %v7695 = vmax.f32 %v7631, 0.0
      %v7696 = vld [vmem:[%s5] sm:$0xff]
      %v7697 = vpack.c.bf16 %v7634, %v7632
      %v7698 = vpack.c.bf16 %v7635, %v7633
      %v7699 = vpack.c.bf16 %v7638, %v7636
      %v7700 = vpack.c.bf16 %v7639, %v7637
      %v7701 = vpack.c.bf16 %v7642, %v7640
      %v7702 = vpack.c.bf16 %v7643, %v7641
      %v7703 = vpack.c.bf16 %v7646, %v7644
      %v7704 = vpack.c.bf16 %v7647, %v7645
      %v7705 = vpack.c.bf16 %v7650, %v7648
      %v7706 = vpack.c.bf16 %v7651, %v7649
      %v7707 = vpack.c.bf16 %v7654, %v7652
      %v7708 = vpack.c.bf16 %v7655, %v7653
      %v7709 = vpack.c.bf16 %v7658, %v7656
      %v7710 = vpack.c.bf16 %v7659, %v7657
      %v7711 = vpack.c.bf16 %v7662, %v7660
      %v7712 = vpack.c.bf16 %v7663, %v7661
      %v7713 = vpack.c.bf16 %v7666, %v7664
      %v7714 = vpack.c.bf16 %v7667, %v7665
      %v7715 = vpack.c.bf16 %v7670, %v7668
      %v7716 = vpack.c.bf16 %v7671, %v7669
      %v7717 = vpack.c.bf16 %v7674, %v7672
      %v7718 = vpack.c.bf16 %v7675, %v7673
      %v7719 = vpack.c.bf16 %v7678, %v7676
      %v7720 = vpack.c.bf16 %v7679, %v7677
      %v7721 = vpack.c.bf16 %v7682, %v7680
      %v7722 = vpack.c.bf16 %v7683, %v7681
      %v7723 = vpack.c.bf16 %v7686, %v7684
      %v7724 = vpack.c.bf16 %v7687, %v7685
      %v7725 = vpack.c.bf16 %v7690, %v7688
      %v7726 = vpack.c.bf16 %v7691, %v7689
      %v7727 = vpack.c.bf16 %v7694, %v7692
      %v7728 = vpack.c.bf16 %v7695, %v7693
      %v7729 = vld [vmem:[%s6] sm:$0xff]
      %7731 = vset.pattern.permute.xlu0 0
      %7732 = vperm.xlu0 %7731, %v7729
      %v7733 = vpop.permute.xlu0 %7732
      %v7736 = vunpack.c.l.b16 %v7696
      %v7737 = vunpack.c.h.b16 %v7696
      %v7738 = vpack.c.b16 %v7736, %v7736
      %v7739 = vpack.c.b16 %v7737, %v7737
      %7742 = vmatprep.subr.bf16.mxu0 %v7698
      %7743 = vmatpush1.bf16.xpose.msra.mxu0 %v7697
      %7744 = vmatprep.subr.bf16.mxu0 %v7700
      %7745 = vmatpush1.bf16.xpose.msra.mxu0 %v7699
      %7746 = vmatprep.subr.bf16.mxu0 %v7702
      %7747 = vmatpush1.bf16.xpose.msra.mxu0 %v7701
      %7748 = vmatprep.subr.bf16.mxu0 %v7704
      %7749 = vmatpush1.bf16.xpose.msra.mxu0 %v7703
      %7750 = vmatprep.subr.bf16.mxu0 %v7706
      %7751 = vmatpush1.bf16.xpose.msra.mxu0 %v7705
      %7752 = vmatprep.subr.bf16.mxu0 %v7708
      %7753 = vmatpush1.bf16.xpose.msra.mxu0 %v7707
      %7754 = vmatprep.subr.bf16.mxu0 %v7710
      %7755 = vmatpush1.bf16.xpose.msra.mxu0 %v7709
      %7756 = vmatprep.subr.bf16.mxu0 %v7712
      %7757 = vmatpush1.bf16.xpose.msra.mxu0 %v7711
      %7758 = vmatprep.subr.bf16.mxu0 %v7714
      %7759 = vmatpush1.bf16.xpose.msra.mxu0 %v7713
      %7760 = vmatprep.subr.bf16.mxu0 %v7716
      %7761 = vmatpush1.bf16.xpose.msra.mxu0 %v7715
      %7762 = vmatprep.subr.bf16.mxu0 %v7718
      %7763 = vmatpush1.bf16.xpose.msra.mxu0 %v7717
      %7764 = vmatprep.subr.bf16.mxu0 %v7720
      %7765 = vmatpush1.bf16.xpose.msra.mxu0 %v7719
      %7766 = vmatprep.subr.bf16.mxu0 %v7722
      %7767 = vmatpush1.bf16.xpose.msra.mxu0 %v7721
      %7768 = vmatprep.subr.bf16.mxu0 %v7724
      %7769 = vmatpush1.bf16.xpose.msra.mxu0 %v7723
      %7770 = vmatprep.subr.bf16.mxu0 %v7726
      %7771 = vmatpush1.bf16.xpose.msra.mxu0 %v7725
      %7772 = vmatprep.subr.bf16.mxu0 %v7728
      %7773 = vmatpush1.bf16.xpose.msra.mxu0 %v7727
      %7774 = vmatprep.mubr.bf16.mxu0 %v7739
      %7775 = vmatmul.mubr.bf16.gmra.mrb[0].mxu0 %v7738
      %v7776 = vpop.f32.mrb[0].mxu0
      %v7777 = vadd.f32 %v7733, %v7776
      %v7778 = vpop.f32.mrb[0].mxu0
      %v7779 = vadd.f32 %v7733, %v7778
      %v7780 = vpop.f32.mrb[0].mxu0
      %v7781 = vpop.f32.mrb[0].mxu0
      %7782 = vdwg.mxu0
      %7783 = vst [vmem:[%s314] sm:$0xff] %v7777
      %7784 = vst [vmem:[%s314 + $0x8] sm:$0xff] %v7779
      %s7785 = smul.u32 2, %s23
      %p7786 = scmp.lt.s32.totalorder %s22, 1
      %s7787 = scalar_select %p7786, %s22, 1
      %p7788 = scmp.lt.s32.totalorder %s7785, 1
      %s7789 = scalar_select %p7788, %s7785, 1
      %s7790 = smul.addr %s7787, 2
      %s7791 = sadd.s32 %s7789, %s7790
      %s7792 = smul.addr %s7791, 8
      %s7793 = scalar_lea.vmem %s7, %s7792
      // Predicated region
      $region49: #{upsampling_forward.1} parent=47 // pred_check
        %p7794 = pneg %p204
      $region50: #{upsampling_forward.1} parent=47 // pred_check_branch
        %7796 = sbr.rel (%p7794) target = $region52
      $region51: #{upsampling_forward.1} parent=47 // pred_region
        %s7797 = smul.u32 2, %s23
      $region52: #{upsampling_forward.1} parent=47 // pred_fallthru
        _
    $region48: #{upsampling_forward.1} parent=5 // pred_fallthru
      _
    %p7798 = scmp.le.s32.totalorder 2, %s13
    // Predicated region
    $region53: #{upsampling_forward.1} parent=5 // pred_check
      %p7799 = pneg %p7798
    $region54: #{upsampling_forward.1} parent=5 // pred_check_branch
      %7801 = sbr.rel (%p7799) target = $region56
    $region55: #{upsampling_forward.1} parent=5 // pred_region
      %s7802 = ssub.s32 %s13, 2
      // Predicated region
      $region57: #{upsampling_forward.1} parent=55 // pred_check
        %p7803 = pneg %p210
      $region58: #{upsampling_forward.1} parent=55 // pred_check_branch
        %7805 = sbr.rel (%p7803) target = $region60
      $region59: #{upsampling_forward.1} parent=55 // pred_region
        %s7806 = smul.u32 2, %s25
        %p7807 = scmp.lt.s32.totalorder %s24, 1
        %s7808 = scalar_select %p7807, %s24, 1
        %p7809 = scmp.lt.s32.totalorder %s7806, 1
        %s7810 = scalar_select %p7809, %s7806, 1
        %s7811 = smul.addr %s7808, 2
        %s7812 = sadd.s32 %s7810, %s7811
        %s7813 = smul.addr %s7812, 8
        %s7814 = scalar_lea.vmem %s7, %s7813
      $region60: #{upsampling_forward.1} parent=55 // pred_fallthru
        _
    $region56: #{upsampling_forward.1} parent=5 // pred_fallthru
      _
  $region6: #{upsampling_forward.1} parent=0 // loop_footer
    %s17 = sadd.s32 1, %s13
  $region7: #{upsampling_forward.1} parent=0 // loop_footer_branch
    %12 = sbr.rel target = $region3
  $region8: #{upsampling_forward.1} parent=0 // loop_exit
    _

</llo_original>
